<compile_context>
chip_gen: v5e
topology: v5e:2x2
jax: 0.10.0
libtpu: 0.0.40
codegen_flags: <defaults>
</compile_context>

<pallas_src>
import math
from functools import partial

import jax
import jax.numpy as jnp
from jax.experimental import pallas as pl
from jax.experimental.pallas import tpu as pltpu

LN_EPS = 1e-12  # ESPnet LayerNorm eps


def _layer_norm(v, gamma, beta):
    mu = jnp.mean(v, axis=-1, keepdims=True)
    var = jnp.mean((v - mu) ** 2, axis=-1, keepdims=True)
    return (v - mu) * jax.lax.rsqrt(var + LN_EPS) * gamma + beta


def encoder_layer_kernel(
    mask_ref, x_ref,
    g1_ref, be1_ref,
    wq_ref, bq_ref, wk_ref, bk_ref, wv_ref, bv_ref, wo_ref, bo_ref,
    g2_ref, be2_ref,
    w1_ref, b1_ref, w2_ref, b2_ref,
    out_ref,
    q_scr, k_scr, v_scr,
    *, n_heads, q_tile,
):
    f32 = jnp.float32
    bf16 = jnp.bfloat16

    x_full = x_ref[0].astype(f32)                       # (T, D) full sequence (for K/V)
    T, D = x_full.shape

    qi = pl.program_id(1)
    row0 = pl.multiple_of(qi * q_tile, q_tile)
    x_tile = x_ref[0, pl.ds(row0, q_tile), :].astype(f32)   # (TQ, D) query rows

    key_masked = mask_ref[...] == 0                     # (1, 1, T), True = padded key

    # ---- pre-norm 1 (LayerNorm is per-row, so tile recompute is exact) ------
    g1 = g1_ref[...]
    be1 = be1_ref[...]
    src1_b = _layer_norm(x_full, g1, be1).astype(bf16)      # (T, D)   keys/values
    src1q_b = _layer_norm(x_tile, g1, be1).astype(bf16)     # (TQ, D)  queries

    # ---- per-head Q/K/V projections (K = D wide matmuls), heads on leading axis
    # 1/sqrt(dk) is already folded into wq/bq outside the kernel.
    for h in range(n_heads):
        q_scr[h] = (jnp.dot(src1q_b, wq_ref[h], preferred_element_type=f32)
                    + bq_ref[h]).astype(bf16)
        k_scr[h] = (jnp.dot(src1_b, wk_ref[h], preferred_element_type=f32)
                    + bk_ref[h]).astype(bf16)
        v_scr[h] = (jnp.dot(src1_b, wv_ref[h], preferred_element_type=f32)
                    + bv_ref[h]).astype(bf16)

    # ---- head-batched attention --------------------------------------------
    scores = jnp.einsum("hqd,hkd->hqk", q_scr[...], k_scr[...],
                        preferred_element_type=f32)          # (H, TQ, T)
    scores = jnp.where(key_masked, jnp.finfo(f32).min, scores)
    m = jnp.max(scores, axis=-1, keepdims=True)
    e = jnp.exp(scores - m)
    p = e * pl.reciprocal(jnp.sum(e, axis=-1, keepdims=True), approx=True)
    p = jnp.where(key_masked, 0.0, p)
    ctx = jnp.einsum("hqk,hkd->hqd", p.astype(bf16), v_scr[...],
                     preferred_element_type=f32)             # (H, TQ, dk)

    # ---- output projection accumulated over heads (no lane concatenate) -----
    attn_acc = jnp.zeros((q_tile, D), f32)
    for h in range(n_heads):
        attn_acc = attn_acc + jnp.dot(ctx[h].astype(bf16), wo_ref[h],
                                      preferred_element_type=f32)
    x1 = x_tile + attn_acc + bo_ref[...]                     # residual (dropout = id)

    # ---- pre-norm 2 + positionwise feed-forward ------------------------------
    src2_b = _layer_norm(x1, g2_ref[...], be2_ref[...]).astype(bf16)
    hid = jnp.maximum(
        jnp.dot(src2_b, w1_ref[...], preferred_element_type=f32) + b1_ref[...], 0.0)
    ffn = jnp.dot(hid.astype(bf16), w2_ref[...], preferred_element_type=f32) + b2_ref[...]

    out_ref[0] = (x1 + ffn).astype(out_ref.dtype)
    # TODO(synk): dropout is identity (eval mode); training dropout would need
    # pltpu.prng_seed / pltpu.prng_random_bits inside the kernel.


def _prepare_params(params, n_heads):
    """Split per-head weights, fold the softmax scale into Wq/bq, cast matmul
    weights to bf16 (f32 accumulation happens in-kernel)."""
    f32 = jnp.float32
    bf16 = jnp.bfloat16
    D = params["wq"].shape[0]
    dk = D // n_heads
    scale = 1.0 / math.sqrt(dk)

    def split_out(w):   # (D, D) -> (H, D, dk), column block h is head h
        return w.reshape(D, n_heads, dk).transpose(1, 0, 2)

    def split_bias(b):  # (1, D) -> (H, 1, dk)
        return b.reshape(n_heads, 1, dk)

    return {
        "g1": params["g1"].astype(f32), "be1": params["be1"].astype(f32),
        "wq": (split_out(params["wq"]) * scale).astype(bf16),
        "bq": (split_bias(params["bq"]) * scale).astype(f32),
        "wk": split_out(params["wk"]).astype(bf16),
        "bk": split_bias(params["bk"]).astype(f32),
        "wv": split_out(params["wv"]).astype(bf16),
        "bv": split_bias(params["bv"]).astype(f32),
        "wo": params["wo"].reshape(n_heads, dk, D).astype(bf16),
        "bo": params["bo"].astype(f32),
        "g2": params["g2"].astype(f32), "be2": params["be2"].astype(f32),
        "w1": params["w1"].astype(bf16), "b1": params["bb1"].astype(f32),
        "w2": params["w2"].astype(bf16), "b2": params["bb2"].astype(f32),
    }


def encoder_layer(x, mask, params, n_heads):
    """x: (B, T, D) f32, mask: (B, 1, T) int32 (1 = keep). Returns (y, mask)."""
    B, T, D = x.shape
    assert D % n_heads == 0
    dk = D // n_heads
    Dff = params["w1"].shape[1]

    # Query-tile the time dimension (flash-style row tiling of the whole layer).
    TQ = 128 if (T % 128 == 0) else T
    NQ = T // TQ

    kp = _prepare_params(params, n_heads)

    def call(weight_mode):
        def wspec(shape):
            nd = len(shape)
            kwargs = {} if weight_mode is None else {"pipeline_mode": weight_mode}
            return pl.BlockSpec(shape, lambda b, q, _nd=nd: (0,) * _nd, **kwargs)

        in_specs = [
            pl.BlockSpec((1, 1, T), lambda b, q: (b, 0, 0)),   # mask
            pl.BlockSpec((1, T, D), lambda b, q: (b, 0, 0)),   # x (full seq per batch)
            wspec((1, D)), wspec((1, D)),                      # gamma1, beta1
            wspec((n_heads, D, dk)), wspec((n_heads, 1, dk)),  # Wq, bq (scaled)
            wspec((n_heads, D, dk)), wspec((n_heads, 1, dk)),  # Wk, bk
            wspec((n_heads, D, dk)), wspec((n_heads, 1, dk)),  # Wv, bv
            wspec((n_heads, dk, D)), wspec((1, D)),            # Wo, bo
            wspec((1, D)), wspec((1, D)),                      # gamma2, beta2
            wspec((D, Dff)), wspec((1, Dff)),                  # W1, b1
            wspec((Dff, D)), wspec((1, D)),                    # W2, b2
        ]

        return pl.pallas_call(
            partial(encoder_layer_kernel, n_heads=n_heads, q_tile=TQ),
            out_shape=jax.ShapeDtypeStruct((B, T, D), x.dtype),
            grid_spec=pltpu.PrefetchScalarGridSpec(
                num_scalar_prefetch=0,
                grid=(B, NQ),
                in_specs=in_specs,
                out_specs=pl.BlockSpec((1, TQ, D), lambda b, q: (b, q, 0)),
                scratch_shapes=[
                    pltpu.VMEM((n_heads, TQ, dk), jnp.bfloat16),  # Q heads
                    pltpu.VMEM((n_heads, T, dk), jnp.bfloat16),   # K heads
                    pltpu.VMEM((n_heads, T, dk), jnp.bfloat16),   # V heads
                ],
            ),
            compiler_params=pltpu.CompilerParams(
                dimension_semantics=("parallel", "parallel"),
                vmem_limit_bytes=48 * 1024 * 1024,
            ),
        )(mask, x,
          kp["g1"], kp["be1"],
          kp["wq"], kp["bq"], kp["wk"], kp["bk"], kp["wv"], kp["bv"],
          kp["wo"], kp["bo"],
          kp["g2"], kp["be2"],
          kp["w1"], kp["b1"], kp["w2"], kp["b2"])

    # Grid-invariant weights: try single-buffering (halves their VMEM footprint,
    # important on v7x); fall back to default double-buffering if unsupported.
    modes = ([pl.Buffered(1)] if hasattr(pl, "Buffered") else []) + [None]
    err = None
    for mode in modes:
        try:
            y = jax.block_until_ready(call(mode))
            return y, mask
        except Exception as e:  # pragma: no cover - fallback path
            err = e
    raise err


def _reference(x, mask, p, n_heads):
    """Pure-JAX f32 reference for sanity checking."""
    B, T, D = x.shape
    dk = D // n_heads

    def ln(v, g, b):
        mu = jnp.mean(v, -1, keepdims=True)
        var = jnp.mean((v - mu) ** 2, -1, keepdims=True)
        return (v - mu) * jax.lax.rsqrt(var + LN_EPS) * g + b

    src1 = ln(x, p["g1"], p["be1"])
    q = src1 @ p["wq"] + p["bq"]
    k = src1 @ p["wk"] + p["bk"]
    v = src1 @ p["wv"] + p["bv"]
    q = q.reshape(B, T, n_heads, dk).transpose(0, 2, 1, 3)
    k = k.reshape(B, T, n_heads, dk).transpose(0, 2, 1, 3)
    v = v.reshape(B, T, n_heads, dk).transpose(0, 2, 1, 3)
    scores = jnp.einsum("bhqd,bhkd->bhqk", q, k) / math.sqrt(dk)
    m = (mask == 0)[:, None, :, :]              # (B,1,1,T)
    scores = jnp.where(m, jnp.finfo(jnp.float32).min, scores)
    attn = jax.nn.softmax(scores, axis=-1)
    attn = jnp.where(m, 0.0, attn)
    ctx = jnp.einsum("bhqk,bhkd->bhqd", attn, v).transpose(0, 2, 1, 3).reshape(B, T, D)
    x1 = x + ctx @ p["wo"] + p["bo"]
    src2 = ln(x1, p["g2"], p["be2"])
    ffn = jnp.maximum(src2 @ p["w1"] + p["bb1"], 0.0) @ p["w2"] + p["bb2"]
    return x1 + ffn


if __name__ == "__main__":
    # Small but lane-dense shapes (D multiple of 128 per the layout feedback).
    B, T, D, H, Dff = 2, 16, 128, 4, 256

    key = jax.random.PRNGKey(0)
    ks = jax.random.split(key, 16)
    init = lambda k, shape, s: jax.random.normal(k, shape, jnp.float32) * s

    params = {
        "g1": jnp.ones((1, D), jnp.float32),
        "be1": jnp.zeros((1, D), jnp.float32),
        "wq": init(ks[0], (D, D), 0.05), "bq": init(ks[1], (1, D), 0.01),
        "wk": init(ks[2], (D, D), 0.05), "bk": init(ks[3], (1, D), 0.01),
        "wv": init(ks[4], (D, D), 0.05), "bv": init(ks[5], (1, D), 0.01),
        "wo": init(ks[6], (D, D), 0.05), "bo": init(ks[7], (1, D), 0.01),
        "g2": jnp.ones((1, D), jnp.float32),
        "be2": jnp.zeros((1, D), jnp.float32),
        "w1": init(ks[8], (D, Dff), 0.05), "bb1": init(ks[9], (1, Dff), 0.01),
        "w2": init(ks[10], (Dff, D), 0.05), "bb2": init(ks[11], (1, D), 0.01),
    }

    x = jax.random.normal(ks[12], (B, T, D), jnp.float32)
    # mask: batch 0 fully valid, batch 1 has last three key positions masked.
    mask = jnp.ones((B, 1, T), jnp.int32).at[1, 0, -3:].set(0)

    y, mask_out = encoder_layer(x, mask, params, n_heads=H)
    y = jax.block_until_ready(y)

    y_ref = _reference(x, mask, params, H)
    assert y.shape == (B, T, D) and mask_out.shape == (B, 1, T)
    max_err = float(jnp.max(jnp.abs(y - y_ref)))
    # bf16 matmul operands (f32 accumulation) -> loosened tolerance vs f32 reference.
    assert jnp.allclose(y, y_ref, atol=5e-2, rtol=5e-2), (
        f"mismatch vs JAX reference (max abs err {max_err})")
    print("KERNEL_OK")
</pallas_src>

<mosaic_0001>
module attributes {stable_mosaic.version = 11 : i64} {
  func.func @encoder_layer_kernel(%arg0: i32, %arg1: i32, %arg2: memref<1x1x16xi32, #tpu.memory_space<vmem>>, %arg3: memref<1x16x128xf32, #tpu.memory_space<vmem>>, %arg4: memref<1x128xf32, #tpu.memory_space<vmem>>, %arg5: memref<1x128xf32, #tpu.memory_space<vmem>>, %arg6: memref<4x128x32xbf16, #tpu.memory_space<vmem>>, %arg7: memref<4x1x32xf32, #tpu.memory_space<vmem>>, %arg8: memref<4x128x32xbf16, #tpu.memory_space<vmem>>, %arg9: memref<4x1x32xf32, #tpu.memory_space<vmem>>, %arg10: memref<4x128x32xbf16, #tpu.memory_space<vmem>>, %arg11: memref<4x1x32xf32, #tpu.memory_space<vmem>>, %arg12: memref<4x32x128xbf16, #tpu.memory_space<vmem>>, %arg13: memref<1x128xf32, #tpu.memory_space<vmem>>, %arg14: memref<1x128xf32, #tpu.memory_space<vmem>>, %arg15: memref<1x128xf32, #tpu.memory_space<vmem>>, %arg16: memref<128x256xbf16, #tpu.memory_space<vmem>>, %arg17: memref<1x256xf32, #tpu.memory_space<vmem>>, %arg18: memref<256x128xbf16, #tpu.memory_space<vmem>>, %arg19: memref<1x128xf32, #tpu.memory_space<vmem>>, %arg20: memref<1x16x128xf32, #tpu.memory_space<vmem>>, %arg21: memref<4x16x32xbf16, #tpu.memory_space<vmem>>, %arg22: memref<4x16x32xbf16, #tpu.memory_space<vmem>>, %arg23: memref<4x16x32xbf16, #tpu.memory_space<vmem>>) attributes {dimension_semantics = [#tpu.dimension_semantics<parallel>, #tpu.dimension_semantics<parallel>], iteration_bounds = array<i64: 2, 1>, scalar_prefetch = 0 : i64, scratch_operands = 3 : i64, tpu.core_type = #tpu.core_type<tc>, window_params = [{transform_indices = @transform_0, window_bounds = array<i64: 1, 1, 16>}, {transform_indices = @transform_1, window_bounds = array<i64: 1, 16, 128>}, {pipeline_mode = #tpu.pipeline_mode<synchronous>, transform_indices = @transform_2, window_bounds = array<i64: 1, 128>}, {pipeline_mode = #tpu.pipeline_mode<synchronous>, transform_indices = @transform_3, window_bounds = array<i64: 1, 128>}, {pipeline_mode = #tpu.pipeline_mode<synchronous>, transform_indices = @transform_4, window_bounds = array<i64: 4, 128, 32>}, {pipeline_mode = #tpu.pipeline_mode<synchronous>, transform_indices = @transform_5, window_bounds = array<i64: 4, 1, 32>}, {pipeline_mode = #tpu.pipeline_mode<synchronous>, transform_indices = @transform_6, window_bounds = array<i64: 4, 128, 32>}, {pipeline_mode = #tpu.pipeline_mode<synchronous>, transform_indices = @transform_7, window_bounds = array<i64: 4, 1, 32>}, {pipeline_mode = #tpu.pipeline_mode<synchronous>, transform_indices = @transform_8, window_bounds = array<i64: 4, 128, 32>}, {pipeline_mode = #tpu.pipeline_mode<synchronous>, transform_indices = @transform_9, window_bounds = array<i64: 4, 1, 32>}, {pipeline_mode = #tpu.pipeline_mode<synchronous>, transform_indices = @transform_10, window_bounds = array<i64: 4, 32, 128>}, {pipeline_mode = #tpu.pipeline_mode<synchronous>, transform_indices = @transform_11, window_bounds = array<i64: 1, 128>}, {pipeline_mode = #tpu.pipeline_mode<synchronous>, transform_indices = @transform_12, window_bounds = array<i64: 1, 128>}, {pipeline_mode = #tpu.pipeline_mode<synchronous>, transform_indices = @transform_13, window_bounds = array<i64: 1, 128>}, {pipeline_mode = #tpu.pipeline_mode<synchronous>, transform_indices = @transform_14, window_bounds = array<i64: 128, 256>}, {pipeline_mode = #tpu.pipeline_mode<synchronous>, transform_indices = @transform_15, window_bounds = array<i64: 1, 256>}, {pipeline_mode = #tpu.pipeline_mode<synchronous>, transform_indices = @transform_16, window_bounds = array<i64: 256, 128>}, {pipeline_mode = #tpu.pipeline_mode<synchronous>, transform_indices = @transform_17, window_bounds = array<i64: 1, 128>}, {transform_indices = @transform_18, window_bounds = array<i64: 1, 16, 128>}]} {
    %c0 = arith.constant 0 : index
    %c0_0 = arith.constant 0 : index
    %c0_1 = arith.constant 0 : index
    %0 = vector.load %arg3[%c0, %c0_0, %c0_1] : memref<1x16x128xf32, #tpu.memory_space<vmem>>, vector<1x16x128xf32>
    %1 = vector.shape_cast %0 : vector<1x16x128xf32> to vector<16x128xf32>
    %c16_i32 = arith.constant 16 : i32
    %2 = arith.muli %arg1, %c16_i32 : i32
    %3 = tpu.assume_multiple %2, 16 : i32
    %c0_2 = arith.constant 0 : index
    %4 = arith.index_cast %3 : i32 to index
    %c0_3 = arith.constant 0 : index
    %5 = vector.load %arg3[%c0_2, %4, %c0_3] : memref<1x16x128xf32, #tpu.memory_space<vmem>>, vector<1x16x128xf32>
    %6 = vector.shape_cast %5 : vector<1x16x128xf32> to vector<16x128xf32>
    %c0_4 = arith.constant 0 : index
    %c0_5 = arith.constant 0 : index
    %c0_6 = arith.constant 0 : index
    %7 = vector.load %arg2[%c0_4, %c0_5, %c0_6] : memref<1x1x16xi32, #tpu.memory_space<vmem>>, vector<1x1x16xi32>
    %c0_i32 = arith.constant 0 : i32
    %8 = vector.broadcast %c0_i32 : i32 to vector<1x1x16xi32>
    %9 = arith.cmpi eq, %7, %8 : vector<1x1x16xi32>
    %c0_7 = arith.constant 0 : index
    %c0_8 = arith.constant 0 : index
    %10 = vector.load %arg4[%c0_7, %c0_8] : memref<1x128xf32, #tpu.memory_space<vmem>>, vector<1x128xf32>
    %c0_9 = arith.constant 0 : index
    %c0_10 = arith.constant 0 : index
    %11 = vector.load %arg5[%c0_9, %c0_10] : memref<1x128xf32, #tpu.memory_space<vmem>>, vector<1x128xf32>
    %cst = arith.constant dense<0.000000e+00> : vector<16xf32>
    %12 = vector.multi_reduction <add>, %1, %cst [1] : vector<16x128xf32> to vector<16xf32>
    %13 = vector.shape_cast %12 : vector<16xf32> to vector<16x1xf32>
    %cst_11 = arith.constant 1.280000e+02 : f32
    %14 = vector.broadcast %cst_11 : f32 to vector<16x1xf32>
    %15 = arith.divf %13, %14 : vector<16x1xf32>
    %16 = vector.broadcast %15 : vector<16x1xf32> to vector<16x128xf32>
    %17 = arith.subf %1, %16 : vector<16x128xf32>
    %18 = arith.mulf %17, %17 : vector<16x128xf32>
    %cst_12 = arith.constant dense<0.000000e+00> : vector<16xf32>
    %19 = vector.multi_reduction <add>, %18, %cst_12 [1] : vector<16x128xf32> to vector<16xf32>
    %20 = vector.shape_cast %19 : vector<16xf32> to vector<16x1xf32>
    %cst_13 = arith.constant 1.280000e+02 : f32
    %21 = vector.broadcast %cst_13 : f32 to vector<16x1xf32>
    %22 = arith.divf %20, %21 : vector<16x1xf32>
    %23 = vector.broadcast %15 : vector<16x1xf32> to vector<16x128xf32>
    %24 = arith.subf %1, %23 : vector<16x128xf32>
    %cst_14 = arith.constant 9.99999996E-13 : f32
    %25 = vector.broadcast %cst_14 : f32 to vector<16x1xf32>
    %26 = arith.addf %22, %25 : vector<16x1xf32>
    %27 = math.rsqrt %26 : vector<16x1xf32>
    %28 = vector.broadcast %27 : vector<16x1xf32> to vector<16x128xf32>
    %29 = arith.mulf %24, %28 : vector<16x128xf32>
    %30 = vector.broadcast %10 : vector<1x128xf32> to vector<16x128xf32>
    %31 = arith.mulf %29, %30 : vector<16x128xf32>
    %32 = vector.broadcast %11 : vector<1x128xf32> to vector<16x128xf32>
    %33 = arith.addf %31, %32 : vector<16x128xf32>
    %34 = arith.truncf %33 : vector<16x128xf32> to vector<16x128xbf16>
    %cst_15 = arith.constant dense<0.000000e+00> : vector<16xf32>
    %35 = vector.multi_reduction <add>, %6, %cst_15 [1] : vector<16x128xf32> to vector<16xf32>
    %36 = vector.shape_cast %35 : vector<16xf32> to vector<16x1xf32>
    %cst_16 = arith.constant 1.280000e+02 : f32
    %37 = vector.broadcast %cst_16 : f32 to vector<16x1xf32>
    %38 = arith.divf %36, %37 : vector<16x1xf32>
    %39 = vector.broadcast %38 : vector<16x1xf32> to vector<16x128xf32>
    %40 = arith.subf %6, %39 : vector<16x128xf32>
    %41 = arith.mulf %40, %40 : vector<16x128xf32>
    %cst_17 = arith.constant dense<0.000000e+00> : vector<16xf32>
    %42 = vector.multi_reduction <add>, %41, %cst_17 [1] : vector<16x128xf32> to vector<16xf32>
    %43 = vector.shape_cast %42 : vector<16xf32> to vector<16x1xf32>
    %cst_18 = arith.constant 1.280000e+02 : f32
    %44 = vector.broadcast %cst_18 : f32 to vector<16x1xf32>
    %45 = arith.divf %43, %44 : vector<16x1xf32>
    %46 = vector.broadcast %38 : vector<16x1xf32> to vector<16x128xf32>
    %47 = arith.subf %6, %46 : vector<16x128xf32>
    %cst_19 = arith.constant 9.99999996E-13 : f32
    %48 = vector.broadcast %cst_19 : f32 to vector<16x1xf32>
    %49 = arith.addf %45, %48 : vector<16x1xf32>
    %50 = math.rsqrt %49 : vector<16x1xf32>
    %51 = vector.broadcast %50 : vector<16x1xf32> to vector<16x128xf32>
    %52 = arith.mulf %47, %51 : vector<16x128xf32>
    %53 = vector.broadcast %10 : vector<1x128xf32> to vector<16x128xf32>
    %54 = arith.mulf %52, %53 : vector<16x128xf32>
    %55 = vector.broadcast %11 : vector<1x128xf32> to vector<16x128xf32>
    %56 = arith.addf %54, %55 : vector<16x128xf32>
    %57 = arith.truncf %56 : vector<16x128xf32> to vector<16x128xbf16>
    %c0_20 = arith.constant 0 : index
    %c0_21 = arith.constant 0 : index
    %c0_22 = arith.constant 0 : index
    %58 = vector.load %arg6[%c0_20, %c0_21, %c0_22] : memref<4x128x32xbf16, #tpu.memory_space<vmem>>, vector<1x128x32xbf16>
    %59 = vector.shape_cast %58 : vector<1x128x32xbf16> to vector<128x32xbf16>
    %cst_23 = arith.constant dense<0.000000e+00> : vector<16x32xf32>
    %60 = tpu.matmul %57, %59, %cst_23 {dimension_numbers = #tpu.dot_dimension_numbers<[1], [0], [0], [1], [0, 0, 1, 1], [], []>} : vector<16x128xbf16>, vector<128x32xbf16>, vector<16x32xf32> -> vector<16x32xf32>
    %c0_24 = arith.constant 0 : index
    %c0_25 = arith.constant 0 : index
    %c0_26 = arith.constant 0 : index
    %61 = vector.load %arg7[%c0_24, %c0_25, %c0_26] : memref<4x1x32xf32, #tpu.memory_space<vmem>>, vector<1x1x32xf32>
    %62 = vector.shape_cast %61 : vector<1x1x32xf32> to vector<1x32xf32>
    %63 = vector.broadcast %62 : vector<1x32xf32> to vector<16x32xf32>
    %64 = arith.addf %60, %63 : vector<16x32xf32>
    %65 = arith.truncf %64 : vector<16x32xf32> to vector<16x32xbf16>
    %c0_27 = arith.constant 0 : index
    %c0_28 = arith.constant 0 : index
    %c0_29 = arith.constant 0 : index
    %66 = vector.load %arg21[%c0_27, %c0_28, %c0_29] : memref<4x16x32xbf16, #tpu.memory_space<vmem>>, vector<1x16x32xbf16>
    %67 = vector.shape_cast %66 : vector<1x16x32xbf16> to vector<16x32xbf16>
    %68 = vector.shape_cast %65 : vector<16x32xbf16> to vector<1x16x32xbf16>
    tpu.vector_store %arg21[%c0_27, %c0_28, %c0_29], %68 {strides = array<i32>} : memref<4x16x32xbf16, #tpu.memory_space<vmem>>, vector<1x16x32xbf16>,
    %c0_30 = arith.constant 0 : index
    %c0_31 = arith.constant 0 : index
    %c0_32 = arith.constant 0 : index
    %69 = vector.load %arg8[%c0_30, %c0_31, %c0_32] : memref<4x128x32xbf16, #tpu.memory_space<vmem>>, vector<1x128x32xbf16>
    %70 = vector.shape_cast %69 : vector<1x128x32xbf16> to vector<128x32xbf16>
    %cst_33 = arith.constant dense<0.000000e+00> : vector<16x32xf32>
    %71 = tpu.matmul %34, %70, %cst_33 {dimension_numbers = #tpu.dot_dimension_numbers<[1], [0], [0], [1], [0, 0, 1, 1], [], []>} : vector<16x128xbf16>, vector<128x32xbf16>, vector<16x32xf32> -> vector<16x32xf32>
    %c0_34 = arith.constant 0 : index
    %c0_35 = arith.constant 0 : index
    %c0_36 = arith.constant 0 : index
    %72 = vector.load %arg9[%c0_34, %c0_35, %c0_36] : memref<4x1x32xf32, #tpu.memory_space<vmem>>, vector<1x1x32xf32>
    %73 = vector.shape_cast %72 : vector<1x1x32xf32> to vector<1x32xf32>
    %74 = vector.broadcast %73 : vector<1x32xf32> to vector<16x32xf32>
    %75 = arith.addf %71, %74 : vector<16x32xf32>
    %76 = arith.truncf %75 : vector<16x32xf32> to vector<16x32xbf16>
    %c0_37 = arith.constant 0 : index
    %c0_38 = arith.constant 0 : index
    %c0_39 = arith.constant 0 : index
    %77 = vector.load %arg22[%c0_37, %c0_38, %c0_39] : memref<4x16x32xbf16, #tpu.memory_space<vmem>>, vector<1x16x32xbf16>
    %78 = vector.shape_cast %77 : vector<1x16x32xbf16> to vector<16x32xbf16>
    %79 = vector.shape_cast %76 : vector<16x32xbf16> to vector<1x16x32xbf16>
    tpu.vector_store %arg22[%c0_37, %c0_38, %c0_39], %79 {strides = array<i32>} : memref<4x16x32xbf16, #tpu.memory_space<vmem>>, vector<1x16x32xbf16>,
    %c0_40 = arith.constant 0 : index
    %c0_41 = arith.constant 0 : index
    %c0_42 = arith.constant 0 : index
    %80 = vector.load %arg10[%c0_40, %c0_41, %c0_42] : memref<4x128x32xbf16, #tpu.memory_space<vmem>>, vector<1x128x32xbf16>
    %81 = vector.shape_cast %80 : vector<1x128x32xbf16> to vector<128x32xbf16>
    %cst_43 = arith.constant dense<0.000000e+00> : vector<16x32xf32>
    %82 = tpu.matmul %34, %81, %cst_43 {dimension_numbers = #tpu.dot_dimension_numbers<[1], [0], [0], [1], [0, 0, 1, 1], [], []>} : vector<16x128xbf16>, vector<128x32xbf16>, vector<16x32xf32> -> vector<16x32xf32>
    %c0_44 = arith.constant 0 : index
    %c0_45 = arith.constant 0 : index
    %c0_46 = arith.constant 0 : index
    %83 = vector.load %arg11[%c0_44, %c0_45, %c0_46] : memref<4x1x32xf32, #tpu.memory_space<vmem>>, vector<1x1x32xf32>
    %84 = vector.shape_cast %83 : vector<1x1x32xf32> to vector<1x32xf32>
    %85 = vector.broadcast %84 : vector<1x32xf32> to vector<16x32xf32>
    %86 = arith.addf %82, %85 : vector<16x32xf32>
    %87 = arith.truncf %86 : vector<16x32xf32> to vector<16x32xbf16>
    %c0_47 = arith.constant 0 : index
    %c0_48 = arith.constant 0 : index
    %c0_49 = arith.constant 0 : index
    %88 = vector.load %arg23[%c0_47, %c0_48, %c0_49] : memref<4x16x32xbf16, #tpu.memory_space<vmem>>, vector<1x16x32xbf16>
    %89 = vector.shape_cast %88 : vector<1x16x32xbf16> to vector<16x32xbf16>
    %90 = vector.shape_cast %87 : vector<16x32xbf16> to vector<1x16x32xbf16>
    tpu.vector_store %arg23[%c0_47, %c0_48, %c0_49], %90 {strides = array<i32>} : memref<4x16x32xbf16, #tpu.memory_space<vmem>>, vector<1x16x32xbf16>,
    %c1 = arith.constant 1 : index
    %c0_50 = arith.constant 0 : index
    %c0_51 = arith.constant 0 : index
    %91 = vector.load %arg6[%c1, %c0_50, %c0_51] : memref<4x128x32xbf16, #tpu.memory_space<vmem>>, vector<1x128x32xbf16>
    %92 = vector.shape_cast %91 : vector<1x128x32xbf16> to vector<128x32xbf16>
    %cst_52 = arith.constant dense<0.000000e+00> : vector<16x32xf32>
    %93 = tpu.matmul %57, %92, %cst_52 {dimension_numbers = #tpu.dot_dimension_numbers<[1], [0], [0], [1], [0, 0, 1, 1], [], []>} : vector<16x128xbf16>, vector<128x32xbf16>, vector<16x32xf32> -> vector<16x32xf32>
    %c1_53 = arith.constant 1 : index
    %c0_54 = arith.constant 0 : index
    %c0_55 = arith.constant 0 : index
    %94 = vector.load %arg7[%c1_53, %c0_54, %c0_55] : memref<4x1x32xf32, #tpu.memory_space<vmem>>, vector<1x1x32xf32>
    %95 = vector.shape_cast %94 : vector<1x1x32xf32> to vector<1x32xf32>
    %96 = vector.broadcast %95 : vector<1x32xf32> to vector<16x32xf32>
    %97 = arith.addf %93, %96 : vector<16x32xf32>
    %98 = arith.truncf %97 : vector<16x32xf32> to vector<16x32xbf16>
    %c1_56 = arith.constant 1 : index
    %c0_57 = arith.constant 0 : index
    %c0_58 = arith.constant 0 : index
    %99 = vector.load %arg21[%c1_56, %c0_57, %c0_58] : memref<4x16x32xbf16, #tpu.memory_space<vmem>>, vector<1x16x32xbf16>
    %100 = vector.shape_cast %99 : vector<1x16x32xbf16> to vector<16x32xbf16>
    %101 = vector.shape_cast %98 : vector<16x32xbf16> to vector<1x16x32xbf16>
    tpu.vector_store %arg21[%c1_56, %c0_57, %c0_58], %101 {strides = array<i32>} : memref<4x16x32xbf16, #tpu.memory_space<vmem>>, vector<1x16x32xbf16>,
    %c1_59 = arith.constant 1 : index
    %c0_60 = arith.constant 0 : index
    %c0_61 = arith.constant 0 : index
    %102 = vector.load %arg8[%c1_59, %c0_60, %c0_61] : memref<4x128x32xbf16, #tpu.memory_space<vmem>>, vector<1x128x32xbf16>
    %103 = vector.shape_cast %102 : vector<1x128x32xbf16> to vector<128x32xbf16>
    %cst_62 = arith.constant dense<0.000000e+00> : vector<16x32xf32>
    %104 = tpu.matmul %34, %103, %cst_62 {dimension_numbers = #tpu.dot_dimension_numbers<[1], [0], [0], [1], [0, 0, 1, 1], [], []>} : vector<16x128xbf16>, vector<128x32xbf16>, vector<16x32xf32> -> vector<16x32xf32>
    %c1_63 = arith.constant 1 : index
    %c0_64 = arith.constant 0 : index
    %c0_65 = arith.constant 0 : index
    %105 = vector.load %arg9[%c1_63, %c0_64, %c0_65] : memref<4x1x32xf32, #tpu.memory_space<vmem>>, vector<1x1x32xf32>
    %106 = vector.shape_cast %105 : vector<1x1x32xf32> to vector<1x32xf32>
    %107 = vector.broadcast %106 : vector<1x32xf32> to vector<16x32xf32>
    %108 = arith.addf %104, %107 : vector<16x32xf32>
    %109 = arith.truncf %108 : vector<16x32xf32> to vector<16x32xbf16>
    %c1_66 = arith.constant 1 : index
    %c0_67 = arith.constant 0 : index
    %c0_68 = arith.constant 0 : index
    %110 = vector.load %arg22[%c1_66, %c0_67, %c0_68] : memref<4x16x32xbf16, #tpu.memory_space<vmem>>, vector<1x16x32xbf16>
    %111 = vector.shape_cast %110 : vector<1x16x32xbf16> to vector<16x32xbf16>
    %112 = vector.shape_cast %109 : vector<16x32xbf16> to vector<1x16x32xbf16>
    tpu.vector_store %arg22[%c1_66, %c0_67, %c0_68], %112 {strides = array<i32>} : memref<4x16x32xbf16, #tpu.memory_space<vmem>>, vector<1x16x32xbf16>,
    %c1_69 = arith.constant 1 : index
    %c0_70 = arith.constant 0 : index
    %c0_71 = arith.constant 0 : index
    %113 = vector.load %arg10[%c1_69, %c0_70, %c0_71] : memref<4x128x32xbf16, #tpu.memory_space<vmem>>, vector<1x128x32xbf16>
    %114 = vector.shape_cast %113 : vector<1x128x32xbf16> to vector<128x32xbf16>
    %cst_72 = arith.constant dense<0.000000e+00> : vector<16x32xf32>
    %115 = tpu.matmul %34, %114, %cst_72 {dimension_numbers = #tpu.dot_dimension_numbers<[1], [0], [0], [1], [0, 0, 1, 1], [], []>} : vector<16x128xbf16>, vector<128x32xbf16>, vector<16x32xf32> -> vector<16x32xf32>
    %c1_73 = arith.constant 1 : index
    %c0_74 = arith.constant 0 : index
    %c0_75 = arith.constant 0 : index
    %116 = vector.load %arg11[%c1_73, %c0_74, %c0_75] : memref<4x1x32xf32, #tpu.memory_space<vmem>>, vector<1x1x32xf32>
    %117 = vector.shape_cast %116 : vector<1x1x32xf32> to vector<1x32xf32>
    %118 = vector.broadcast %117 : vector<1x32xf32> to vector<16x32xf32>
    %119 = arith.addf %115, %118 : vector<16x32xf32>
    %120 = arith.truncf %119 : vector<16x32xf32> to vector<16x32xbf16>
    %c1_76 = arith.constant 1 : index
    %c0_77 = arith.constant 0 : index
    %c0_78 = arith.constant 0 : index
    %121 = vector.load %arg23[%c1_76, %c0_77, %c0_78] : memref<4x16x32xbf16, #tpu.memory_space<vmem>>, vector<1x16x32xbf16>
    %122 = vector.shape_cast %121 : vector<1x16x32xbf16> to vector<16x32xbf16>
    %123 = vector.shape_cast %120 : vector<16x32xbf16> to vector<1x16x32xbf16>
    tpu.vector_store %arg23[%c1_76, %c0_77, %c0_78], %123 {strides = array<i32>} : memref<4x16x32xbf16, #tpu.memory_space<vmem>>, vector<1x16x32xbf16>,
    %c2 = arith.constant 2 : index
    %c0_79 = arith.constant 0 : index
    %c0_80 = arith.constant 0 : index
    %124 = vector.load %arg6[%c2, %c0_79, %c0_80] : memref<4x128x32xbf16, #tpu.memory_space<vmem>>, vector<1x128x32xbf16>
    %125 = vector.shape_cast %124 : vector<1x128x32xbf16> to vector<128x32xbf16>
    %cst_81 = arith.constant dense<0.000000e+00> : vector<16x32xf32>
    %126 = tpu.matmul %57, %125, %cst_81 {dimension_numbers = #tpu.dot_dimension_numbers<[1], [0], [0], [1], [0, 0, 1, 1], [], []>} : vector<16x128xbf16>, vector<128x32xbf16>, vector<16x32xf32> -> vector<16x32xf32>
    %c2_82 = arith.constant 2 : index
    %c0_83 = arith.constant 0 : index
    %c0_84 = arith.constant 0 : index
    %127 = vector.load %arg7[%c2_82, %c0_83, %c0_84] : memref<4x1x32xf32, #tpu.memory_space<vmem>>, vector<1x1x32xf32>
    %128 = vector.shape_cast %127 : vector<1x1x32xf32> to vector<1x32xf32>
    %129 = vector.broadcast %128 : vector<1x32xf32> to vector<16x32xf32>
    %130 = arith.addf %126, %129 : vector<16x32xf32>
    %131 = arith.truncf %130 : vector<16x32xf32> to vector<16x32xbf16>
    %c2_85 = arith.constant 2 : index
    %c0_86 = arith.constant 0 : index
    %c0_87 = arith.constant 0 : index
    %132 = vector.load %arg21[%c2_85, %c0_86, %c0_87] : memref<4x16x32xbf16, #tpu.memory_space<vmem>>, vector<1x16x32xbf16>
    %133 = vector.shape_cast %132 : vector<1x16x32xbf16> to vector<16x32xbf16>
    %134 = vector.shape_cast %131 : vector<16x32xbf16> to vector<1x16x32xbf16>
    tpu.vector_store %arg21[%c2_85, %c0_86, %c0_87], %134 {strides = array<i32>} : memref<4x16x32xbf16, #tpu.memory_space<vmem>>, vector<1x16x32xbf16>,
    %c2_88 = arith.constant 2 : index
    %c0_89 = arith.constant 0 : index
    %c0_90 = arith.constant 0 : index
    %135 = vector.load %arg8[%c2_88, %c0_89, %c0_90] : memref<4x128x32xbf16, #tpu.memory_space<vmem>>, vector<1x128x32xbf16>
    %136 = vector.shape_cast %135 : vector<1x128x32xbf16> to vector<128x32xbf16>
    %cst_91 = arith.constant dense<0.000000e+00> : vector<16x32xf32>
    %137 = tpu.matmul %34, %136, %cst_91 {dimension_numbers = #tpu.dot_dimension_numbers<[1], [0], [0], [1], [0, 0, 1, 1], [], []>} : vector<16x128xbf16>, vector<128x32xbf16>, vector<16x32xf32> -> vector<16x32xf32>
    %c2_92 = arith.constant 2 : index
    %c0_93 = arith.constant 0 : index
    %c0_94 = arith.constant 0 : index
    %138 = vector.load %arg9[%c2_92, %c0_93, %c0_94] : memref<4x1x32xf32, #tpu.memory_space<vmem>>, vector<1x1x32xf32>
    %139 = vector.shape_cast %138 : vector<1x1x32xf32> to vector<1x32xf32>
    %140 = vector.broadcast %139 : vector<1x32xf32> to vector<16x32xf32>
    %141 = arith.addf %137, %140 : vector<16x32xf32>
    %142 = arith.truncf %141 : vector<16x32xf32> to vector<16x32xbf16>
    %c2_95 = arith.constant 2 : index
    %c0_96 = arith.constant 0 : index
    %c0_97 = arith.constant 0 : index
    %143 = vector.load %arg22[%c2_95, %c0_96, %c0_97] : memref<4x16x32xbf16, #tpu.memory_space<vmem>>, vector<1x16x32xbf16>
    %144 = vector.shape_cast %143 : vector<1x16x32xbf16> to vector<16x32xbf16>
    %145 = vector.shape_cast %142 : vector<16x32xbf16> to vector<1x16x32xbf16>
    tpu.vector_store %arg22[%c2_95, %c0_96, %c0_97], %145 {strides = array<i32>} : memref<4x16x32xbf16, #tpu.memory_space<vmem>>, vector<1x16x32xbf16>,
    %c2_98 = arith.constant 2 : index
    %c0_99 = arith.constant 0 : index
    %c0_100 = arith.constant 0 : index
    %146 = vector.load %arg10[%c2_98, %c0_99, %c0_100] : memref<4x128x32xbf16, #tpu.memory_space<vmem>>, vector<1x128x32xbf16>
    %147 = vector.shape_cast %146 : vector<1x128x32xbf16> to vector<128x32xbf16>
    %cst_101 = arith.constant dense<0.000000e+00> : vector<16x32xf32>
    %148 = tpu.matmul %34, %147, %cst_101 {dimension_numbers = #tpu.dot_dimension_numbers<[1], [0], [0], [1], [0, 0, 1, 1], [], []>} : vector<16x128xbf16>, vector<128x32xbf16>, vector<16x32xf32> -> vector<16x32xf32>
    %c2_102 = arith.constant 2 : index
    %c0_103 = arith.constant 0 : index
    %c0_104 = arith.constant 0 : index
    %149 = vector.load %arg11[%c2_102, %c0_103, %c0_104] : memref<4x1x32xf32, #tpu.memory_space<vmem>>, vector<1x1x32xf32>
    %150 = vector.shape_cast %149 : vector<1x1x32xf32> to vector<1x32xf32>
    %151 = vector.broadcast %150 : vector<1x32xf32> to vector<16x32xf32>
    %152 = arith.addf %148, %151 : vector<16x32xf32>
    %153 = arith.truncf %152 : vector<16x32xf32> to vector<16x32xbf16>
    %c2_105 = arith.constant 2 : index
    %c0_106 = arith.constant 0 : index
    %c0_107 = arith.constant 0 : index
    %154 = vector.load %arg23[%c2_105, %c0_106, %c0_107] : memref<4x16x32xbf16, #tpu.memory_space<vmem>>, vector<1x16x32xbf16>
    %155 = vector.shape_cast %154 : vector<1x16x32xbf16> to vector<16x32xbf16>
    %156 = vector.shape_cast %153 : vector<16x32xbf16> to vector<1x16x32xbf16>
    tpu.vector_store %arg23[%c2_105, %c0_106, %c0_107], %156 {strides = array<i32>} : memref<4x16x32xbf16, #tpu.memory_space<vmem>>, vector<1x16x32xbf16>,
    %c3 = arith.constant 3 : index
    %c0_108 = arith.constant 0 : index
    %c0_109 = arith.constant 0 : index
    %157 = vector.load %arg6[%c3, %c0_108, %c0_109] : memref<4x128x32xbf16, #tpu.memory_space<vmem>>, vector<1x128x32xbf16>
    %158 = vector.shape_cast %157 : vector<1x128x32xbf16> to vector<128x32xbf16>
    %cst_110 = arith.constant dense<0.000000e+00> : vector<16x32xf32>
    %159 = tpu.matmul %57, %158, %cst_110 {dimension_numbers = #tpu.dot_dimension_numbers<[1], [0], [0], [1], [0, 0, 1, 1], [], []>} : vector<16x128xbf16>, vector<128x32xbf16>, vector<16x32xf32> -> vector<16x32xf32>
    %c3_111 = arith.constant 3 : index
    %c0_112 = arith.constant 0 : index
    %c0_113 = arith.constant 0 : index
    %160 = vector.load %arg7[%c3_111, %c0_112, %c0_113] : memref<4x1x32xf32, #tpu.memory_space<vmem>>, vector<1x1x32xf32>
    %161 = vector.shape_cast %160 : vector<1x1x32xf32> to vector<1x32xf32>
    %162 = vector.broadcast %161 : vector<1x32xf32> to vector<16x32xf32>
    %163 = arith.addf %159, %162 : vector<16x32xf32>
    %164 = arith.truncf %163 : vector<16x32xf32> to vector<16x32xbf16>
    %c3_114 = arith.constant 3 : index
    %c0_115 = arith.constant 0 : index
    %c0_116 = arith.constant 0 : index
    %165 = vector.load %arg21[%c3_114, %c0_115, %c0_116] : memref<4x16x32xbf16, #tpu.memory_space<vmem>>, vector<1x16x32xbf16>
    %166 = vector.shape_cast %165 : vector<1x16x32xbf16> to vector<16x32xbf16>
    %167 = vector.shape_cast %164 : vector<16x32xbf16> to vector<1x16x32xbf16>
    tpu.vector_store %arg21[%c3_114, %c0_115, %c0_116], %167 {strides = array<i32>} : memref<4x16x32xbf16, #tpu.memory_space<vmem>>, vector<1x16x32xbf16>,
    %c3_117 = arith.constant 3 : index
    %c0_118 = arith.constant 0 : index
    %c0_119 = arith.constant 0 : index
    %168 = vector.load %arg8[%c3_117, %c0_118, %c0_119] : memref<4x128x32xbf16, #tpu.memory_space<vmem>>, vector<1x128x32xbf16>
    %169 = vector.shape_cast %168 : vector<1x128x32xbf16> to vector<128x32xbf16>
    %cst_120 = arith.constant dense<0.000000e+00> : vector<16x32xf32>
    %170 = tpu.matmul %34, %169, %cst_120 {dimension_numbers = #tpu.dot_dimension_numbers<[1], [0], [0], [1], [0, 0, 1, 1], [], []>} : vector<16x128xbf16>, vector<128x32xbf16>, vector<16x32xf32> -> vector<16x32xf32>
    %c3_121 = arith.constant 3 : index
    %c0_122 = arith.constant 0 : index
    %c0_123 = arith.constant 0 : index
    %171 = vector.load %arg9[%c3_121, %c0_122, %c0_123] : memref<4x1x32xf32, #tpu.memory_space<vmem>>, vector<1x1x32xf32>
    %172 = vector.shape_cast %171 : vector<1x1x32xf32> to vector<1x32xf32>
    %173 = vector.broadcast %172 : vector<1x32xf32> to vector<16x32xf32>
    %174 = arith.addf %170, %173 : vector<16x32xf32>
    %175 = arith.truncf %174 : vector<16x32xf32> to vector<16x32xbf16>
    %c3_124 = arith.constant 3 : index
    %c0_125 = arith.constant 0 : index
    %c0_126 = arith.constant 0 : index
    %176 = vector.load %arg22[%c3_124, %c0_125, %c0_126] : memref<4x16x32xbf16, #tpu.memory_space<vmem>>, vector<1x16x32xbf16>
    %177 = vector.shape_cast %176 : vector<1x16x32xbf16> to vector<16x32xbf16>
    %178 = vector.shape_cast %175 : vector<16x32xbf16> to vector<1x16x32xbf16>
    tpu.vector_store %arg22[%c3_124, %c0_125, %c0_126], %178 {strides = array<i32>} : memref<4x16x32xbf16, #tpu.memory_space<vmem>>, vector<1x16x32xbf16>,
    %c3_127 = arith.constant 3 : index
    %c0_128 = arith.constant 0 : index
    %c0_129 = arith.constant 0 : index
    %179 = vector.load %arg10[%c3_127, %c0_128, %c0_129] : memref<4x128x32xbf16, #tpu.memory_space<vmem>>, vector<1x128x32xbf16>
    %180 = vector.shape_cast %179 : vector<1x128x32xbf16> to vector<128x32xbf16>
    %cst_130 = arith.constant dense<0.000000e+00> : vector<16x32xf32>
    %181 = tpu.matmul %34, %180, %cst_130 {dimension_numbers = #tpu.dot_dimension_numbers<[1], [0], [0], [1], [0, 0, 1, 1], [], []>} : vector<16x128xbf16>, vector<128x32xbf16>, vector<16x32xf32> -> vector<16x32xf32>
    %c3_131 = arith.constant 3 : index
    %c0_132 = arith.constant 0 : index
    %c0_133 = arith.constant 0 : index
    %182 = vector.load %arg11[%c3_131, %c0_132, %c0_133] : memref<4x1x32xf32, #tpu.memory_space<vmem>>, vector<1x1x32xf32>
    %183 = vector.shape_cast %182 : vector<1x1x32xf32> to vector<1x32xf32>
    %184 = vector.broadcast %183 : vector<1x32xf32> to vector<16x32xf32>
    %185 = arith.addf %181, %184 : vector<16x32xf32>
    %186 = arith.truncf %185 : vector<16x32xf32> to vector<16x32xbf16>
    %c3_134 = arith.constant 3 : index
    %c0_135 = arith.constant 0 : index
    %c0_136 = arith.constant 0 : index
    %187 = vector.load %arg23[%c3_134, %c0_135, %c0_136] : memref<4x16x32xbf16, #tpu.memory_space<vmem>>, vector<1x16x32xbf16>
    %188 = vector.shape_cast %187 : vector<1x16x32xbf16> to vector<16x32xbf16>
    %189 = vector.shape_cast %186 : vector<16x32xbf16> to vector<1x16x32xbf16>
    tpu.vector_store %arg23[%c3_134, %c0_135, %c0_136], %189 {strides = array<i32>} : memref<4x16x32xbf16, #tpu.memory_space<vmem>>, vector<1x16x32xbf16>,
    %c0_137 = arith.constant 0 : index
    %c0_138 = arith.constant 0 : index
    %c0_139 = arith.constant 0 : index
    %190 = vector.load %arg21[%c0_137, %c0_138, %c0_139] : memref<4x16x32xbf16, #tpu.memory_space<vmem>>, vector<4x16x32xbf16>
    %c0_140 = arith.constant 0 : index
    %c0_141 = arith.constant 0 : index
    %c0_142 = arith.constant 0 : index
    %191 = vector.load %arg22[%c0_140, %c0_141, %c0_142] : memref<4x16x32xbf16, #tpu.memory_space<vmem>>, vector<4x16x32xbf16>
    "tpu.trace_start"() <{level = 10 : i32, message = "hqd,hkd->hqk"}> : () -> ()
    %cst_143 = arith.constant dense<0.000000e+00> : vector<4x16x16xf32>
    %192 = tpu.matmul %190, %191, %cst_143 {dimension_numbers = #tpu.dot_dimension_numbers<[2], [2], [1], [1], [0, 0, 0, 1, 1, 1], [0], [0]>} : vector<4x16x32xbf16>, vector<4x16x32xbf16>, vector<4x16x16xf32> -> vector<4x16x16xf32>
    %cst_144 = arith.constant -3.40282347E+38 : f32
    "tpu.trace_stop"() : () -> ()
    %193 = vector.shape_cast %9 : vector<1x1x16xi1> to vector<1x1x16xi1>
    %194 = vector.broadcast %193 : vector<1x1x16xi1> to vector<4x16x16xi1>
    %195 = vector.broadcast %cst_144 : f32 to vector<4x16x16xf32>
    %196 = arith.select %194, %195, %192 : vector<4x16x16xi1>, vector<4x16x16xf32>
    %cst_145 = arith.constant dense<0xFF800000> : vector<4x16xf32>
    %197 = vector.multi_reduction <maximumf>, %196, %cst_145 [2] : vector<4x16x16xf32> to vector<4x16xf32>
    %198 = vector.shape_cast %197 : vector<4x16xf32> to vector<4x16x1xf32>
    %199 = vector.broadcast %198 : vector<4x16x1xf32> to vector<4x16x16xf32>
    %200 = arith.subf %196, %199 : vector<4x16x16xf32>
    %201 = math.exp %200 : vector<4x16x16xf32>
    %cst_146 = arith.constant dense<0.000000e+00> : vector<4x16xf32>
    %202 = vector.multi_reduction <add>, %201, %cst_146 [2] : vector<4x16x16xf32> to vector<4x16xf32>
    %203 = vector.shape_cast %202 : vector<4x16xf32> to vector<4x16x1xf32>
    %204 = tpu.reciprocal %203 {approx = true} : vector<4x16x1xf32> -> vector<4x16x1xf32>
    %205 = vector.broadcast %204 : vector<4x16x1xf32> to vector<4x16x16xf32>
    %206 = arith.mulf %201, %205 : vector<4x16x16xf32>
    %cst_147 = arith.constant 0.000000e+00 : f32
    %207 = vector.shape_cast %9 : vector<1x1x16xi1> to vector<1x1x16xi1>
    %208 = vector.broadcast %207 : vector<1x1x16xi1> to vector<4x16x16xi1>
    %209 = vector.broadcast %cst_147 : f32 to vector<4x16x16xf32>
    %210 = arith.select %208, %209, %206 : vector<4x16x16xi1>, vector<4x16x16xf32>
    %211 = arith.truncf %210 : vector<4x16x16xf32> to vector<4x16x16xbf16>
    %c0_148 = arith.constant 0 : index
    %c0_149 = arith.constant 0 : index
    %c0_150 = arith.constant 0 : index
    %212 = vector.load %arg23[%c0_148, %c0_149, %c0_150] : memref<4x16x32xbf16, #tpu.memory_space<vmem>>, vector<4x16x32xbf16>
    "tpu.trace_start"() <{level = 10 : i32, message = "hqk,hkd->hqd"}> : () -> ()
    %cst_151 = arith.constant dense<0.000000e+00> : vector<4x16x32xf32>
    %213 = tpu.matmul %211, %212, %cst_151 {dimension_numbers = #tpu.dot_dimension_numbers<[2], [1], [1], [2], [0, 0, 0, 1, 1, 2], [0], [0]>} : vector<4x16x16xbf16>, vector<4x16x32xbf16>, vector<4x16x32xf32> -> vector<4x16x32xf32>
    %cst_152 = arith.constant 0.000000e+00 : f32
    "tpu.trace_stop"() : () -> ()
    %214 = vector.broadcast %cst_152 : f32 to vector<16x128xf32>
    %215 = vector.extract_strided_slice %213 {offsets = [0, 0, 0], sizes = [1, 16, 32], strides = [1, 1, 1]} : vector<4x16x32xf32> to vector<1x16x32xf32>
    %216 = vector.shape_cast %215 : vector<1x16x32xf32> to vector<16x32xf32>
    %217 = arith.truncf %216 : vector<16x32xf32> to vector<16x32xbf16>
    %c0_153 = arith.constant 0 : index
    %c0_154 = arith.constant 0 : index
    %c0_155 = arith.constant 0 : index
    %218 = vector.load %arg12[%c0_153, %c0_154, %c0_155] : memref<4x32x128xbf16, #tpu.memory_space<vmem>>, vector<1x32x128xbf16>
    %219 = vector.shape_cast %218 : vector<1x32x128xbf16> to vector<32x128xbf16>
    %cst_156 = arith.constant dense<0.000000e+00> : vector<16x128xf32>
    %220 = tpu.matmul %217, %219, %cst_156 {dimension_numbers = #tpu.dot_dimension_numbers<[1], [0], [0], [1], [0, 0, 1, 1], [], []>} : vector<16x32xbf16>, vector<32x128xbf16>, vector<16x128xf32> -> vector<16x128xf32>
    %221 = arith.addf %214, %220 : vector<16x128xf32>
    %222 = vector.extract_strided_slice %213 {offsets = [1, 0, 0], sizes = [1, 16, 32], strides = [1, 1, 1]} : vector<4x16x32xf32> to vector<1x16x32xf32>
    %223 = vector.shape_cast %222 : vector<1x16x32xf32> to vector<16x32xf32>
    %224 = arith.truncf %223 : vector<16x32xf32> to vector<16x32xbf16>
    %c1_157 = arith.constant 1 : index
    %c0_158 = arith.constant 0 : index
    %c0_159 = arith.constant 0 : index
    %225 = vector.load %arg12[%c1_157, %c0_158, %c0_159] : memref<4x32x128xbf16, #tpu.memory_space<vmem>>, vector<1x32x128xbf16>
    %226 = vector.shape_cast %225 : vector<1x32x128xbf16> to vector<32x128xbf16>
    %cst_160 = arith.constant dense<0.000000e+00> : vector<16x128xf32>
    %227 = tpu.matmul %224, %226, %cst_160 {dimension_numbers = #tpu.dot_dimension_numbers<[1], [0], [0], [1], [0, 0, 1, 1], [], []>} : vector<16x32xbf16>, vector<32x128xbf16>, vector<16x128xf32> -> vector<16x128xf32>
    %228 = arith.addf %221, %227 : vector<16x128xf32>
    %229 = vector.extract_strided_slice %213 {offsets = [2, 0, 0], sizes = [1, 16, 32], strides = [1, 1, 1]} : vector<4x16x32xf32> to vector<1x16x32xf32>
    %230 = vector.shape_cast %229 : vector<1x16x32xf32> to vector<16x32xf32>
    %231 = arith.truncf %230 : vector<16x32xf32> to vector<16x32xbf16>
    %c2_161 = arith.constant 2 : index
    %c0_162 = arith.constant 0 : index
    %c0_163 = arith.constant 0 : index
    %232 = vector.load %arg12[%c2_161, %c0_162, %c0_163] : memref<4x32x128xbf16, #tpu.memory_space<vmem>>, vector<1x32x128xbf16>
    %233 = vector.shape_cast %232 : vector<1x32x128xbf16> to vector<32x128xbf16>
    %cst_164 = arith.constant dense<0.000000e+00> : vector<16x128xf32>
    %234 = tpu.matmul %231, %233, %cst_164 {dimension_numbers = #tpu.dot_dimension_numbers<[1], [0], [0], [1], [0, 0, 1, 1], [], []>} : vector<16x32xbf16>, vector<32x128xbf16>, vector<16x128xf32> -> vector<16x128xf32>
    %235 = arith.addf %228, %234 : vector<16x128xf32>
    %236 = vector.extract_strided_slice %213 {offsets = [3, 0, 0], sizes = [1, 16, 32], strides = [1, 1, 1]} : vector<4x16x32xf32> to vector<1x16x32xf32>
    %237 = vector.shape_cast %236 : vector<1x16x32xf32> to vector<16x32xf32>
    %238 = arith.truncf %237 : vector<16x32xf32> to vector<16x32xbf16>
    %c3_165 = arith.constant 3 : index
    %c0_166 = arith.constant 0 : index
    %c0_167 = arith.constant 0 : index
    %239 = vector.load %arg12[%c3_165, %c0_166, %c0_167] : memref<4x32x128xbf16, #tpu.memory_space<vmem>>, vector<1x32x128xbf16>
    %240 = vector.shape_cast %239 : vector<1x32x128xbf16> to vector<32x128xbf16>
    %cst_168 = arith.constant dense<0.000000e+00> : vector<16x128xf32>
    %241 = tpu.matmul %238, %240, %cst_168 {dimension_numbers = #tpu.dot_dimension_numbers<[1], [0], [0], [1], [0, 0, 1, 1], [], []>} : vector<16x32xbf16>, vector<32x128xbf16>, vector<16x128xf32> -> vector<16x128xf32>
    %242 = arith.addf %235, %241 : vector<16x128xf32>
    %243 = arith.addf %6, %242 : vector<16x128xf32>
    %c0_169 = arith.constant 0 : index
    %c0_170 = arith.constant 0 : index
    %244 = vector.load %arg13[%c0_169, %c0_170] : memref<1x128xf32, #tpu.memory_space<vmem>>, vector<1x128xf32>
    %245 = vector.broadcast %244 : vector<1x128xf32> to vector<16x128xf32>
    %246 = arith.addf %243, %245 : vector<16x128xf32>
    %c0_171 = arith.constant 0 : index
    %c0_172 = arith.constant 0 : index
    %247 = vector.load %arg14[%c0_171, %c0_172] : memref<1x128xf32, #tpu.memory_space<vmem>>, vector<1x128xf32>
    %c0_173 = arith.constant 0 : index
    %c0_174 = arith.constant 0 : index
    %248 = vector.load %arg15[%c0_173, %c0_174] : memref<1x128xf32, #tpu.memory_space<vmem>>, vector<1x128xf32>
    %cst_175 = arith.constant dense<0.000000e+00> : vector<16xf32>
    %249 = vector.multi_reduction <add>, %246, %cst_175 [1] : vector<16x128xf32> to vector<16xf32>
    %250 = vector.shape_cast %249 : vector<16xf32> to vector<16x1xf32>
    %cst_176 = arith.constant 1.280000e+02 : f32
    %251 = vector.broadcast %cst_176 : f32 to vector<16x1xf32>
    %252 = arith.divf %250, %251 : vector<16x1xf32>
    %253 = vector.broadcast %252 : vector<16x1xf32> to vector<16x128xf32>
    %254 = arith.subf %246, %253 : vector<16x128xf32>
    %255 = arith.mulf %254, %254 : vector<16x128xf32>
    %cst_177 = arith.constant dense<0.000000e+00> : vector<16xf32>
    %256 = vector.multi_reduction <add>, %255, %cst_177 [1] : vector<16x128xf32> to vector<16xf32>
    %257 = vector.shape_cast %256 : vector<16xf32> to vector<16x1xf32>
    %cst_178 = arith.constant 1.280000e+02 : f32
    %258 = vector.broadcast %cst_178 : f32 to vector<16x1xf32>
    %259 = arith.divf %257, %258 : vector<16x1xf32>
    %260 = vector.broadcast %252 : vector<16x1xf32> to vector<16x128xf32>
    %261 = arith.subf %246, %260 : vector<16x128xf32>
    %cst_179 = arith.constant 9.99999996E-13 : f32
    %262 = vector.broadcast %cst_179 : f32 to vector<16x1xf32>
    %263 = arith.addf %259, %262 : vector<16x1xf32>
    %264 = math.rsqrt %263 : vector<16x1xf32>
    %265 = vector.broadcast %264 : vector<16x1xf32> to vector<16x128xf32>
    %266 = arith.mulf %261, %265 : vector<16x128xf32>
    %267 = vector.broadcast %247 : vector<1x128xf32> to vector<16x128xf32>
    %268 = arith.mulf %266, %267 : vector<16x128xf32>
    %269 = vector.broadcast %248 : vector<1x128xf32> to vector<16x128xf32>
    %270 = arith.addf %268, %269 : vector<16x128xf32>
    %271 = arith.truncf %270 : vector<16x128xf32> to vector<16x128xbf16>
    %c0_180 = arith.constant 0 : index
    %c0_181 = arith.constant 0 : index
    %272 = vector.load %arg16[%c0_180, %c0_181] : memref<128x256xbf16, #tpu.memory_space<vmem>>, vector<128x256xbf16>
    %cst_182 = arith.constant dense<0.000000e+00> : vector<16x256xf32>
    %273 = tpu.matmul %271, %272, %cst_182 {dimension_numbers = #tpu.dot_dimension_numbers<[1], [0], [0], [1], [0, 0, 1, 1], [], []>} : vector<16x128xbf16>, vector<128x256xbf16>, vector<16x256xf32> -> vector<16x256xf32>
    %c0_183 = arith.constant 0 : index
    %c0_184 = arith.constant 0 : index
    %274 = vector.load %arg17[%c0_183, %c0_184] : memref<1x256xf32, #tpu.memory_space<vmem>>, vector<1x256xf32>
    %275 = vector.broadcast %274 : vector<1x256xf32> to vector<16x256xf32>
    %276 = arith.addf %273, %275 : vector<16x256xf32>
    %cst_185 = arith.constant 0.000000e+00 : f32
    %277 = vector.broadcast %cst_185 : f32 to vector<16x256xf32>
    %278 = arith.maximumf %276, %277 : vector<16x256xf32>
    %279 = arith.truncf %278 : vector<16x256xf32> to vector<16x256xbf16>
    %c0_186 = arith.constant 0 : index
    %c0_187 = arith.constant 0 : index
    %280 = vector.load %arg18[%c0_186, %c0_187] : memref<256x128xbf16, #tpu.memory_space<vmem>>, vector<256x128xbf16>
    %cst_188 = arith.constant dense<0.000000e+00> : vector<16x128xf32>
    %281 = tpu.matmul %279, %280, %cst_188 {dimension_numbers = #tpu.dot_dimension_numbers<[1], [0], [0], [1], [0, 0, 1, 1], [], []>} : vector<16x256xbf16>, vector<256x128xbf16>, vector<16x128xf32> -> vector<16x128xf32>
    %c0_189 = arith.constant 0 : index
    %c0_190 = arith.constant 0 : index
    %282 = vector.load %arg19[%c0_189, %c0_190] : memref<1x128xf32, #tpu.memory_space<vmem>>, vector<1x128xf32>
    %283 = vector.broadcast %282 : vector<1x128xf32> to vector<16x128xf32>
    %284 = arith.addf %281, %283 : vector<16x128xf32>
    %285 = arith.addf %246, %284 : vector<16x128xf32>
    %c0_191 = arith.constant 0 : index
    %c0_192 = arith.constant 0 : index
    %c0_193 = arith.constant 0 : index
    %286 = vector.load %arg20[%c0_191, %c0_192, %c0_193] : memref<1x16x128xf32, #tpu.memory_space<vmem>>, vector<1x16x128xf32>
    %287 = vector.shape_cast %286 : vector<1x16x128xf32> to vector<16x128xf32>
    %288 = vector.shape_cast %285 : vector<16x128xf32> to vector<1x16x128xf32>
    tpu.vector_store %arg20[%c0_191, %c0_192, %c0_193], %288 {strides = array<i32>} : memref<1x16x128xf32, #tpu.memory_space<vmem>>, vector<1x16x128xf32>,
    return
  }
  func.func @transform_0(%arg0: i32, %arg1: i32) -> (i32, i32, i32) {
    %c0_i32 = arith.constant 0 : i32
    %c0_i32_0 = arith.constant 0 : i32
    %c0_i32_1 = arith.constant 0 : i32
    return %arg0, %c0_i32, %c0_i32_0 : i32, i32, i32
  }
  func.func @transform_1(%arg0: i32, %arg1: i32) -> (i32, i32, i32) {
    %c0_i32 = arith.constant 0 : i32
    %c0_i32_0 = arith.constant 0 : i32
    %c0_i32_1 = arith.constant 0 : i32
    return %arg0, %c0_i32, %c0_i32_0 : i32, i32, i32
  }
  func.func @transform_2(%arg0: i32, %arg1: i32) -> (i32, i32) {
    %c0_i32 = arith.constant 0 : i32
    %c0_i32_0 = arith.constant 0 : i32
    %c0_i32_1 = arith.constant 0 : i32
    return %c0_i32, %c0_i32_0 : i32, i32
  }
  func.func @transform_3(%arg0: i32, %arg1: i32) -> (i32, i32) {
    %c0_i32 = arith.constant 0 : i32
    %c0_i32_0 = arith.constant 0 : i32
    %c0_i32_1 = arith.constant 0 : i32
    return %c0_i32, %c0_i32_0 : i32, i32
  }
  func.func @transform_4(%arg0: i32, %arg1: i32) -> (i32, i32, i32) {
    %c0_i32 = arith.constant 0 : i32
    %c0_i32_0 = arith.constant 0 : i32
    %c0_i32_1 = arith.constant 0 : i32
    %c0_i32_2 = arith.constant 0 : i32
    return %c0_i32, %c0_i32_0, %c0_i32_1 : i32, i32, i32
  }
  func.func @transform_5(%arg0: i32, %arg1: i32) -> (i32, i32, i32) {
    %c0_i32 = arith.constant 0 : i32
    %c0_i32_0 = arith.constant 0 : i32
    %c0_i32_1 = arith.constant 0 : i32
    %c0_i32_2 = arith.constant 0 : i32
    return %c0_i32, %c0_i32_0, %c0_i32_1 : i32, i32, i32
  }
  func.func @transform_6(%arg0: i32, %arg1: i32) -> (i32, i32, i32) {
    %c0_i32 = arith.constant 0 : i32
    %c0_i32_0 = arith.constant 0 : i32
    %c0_i32_1 = arith.constant 0 : i32
    %c0_i32_2 = arith.constant 0 : i32
    return %c0_i32, %c0_i32_0, %c0_i32_1 : i32, i32, i32
  }
  func.func @transform_7(%arg0: i32, %arg1: i32) -> (i32, i32, i32) {
    %c0_i32 = arith.constant 0 : i32
    %c0_i32_0 = arith.constant 0 : i32
    %c0_i32_1 = arith.constant 0 : i32
    %c0_i32_2 = arith.constant 0 : i32
    return %c0_i32, %c0_i32_0, %c0_i32_1 : i32, i32, i32
  }
  func.func @transform_8(%arg0: i32, %arg1: i32) -> (i32, i32, i32) {
    %c0_i32 = arith.constant 0 : i32
    %c0_i32_0 = arith.constant 0 : i32
    %c0_i32_1 = arith.constant 0 : i32
    %c0_i32_2 = arith.constant 0 : i32
    return %c0_i32, %c0_i32_0, %c0_i32_1 : i32, i32, i32
  }
  func.func @transform_9(%arg0: i32, %arg1: i32) -> (i32, i32, i32) {
    %c0_i32 = arith.constant 0 : i32
    %c0_i32_0 = arith.constant 0 : i32
    %c0_i32_1 = arith.constant 0 : i32
    %c0_i32_2 = arith.constant 0 : i32
    return %c0_i32, %c0_i32_0, %c0_i32_1 : i32, i32, i32
  }
  func.func @transform_10(%arg0: i32, %arg1: i32) -> (i32, i32, i32) {
    %c0_i32 = arith.constant 0 : i32
    %c0_i32_0 = arith.constant 0 : i32
    %c0_i32_1 = arith.constant 0 : i32
    %c0_i32_2 = arith.constant 0 : i32
    return %c0_i32, %c0_i32_0, %c0_i32_1 : i32, i32, i32
  }
  func.func @transform_11(%arg0: i32, %arg1: i32) -> (i32, i32) {
    %c0_i32 = arith.constant 0 : i32
    %c0_i32_0 = arith.constant 0 : i32
    %c0_i32_1 = arith.constant 0 : i32
    return %c0_i32, %c0_i32_0 : i32, i32
  }
  func.func @transform_12(%arg0: i32, %arg1: i32) -> (i32, i32) {
    %c0_i32 = arith.constant 0 : i32
    %c0_i32_0 = arith.constant 0 : i32
    %c0_i32_1 = arith.constant 0 : i32
    return %c0_i32, %c0_i32_0 : i32, i32
  }
  func.func @transform_13(%arg0: i32, %arg1: i32) -> (i32, i32) {
    %c0_i32 = arith.constant 0 : i32
    %c0_i32_0 = arith.constant 0 : i32
    %c0_i32_1 = arith.constant 0 : i32
    return %c0_i32, %c0_i32_0 : i32, i32
  }
  func.func @transform_14(%arg0: i32, %arg1: i32) -> (i32, i32) {
    %c0_i32 = arith.constant 0 : i32
    %c0_i32_0 = arith.constant 0 : i32
    %c0_i32_1 = arith.constant 0 : i32
    return %c0_i32, %c0_i32_0 : i32, i32
  }
  func.func @transform_15(%arg0: i32, %arg1: i32) -> (i32, i32) {
    %c0_i32 = arith.constant 0 : i32
    %c0_i32_0 = arith.constant 0 : i32
    %c0_i32_1 = arith.constant 0 : i32
    return %c0_i32, %c0_i32_0 : i32, i32
  }
  func.func @transform_16(%arg0: i32, %arg1: i32) -> (i32, i32) {
    %c0_i32 = arith.constant 0 : i32
    %c0_i32_0 = arith.constant 0 : i32
    %c0_i32_1 = arith.constant 0 : i32
    return %c0_i32, %c0_i32_0 : i32, i32
  }
  func.func @transform_17(%arg0: i32, %arg1: i32) -> (i32, i32) {
    %c0_i32 = arith.constant 0 : i32
    %c0_i32_0 = arith.constant 0 : i32
    %c0_i32_1 = arith.constant 0 : i32
    return %c0_i32, %c0_i32_0 : i32, i32
  }
  func.func @transform_18(%arg0: i32, %arg1: i32) -> (i32, i32, i32) {
    %c0_i32 = arith.constant 0 : i32
    %c0_i32_0 = arith.constant 0 : i32
    return %arg0, %arg1, %c0_i32 : i32, i32, i32
  }
}

module attributes {stable_mosaic.version = 11 : i64} {
  func.func @encoder_layer_kernel(%arg0: i32, %arg1: i32, %arg2: memref<1x1x16xi32, #tpu.memory_space<vmem>>, %arg3: memref<1x16x128xf32, #tpu.memory_space<vmem>>, %arg4: memref<1x128xf32, #tpu.memory_space<vmem>>, %arg5: memref<1x128xf32, #tpu.memory_space<vmem>>, %arg6: memref<4x128x32xbf16, #tpu.memory_space<vmem>>, %arg7: memref<4x1x32xf32, #tpu.memory_space<vmem>>, %arg8: memref<4x128x32xbf16, #tpu.memory_space<vmem>>, %arg9: memref<4x1x32xf32, #tpu.memory_space<vmem>>, %arg10: memref<4x128x32xbf16, #tpu.memory_space<vmem>>, %arg11: memref<4x1x32xf32, #tpu.memory_space<vmem>>, %arg12: memref<4x32x128xbf16, #tpu.memory_space<vmem>>, %arg13: memref<1x128xf32, #tpu.memory_space<vmem>>, %arg14: memref<1x128xf32, #tpu.memory_space<vmem>>, %arg15: memref<1x128xf32, #tpu.memory_space<vmem>>, %arg16: memref<128x256xbf16, #tpu.memory_space<vmem>>, %arg17: memref<1x256xf32, #tpu.memory_space<vmem>>, %arg18: memref<256x128xbf16, #tpu.memory_space<vmem>>, %arg19: memref<1x128xf32, #tpu.memory_space<vmem>>, %arg20: memref<1x16x128xf32, #tpu.memory_space<vmem>>, %arg21: memref<4x16x32xbf16, #tpu.memory_space<vmem>>, %arg22: memref<4x16x32xbf16, #tpu.memory_space<vmem>>, %arg23: memref<4x16x32xbf16, #tpu.memory_space<vmem>>) attributes {dimension_semantics = [#tpu.dimension_semantics<parallel>, #tpu.dimension_semantics<parallel>], iteration_bounds = array<i64: 2, 1>, scalar_prefetch = 0 : i64, scratch_operands = 3 : i64, tpu.core_type = #tpu.core_type<tc>, window_params = [{transform_indices = @transform_0, window_bounds = array<i64: 1, 1, 16>}, {transform_indices = @transform_1, window_bounds = array<i64: 1, 16, 128>}, {pipeline_mode = #tpu.pipeline_mode<synchronous>, transform_indices = @transform_2, window_bounds = array<i64: 1, 128>}, {pipeline_mode = #tpu.pipeline_mode<synchronous>, transform_indices = @transform_3, window_bounds = array<i64: 1, 128>}, {pipeline_mode = #tpu.pipeline_mode<synchronous>, transform_indices = @transform_4, window_bounds = array<i64: 4, 128, 32>}, {pipeline_mode = #tpu.pipeline_mode<synchronous>, transform_indices = @transform_5, window_bounds = array<i64: 4, 1, 32>}, {pipeline_mode = #tpu.pipeline_mode<synchronous>, transform_indices = @transform_6, window_bounds = array<i64: 4, 128, 32>}, {pipeline_mode = #tpu.pipeline_mode<synchronous>, transform_indices = @transform_7, window_bounds = array<i64: 4, 1, 32>}, {pipeline_mode = #tpu.pipeline_mode<synchronous>, transform_indices = @transform_8, window_bounds = array<i64: 4, 128, 32>}, {pipeline_mode = #tpu.pipeline_mode<synchronous>, transform_indices = @transform_9, window_bounds = array<i64: 4, 1, 32>}, {pipeline_mode = #tpu.pipeline_mode<synchronous>, transform_indices = @transform_10, window_bounds = array<i64: 4, 32, 128>}, {pipeline_mode = #tpu.pipeline_mode<synchronous>, transform_indices = @transform_11, window_bounds = array<i64: 1, 128>}, {pipeline_mode = #tpu.pipeline_mode<synchronous>, transform_indices = @transform_12, window_bounds = array<i64: 1, 128>}, {pipeline_mode = #tpu.pipeline_mode<synchronous>, transform_indices = @transform_13, window_bounds = array<i64: 1, 128>}, {pipeline_mode = #tpu.pipeline_mode<synchronous>, transform_indices = @transform_14, window_bounds = array<i64: 128, 256>}, {pipeline_mode = #tpu.pipeline_mode<synchronous>, transform_indices = @transform_15, window_bounds = array<i64: 1, 256>}, {pipeline_mode = #tpu.pipeline_mode<synchronous>, transform_indices = @transform_16, window_bounds = array<i64: 256, 128>}, {pipeline_mode = #tpu.pipeline_mode<synchronous>, transform_indices = @transform_17, window_bounds = array<i64: 1, 128>}, {transform_indices = @transform_18, window_bounds = array<i64: 1, 16, 128>}]} {
    %c0 = arith.constant 0 : index
    %c0_0 = arith.constant 0 : index
    %c0_1 = arith.constant 0 : index
    %0 = vector.load %arg3[%c0, %c0_0, %c0_1] : memref<1x16x128xf32, #tpu.memory_space<vmem>>, vector<1x16x128xf32>
    %1 = vector.shape_cast %0 : vector<1x16x128xf32> to vector<16x128xf32>
    %c16_i32 = arith.constant 16 : i32
    %2 = arith.muli %arg1, %c16_i32 : i32
    %3 = tpu.assume_multiple %2, 16 : i32
    %c0_2 = arith.constant 0 : index
    %4 = arith.index_cast %3 : i32 to index
    %c0_3 = arith.constant 0 : index
    %5 = vector.load %arg3[%c0_2, %4, %c0_3] : memref<1x16x128xf32, #tpu.memory_space<vmem>>, vector<1x16x128xf32>
    %6 = vector.shape_cast %5 : vector<1x16x128xf32> to vector<16x128xf32>
    %c0_4 = arith.constant 0 : index
    %c0_5 = arith.constant 0 : index
    %c0_6 = arith.constant 0 : index
    %7 = vector.load %arg2[%c0_4, %c0_5, %c0_6] : memref<1x1x16xi32, #tpu.memory_space<vmem>>, vector<1x1x16xi32>
    %c0_i32 = arith.constant 0 : i32
    %8 = vector.broadcast %c0_i32 : i32 to vector<1x1x16xi32>
    %9 = arith.cmpi eq, %7, %8 : vector<1x1x16xi32>
    %c0_7 = arith.constant 0 : index
    %c0_8 = arith.constant 0 : index
    %10 = vector.load %arg4[%c0_7, %c0_8] : memref<1x128xf32, #tpu.memory_space<vmem>>, vector<1x128xf32>
    %c0_9 = arith.constant 0 : index
    %c0_10 = arith.constant 0 : index
    %11 = vector.load %arg5[%c0_9, %c0_10] : memref<1x128xf32, #tpu.memory_space<vmem>>, vector<1x128xf32>
    %cst = arith.constant dense<0.000000e+00> : vector<16xf32>
    %12 = vector.multi_reduction <add>, %1, %cst [1] : vector<16x128xf32> to vector<16xf32>
    %13 = vector.shape_cast %12 : vector<16xf32> to vector<16x1xf32>
    %cst_11 = arith.constant 1.280000e+02 : f32
    %14 = vector.broadcast %cst_11 : f32 to vector<16x1xf32>
    %15 = arith.divf %13, %14 : vector<16x1xf32>
    %16 = vector.broadcast %15 : vector<16x1xf32> to vector<16x128xf32>
    %17 = arith.subf %1, %16 : vector<16x128xf32>
    %18 = arith.mulf %17, %17 : vector<16x128xf32>
    %cst_12 = arith.constant dense<0.000000e+00> : vector<16xf32>
    %19 = vector.multi_reduction <add>, %18, %cst_12 [1] : vector<16x128xf32> to vector<16xf32>
    %20 = vector.shape_cast %19 : vector<16xf32> to vector<16x1xf32>
    %cst_13 = arith.constant 1.280000e+02 : f32
    %21 = vector.broadcast %cst_13 : f32 to vector<16x1xf32>
    %22 = arith.divf %20, %21 : vector<16x1xf32>
    %23 = vector.broadcast %15 : vector<16x1xf32> to vector<16x128xf32>
    %24 = arith.subf %1, %23 : vector<16x128xf32>
    %cst_14 = arith.constant 9.99999996E-13 : f32
    %25 = vector.broadcast %cst_14 : f32 to vector<16x1xf32>
    %26 = arith.addf %22, %25 : vector<16x1xf32>
    %27 = math.rsqrt %26 : vector<16x1xf32>
    %28 = vector.broadcast %27 : vector<16x1xf32> to vector<16x128xf32>
    %29 = arith.mulf %24, %28 : vector<16x128xf32>
    %30 = vector.broadcast %10 : vector<1x128xf32> to vector<16x128xf32>
    %31 = arith.mulf %29, %30 : vector<16x128xf32>
    %32 = vector.broadcast %11 : vector<1x128xf32> to vector<16x128xf32>
    %33 = arith.addf %31, %32 : vector<16x128xf32>
    %34 = arith.truncf %33 : vector<16x128xf32> to vector<16x128xbf16>
    %cst_15 = arith.constant dense<0.000000e+00> : vector<16xf32>
    %35 = vector.multi_reduction <add>, %6, %cst_15 [1] : vector<16x128xf32> to vector<16xf32>
    %36 = vector.shape_cast %35 : vector<16xf32> to vector<16x1xf32>
    %cst_16 = arith.constant 1.280000e+02 : f32
    %37 = vector.broadcast %cst_16 : f32 to vector<16x1xf32>
    %38 = arith.divf %36, %37 : vector<16x1xf32>
    %39 = vector.broadcast %38 : vector<16x1xf32> to vector<16x128xf32>
    %40 = arith.subf %6, %39 : vector<16x128xf32>
    %41 = arith.mulf %40, %40 : vector<16x128xf32>
    %cst_17 = arith.constant dense<0.000000e+00> : vector<16xf32>
    %42 = vector.multi_reduction <add>, %41, %cst_17 [1] : vector<16x128xf32> to vector<16xf32>
    %43 = vector.shape_cast %42 : vector<16xf32> to vector<16x1xf32>
    %cst_18 = arith.constant 1.280000e+02 : f32
    %44 = vector.broadcast %cst_18 : f32 to vector<16x1xf32>
    %45 = arith.divf %43, %44 : vector<16x1xf32>
    %46 = vector.broadcast %38 : vector<16x1xf32> to vector<16x128xf32>
    %47 = arith.subf %6, %46 : vector<16x128xf32>
    %cst_19 = arith.constant 9.99999996E-13 : f32
    %48 = vector.broadcast %cst_19 : f32 to vector<16x1xf32>
    %49 = arith.addf %45, %48 : vector<16x1xf32>
    %50 = math.rsqrt %49 : vector<16x1xf32>
    %51 = vector.broadcast %50 : vector<16x1xf32> to vector<16x128xf32>
    %52 = arith.mulf %47, %51 : vector<16x128xf32>
    %53 = vector.broadcast %10 : vector<1x128xf32> to vector<16x128xf32>
    %54 = arith.mulf %52, %53 : vector<16x128xf32>
    %55 = vector.broadcast %11 : vector<1x128xf32> to vector<16x128xf32>
    %56 = arith.addf %54, %55 : vector<16x128xf32>
    %57 = arith.truncf %56 : vector<16x128xf32> to vector<16x128xbf16>
    %c0_20 = arith.constant 0 : index
    %c0_21 = arith.constant 0 : index
    %c0_22 = arith.constant 0 : index
    %58 = vector.load %arg6[%c0_20, %c0_21, %c0_22] : memref<4x128x32xbf16, #tpu.memory_space<vmem>>, vector<1x128x32xbf16>
    %59 = vector.shape_cast %58 : vector<1x128x32xbf16> to vector<128x32xbf16>
    %cst_23 = arith.constant dense<0.000000e+00> : vector<16x32xf32>
    %60 = tpu.matmul %57, %59, %cst_23 {dimension_numbers = #tpu.dot_dimension_numbers<[1], [0], [0], [1], [0, 0, 1, 1], [], []>} : vector<16x128xbf16>, vector<128x32xbf16>, vector<16x32xf32> -> vector<16x32xf32>
    %c0_24 = arith.constant 0 : index
    %c0_25 = arith.constant 0 : index
    %c0_26 = arith.constant 0 : index
    %61 = vector.load %arg7[%c0_24, %c0_25, %c0_26] : memref<4x1x32xf32, #tpu.memory_space<vmem>>, vector<1x1x32xf32>
    %62 = vector.shape_cast %61 : vector<1x1x32xf32> to vector<1x32xf32>
    %63 = vector.broadcast %62 : vector<1x32xf32> to vector<16x32xf32>
    %64 = arith.addf %60, %63 : vector<16x32xf32>
    %65 = arith.truncf %64 : vector<16x32xf32> to vector<16x32xbf16>
    %c0_27 = arith.constant 0 : index
    %c0_28 = arith.constant 0 : index
    %c0_29 = arith.constant 0 : index
    %66 = vector.load %arg21[%c0_27, %c0_28, %c0_29] : memref<4x16x32xbf16, #tpu.memory_space<vmem>>, vector<1x16x32xbf16>
    %67 = vector.shape_cast %66 : vector<1x16x32xbf16> to vector<16x32xbf16>
    %68 = vector.shape_cast %65 : vector<16x32xbf16> to vector<1x16x32xbf16>
    tpu.vector_store %arg21[%c0_27, %c0_28, %c0_29], %68 {strides = array<i32>} : memref<4x16x32xbf16, #tpu.memory_space<vmem>>, vector<1x16x32xbf16>,
    %c0_30 = arith.constant 0 : index
    %c0_31 = arith.constant 0 : index
    %c0_32 = arith.constant 0 : index
    %69 = vector.load %arg8[%c0_30, %c0_31, %c0_32] : memref<4x128x32xbf16, #tpu.memory_space<vmem>>, vector<1x128x32xbf16>
    %70 = vector.shape_cast %69 : vector<1x128x32xbf16> to vector<128x32xbf16>
    %cst_33 = arith.constant dense<0.000000e+00> : vector<16x32xf32>
    %71 = tpu.matmul %34, %70, %cst_33 {dimension_numbers = #tpu.dot_dimension_numbers<[1], [0], [0], [1], [0, 0, 1, 1], [], []>} : vector<16x128xbf16>, vector<128x32xbf16>, vector<16x32xf32> -> vector<16x32xf32>
    %c0_34 = arith.constant 0 : index
    %c0_35 = arith.constant 0 : index
    %c0_36 = arith.constant 0 : index
    %72 = vector.load %arg9[%c0_34, %c0_35, %c0_36] : memref<4x1x32xf32, #tpu.memory_space<vmem>>, vector<1x1x32xf32>
    %73 = vector.shape_cast %72 : vector<1x1x32xf32> to vector<1x32xf32>
    %74 = vector.broadcast %73 : vector<1x32xf32> to vector<16x32xf32>
    %75 = arith.addf %71, %74 : vector<16x32xf32>
    %76 = arith.truncf %75 : vector<16x32xf32> to vector<16x32xbf16>
    %c0_37 = arith.constant 0 : index
    %c0_38 = arith.constant 0 : index
    %c0_39 = arith.constant 0 : index
    %77 = vector.load %arg22[%c0_37, %c0_38, %c0_39] : memref<4x16x32xbf16, #tpu.memory_space<vmem>>, vector<1x16x32xbf16>
    %78 = vector.shape_cast %77 : vector<1x16x32xbf16> to vector<16x32xbf16>
    %79 = vector.shape_cast %76 : vector<16x32xbf16> to vector<1x16x32xbf16>
    tpu.vector_store %arg22[%c0_37, %c0_38, %c0_39], %79 {strides = array<i32>} : memref<4x16x32xbf16, #tpu.memory_space<vmem>>, vector<1x16x32xbf16>,
    %c0_40 = arith.constant 0 : index
    %c0_41 = arith.constant 0 : index
    %c0_42 = arith.constant 0 : index
    %80 = vector.load %arg10[%c0_40, %c0_41, %c0_42] : memref<4x128x32xbf16, #tpu.memory_space<vmem>>, vector<1x128x32xbf16>
    %81 = vector.shape_cast %80 : vector<1x128x32xbf16> to vector<128x32xbf16>
    %cst_43 = arith.constant dense<0.000000e+00> : vector<16x32xf32>
    %82 = tpu.matmul %34, %81, %cst_43 {dimension_numbers = #tpu.dot_dimension_numbers<[1], [0], [0], [1], [0, 0, 1, 1], [], []>} : vector<16x128xbf16>, vector<128x32xbf16>, vector<16x32xf32> -> vector<16x32xf32>
    %c0_44 = arith.constant 0 : index
    %c0_45 = arith.constant 0 : index
    %c0_46 = arith.constant 0 : index
    %83 = vector.load %arg11[%c0_44, %c0_45, %c0_46] : memref<4x1x32xf32, #tpu.memory_space<vmem>>, vector<1x1x32xf32>
    %84 = vector.shape_cast %83 : vector<1x1x32xf32> to vector<1x32xf32>
    %85 = vector.broadcast %84 : vector<1x32xf32> to vector<16x32xf32>
    %86 = arith.addf %82, %85 : vector<16x32xf32>
    %87 = arith.truncf %86 : vector<16x32xf32> to vector<16x32xbf16>
    %c0_47 = arith.constant 0 : index
    %c0_48 = arith.constant 0 : index
    %c0_49 = arith.constant 0 : index
    %88 = vector.load %arg23[%c0_47, %c0_48, %c0_49] : memref<4x16x32xbf16, #tpu.memory_space<vmem>>, vector<1x16x32xbf16>
    %89 = vector.shape_cast %88 : vector<1x16x32xbf16> to vector<16x32xbf16>
    %90 = vector.shape_cast %87 : vector<16x32xbf16> to vector<1x16x32xbf16>
    tpu.vector_store %arg23[%c0_47, %c0_48, %c0_49], %90 {strides = array<i32>} : memref<4x16x32xbf16, #tpu.memory_space<vmem>>, vector<1x16x32xbf16>,
    %c1 = arith.constant 1 : index
    %c0_50 = arith.constant 0 : index
    %c0_51 = arith.constant 0 : index
    %91 = vector.load %arg6[%c1, %c0_50, %c0_51] : memref<4x128x32xbf16, #tpu.memory_space<vmem>>, vector<1x128x32xbf16>
    %92 = vector.shape_cast %91 : vector<1x128x32xbf16> to vector<128x32xbf16>
    %cst_52 = arith.constant dense<0.000000e+00> : vector<16x32xf32>
    %93 = tpu.matmul %57, %92, %cst_52 {dimension_numbers = #tpu.dot_dimension_numbers<[1], [0], [0], [1], [0, 0, 1, 1], [], []>} : vector<16x128xbf16>, vector<128x32xbf16>, vector<16x32xf32> -> vector<16x32xf32>
    %c1_53 = arith.constant 1 : index
    %c0_54 = arith.constant 0 : index
    %c0_55 = arith.constant 0 : index
    %94 = vector.load %arg7[%c1_53, %c0_54, %c0_55] : memref<4x1x32xf32, #tpu.memory_space<vmem>>, vector<1x1x32xf32>
    %95 = vector.shape_cast %94 : vector<1x1x32xf32> to vector<1x32xf32>
    %96 = vector.broadcast %95 : vector<1x32xf32> to vector<16x32xf32>
    %97 = arith.addf %93, %96 : vector<16x32xf32>
    %98 = arith.truncf %97 : vector<16x32xf32> to vector<16x32xbf16>
    %c1_56 = arith.constant 1 : index
    %c0_57 = arith.constant 0 : index
    %c0_58 = arith.constant 0 : index
    %99 = vector.load %arg21[%c1_56, %c0_57, %c0_58] : memref<4x16x32xbf16, #tpu.memory_space<vmem>>, vector<1x16x32xbf16>
    %100 = vector.shape_cast %99 : vector<1x16x32xbf16> to vector<16x32xbf16>
    %101 = vector.shape_cast %98 : vector<16x32xbf16> to vector<1x16x32xbf16>
    tpu.vector_store %arg21[%c1_56, %c0_57, %c0_58], %101 {strides = array<i32>} : memref<4x16x32xbf16, #tpu.memory_space<vmem>>, vector<1x16x32xbf16>,
    %c1_59 = arith.constant 1 : index
    %c0_60 = arith.constant 0 : index
    %c0_61 = arith.constant 0 : index
    %102 = vector.load %arg8[%c1_59, %c0_60, %c0_61] : memref<4x128x32xbf16, #tpu.memory_space<vmem>>, vector<1x128x32xbf16>
    %103 = vector.shape_cast %102 : vector<1x128x32xbf16> to vector<128x32xbf16>
    %cst_62 = arith.constant dense<0.000000e+00> : vector<16x32xf32>
    %104 = tpu.matmul %34, %103, %cst_62 {dimension_numbers = #tpu.dot_dimension_numbers<[1], [0], [0], [1], [0, 0, 1, 1], [], []>} : vector<16x128xbf16>, vector<128x32xbf16>, vector<16x32xf32> -> vector<16x32xf32>
    %c1_63 = arith.constant 1 : index
    %c0_64 = arith.constant 0 : index
    %c0_65 = arith.constant 0 : index
    %105 = vector.load %arg9[%c1_63, %c0_64, %c0_65] : memref<4x1x32xf32, #tpu.memory_space<vmem>>, vector<1x1x32xf32>
    %106 = vector.shape_cast %105 : vector<1x1x32xf32> to vector<1x32xf32>
    %107 = vector.broadcast %106 : vector<1x32xf32> to vector<16x32xf32>
    %108 = arith.addf %104, %107 : vector<16x32xf32>
    %109 = arith.truncf %108 : vector<16x32xf32> to vector<16x32xbf16>
    %c1_66 = arith.constant 1 : index
    %c0_67 = arith.constant 0 : index
    %c0_68 = arith.constant 0 : index
    %110 = vector.load %arg22[%c1_66, %c0_67, %c0_68] : memref<4x16x32xbf16, #tpu.memory_space<vmem>>, vector<1x16x32xbf16>
    %111 = vector.shape_cast %110 : vector<1x16x32xbf16> to vector<16x32xbf16>
    %112 = vector.shape_cast %109 : vector<16x32xbf16> to vector<1x16x32xbf16>
    tpu.vector_store %arg22[%c1_66, %c0_67, %c0_68], %112 {strides = array<i32>} : memref<4x16x32xbf16, #tpu.memory_space<vmem>>, vector<1x16x32xbf16>,
    %c1_69 = arith.constant 1 : index
    %c0_70 = arith.constant 0 : index
    %c0_71 = arith.constant 0 : index
    %113 = vector.load %arg10[%c1_69, %c0_70, %c0_71] : memref<4x128x32xbf16, #tpu.memory_space<vmem>>, vector<1x128x32xbf16>
    %114 = vector.shape_cast %113 : vector<1x128x32xbf16> to vector<128x32xbf16>
    %cst_72 = arith.constant dense<0.000000e+00> : vector<16x32xf32>
    %115 = tpu.matmul %34, %114, %cst_72 {dimension_numbers = #tpu.dot_dimension_numbers<[1], [0], [0], [1], [0, 0, 1, 1], [], []>} : vector<16x128xbf16>, vector<128x32xbf16>, vector<16x32xf32> -> vector<16x32xf32>
    %c1_73 = arith.constant 1 : index
    %c0_74 = arith.constant 0 : index
    %c0_75 = arith.constant 0 : index
    %116 = vector.load %arg11[%c1_73, %c0_74, %c0_75] : memref<4x1x32xf32, #tpu.memory_space<vmem>>, vector<1x1x32xf32>
    %117 = vector.shape_cast %116 : vector<1x1x32xf32> to vector<1x32xf32>
    %118 = vector.broadcast %117 : vector<1x32xf32> to vector<16x32xf32>
    %119 = arith.addf %115, %118 : vector<16x32xf32>
    %120 = arith.truncf %119 : vector<16x32xf32> to vector<16x32xbf16>
    %c1_76 = arith.constant 1 : index
    %c0_77 = arith.constant 0 : index
    %c0_78 = arith.constant 0 : index
    %121 = vector.load %arg23[%c1_76, %c0_77, %c0_78] : memref<4x16x32xbf16, #tpu.memory_space<vmem>>, vector<1x16x32xbf16>
    %122 = vector.shape_cast %121 : vector<1x16x32xbf16> to vector<16x32xbf16>
    %123 = vector.shape_cast %120 : vector<16x32xbf16> to vector<1x16x32xbf16>
    tpu.vector_store %arg23[%c1_76, %c0_77, %c0_78], %123 {strides = array<i32>} : memref<4x16x32xbf16, #tpu.memory_space<vmem>>, vector<1x16x32xbf16>,
    %c2 = arith.constant 2 : index
    %c0_79 = arith.constant 0 : index
    %c0_80 = arith.constant 0 : index
    %124 = vector.load %arg6[%c2, %c0_79, %c0_80] : memref<4x128x32xbf16, #tpu.memory_space<vmem>>, vector<1x128x32xbf16>
    %125 = vector.shape_cast %124 : vector<1x128x32xbf16> to vector<128x32xbf16>
    %cst_81 = arith.constant dense<0.000000e+00> : vector<16x32xf32>
    %126 = tpu.matmul %57, %125, %cst_81 {dimension_numbers = #tpu.dot_dimension_numbers<[1], [0], [0], [1], [0, 0, 1, 1], [], []>} : vector<16x128xbf16>, vector<128x32xbf16>, vector<16x32xf32> -> vector<16x32xf32>
    %c2_82 = arith.constant 2 : index
    %c0_83 = arith.constant 0 : index
    %c0_84 = arith.constant 0 : index
    %127 = vector.load %arg7[%c2_82, %c0_83, %c0_84] : memref<4x1x32xf32, #tpu.memory_space<vmem>>, vector<1x1x32xf32>
    %128 = vector.shape_cast %127 : vector<1x1x32xf32> to vector<1x32xf32>
    %129 = vector.broadcast %128 : vector<1x32xf32> to vector<16x32xf32>
    %130 = arith.addf %126, %129 : vector<16x32xf32>
    %131 = arith.truncf %130 : vector<16x32xf32> to vector<16x32xbf16>
    %c2_85 = arith.constant 2 : index
    %c0_86 = arith.constant 0 : index
    %c0_87 = arith.constant 0 : index
    %132 = vector.load %arg21[%c2_85, %c0_86, %c0_87] : memref<4x16x32xbf16, #tpu.memory_space<vmem>>, vector<1x16x32xbf16>
    %133 = vector.shape_cast %132 : vector<1x16x32xbf16> to vector<16x32xbf16>
    %134 = vector.shape_cast %131 : vector<16x32xbf16> to vector<1x16x32xbf16>
    tpu.vector_store %arg21[%c2_85, %c0_86, %c0_87], %134 {strides = array<i32>} : memref<4x16x32xbf16, #tpu.memory_space<vmem>>, vector<1x16x32xbf16>,
    %c2_88 = arith.constant 2 : index
    %c0_89 = arith.constant 0 : index
    %c0_90 = arith.constant 0 : index
    %135 = vector.load %arg8[%c2_88, %c0_89, %c0_90] : memref<4x128x32xbf16, #tpu.memory_space<vmem>>, vector<1x128x32xbf16>
    %136 = vector.shape_cast %135 : vector<1x128x32xbf16> to vector<128x32xbf16>
    %cst_91 = arith.constant dense<0.000000e+00> : vector<16x32xf32>
    %137 = tpu.matmul %34, %136, %cst_91 {dimension_numbers = #tpu.dot_dimension_numbers<[1], [0], [0], [1], [0, 0, 1, 1], [], []>} : vector<16x128xbf16>, vector<128x32xbf16>, vector<16x32xf32> -> vector<16x32xf32>
    %c2_92 = arith.constant 2 : index
    %c0_93 = arith.constant 0 : index
    %c0_94 = arith.constant 0 : index
    %138 = vector.load %arg9[%c2_92, %c0_93, %c0_94] : memref<4x1x32xf32, #tpu.memory_space<vmem>>, vector<1x1x32xf32>
    %139 = vector.shape_cast %138 : vector<1x1x32xf32> to vector<1x32xf32>
    %140 = vector.broadcast %139 : vector<1x32xf32> to vector<16x32xf32>
    %141 = arith.addf %137, %140 : vector<16x32xf32>
    %142 = arith.truncf %141 : vector<16x32xf32> to vector<16x32xbf16>
    %c2_95 = arith.constant 2 : index
    %c0_96 = arith.constant 0 : index
    %c0_97 = arith.constant 0 : index
    %143 = vector.load %arg22[%c2_95, %c0_96, %c0_97] : memref<4x16x32xbf16, #tpu.memory_space<vmem>>, vector<1x16x32xbf16>
    %144 = vector.shape_cast %143 : vector<1x16x32xbf16> to vector<16x32xbf16>
    %145 = vector.shape_cast %142 : vector<16x32xbf16> to vector<1x16x32xbf16>
    tpu.vector_store %arg22[%c2_95, %c0_96, %c0_97], %145 {strides = array<i32>} : memref<4x16x32xbf16, #tpu.memory_space<vmem>>, vector<1x16x32xbf16>,
    %c2_98 = arith.constant 2 : index
    %c0_99 = arith.constant 0 : index
    %c0_100 = arith.constant 0 : index
    %146 = vector.load %arg10[%c2_98, %c0_99, %c0_100] : memref<4x128x32xbf16, #tpu.memory_space<vmem>>, vector<1x128x32xbf16>
    %147 = vector.shape_cast %146 : vector<1x128x32xbf16> to vector<128x32xbf16>
    %cst_101 = arith.constant dense<0.000000e+00> : vector<16x32xf32>
    %148 = tpu.matmul %34, %147, %cst_101 {dimension_numbers = #tpu.dot_dimension_numbers<[1], [0], [0], [1], [0, 0, 1, 1], [], []>} : vector<16x128xbf16>, vector<128x32xbf16>, vector<16x32xf32> -> vector<16x32xf32>
    %c2_102 = arith.constant 2 : index
    %c0_103 = arith.constant 0 : index
    %c0_104 = arith.constant 0 : index
    %149 = vector.load %arg11[%c2_102, %c0_103, %c0_104] : memref<4x1x32xf32, #tpu.memory_space<vmem>>, vector<1x1x32xf32>
    %150 = vector.shape_cast %149 : vector<1x1x32xf32> to vector<1x32xf32>
    %151 = vector.broadcast %150 : vector<1x32xf32> to vector<16x32xf32>
    %152 = arith.addf %148, %151 : vector<16x32xf32>
    %153 = arith.truncf %152 : vector<16x32xf32> to vector<16x32xbf16>
    %c2_105 = arith.constant 2 : index
    %c0_106 = arith.constant 0 : index
    %c0_107 = arith.constant 0 : index
    %154 = vector.load %arg23[%c2_105, %c0_106, %c0_107] : memref<4x16x32xbf16, #tpu.memory_space<vmem>>, vector<1x16x32xbf16>
    %155 = vector.shape_cast %154 : vector<1x16x32xbf16> to vector<16x32xbf16>
    %156 = vector.shape_cast %153 : vector<16x32xbf16> to vector<1x16x32xbf16>
    tpu.vector_store %arg23[%c2_105, %c0_106, %c0_107], %156 {strides = array<i32>} : memref<4x16x32xbf16, #tpu.memory_space<vmem>>, vector<1x16x32xbf16>,
    %c3 = arith.constant 3 : index
    %c0_108 = arith.constant 0 : index
    %c0_109 = arith.constant 0 : index
    %157 = vector.load %arg6[%c3, %c0_108, %c0_109] : memref<4x128x32xbf16, #tpu.memory_space<vmem>>, vector<1x128x32xbf16>
    %158 = vector.shape_cast %157 : vector<1x128x32xbf16> to vector<128x32xbf16>
    %cst_110 = arith.constant dense<0.000000e+00> : vector<16x32xf32>
    %159 = tpu.matmul %57, %158, %cst_110 {dimension_numbers = #tpu.dot_dimension_numbers<[1], [0], [0], [1], [0, 0, 1, 1], [], []>} : vector<16x128xbf16>, vector<128x32xbf16>, vector<16x32xf32> -> vector<16x32xf32>
    %c3_111 = arith.constant 3 : index
    %c0_112 = arith.constant 0 : index
    %c0_113 = arith.constant 0 : index
    %160 = vector.load %arg7[%c3_111, %c0_112, %c0_113] : memref<4x1x32xf32, #tpu.memory_space<vmem>>, vector<1x1x32xf32>
    %161 = vector.shape_cast %160 : vector<1x1x32xf32> to vector<1x32xf32>
    %162 = vector.broadcast %161 : vector<1x32xf32> to vector<16x32xf32>
    %163 = arith.addf %159, %162 : vector<16x32xf32>
    %164 = arith.truncf %163 : vector<16x32xf32> to vector<16x32xbf16>
    %c3_114 = arith.constant 3 : index
    %c0_115 = arith.constant 0 : index
    %c0_116 = arith.constant 0 : index
    %165 = vector.load %arg21[%c3_114, %c0_115, %c0_116] : memref<4x16x32xbf16, #tpu.memory_space<vmem>>, vector<1x16x32xbf16>
    %166 = vector.shape_cast %165 : vector<1x16x32xbf16> to vector<16x32xbf16>
    %167 = vector.shape_cast %164 : vector<16x32xbf16> to vector<1x16x32xbf16>
    tpu.vector_store %arg21[%c3_114, %c0_115, %c0_116], %167 {strides = array<i32>} : memref<4x16x32xbf16, #tpu.memory_space<vmem>>, vector<1x16x32xbf16>,
    %c3_117 = arith.constant 3 : index
    %c0_118 = arith.constant 0 : index
    %c0_119 = arith.constant 0 : index
    %168 = vector.load %arg8[%c3_117, %c0_118, %c0_119] : memref<4x128x32xbf16, #tpu.memory_space<vmem>>, vector<1x128x32xbf16>
    %169 = vector.shape_cast %168 : vector<1x128x32xbf16> to vector<128x32xbf16>
    %cst_120 = arith.constant dense<0.000000e+00> : vector<16x32xf32>
    %170 = tpu.matmul %34, %169, %cst_120 {dimension_numbers = #tpu.dot_dimension_numbers<[1], [0], [0], [1], [0, 0, 1, 1], [], []>} : vector<16x128xbf16>, vector<128x32xbf16>, vector<16x32xf32> -> vector<16x32xf32>
    %c3_121 = arith.constant 3 : index
    %c0_122 = arith.constant 0 : index
    %c0_123 = arith.constant 0 : index
    %171 = vector.load %arg9[%c3_121, %c0_122, %c0_123] : memref<4x1x32xf32, #tpu.memory_space<vmem>>, vector<1x1x32xf32>
    %172 = vector.shape_cast %171 : vector<1x1x32xf32> to vector<1x32xf32>
    %173 = vector.broadcast %172 : vector<1x32xf32> to vector<16x32xf32>
    %174 = arith.addf %170, %173 : vector<16x32xf32>
    %175 = arith.truncf %174 : vector<16x32xf32> to vector<16x32xbf16>
    %c3_124 = arith.constant 3 : index
    %c0_125 = arith.constant 0 : index
    %c0_126 = arith.constant 0 : index
    %176 = vector.load %arg22[%c3_124, %c0_125, %c0_126] : memref<4x16x32xbf16, #tpu.memory_space<vmem>>, vector<1x16x32xbf16>
    %177 = vector.shape_cast %176 : vector<1x16x32xbf16> to vector<16x32xbf16>
    %178 = vector.shape_cast %175 : vector<16x32xbf16> to vector<1x16x32xbf16>
    tpu.vector_store %arg22[%c3_124, %c0_125, %c0_126], %178 {strides = array<i32>} : memref<4x16x32xbf16, #tpu.memory_space<vmem>>, vector<1x16x32xbf16>,
    %c3_127 = arith.constant 3 : index
    %c0_128 = arith.constant 0 : index
    %c0_129 = arith.constant 0 : index
    %179 = vector.load %arg10[%c3_127, %c0_128, %c0_129] : memref<4x128x32xbf16, #tpu.memory_space<vmem>>, vector<1x128x32xbf16>
    %180 = vector.shape_cast %179 : vector<1x128x32xbf16> to vector<128x32xbf16>
    %cst_130 = arith.constant dense<0.000000e+00> : vector<16x32xf32>
    %181 = tpu.matmul %34, %180, %cst_130 {dimension_numbers = #tpu.dot_dimension_numbers<[1], [0], [0], [1], [0, 0, 1, 1], [], []>} : vector<16x128xbf16>, vector<128x32xbf16>, vector<16x32xf32> -> vector<16x32xf32>
    %c3_131 = arith.constant 3 : index
    %c0_132 = arith.constant 0 : index
    %c0_133 = arith.constant 0 : index
    %182 = vector.load %arg11[%c3_131, %c0_132, %c0_133] : memref<4x1x32xf32, #tpu.memory_space<vmem>>, vector<1x1x32xf32>
    %183 = vector.shape_cast %182 : vector<1x1x32xf32> to vector<1x32xf32>
    %184 = vector.broadcast %183 : vector<1x32xf32> to vector<16x32xf32>
    %185 = arith.addf %181, %184 : vector<16x32xf32>
    %186 = arith.truncf %185 : vector<16x32xf32> to vector<16x32xbf16>
    %c3_134 = arith.constant 3 : index
    %c0_135 = arith.constant 0 : index
    %c0_136 = arith.constant 0 : index
    %187 = vector.load %arg23[%c3_134, %c0_135, %c0_136] : memref<4x16x32xbf16, #tpu.memory_space<vmem>>, vector<1x16x32xbf16>
    %188 = vector.shape_cast %187 : vector<1x16x32xbf16> to vector<16x32xbf16>
    %189 = vector.shape_cast %186 : vector<16x32xbf16> to vector<1x16x32xbf16>
    tpu.vector_store %arg23[%c3_134, %c0_135, %c0_136], %189 {strides = array<i32>} : memref<4x16x32xbf16, #tpu.memory_space<vmem>>, vector<1x16x32xbf16>,
    %c0_137 = arith.constant 0 : index
    %c0_138 = arith.constant 0 : index
    %c0_139 = arith.constant 0 : index
    %190 = vector.load %arg21[%c0_137, %c0_138, %c0_139] : memref<4x16x32xbf16, #tpu.memory_space<vmem>>, vector<4x16x32xbf16>
    %c0_140 = arith.constant 0 : index
    %c0_141 = arith.constant 0 : index
    %c0_142 = arith.constant 0 : index
    %191 = vector.load %arg22[%c0_140, %c0_141, %c0_142] : memref<4x16x32xbf16, #tpu.memory_space<vmem>>, vector<4x16x32xbf16>
    "tpu.trace_start"() <{level = 10 : i32, message = "hqd,hkd->hqk"}> : () -> ()
    %cst_143 = arith.constant dense<0.000000e+00> : vector<4x16x16xf32>
    %192 = tpu.matmul %190, %191, %cst_143 {dimension_numbers = #tpu.dot_dimension_numbers<[2], [2], [1], [1], [0, 0, 0, 1, 1, 1], [0], [0]>} : vector<4x16x32xbf16>, vector<4x16x32xbf16>, vector<4x16x16xf32> -> vector<4x16x16xf32>
    %cst_144 = arith.constant -3.40282347E+38 : f32
    "tpu.trace_stop"() : () -> ()
    %193 = vector.shape_cast %9 : vector<1x1x16xi1> to vector<1x1x16xi1>
    %194 = vector.broadcast %193 : vector<1x1x16xi1> to vector<4x16x16xi1>
    %195 = vector.broadcast %cst_144 : f32 to vector<4x16x16xf32>
    %196 = arith.select %194, %195, %192 : vector<4x16x16xi1>, vector<4x16x16xf32>
    %cst_145 = arith.constant dense<0xFF800000> : vector<4x16xf32>
    %197 = vector.multi_reduction <maximumf>, %196, %cst_145 [2] : vector<4x16x16xf32> to vector<4x16xf32>
    %198 = vector.shape_cast %197 : vector<4x16xf32> to vector<4x16x1xf32>
    %199 = vector.broadcast %198 : vector<4x16x1xf32> to vector<4x16x16xf32>
    %200 = arith.subf %196, %199 : vector<4x16x16xf32>
    %201 = math.exp %200 : vector<4x16x16xf32>
    %cst_146 = arith.constant dense<0.000000e+00> : vector<4x16xf32>
    %202 = vector.multi_reduction <add>, %201, %cst_146 [2] : vector<4x16x16xf32> to vector<4x16xf32>
    %203 = vector.shape_cast %202 : vector<4x16xf32> to vector<4x16x1xf32>
    %204 = tpu.reciprocal %203 {approx = true} : vector<4x16x1xf32> -> vector<4x16x1xf32>
    %205 = vector.broadcast %204 : vector<4x16x1xf32> to vector<4x16x16xf32>
    %206 = arith.mulf %201, %205 : vector<4x16x16xf32>
    %cst_147 = arith.constant 0.000000e+00 : f32
    %207 = vector.shape_cast %9 : vector<1x1x16xi1> to vector<1x1x16xi1>
    %208 = vector.broadcast %207 : vector<1x1x16xi1> to vector<4x16x16xi1>
    %209 = vector.broadcast %cst_147 : f32 to vector<4x16x16xf32>
    %210 = arith.select %208, %209, %206 : vector<4x16x16xi1>, vector<4x16x16xf32>
    %211 = arith.truncf %210 : vector<4x16x16xf32> to vector<4x16x16xbf16>
    %c0_148 = arith.constant 0 : index
    %c0_149 = arith.constant 0 : index
    %c0_150 = arith.constant 0 : index
    %212 = vector.load %arg23[%c0_148, %c0_149, %c0_150] : memref<4x16x32xbf16, #tpu.memory_space<vmem>>, vector<4x16x32xbf16>
    "tpu.trace_start"() <{level = 10 : i32, message = "hqk,hkd->hqd"}> : () -> ()
    %cst_151 = arith.constant dense<0.000000e+00> : vector<4x16x32xf32>
    %213 = tpu.matmul %211, %212, %cst_151 {dimension_numbers = #tpu.dot_dimension_numbers<[2], [1], [1], [2], [0, 0, 0, 1, 1, 2], [0], [0]>} : vector<4x16x16xbf16>, vector<4x16x32xbf16>, vector<4x16x32xf32> -> vector<4x16x32xf32>
    %cst_152 = arith.constant 0.000000e+00 : f32
    "tpu.trace_stop"() : () -> ()
    %214 = vector.broadcast %cst_152 : f32 to vector<16x128xf32>
    %215 = vector.extract_strided_slice %213 {offsets = [0, 0, 0], sizes = [1, 16, 32], strides = [1, 1, 1]} : vector<4x16x32xf32> to vector<1x16x32xf32>
    %216 = vector.shape_cast %215 : vector<1x16x32xf32> to vector<16x32xf32>
    %217 = arith.truncf %216 : vector<16x32xf32> to vector<16x32xbf16>
    %c0_153 = arith.constant 0 : index
    %c0_154 = arith.constant 0 : index
    %c0_155 = arith.constant 0 : index
    %218 = vector.load %arg12[%c0_153, %c0_154, %c0_155] : memref<4x32x128xbf16, #tpu.memory_space<vmem>>, vector<1x32x128xbf16>
    %219 = vector.shape_cast %218 : vector<1x32x128xbf16> to vector<32x128xbf16>
    %cst_156 = arith.constant dense<0.000000e+00> : vector<16x128xf32>
    %220 = tpu.matmul %217, %219, %cst_156 {dimension_numbers = #tpu.dot_dimension_numbers<[1], [0], [0], [1], [0, 0, 1, 1], [], []>} : vector<16x32xbf16>, vector<32x128xbf16>, vector<16x128xf32> -> vector<16x128xf32>
    %221 = arith.addf %214, %220 : vector<16x128xf32>
    %222 = vector.extract_strided_slice %213 {offsets = [1, 0, 0], sizes = [1, 16, 32], strides = [1, 1, 1]} : vector<4x16x32xf32> to vector<1x16x32xf32>
    %223 = vector.shape_cast %222 : vector<1x16x32xf32> to vector<16x32xf32>
    %224 = arith.truncf %223 : vector<16x32xf32> to vector<16x32xbf16>
    %c1_157 = arith.constant 1 : index
    %c0_158 = arith.constant 0 : index
    %c0_159 = arith.constant 0 : index
    %225 = vector.load %arg12[%c1_157, %c0_158, %c0_159] : memref<4x32x128xbf16, #tpu.memory_space<vmem>>, vector<1x32x128xbf16>
    %226 = vector.shape_cast %225 : vector<1x32x128xbf16> to vector<32x128xbf16>
    %cst_160 = arith.constant dense<0.000000e+00> : vector<16x128xf32>
    %227 = tpu.matmul %224, %226, %cst_160 {dimension_numbers = #tpu.dot_dimension_numbers<[1], [0], [0], [1], [0, 0, 1, 1], [], []>} : vector<16x32xbf16>, vector<32x128xbf16>, vector<16x128xf32> -> vector<16x128xf32>
    %228 = arith.addf %221, %227 : vector<16x128xf32>
    %229 = vector.extract_strided_slice %213 {offsets = [2, 0, 0], sizes = [1, 16, 32], strides = [1, 1, 1]} : vector<4x16x32xf32> to vector<1x16x32xf32>
    %230 = vector.shape_cast %229 : vector<1x16x32xf32> to vector<16x32xf32>
    %231 = arith.truncf %230 : vector<16x32xf32> to vector<16x32xbf16>
    %c2_161 = arith.constant 2 : index
    %c0_162 = arith.constant 0 : index
    %c0_163 = arith.constant 0 : index
    %232 = vector.load %arg12[%c2_161, %c0_162, %c0_163] : memref<4x32x128xbf16, #tpu.memory_space<vmem>>, vector<1x32x128xbf16>
    %233 = vector.shape_cast %232 : vector<1x32x128xbf16> to vector<32x128xbf16>
    %cst_164 = arith.constant dense<0.000000e+00> : vector<16x128xf32>
    %234 = tpu.matmul %231, %233, %cst_164 {dimension_numbers = #tpu.dot_dimension_numbers<[1], [0], [0], [1], [0, 0, 1, 1], [], []>} : vector<16x32xbf16>, vector<32x128xbf16>, vector<16x128xf32> -> vector<16x128xf32>
    %235 = arith.addf %228, %234 : vector<16x128xf32>
    %236 = vector.extract_strided_slice %213 {offsets = [3, 0, 0], sizes = [1, 16, 32], strides = [1, 1, 1]} : vector<4x16x32xf32> to vector<1x16x32xf32>
    %237 = vector.shape_cast %236 : vector<1x16x32xf32> to vector<16x32xf32>
    %238 = arith.truncf %237 : vector<16x32xf32> to vector<16x32xbf16>
    %c3_165 = arith.constant 3 : index
    %c0_166 = arith.constant 0 : index
    %c0_167 = arith.constant 0 : index
    %239 = vector.load %arg12[%c3_165, %c0_166, %c0_167] : memref<4x32x128xbf16, #tpu.memory_space<vmem>>, vector<1x32x128xbf16>
    %240 = vector.shape_cast %239 : vector<1x32x128xbf16> to vector<32x128xbf16>
    %cst_168 = arith.constant dense<0.000000e+00> : vector<16x128xf32>
    %241 = tpu.matmul %238, %240, %cst_168 {dimension_numbers = #tpu.dot_dimension_numbers<[1], [0], [0], [1], [0, 0, 1, 1], [], []>} : vector<16x32xbf16>, vector<32x128xbf16>, vector<16x128xf32> -> vector<16x128xf32>
    %242 = arith.addf %235, %241 : vector<16x128xf32>
    %243 = arith.addf %6, %242 : vector<16x128xf32>
    %c0_169 = arith.constant 0 : index
    %c0_170 = arith.constant 0 : index
    %244 = vector.load %arg13[%c0_169, %c0_170] : memref<1x128xf32, #tpu.memory_space<vmem>>, vector<1x128xf32>
    %245 = vector.broadcast %244 : vector<1x128xf32> to vector<16x128xf32>
    %246 = arith.addf %243, %245 : vector<16x128xf32>
    %c0_171 = arith.constant 0 : index
    %c0_172 = arith.constant 0 : index
    %247 = vector.load %arg14[%c0_171, %c0_172] : memref<1x128xf32, #tpu.memory_space<vmem>>, vector<1x128xf32>
    %c0_173 = arith.constant 0 : index
    %c0_174 = arith.constant 0 : index
    %248 = vector.load %arg15[%c0_173, %c0_174] : memref<1x128xf32, #tpu.memory_space<vmem>>, vector<1x128xf32>
    %cst_175 = arith.constant dense<0.000000e+00> : vector<16xf32>
    %249 = vector.multi_reduction <add>, %246, %cst_175 [1] : vector<16x128xf32> to vector<16xf32>
    %250 = vector.shape_cast %249 : vector<16xf32> to vector<16x1xf32>
    %cst_176 = arith.constant 1.280000e+02 : f32
    %251 = vector.broadcast %cst_176 : f32 to vector<16x1xf32>
    %252 = arith.divf %250, %251 : vector<16x1xf32>
    %253 = vector.broadcast %252 : vector<16x1xf32> to vector<16x128xf32>
    %254 = arith.subf %246, %253 : vector<16x128xf32>
    %255 = arith.mulf %254, %254 : vector<16x128xf32>
    %cst_177 = arith.constant dense<0.000000e+00> : vector<16xf32>
    %256 = vector.multi_reduction <add>, %255, %cst_177 [1] : vector<16x128xf32> to vector<16xf32>
    %257 = vector.shape_cast %256 : vector<16xf32> to vector<16x1xf32>
    %cst_178 = arith.constant 1.280000e+02 : f32
    %258 = vector.broadcast %cst_178 : f32 to vector<16x1xf32>
    %259 = arith.divf %257, %258 : vector<16x1xf32>
    %260 = vector.broadcast %252 : vector<16x1xf32> to vector<16x128xf32>
    %261 = arith.subf %246, %260 : vector<16x128xf32>
    %cst_179 = arith.constant 9.99999996E-13 : f32
    %262 = vector.broadcast %cst_179 : f32 to vector<16x1xf32>
    %263 = arith.addf %259, %262 : vector<16x1xf32>
    %264 = math.rsqrt %263 : vector<16x1xf32>
    %265 = vector.broadcast %264 : vector<16x1xf32> to vector<16x128xf32>
    %266 = arith.mulf %261, %265 : vector<16x128xf32>
    %267 = vector.broadcast %247 : vector<1x128xf32> to vector<16x128xf32>
    %268 = arith.mulf %266, %267 : vector<16x128xf32>
    %269 = vector.broadcast %248 : vector<1x128xf32> to vector<16x128xf32>
    %270 = arith.addf %268, %269 : vector<16x128xf32>
    %271 = arith.truncf %270 : vector<16x128xf32> to vector<16x128xbf16>
    %c0_180 = arith.constant 0 : index
    %c0_181 = arith.constant 0 : index
    %272 = vector.load %arg16[%c0_180, %c0_181] : memref<128x256xbf16, #tpu.memory_space<vmem>>, vector<128x256xbf16>
    %cst_182 = arith.constant dense<0.000000e+00> : vector<16x256xf32>
    %273 = tpu.matmul %271, %272, %cst_182 {dimension_numbers = #tpu.dot_dimension_numbers<[1], [0], [0], [1], [0, 0, 1, 1], [], []>} : vector<16x128xbf16>, vector<128x256xbf16>, vector<16x256xf32> -> vector<16x256xf32>
    %c0_183 = arith.constant 0 : index
    %c0_184 = arith.constant 0 : index
    %274 = vector.load %arg17[%c0_183, %c0_184] : memref<1x256xf32, #tpu.memory_space<vmem>>, vector<1x256xf32>
    %275 = vector.broadcast %274 : vector<1x256xf32> to vector<16x256xf32>
    %276 = arith.addf %273, %275 : vector<16x256xf32>
    %cst_185 = arith.constant 0.000000e+00 : f32
    %277 = vector.broadcast %cst_185 : f32 to vector<16x256xf32>
    %278 = arith.maximumf %276, %277 : vector<16x256xf32>
    %279 = arith.truncf %278 : vector<16x256xf32> to vector<16x256xbf16>
    %c0_186 = arith.constant 0 : index
    %c0_187 = arith.constant 0 : index
    %280 = vector.load %arg18[%c0_186, %c0_187] : memref<256x128xbf16, #tpu.memory_space<vmem>>, vector<256x128xbf16>
    %cst_188 = arith.constant dense<0.000000e+00> : vector<16x128xf32>
    %281 = tpu.matmul %279, %280, %cst_188 {dimension_numbers = #tpu.dot_dimension_numbers<[1], [0], [0], [1], [0, 0, 1, 1], [], []>} : vector<16x256xbf16>, vector<256x128xbf16>, vector<16x128xf32> -> vector<16x128xf32>
    %c0_189 = arith.constant 0 : index
    %c0_190 = arith.constant 0 : index
    %282 = vector.load %arg19[%c0_189, %c0_190] : memref<1x128xf32, #tpu.memory_space<vmem>>, vector<1x128xf32>
    %283 = vector.broadcast %282 : vector<1x128xf32> to vector<16x128xf32>
    %284 = arith.addf %281, %283 : vector<16x128xf32>
    %285 = arith.addf %246, %284 : vector<16x128xf32>
    %c0_191 = arith.constant 0 : index
    %c0_192 = arith.constant 0 : index
    %c0_193 = arith.constant 0 : index
    %286 = vector.load %arg20[%c0_191, %c0_192, %c0_193] : memref<1x16x128xf32, #tpu.memory_space<vmem>>, vector<1x16x128xf32>
    %287 = vector.shape_cast %286 : vector<1x16x128xf32> to vector<16x128xf32>
    %288 = vector.shape_cast %285 : vector<16x128xf32> to vector<1x16x128xf32>
    tpu.vector_store %arg20[%c0_191, %c0_192, %c0_193], %288 {strides = array<i32>} : memref<1x16x128xf32, #tpu.memory_space<vmem>>, vector<1x16x128xf32>,
    return
  }
  func.func @transform_0(%arg0: i32, %arg1: i32) -> (i32, i32, i32) {
    %c0_i32 = arith.constant 0 : i32
    %c0_i32_0 = arith.constant 0 : i32
    %c0_i32_1 = arith.constant 0 : i32
    return %arg0, %c0_i32, %c0_i32_0 : i32, i32, i32
  }
  func.func @transform_1(%arg0: i32, %arg1: i32) -> (i32, i32, i32) {
    %c0_i32 = arith.constant 0 : i32
    %c0_i32_0 = arith.constant 0 : i32
    %c0_i32_1 = arith.constant 0 : i32
    return %arg0, %c0_i32, %c0_i32_0 : i32, i32, i32
  }
  func.func @transform_2(%arg0: i32, %arg1: i32) -> (i32, i32) {
    %c0_i32 = arith.constant 0 : i32
    %c0_i32_0 = arith.constant 0 : i32
    %c0_i32_1 = arith.constant 0 : i32
    return %c0_i32, %c0_i32_0 : i32, i32
  }
  func.func @transform_3(%arg0: i32, %arg1: i32) -> (i32, i32) {
    %c0_i32 = arith.constant 0 : i32
    %c0_i32_0 = arith.constant 0 : i32
    %c0_i32_1 = arith.constant 0 : i32
    return %c0_i32, %c0_i32_0 : i32, i32
  }
  func.func @transform_4(%arg0: i32, %arg1: i32) -> (i32, i32, i32) {
    %c0_i32 = arith.constant 0 : i32
    %c0_i32_0 = arith.constant 0 : i32
    %c0_i32_1 = arith.constant 0 : i32
    %c0_i32_2 = arith.constant 0 : i32
    return %c0_i32, %c0_i32_0, %c0_i32_1 : i32, i32, i32
  }
  func.func @transform_5(%arg0: i32, %arg1: i32) -> (i32, i32, i32) {
    %c0_i32 = arith.constant 0 : i32
    %c0_i32_0 = arith.constant 0 : i32
    %c0_i32_1 = arith.constant 0 : i32
    %c0_i32_2 = arith.constant 0 : i32
    return %c0_i32, %c0_i32_0, %c0_i32_1 : i32, i32, i32
  }
  func.func @transform_6(%arg0: i32, %arg1: i32) -> (i32, i32, i32) {
    %c0_i32 = arith.constant 0 : i32
    %c0_i32_0 = arith.constant 0 : i32
    %c0_i32_1 = arith.constant 0 : i32
    %c0_i32_2 = arith.constant 0 : i32
    return %c0_i32, %c0_i32_0, %c0_i32_1 : i32, i32, i32
  }
  func.func @transform_7(%arg0: i32, %arg1: i32) -> (i32, i32, i32) {
    %c0_i32 = arith.constant 0 : i32
    %c0_i32_0 = arith.constant 0 : i32
    %c0_i32_1 = arith.constant 0 : i32
    %c0_i32_2 = arith.constant 0 : i32
    return %c0_i32, %c0_i32_0, %c0_i32_1 : i32, i32, i32
  }
  func.func @transform_8(%arg0: i32, %arg1: i32) -> (i32, i32, i32) {
    %c0_i32 = arith.constant 0 : i32
    %c0_i32_0 = arith.constant 0 : i32
    %c0_i32_1 = arith.constant 0 : i32
    %c0_i32_2 = arith.constant 0 : i32
    return %c0_i32, %c0_i32_0, %c0_i32_1 : i32, i32, i32
  }
  func.func @transform_9(%arg0: i32, %arg1: i32) -> (i32, i32, i32) {
    %c0_i32 = arith.constant 0 : i32
    %c0_i32_0 = arith.constant 0 : i32
    %c0_i32_1 = arith.constant 0 : i32
    %c0_i32_2 = arith.constant 0 : i32
    return %c0_i32, %c0_i32_0, %c0_i32_1 : i32, i32, i32
  }
  func.func @transform_10(%arg0: i32, %arg1: i32) -> (i32, i32, i32) {
    %c0_i32 = arith.constant 0 : i32
    %c0_i32_0 = arith.constant 0 : i32
    %c0_i32_1 = arith.constant 0 : i32
    %c0_i32_2 = arith.constant 0 : i32
    return %c0_i32, %c0_i32_0, %c0_i32_1 : i32, i32, i32
  }
  func.func @transform_11(%arg0: i32, %arg1: i32) -> (i32, i32) {
    %c0_i32 = arith.constant 0 : i32
    %c0_i32_0 = arith.constant 0 : i32
    %c0_i32_1 = arith.constant 0 : i32
    return %c0_i32, %c0_i32_0 : i32, i32
  }
  func.func @transform_12(%arg0: i32, %arg1: i32) -> (i32, i32) {
    %c0_i32 = arith.constant 0 : i32
    %c0_i32_0 = arith.constant 0 : i32
    %c0_i32_1 = arith.constant 0 : i32
    return %c0_i32, %c0_i32_0 : i32, i32
  }
  func.func @transform_13(%arg0: i32, %arg1: i32) -> (i32, i32) {
    %c0_i32 = arith.constant 0 : i32
    %c0_i32_0 = arith.constant 0 : i32
    %c0_i32_1 = arith.constant 0 : i32
    return %c0_i32, %c0_i32_0 : i32, i32
  }
  func.func @transform_14(%arg0: i32, %arg1: i32) -> (i32, i32) {
    %c0_i32 = arith.constant 0 : i32
    %c0_i32_0 = arith.constant 0 : i32
    %c0_i32_1 = arith.constant 0 : i32
    return %c0_i32, %c0_i32_0 : i32, i32
  }
  func.func @transform_15(%arg0: i32, %arg1: i32) -> (i32, i32) {
    %c0_i32 = arith.constant 0 : i32
    %c0_i32_0 = arith.constant 0 : i32
    %c0_i32_1 = arith.constant 0 : i32
    return %c0_i32, %c0_i32_0 : i32, i32
  }
  func.func @transform_16(%arg0: i32, %arg1: i32) -> (i32, i32) {
    %c0_i32 = arith.constant 0 : i32
    %c0_i32_0 = arith.constant 0 : i32
    %c0_i32_1 = arith.constant 0 : i32
    return %c0_i32, %c0_i32_0 : i32, i32
  }
  func.func @transform_17(%arg0: i32, %arg1: i32) -> (i32, i32) {
    %c0_i32 = arith.constant 0 : i32
    %c0_i32_0 = arith.constant 0 : i32
    %c0_i32_1 = arith.constant 0 : i32
    return %c0_i32, %c0_i32_0 : i32, i32
  }
  func.func @transform_18(%arg0: i32, %arg1: i32) -> (i32, i32, i32) {
    %c0_i32 = arith.constant 0 : i32
    %c0_i32_0 = arith.constant 0 : i32
    return %arg0, %arg1, %c0_i32 : i32, i32, i32
  }
}

</mosaic_0001>

<llo_original>
// kernel: tpu_custom_call.1
$region0: #{tpu_custom_call.1}
  #allocation0 [shape = 'u32[]', space=smem, size = 0x4, offset = 0x4, fixed_abs, tag = 'smem constant byte address 0x4 - core index']
  #allocation1 [shape = 'u32[72,128]{1,0:T(1,128)}', space=vmem, size = 0x9000, scoped, tag = 'internal scratch']
  #allocation2 [shape = 'bf16[4,16,32]{2,1,0:T(8,128)(2,1)}', space=vmem, size = 0x4000, scoped, tag = 'scratch operand']
  #allocation3 [shape = 'bf16[4,16,32]{2,1,0:T(8,128)(2,1)}', space=vmem, size = 0x4000, scoped, tag = 'scratch operand']
  #allocation4 [shape = 'bf16[4,16,32]{2,1,0:T(8,128)(2,1)}', space=vmem, size = 0x4000, scoped, tag = 'scratch operand']
  %s0 = inlined_call_operand.vmem [shape: s32[2,1,16], index: 0, kind: input, shape index: {}]
  %s1 = inlined_call_operand.vmem [shape: f32[2,16,128], index: 1, kind: input, shape index: {}]
  %s2 = inlined_call_operand.vmem [shape: f32[1,128], index: 2, kind: input, shape index: {}]
  %s3 = inlined_call_operand.vmem [shape: f32[1,128], index: 3, kind: input, shape index: {}]
  %s4 = inlined_call_operand.vmem [shape: bf16[4,128,32], index: 4, kind: input, shape index: {}]
  %s5 = inlined_call_operand.vmem [shape: f32[4,1,32], index: 5, kind: input, shape index: {}]
  %s6 = inlined_call_operand.vmem [shape: bf16[4,128,32], index: 6, kind: input, shape index: {}]
  %s7 = inlined_call_operand.vmem [shape: f32[4,1,32], index: 7, kind: input, shape index: {}]
  %s8 = inlined_call_operand.vmem [shape: bf16[4,128,32], index: 8, kind: input, shape index: {}]
  %s9 = inlined_call_operand.vmem [shape: f32[4,1,32], index: 9, kind: input, shape index: {}]
  %s10 = inlined_call_operand.vmem [shape: bf16[4,32,128], index: 10, kind: input, shape index: {}]
  %s11 = inlined_call_operand.vmem [shape: f32[1,128], index: 11, kind: input, shape index: {}]
  %s12 = inlined_call_operand.vmem [shape: f32[1,128], index: 12, kind: input, shape index: {}]
  %s13 = inlined_call_operand.vmem [shape: f32[1,128], index: 13, kind: input, shape index: {}]
  %s14 = inlined_call_operand.vmem [shape: bf16[128,256], index: 14, kind: input, shape index: {}]
  %s15 = inlined_call_operand.vmem [shape: f32[1,256], index: 15, kind: input, shape index: {}]
  %s16 = inlined_call_operand.vmem [shape: bf16[256,128], index: 16, kind: input, shape index: {}]
  %s17 = inlined_call_operand.vmem [shape: f32[1,128], index: 17, kind: input, shape index: {}]
  %s18 = inlined_call_operand.hbm [shape: f32[2,16,128], index: 18, kind: output, shape index: {}]
  %s19 = sld [smem:[#allocation0]]
  $region105: #{tpu_custom_call.1} parent=0
    _
  %s21 = ssub.s32 1, %s19
  %s22 = scalar_select 0, %s21, %s19
  $region1: #{tpu_custom_call.1} parent=0
    #allocation5 [shape = 'u8[16384]{0}', space=vmem, size = 0x4000, scoped, tag = 'output window, operand 0']
    #allocation6 [shape = 's32[2]{0}', space=sflag, size = 0x8, scoped, tag = 'scoped memory for tpu_custom_call.1']
    %23 = vsyncpa [#allocation6], 0
    %s24 = scalar_lea.sflag [#allocation6], 1
    %25 = vsyncpa %s24, 0
    loop: start=0, step=1, limit=4
    $region2: #{tpu_custom_call.1} parent=1 // loop_pre_header
      _
    $region3: #{tpu_custom_call.1} parent=1 // loop_header
      %s27 = sphi 0, %s31
      %p28 = scmp.ge.s32.totalorder %s27, 4
      %s34 = sphi 0, %s46
      %s35 = sphi 0, %s42
      %s36 = sphi 0, %s34
      %s37 = sphi 0, %s35
      %s38 = sphi 0, %s36
      %s39 = sphi 0, %s37
      %s49 = sphi 0, %s51
      %s52 = sphi 0, %s49
      %s53 = sphi 0, %s52
      %s69 = sphi 0, %s53
      %s75 = sphi 0, %s77
      %s78 = sphi 0, %s75
      %s79 = sphi 0, %s78
      %s95 = sphi 0, %s79
      %s99 = sphi 0, %s99
      %s101 = sphi 0, %s99
      %s102 = sphi 0, %s101
      %s116 = sphi 0, %s102
      %s120 = sphi 0, %s120
      %s122 = sphi 0, %s120
      %s123 = sphi 0, %s122
      %s137 = sphi 0, %s123
      %s141 = sphi 0, %s141
      %s143 = sphi 0, %s141
      %s144 = sphi 0, %s143
      %s158 = sphi 0, %s144
      %s162 = sphi 0, %s162
      %s164 = sphi 0, %s162
      %s165 = sphi 0, %s164
      %s179 = sphi 0, %s165
      %s183 = sphi 0, %s183
      %s185 = sphi 0, %s183
      %s186 = sphi 0, %s185
      %s200 = sphi 0, %s186
      %s204 = sphi 0, %s204
      %s206 = sphi 0, %s204
      %s207 = sphi 0, %s206
      %s221 = sphi 0, %s207
      %s225 = sphi 0, %s225
      %s227 = sphi 0, %s225
      %s228 = sphi 0, %s227
      %s242 = sphi 0, %s228
      %s246 = sphi 0, %s246
      %s248 = sphi 0, %s246
      %s249 = sphi 0, %s248
      %s263 = sphi 0, %s249
      %s267 = sphi 0, %s267
      %s269 = sphi 0, %s267
      %s270 = sphi 0, %s269
      %s284 = sphi 0, %s270
      %s288 = sphi 0, %s288
      %s290 = sphi 0, %s288
      %s291 = sphi 0, %s290
      %s305 = sphi 0, %s291
      %s309 = sphi 0, %s309
      %s311 = sphi 0, %s309
      %s312 = sphi 0, %s311
      %s326 = sphi 0, %s312
      %s330 = sphi 0, %s330
      %s332 = sphi 0, %s330
      %s333 = sphi 0, %s332
      %s347 = sphi 0, %s333
      %s351 = sphi 0, %s351
      %s353 = sphi 0, %s351
      %s354 = sphi 0, %s353
      %s368 = sphi 0, %s354
      %s372 = sphi 0, %s372
      %s374 = sphi 0, %s372
      %s375 = sphi 0, %s374
      %s389 = sphi 0, %s375
      %s393 = sphi 0, %s393
      %s395 = sphi 0, %s393
      %s396 = sphi 0, %s395
      %s410 = sphi 0, %s396
      %s414 = sphi 0, %s414
      %s416 = sphi 0, %s414
      %s417 = sphi 0, %s416
      %s431 = sphi 0, %s417
      %s439 = sphi 0, %s441
      %s442 = sphi 0, %s439
      %s443 = sphi 0, %s442
      %s459 = sphi 0, %s443
    $region4: #{tpu_custom_call.1} parent=1 // loop_header_branch
      %30 = sbr.rel (%p28) target = $region8
    $region5: #{tpu_custom_call.1} parent=1 // loop_body
      %s32 = ssub.s32 %s27, 1
      %s33 = ssub.s32 %s27, 2
      %s40 = sadd.s32 1, %s35
      %p41 = scmp.ge.s32.totalorder %s40, 1
      %s42 = scalar_select %p41, 0, %s40
      %s43 = sadd.s32 1, %s34
      %s44 = scalar_select %p41, %s43, %s34
      %p45 = scmp.ge.s32.totalorder %s44, 2
      %s46 = scalar_select %p45, 0, %s44
      %s47 = ssub.s32 %s34, %s46
      %p48 = scmp.eq.s32.totalorder %s47, 0
      %s50 = sadd.s32 %s49, 1
      %s51 = scalar_select %p48, %s49, %s50
      %p54 = pneg %p48
      %p55 = scmp.eq.s32.totalorder %s27, 1
      %p56 = por %p54, %p55
      %p57 = scmp.ne.s32.totalorder %s49, %s52
      %p58 = scmp.eq.s32.totalorder %s27, 0
      %p59 = por %p57, %p58
      %p60 = scmp.ne.s32.totalorder %s49, %s52
      %p61 = scmp.eq.s32.totalorder %s32, 1
      %p62 = por %p60, %p61
      %p63 = scmp.ne.s32.totalorder %s52, %s53
      %p64 = scmp.eq.s32.totalorder %s32, 0
      %p65 = por %p63, %p64
      %p66 = scmp.ne.s32.totalorder %s52, %s53
      %p67 = scmp.eq.s32.totalorder %s33, 1
      %p68 = por %p66, %p67
      %p70 = scmp.ne.s32.totalorder %s53, %s69
      %p71 = scmp.eq.s32.totalorder %s33, 0
      %p72 = por %p70, %p71
      %s73 = ssub.s32 %s34, %s46
      %p74 = scmp.eq.s32.totalorder %s73, 0
      %s76 = sadd.s32 %s75, 1
      %s77 = scalar_select %p74, %s75, %s76
      %p80 = pneg %p74
      %p81 = scmp.eq.s32.totalorder %s27, 1
      %p82 = por %p80, %p81
      %p83 = scmp.ne.s32.totalorder %s75, %s78
      %p84 = scmp.eq.s32.totalorder %s27, 0
      %p85 = por %p83, %p84
      %p86 = scmp.ne.s32.totalorder %s75, %s78
      %p87 = scmp.eq.s32.totalorder %s32, 1
      %p88 = por %p86, %p87
      %p89 = scmp.ne.s32.totalorder %s78, %s79
      %p90 = scmp.eq.s32.totalorder %s32, 0
      %p91 = por %p89, %p90
      %p92 = scmp.ne.s32.totalorder %s78, %s79
      %p93 = scmp.eq.s32.totalorder %s33, 1
      %p94 = por %p92, %p93
      %p96 = scmp.ne.s32.totalorder %s79, %s95
      %p97 = scmp.eq.s32.totalorder %s33, 0
      %p98 = por %p96, %p97
      %s100 = sadd.s32 %s99, 1
      %p103 = scmp.eq.s32.totalorder %s27, 1
      %p104 = scmp.ne.s32.totalorder %s99, %s101
      %p105 = scmp.eq.s32.totalorder %s27, 0
      %p106 = por %p104, %p105
      %p107 = scmp.ne.s32.totalorder %s99, %s101
      %p108 = scmp.eq.s32.totalorder %s32, 1
      %p109 = por %p107, %p108
      %p110 = scmp.ne.s32.totalorder %s101, %s102
      %p111 = scmp.eq.s32.totalorder %s32, 0
      %p112 = por %p110, %p111
      %p113 = scmp.ne.s32.totalorder %s101, %s102
      %p114 = scmp.eq.s32.totalorder %s33, 1
      %p115 = por %p113, %p114
      %p117 = scmp.ne.s32.totalorder %s102, %s116
      %p118 = scmp.eq.s32.totalorder %s33, 0
      %p119 = por %p117, %p118
      %s121 = sadd.s32 %s120, 1
      %p124 = scmp.eq.s32.totalorder %s27, 1
      %p125 = scmp.ne.s32.totalorder %s120, %s122
      %p126 = scmp.eq.s32.totalorder %s27, 0
      %p127 = por %p125, %p126
      %p128 = scmp.ne.s32.totalorder %s120, %s122
      %p129 = scmp.eq.s32.totalorder %s32, 1
      %p130 = por %p128, %p129
      %p131 = scmp.ne.s32.totalorder %s122, %s123
      %p132 = scmp.eq.s32.totalorder %s32, 0
      %p133 = por %p131, %p132
      %p134 = scmp.ne.s32.totalorder %s122, %s123
      %p135 = scmp.eq.s32.totalorder %s33, 1
      %p136 = por %p134, %p135
      %p138 = scmp.ne.s32.totalorder %s123, %s137
      %p139 = scmp.eq.s32.totalorder %s33, 0
      %p140 = por %p138, %p139
      %s142 = sadd.s32 %s141, 1
      %p145 = scmp.eq.s32.totalorder %s27, 1
      %p146 = scmp.ne.s32.totalorder %s141, %s143
      %p147 = scmp.eq.s32.totalorder %s27, 0
      %p148 = por %p146, %p147
      %p149 = scmp.ne.s32.totalorder %s141, %s143
      %p150 = scmp.eq.s32.totalorder %s32, 1
      %p151 = por %p149, %p150
      %p152 = scmp.ne.s32.totalorder %s143, %s144
      %p153 = scmp.eq.s32.totalorder %s32, 0
      %p154 = por %p152, %p153
      %p155 = scmp.ne.s32.totalorder %s143, %s144
      %p156 = scmp.eq.s32.totalorder %s33, 1
      %p157 = por %p155, %p156
      %p159 = scmp.ne.s32.totalorder %s144, %s158
      %p160 = scmp.eq.s32.totalorder %s33, 0
      %p161 = por %p159, %p160
      %s163 = sadd.s32 %s162, 1
      %p166 = scmp.eq.s32.totalorder %s27, 1
      %p167 = scmp.ne.s32.totalorder %s162, %s164
      %p168 = scmp.eq.s32.totalorder %s27, 0
      %p169 = por %p167, %p168
      %p170 = scmp.ne.s32.totalorder %s162, %s164
      %p171 = scmp.eq.s32.totalorder %s32, 1
      %p172 = por %p170, %p171
      %p173 = scmp.ne.s32.totalorder %s164, %s165
      %p174 = scmp.eq.s32.totalorder %s32, 0
      %p175 = por %p173, %p174
      %p176 = scmp.ne.s32.totalorder %s164, %s165
      %p177 = scmp.eq.s32.totalorder %s33, 1
      %p178 = por %p176, %p177
      %p180 = scmp.ne.s32.totalorder %s165, %s179
      %p181 = scmp.eq.s32.totalorder %s33, 0
      %p182 = por %p180, %p181
      %s184 = sadd.s32 %s183, 1
      %p187 = scmp.eq.s32.totalorder %s27, 1
      %p188 = scmp.ne.s32.totalorder %s183, %s185
      %p189 = scmp.eq.s32.totalorder %s27, 0
      %p190 = por %p188, %p189
      %p191 = scmp.ne.s32.totalorder %s183, %s185
      %p192 = scmp.eq.s32.totalorder %s32, 1
      %p193 = por %p191, %p192
      %p194 = scmp.ne.s32.totalorder %s185, %s186
      %p195 = scmp.eq.s32.totalorder %s32, 0
      %p196 = por %p194, %p195
      %p197 = scmp.ne.s32.totalorder %s185, %s186
      %p198 = scmp.eq.s32.totalorder %s33, 1
      %p199 = por %p197, %p198
      %p201 = scmp.ne.s32.totalorder %s186, %s200
      %p202 = scmp.eq.s32.totalorder %s33, 0
      %p203 = por %p201, %p202
      %s205 = sadd.s32 %s204, 1
      %p208 = scmp.eq.s32.totalorder %s27, 1
      %p209 = scmp.ne.s32.totalorder %s204, %s206
      %p210 = scmp.eq.s32.totalorder %s27, 0
      %p211 = por %p209, %p210
      %p212 = scmp.ne.s32.totalorder %s204, %s206
      %p213 = scmp.eq.s32.totalorder %s32, 1
      %p214 = por %p212, %p213
      %p215 = scmp.ne.s32.totalorder %s206, %s207
      %p216 = scmp.eq.s32.totalorder %s32, 0
      %p217 = por %p215, %p216
      %p218 = scmp.ne.s32.totalorder %s206, %s207
      %p219 = scmp.eq.s32.totalorder %s33, 1
      %p220 = por %p218, %p219
      %p222 = scmp.ne.s32.totalorder %s207, %s221
      %p223 = scmp.eq.s32.totalorder %s33, 0
      %p224 = por %p222, %p223
      %s226 = sadd.s32 %s225, 1
      %p229 = scmp.eq.s32.totalorder %s27, 1
      %p230 = scmp.ne.s32.totalorder %s225, %s227
      %p231 = scmp.eq.s32.totalorder %s27, 0
      %p232 = por %p230, %p231
      %p233 = scmp.ne.s32.totalorder %s225, %s227
      %p234 = scmp.eq.s32.totalorder %s32, 1
      %p235 = por %p233, %p234
      %p236 = scmp.ne.s32.totalorder %s227, %s228
      %p237 = scmp.eq.s32.totalorder %s32, 0
      %p238 = por %p236, %p237
      %p239 = scmp.ne.s32.totalorder %s227, %s228
      %p240 = scmp.eq.s32.totalorder %s33, 1
      %p241 = por %p239, %p240
      %p243 = scmp.ne.s32.totalorder %s228, %s242
      %p244 = scmp.eq.s32.totalorder %s33, 0
      %p245 = por %p243, %p244
      %s247 = sadd.s32 %s246, 1
      %p250 = scmp.eq.s32.totalorder %s27, 1
      %p251 = scmp.ne.s32.totalorder %s246, %s248
      %p252 = scmp.eq.s32.totalorder %s27, 0
      %p253 = por %p251, %p252
      %p254 = scmp.ne.s32.totalorder %s246, %s248
      %p255 = scmp.eq.s32.totalorder %s32, 1
      %p256 = por %p254, %p255
      %p257 = scmp.ne.s32.totalorder %s248, %s249
      %p258 = scmp.eq.s32.totalorder %s32, 0
      %p259 = por %p257, %p258
      %p260 = scmp.ne.s32.totalorder %s248, %s249
      %p261 = scmp.eq.s32.totalorder %s33, 1
      %p262 = por %p260, %p261
      %p264 = scmp.ne.s32.totalorder %s249, %s263
      %p265 = scmp.eq.s32.totalorder %s33, 0
      %p266 = por %p264, %p265
      %s268 = sadd.s32 %s267, 1
      %p271 = scmp.eq.s32.totalorder %s27, 1
      %p272 = scmp.ne.s32.totalorder %s267, %s269
      %p273 = scmp.eq.s32.totalorder %s27, 0
      %p274 = por %p272, %p273
      %p275 = scmp.ne.s32.totalorder %s267, %s269
      %p276 = scmp.eq.s32.totalorder %s32, 1
      %p277 = por %p275, %p276
      %p278 = scmp.ne.s32.totalorder %s269, %s270
      %p279 = scmp.eq.s32.totalorder %s32, 0
      %p280 = por %p278, %p279
      %p281 = scmp.ne.s32.totalorder %s269, %s270
      %p282 = scmp.eq.s32.totalorder %s33, 1
      %p283 = por %p281, %p282
      %p285 = scmp.ne.s32.totalorder %s270, %s284
      %p286 = scmp.eq.s32.totalorder %s33, 0
      %p287 = por %p285, %p286
      %s289 = sadd.s32 %s288, 1
      %p292 = scmp.eq.s32.totalorder %s27, 1
      %p293 = scmp.ne.s32.totalorder %s288, %s290
      %p294 = scmp.eq.s32.totalorder %s27, 0
      %p295 = por %p293, %p294
      %p296 = scmp.ne.s32.totalorder %s288, %s290
      %p297 = scmp.eq.s32.totalorder %s32, 1
      %p298 = por %p296, %p297
      %p299 = scmp.ne.s32.totalorder %s290, %s291
      %p300 = scmp.eq.s32.totalorder %s32, 0
      %p301 = por %p299, %p300
      %p302 = scmp.ne.s32.totalorder %s290, %s291
      %p303 = scmp.eq.s32.totalorder %s33, 1
      %p304 = por %p302, %p303
      %p306 = scmp.ne.s32.totalorder %s291, %s305
      %p307 = scmp.eq.s32.totalorder %s33, 0
      %p308 = por %p306, %p307
      %s310 = sadd.s32 %s309, 1
      %p313 = scmp.eq.s32.totalorder %s27, 1
      %p314 = scmp.ne.s32.totalorder %s309, %s311
      %p315 = scmp.eq.s32.totalorder %s27, 0
      %p316 = por %p314, %p315
      %p317 = scmp.ne.s32.totalorder %s309, %s311
      %p318 = scmp.eq.s32.totalorder %s32, 1
      %p319 = por %p317, %p318
      %p320 = scmp.ne.s32.totalorder %s311, %s312
      %p321 = scmp.eq.s32.totalorder %s32, 0
      %p322 = por %p320, %p321
      %p323 = scmp.ne.s32.totalorder %s311, %s312
      %p324 = scmp.eq.s32.totalorder %s33, 1
      %p325 = por %p323, %p324
      %p327 = scmp.ne.s32.totalorder %s312, %s326
      %p328 = scmp.eq.s32.totalorder %s33, 0
      %p329 = por %p327, %p328
      %s331 = sadd.s32 %s330, 1
      %p334 = scmp.eq.s32.totalorder %s27, 1
      %p335 = scmp.ne.s32.totalorder %s330, %s332
      %p336 = scmp.eq.s32.totalorder %s27, 0
      %p337 = por %p335, %p336
      %p338 = scmp.ne.s32.totalorder %s330, %s332
      %p339 = scmp.eq.s32.totalorder %s32, 1
      %p340 = por %p338, %p339
      %p341 = scmp.ne.s32.totalorder %s332, %s333
      %p342 = scmp.eq.s32.totalorder %s32, 0
      %p343 = por %p341, %p342
      %p344 = scmp.ne.s32.totalorder %s332, %s333
      %p345 = scmp.eq.s32.totalorder %s33, 1
      %p346 = por %p344, %p345
      %p348 = scmp.ne.s32.totalorder %s333, %s347
      %p349 = scmp.eq.s32.totalorder %s33, 0
      %p350 = por %p348, %p349
      %s352 = sadd.s32 %s351, 1
      %p355 = scmp.eq.s32.totalorder %s27, 1
      %p356 = scmp.ne.s32.totalorder %s351, %s353
      %p357 = scmp.eq.s32.totalorder %s27, 0
      %p358 = por %p356, %p357
      %p359 = scmp.ne.s32.totalorder %s351, %s353
      %p360 = scmp.eq.s32.totalorder %s32, 1
      %p361 = por %p359, %p360
      %p362 = scmp.ne.s32.totalorder %s353, %s354
      %p363 = scmp.eq.s32.totalorder %s32, 0
      %p364 = por %p362, %p363
      %p365 = scmp.ne.s32.totalorder %s353, %s354
      %p366 = scmp.eq.s32.totalorder %s33, 1
      %p367 = por %p365, %p366
      %p369 = scmp.ne.s32.totalorder %s354, %s368
      %p370 = scmp.eq.s32.totalorder %s33, 0
      %p371 = por %p369, %p370
      %s373 = sadd.s32 %s372, 1
      %p376 = scmp.eq.s32.totalorder %s27, 1
      %p377 = scmp.ne.s32.totalorder %s372, %s374
      %p378 = scmp.eq.s32.totalorder %s27, 0
      %p379 = por %p377, %p378
      %p380 = scmp.ne.s32.totalorder %s372, %s374
      %p381 = scmp.eq.s32.totalorder %s32, 1
      %p382 = por %p380, %p381
      %p383 = scmp.ne.s32.totalorder %s374, %s375
      %p384 = scmp.eq.s32.totalorder %s32, 0
      %p385 = por %p383, %p384
      %p386 = scmp.ne.s32.totalorder %s374, %s375
      %p387 = scmp.eq.s32.totalorder %s33, 1
      %p388 = por %p386, %p387
      %p390 = scmp.ne.s32.totalorder %s375, %s389
      %p391 = scmp.eq.s32.totalorder %s33, 0
      %p392 = por %p390, %p391
      %s394 = sadd.s32 %s393, 1
      %p397 = scmp.eq.s32.totalorder %s27, 1
      %p398 = scmp.ne.s32.totalorder %s393, %s395
      %p399 = scmp.eq.s32.totalorder %s27, 0
      %p400 = por %p398, %p399
      %p401 = scmp.ne.s32.totalorder %s393, %s395
      %p402 = scmp.eq.s32.totalorder %s32, 1
      %p403 = por %p401, %p402
      %p404 = scmp.ne.s32.totalorder %s395, %s396
      %p405 = scmp.eq.s32.totalorder %s32, 0
      %p406 = por %p404, %p405
      %p407 = scmp.ne.s32.totalorder %s395, %s396
      %p408 = scmp.eq.s32.totalorder %s33, 1
      %p409 = por %p407, %p408
      %p411 = scmp.ne.s32.totalorder %s396, %s410
      %p412 = scmp.eq.s32.totalorder %s33, 0
      %p413 = por %p411, %p412
      %s415 = sadd.s32 %s414, 1
      %p418 = scmp.eq.s32.totalorder %s27, 1
      %p419 = scmp.ne.s32.totalorder %s414, %s416
      %p420 = scmp.eq.s32.totalorder %s27, 0
      %p421 = por %p419, %p420
      %p422 = scmp.ne.s32.totalorder %s414, %s416
      %p423 = scmp.eq.s32.totalorder %s32, 1
      %p424 = por %p422, %p423
      %p425 = scmp.ne.s32.totalorder %s416, %s417
      %p426 = scmp.eq.s32.totalorder %s32, 0
      %p427 = por %p425, %p426
      %p428 = scmp.ne.s32.totalorder %s416, %s417
      %p429 = scmp.eq.s32.totalorder %s33, 1
      %p430 = por %p428, %p429
      %p432 = scmp.ne.s32.totalorder %s417, %s431
      %p433 = scmp.eq.s32.totalorder %s33, 0
      %p434 = por %p432, %p433
      %s435 = ssub.s32 %s34, %s46
      %s436 = ssub.s32 %s35, %s42
      %s437 = sor.u32 %s435, %s436
      %p438 = scmp.eq.s32.totalorder %s437, 0
      %s440 = sadd.s32 %s439, 1
      %s441 = scalar_select %p438, %s439, %s440
      %p444 = pneg %p438
      %p445 = scmp.eq.s32.totalorder %s27, 1
      %p446 = por %p444, %p445
      %p447 = scmp.ne.s32.totalorder %s439, %s442
      %p448 = scmp.eq.s32.totalorder %s27, 0
      %p449 = por %p447, %p448
      %p450 = scmp.ne.s32.totalorder %s439, %s442
      %p451 = scmp.eq.s32.totalorder %s32, 1
      %p452 = por %p450, %p451
      %p453 = scmp.ne.s32.totalorder %s442, %s443
      %p454 = scmp.eq.s32.totalorder %s32, 0
      %p455 = por %p453, %p454
      %p456 = scmp.ne.s32.totalorder %s442, %s443
      %p457 = scmp.eq.s32.totalorder %s33, 1
      %p458 = por %p456, %p457
      %p460 = scmp.ne.s32.totalorder %s443, %s459
      %p461 = scmp.eq.s32.totalorder %s33, 0
      %p462 = por %p460, %p461
      %p463 = scmp.le.s32.totalorder 1, %s27
      %p464 = scmp.lt.s32.totalorder %s27, 3
      %p465 = pnand %p463, %p464
      %p466 = pneg %p465
      // Predicated region
      $region9: #{tpu_custom_call.1} parent=5 // pred_check
        _
      $region10: #{tpu_custom_call.1} parent=5 // pred_check_branch
        %468 = sbr.rel (%p465) target = $region12
      $region11: #{tpu_custom_call.1} parent=5 // pred_region
        %s469 = ssub.s32 %s27, 1
        // Predicated region
        $region13: #{tpu_custom_call.1} parent=11 // pred_check
          %p470 = pneg %p112
        $region14: #{tpu_custom_call.1} parent=11 // pred_check_branch
          %472 = sbr.rel (%p470) target = $region16
        $region15: #{tpu_custom_call.1} parent=11 // pred_region
          _
        $region16: #{tpu_custom_call.1} parent=11 // pred_fallthru
          _
        // Predicated region
        $region17: #{tpu_custom_call.1} parent=11 // pred_check
          %p473 = pneg %p133
        $region18: #{tpu_custom_call.1} parent=11 // pred_check_branch
          %475 = sbr.rel (%p473) target = $region20
        $region19: #{tpu_custom_call.1} parent=11 // pred_region
          _
        $region20: #{tpu_custom_call.1} parent=11 // pred_fallthru
          _
        // Predicated region
        $region21: #{tpu_custom_call.1} parent=11 // pred_check
          %p476 = pneg %p154
        $region22: #{tpu_custom_call.1} parent=11 // pred_check_branch
          %478 = sbr.rel (%p476) target = $region24
        $region23: #{tpu_custom_call.1} parent=11 // pred_region
          _
        $region24: #{tpu_custom_call.1} parent=11 // pred_fallthru
          _
        // Predicated region
        $region25: #{tpu_custom_call.1} parent=11 // pred_check
          %p479 = pneg %p175
        $region26: #{tpu_custom_call.1} parent=11 // pred_check_branch
          %481 = sbr.rel (%p479) target = $region28
        $region27: #{tpu_custom_call.1} parent=11 // pred_region
          _
        $region28: #{tpu_custom_call.1} parent=11 // pred_fallthru
          _
        // Predicated region
        $region29: #{tpu_custom_call.1} parent=11 // pred_check
          %p482 = pneg %p196
        $region30: #{tpu_custom_call.1} parent=11 // pred_check_branch
          %484 = sbr.rel (%p482) target = $region32
        $region31: #{tpu_custom_call.1} parent=11 // pred_region
          _
        $region32: #{tpu_custom_call.1} parent=11 // pred_fallthru
          _
        // Predicated region
        $region33: #{tpu_custom_call.1} parent=11 // pred_check
          %p485 = pneg %p217
        $region34: #{tpu_custom_call.1} parent=11 // pred_check_branch
          %487 = sbr.rel (%p485) target = $region36
        $region35: #{tpu_custom_call.1} parent=11 // pred_region
          _
        $region36: #{tpu_custom_call.1} parent=11 // pred_fallthru
          _
        // Predicated region
        $region37: #{tpu_custom_call.1} parent=11 // pred_check
          %p488 = pneg %p238
        $region38: #{tpu_custom_call.1} parent=11 // pred_check_branch
          %490 = sbr.rel (%p488) target = $region40
        $region39: #{tpu_custom_call.1} parent=11 // pred_region
          _
        $region40: #{tpu_custom_call.1} parent=11 // pred_fallthru
          _
        // Predicated region
        $region41: #{tpu_custom_call.1} parent=11 // pred_check
          %p491 = pneg %p259
        $region42: #{tpu_custom_call.1} parent=11 // pred_check_branch
          %493 = sbr.rel (%p491) target = $region44
        $region43: #{tpu_custom_call.1} parent=11 // pred_region
          _
        $region44: #{tpu_custom_call.1} parent=11 // pred_fallthru
          _
        // Predicated region
        $region45: #{tpu_custom_call.1} parent=11 // pred_check
          %p494 = pneg %p280
        $region46: #{tpu_custom_call.1} parent=11 // pred_check_branch
          %496 = sbr.rel (%p494) target = $region48
        $region47: #{tpu_custom_call.1} parent=11 // pred_region
          _
        $region48: #{tpu_custom_call.1} parent=11 // pred_fallthru
          _
        // Predicated region
        $region49: #{tpu_custom_call.1} parent=11 // pred_check
          %p497 = pneg %p301
        $region50: #{tpu_custom_call.1} parent=11 // pred_check_branch
          %499 = sbr.rel (%p497) target = $region52
        $region51: #{tpu_custom_call.1} parent=11 // pred_region
          _
        $region52: #{tpu_custom_call.1} parent=11 // pred_fallthru
          _
        // Predicated region
        $region53: #{tpu_custom_call.1} parent=11 // pred_check
          %p500 = pneg %p322
        $region54: #{tpu_custom_call.1} parent=11 // pred_check_branch
          %502 = sbr.rel (%p500) target = $region56
        $region55: #{tpu_custom_call.1} parent=11 // pred_region
          _
        $region56: #{tpu_custom_call.1} parent=11 // pred_fallthru
          _
        // Predicated region
        $region57: #{tpu_custom_call.1} parent=11 // pred_check
          %p503 = pneg %p343
        $region58: #{tpu_custom_call.1} parent=11 // pred_check_branch
          %505 = sbr.rel (%p503) target = $region60
        $region59: #{tpu_custom_call.1} parent=11 // pred_region
          _
        $region60: #{tpu_custom_call.1} parent=11 // pred_fallthru
          _
        // Predicated region
        $region61: #{tpu_custom_call.1} parent=11 // pred_check
          %p506 = pneg %p364
        $region62: #{tpu_custom_call.1} parent=11 // pred_check_branch
          %508 = sbr.rel (%p506) target = $region64
        $region63: #{tpu_custom_call.1} parent=11 // pred_region
          _
        $region64: #{tpu_custom_call.1} parent=11 // pred_fallthru
          _
        // Predicated region
        $region65: #{tpu_custom_call.1} parent=11 // pred_check
          %p509 = pneg %p385
        $region66: #{tpu_custom_call.1} parent=11 // pred_check_branch
          %511 = sbr.rel (%p509) target = $region68
        $region67: #{tpu_custom_call.1} parent=11 // pred_region
          _
        $region68: #{tpu_custom_call.1} parent=11 // pred_fallthru
          _
        // Predicated region
        $region69: #{tpu_custom_call.1} parent=11 // pred_check
          %p512 = pneg %p406
        $region70: #{tpu_custom_call.1} parent=11 // pred_check_branch
          %514 = sbr.rel (%p512) target = $region72
        $region71: #{tpu_custom_call.1} parent=11 // pred_region
          _
        $region72: #{tpu_custom_call.1} parent=11 // pred_fallthru
          _
        // Predicated region
        $region73: #{tpu_custom_call.1} parent=11 // pred_check
          %p515 = pneg %p427
        $region74: #{tpu_custom_call.1} parent=11 // pred_check_branch
          %517 = sbr.rel (%p515) target = $region76
        $region75: #{tpu_custom_call.1} parent=11 // pred_region
          _
        $region76: #{tpu_custom_call.1} parent=11 // pred_fallthru
          _
      $region12: #{tpu_custom_call.1} parent=5 // pred_fallthru
        _
      %p518 = scmp.lt.s32.totalorder %s27, 2
      // Predicated region
      $region77: #{tpu_custom_call.1} parent=5 // pred_check
        %p519 = pneg %p518
      $region78: #{tpu_custom_call.1} parent=5 // pred_check_branch
        %521 = sbr.rel (%p519) target = $region80
      $region79: #{tpu_custom_call.1} parent=5 // pred_region
        // Predicated region
        $region81: #{tpu_custom_call.1} parent=79 // pred_check
          %p522 = pneg %p59
        $region82: #{tpu_custom_call.1} parent=79 // pred_check_branch
          %524 = sbr.rel (%p522) target = $region84
        $region83: #{tpu_custom_call.1} parent=79 // pred_region
          %p525 = scmp.lt.s32.totalorder %s34, 1
          %s526 = scalar_select %p525, %s34, 1
          %s527 = scalar_lea.vmem %s0, %s526
        $region84: #{tpu_custom_call.1} parent=79 // pred_fallthru
          _
        // Predicated region
        $region85: #{tpu_custom_call.1} parent=79 // pred_check
          %p528 = pneg %p85
        $region86: #{tpu_custom_call.1} parent=79 // pred_check_branch
          %530 = sbr.rel (%p528) target = $region88
        $region87: #{tpu_custom_call.1} parent=79 // pred_region
          %p531 = scmp.lt.s32.totalorder %s34, 1
          %s532 = scalar_select %p531, %s34, 1
          %s533 = smul.addr %s532, 2
          %s534 = smul.addr %s533, 8
          %s535 = scalar_lea.vmem %s1, %s534
        $region88: #{tpu_custom_call.1} parent=79 // pred_fallthru
          _
      $region80: #{tpu_custom_call.1} parent=5 // pred_fallthru
        _
      %p536 = scmp.le.s32.totalorder 1, %s27
      %p537 = scmp.lt.s32.totalorder %s27, 3
      %p538 = pnand %p536, %p537
      %p539 = pneg %p538
      // Predicated region
      $region89: #{tpu_custom_call.1} parent=5 // pred_check
        _
      $region90: #{tpu_custom_call.1} parent=5 // pred_check_branch
        %541 = sbr.rel (%p538) target = $region92
      $region91: #{tpu_custom_call.1} parent=5 // pred_region
        %s542 = ssub.s32 %s27, 1
        %p543 = scmp.lt.s32.totalorder %s36, 1
        %s544 = scalar_select %p543, %s36, 1
        %s545 = scalar_lea.vmem %s0, %s544
        %p546 = pneg %p65
        %p547 = pneg %p62
        %p548 = scmp.lt.s32.totalorder %s36, 1
        %s549 = scalar_select %p548, %s36, 1
        %s550 = smul.addr %s549, 2
        %s551 = smul.addr %s550, 8
        %s552 = scalar_lea.vmem %s1, %s551
        %p553 = pneg %p91
        %p554 = pneg %p88
        %p555 = pneg %p112
        %p556 = pneg %p109
        %p557 = pneg %p133
        %p558 = pneg %p130
        %p559 = pneg %p154
        %p560 = pneg %p151
        %p561 = pneg %p175
        %p562 = pneg %p172
        %p563 = pneg %p196
        %p564 = pneg %p193
        %p565 = pneg %p217
        %p566 = pneg %p214
        %p567 = pneg %p238
        %p568 = pneg %p235
        %p569 = pneg %p259
        %p570 = pneg %p256
        %p571 = pneg %p280
        %p572 = pneg %p277
        %p573 = pneg %p301
        %p574 = pneg %p298
        %p575 = pneg %p322
        %p576 = pneg %p319
        %p577 = pneg %p343
        %p578 = pneg %p340
        %p579 = pneg %p364
        %p580 = pneg %p361
        %p581 = pneg %p385
        %p582 = pneg %p382
        %p583 = pneg %p406
        %p584 = pneg %p403
        %p585 = pneg %p427
        %p586 = pneg %p424
        %p587 = pneg %p455
        %p588 = pneg %p452
        %s589 = sand.u32 %s442, 1
        %s590 = scalar_lea.sflag [#allocation6], %s589
        %s591 = sand.u32 %s442, 1
        %s592 = smul.addr %s591, 16
        %s593 = scalar_lea.vmem [#allocation5], %s592
        %p594 = scmp.lt.s32.totalorder %s36, 1
        %s595 = scalar_select %p594, %s36, 1
        %s596 = scalar_lea.vmem %s0, %s595
        %p597 = scmp.lt.s32.totalorder %s36, 1
        %s598 = scalar_select %p597, %s36, 1
        %s599 = smul.addr %s598, 2
        %s600 = smul.addr %s599, 8
        %s601 = scalar_lea.vmem %s1, %s600
        %s602 = smul.u32 2, %s37
        %v604 = vld [vmem:[%s601] sm:$0xff]
        %v605 = vld [vmem:[%s601 + $0x8] sm:$0xff]
        %s606 = smul.u32 %s37, 16
        %s607 = scalar_lea.vmem %s601, %s606
        %v608 = vld [vmem:[%s607] sm:$0xff]
        %v609 = vld [vmem:[%s607 + $0x8] sm:$0xff]
        %v610 = vld [vmem:[%s596] sm:$0x1]
        %vm611 = vcmp.eq.s32.totalorder %v610, 0
        %v612 = vld [vmem:[%s2] sm:$0x1]
        %v613 = vld [vmem:[%s3] sm:$0x1]
        %614 = vadd.xlane.f32.xlu0 %v604
        %v615 = vpop.xlane.xlu0 %614
        %616 = vadd.xlane.f32.xlu0 %v605
        %v617 = vpop.xlane.xlu0 %616
        %v618 = vrcp.pop 128.0
        %v619 = vmul.f32 128.0, %v618
        %v620 = vsub.f32 1.0, %v619
        %v621 = vmul.f32 %v618, %v620
        %v622 = vadd.f32 %v618, %v621
        %vm623 = vweird.f32 %v618
        %v624 = vsel %vm623, %v618, %v622
        %v625 = vmul.f32 %v615, %v624
        %v626 = vmul.f32 %v617, %v624
        %v627 = vsub.f32 %v604, %v625
        %v628 = vsub.f32 %v605, %v626
        %v629 = vmul.f32 %v627, %v627
        %v630 = vmul.f32 %v628, %v628
        %631 = vadd.xlane.f32.xlu0 %v629
        %v632 = vpop.xlane.xlu0 %631
        %633 = vadd.xlane.f32.xlu0 %v630
        %v634 = vpop.xlane.xlu0 %633
        %v635 = vmul.f32 %v632, %v624
        %v636 = vmul.f32 %v634, %v624
        %v637 = vadd.f32 %v635, 1e-12
        %v638 = vadd.f32 %v636, 1e-12
        %v639 = vrsqrt.pop %v637
        %v640 = vmul.f32 %v639, %v637
        %v641 = vmul.f32 %v640, %v639
        %v642 = vmul.f32 0.5, %v641
        %v643 = vsub.f32 1.5, %v642
        %v644 = vmul.f32 %v639, %v643
        %vm645 = vweird.f32 %v637
        %vm646 = vweird.f32 %v639
        %vm647 = vmor %vm645, %vm646
        %v648 = vsel %vm647, %v639, %v644
        %v649 = vrsqrt.pop %v638
        %v650 = vmul.f32 %v649, %v638
        %v651 = vmul.f32 %v650, %v649
        %v652 = vmul.f32 0.5, %v651
        %v653 = vsub.f32 1.5, %v652
        %v654 = vmul.f32 %v649, %v653
        %vm655 = vweird.f32 %v638
        %vm656 = vweird.f32 %v649
        %vm657 = vmor %vm655, %vm656
        %v658 = vsel %vm657, %v649, %v654
        %v659 = vmul.f32 %v627, %v648
        %v660 = vmul.f32 %v628, %v658
        %v662 = vperm.slane %v612, 0
        %v664 = vmul.f32 %v659, %v662
        %v665 = vmul.f32 %v660, %v662
        %v667 = vperm.slane %v613, 0
        %v669 = vadd.f32 %v664, %v667
        %v670 = vadd.f32 %v665, %v667
        %v671 = vpack.c.bf16 %v670, %v669
        %672 = vadd.xlane.f32.xlu0 %v608
        %v673 = vpop.xlane.xlu0 %672
        %674 = vadd.xlane.f32.xlu0 %v609
        %v675 = vpop.xlane.xlu0 %674
        %v676 = vmul.f32 %v673, %v624
        %v677 = vmul.f32 %v675, %v624
        %v678 = vsub.f32 %v608, %v676
        %v679 = vsub.f32 %v609, %v677
        %v680 = vmul.f32 %v678, %v678
        %v681 = vmul.f32 %v679, %v679
        %682 = vadd.xlane.f32.xlu0 %v680
        %v683 = vpop.xlane.xlu0 %682
        %684 = vadd.xlane.f32.xlu0 %v681
        %v685 = vpop.xlane.xlu0 %684
        %v686 = vmul.f32 %v683, %v624
        %v687 = vmul.f32 %v685, %v624
        %v688 = vadd.f32 %v686, 1e-12
        %v689 = vadd.f32 %v687, 1e-12
        %v690 = vrsqrt.pop %v688
        %v691 = vmul.f32 %v690, %v688
        %v692 = vmul.f32 %v691, %v690
        %v693 = vmul.f32 0.5, %v692
        %v694 = vsub.f32 1.5, %v693
        %v695 = vmul.f32 %v690, %v694
        %vm696 = vweird.f32 %v688
        %vm697 = vweird.f32 %v690
        %vm698 = vmor %vm696, %vm697
        %v699 = vsel %vm698, %v690, %v695
        %v700 = vrsqrt.pop %v689
        %v701 = vmul.f32 %v700, %v689
        %v702 = vmul.f32 %v701, %v700
        %v703 = vmul.f32 0.5, %v702
        %v704 = vsub.f32 1.5, %v703
        %v705 = vmul.f32 %v700, %v704
        %vm706 = vweird.f32 %v689
        %vm707 = vweird.f32 %v700
        %vm708 = vmor %vm706, %vm707
        %v709 = vsel %vm708, %v700, %v705
        %v710 = vmul.f32 %v678, %v699
        %v711 = vmul.f32 %v679, %v709
        %v712 = vmul.f32 %v710, %v662
        %v713 = vmul.f32 %v711, %v662
        %v714 = vadd.f32 %v712, %v667
        %v715 = vadd.f32 %v713, %v667
        %v716 = vpack.c.bf16 %v715, %v714
        %v717 = vld [vmem:[%s4] sm:$0xf]
        %v718 = vld [vmem:[%s4 + $0x4] sm:$0xf]
        %v719 = vld [vmem:[%s4 + $0x8] sm:$0xf]
        %v720 = vld [vmem:[%s4 + $0xc] sm:$0xf]
        %v721 = vld [vmem:[%s4 + $0x10] sm:$0xf]
        %v722 = vld [vmem:[%s4 + $0x14] sm:$0xf]
        %v723 = vld [vmem:[%s4 + $0x18] sm:$0xf]
        %v724 = vld [vmem:[%s4 + $0x1c] sm:$0xf]
        %v725 = vld [vmem:[%s4 + $0x20] sm:$0xf]
        %v726 = vld [vmem:[%s4 + $0x24] sm:$0xf]
        %v727 = vld [vmem:[%s4 + $0x28] sm:$0xf]
        %v728 = vld [vmem:[%s4 + $0x2c] sm:$0xf]
        %v729 = vld [vmem:[%s4 + $0x30] sm:$0xf]
        %v730 = vld [vmem:[%s4 + $0x34] sm:$0xf]
        %v731 = vld [vmem:[%s4 + $0x38] sm:$0xf]
        %v732 = vld [vmem:[%s4 + $0x3c] sm:$0xf]
        %v733 = vld [vmem:[%s5] sm:$0x1]
        %v735 = vperm.slane %v733, 0
        %v753 = vunpack.c.l.b16 %v717
        %v754 = vunpack.c.l.b16 %v718
        %v755 = vunpack.c.l.b16 %v719
        %v756 = vunpack.c.l.b16 %v720
        %v757 = vunpack.c.l.b16 %v721
        %v758 = vunpack.c.l.b16 %v722
        %v759 = vunpack.c.l.b16 %v723
        %v760 = vunpack.c.l.b16 %v724
        %v761 = vunpack.c.l.b16 %v725
        %v762 = vunpack.c.l.b16 %v726
        %v763 = vunpack.c.l.b16 %v727
        %v764 = vunpack.c.l.b16 %v728
        %v765 = vunpack.c.l.b16 %v729
        %v766 = vunpack.c.l.b16 %v730
        %v767 = vunpack.c.l.b16 %v731
        %v768 = vunpack.c.l.b16 %v732
        %v769 = vpack.c.b16 %v754, %v753
        %v770 = vpack.c.b16 %v756, %v755
        %v771 = vpack.c.b16 %v758, %v757
        %v772 = vpack.c.b16 %v760, %v759
        %v773 = vpack.c.b16 %v762, %v761
        %v774 = vpack.c.b16 %v764, %v763
        %v775 = vpack.c.b16 %v766, %v765
        %v776 = vpack.c.b16 %v768, %v767
        %785 = vmatpush.bf16.msra.mxu0 %v776
        %786 = vmatpush.bf16.msra.mxu0 %v775
        %787 = vmatpush.bf16.msra.mxu0 %v774
        %788 = vmatpush.bf16.msra.mxu0 %v773
        %789 = vmatpush.bf16.msra.mxu0 %v772
        %790 = vmatpush.bf16.msra.mxu0 %v771
        %791 = vmatpush.bf16.msra.mxu0 %v770
        %792 = vmatpush.bf16.msra.mxu0 %v769
        %793 = vmatmul.bf16.gmra.mxu0 %v716
        %v794 = vpop.f32.mrf.mxu0
        %v795 = vadd.f32 %v735, %v794
        %v796 = vpop.f32.mrf.mxu0
        %v797 = vadd.f32 %v735, %v796
        %798 = vdwg.mxu0
        %v799 = vpack.c.bf16 %v795, %v795
        %v800 = vpack.c.bf16 %v797, %v797
        %vm801 = vcmask 257024
        %802 = vst.msk [vmem:[#allocation2] sm:$0xf] %vm801, %v799
        %803 = vst.msk [vmem:[#allocation2 + $0x4] sm:$0xf] %vm801, %v800
        %v804 = vld [vmem:[%s6] sm:$0xf]
        %v805 = vld [vmem:[%s6 + $0x4] sm:$0xf]
        %v806 = vld [vmem:[%s6 + $0x8] sm:$0xf]
        %v807 = vld [vmem:[%s6 + $0xc] sm:$0xf]
        %v808 = vld [vmem:[%s6 + $0x10] sm:$0xf]
        %v809 = vld [vmem:[%s6 + $0x14] sm:$0xf]
        %v810 = vld [vmem:[%s6 + $0x18] sm:$0xf]
        %v811 = vld [vmem:[%s6 + $0x1c] sm:$0xf]
        %v812 = vld [vmem:[%s6 + $0x20] sm:$0xf]
        %v813 = vld [vmem:[%s6 + $0x24] sm:$0xf]
        %v814 = vld [vmem:[%s6 + $0x28] sm:$0xf]
        %v815 = vld [vmem:[%s6 + $0x2c] sm:$0xf]
        %v816 = vld [vmem:[%s6 + $0x30] sm:$0xf]
        %v817 = vld [vmem:[%s6 + $0x34] sm:$0xf]
        %v818 = vld [vmem:[%s6 + $0x38] sm:$0xf]
        %v819 = vld [vmem:[%s6 + $0x3c] sm:$0xf]
        %v820 = vld [vmem:[%s7] sm:$0x1]
        %v822 = vperm.slane %v820, 0
        %v840 = vunpack.c.l.b16 %v804
        %v841 = vunpack.c.l.b16 %v805
        %v842 = vunpack.c.l.b16 %v806
        %v843 = vunpack.c.l.b16 %v807
        %v844 = vunpack.c.l.b16 %v808
        %v845 = vunpack.c.l.b16 %v809
        %v846 = vunpack.c.l.b16 %v810
        %v847 = vunpack.c.l.b16 %v811
        %v848 = vunpack.c.l.b16 %v812
        %v849 = vunpack.c.l.b16 %v813
        %v850 = vunpack.c.l.b16 %v814
        %v851 = vunpack.c.l.b16 %v815
        %v852 = vunpack.c.l.b16 %v816
        %v853 = vunpack.c.l.b16 %v817
        %v854 = vunpack.c.l.b16 %v818
        %v855 = vunpack.c.l.b16 %v819
        %v856 = vpack.c.b16 %v841, %v840
        %v857 = vpack.c.b16 %v843, %v842
        %v858 = vpack.c.b16 %v845, %v844
        %v859 = vpack.c.b16 %v847, %v846
        %v860 = vpack.c.b16 %v849, %v848
        %v861 = vpack.c.b16 %v851, %v850
        %v862 = vpack.c.b16 %v853, %v852
        %v863 = vpack.c.b16 %v855, %v854
        %872 = vmatpush.bf16.msra.mxu0 %v863
        %873 = vmatpush.bf16.msra.mxu0 %v862
        %874 = vmatpush.bf16.msra.mxu0 %v861
        %875 = vmatpush.bf16.msra.mxu0 %v860
        %876 = vmatpush.bf16.msra.mxu0 %v859
        %877 = vmatpush.bf16.msra.mxu0 %v858
        %878 = vmatpush.bf16.msra.mxu0 %v857
        %879 = vmatpush.bf16.msra.mxu0 %v856
        %880 = vmatmul.bf16.gmra.mxu0 %v671
        %v881 = vpop.f32.mrf.mxu0
        %v882 = vadd.f32 %v822, %v881
        %v883 = vpop.f32.mrf.mxu0
        %v884 = vadd.f32 %v822, %v883
        %885 = vdwg.mxu0
        %v886 = vpack.c.bf16 %v882, %v882
        %v887 = vpack.c.bf16 %v884, %v884
        %888 = vst.msk [vmem:[#allocation3] sm:$0xf] %vm801, %v886
        %889 = vst.msk [vmem:[#allocation3 + $0x4] sm:$0xf] %vm801, %v887
        %v890 = vld [vmem:[%s8] sm:$0xf]
        %v891 = vld [vmem:[%s8 + $0x4] sm:$0xf]
        %v892 = vld [vmem:[%s8 + $0x8] sm:$0xf]
        %v893 = vld [vmem:[%s8 + $0xc] sm:$0xf]
        %v894 = vld [vmem:[%s8 + $0x10] sm:$0xf]
        %v895 = vld [vmem:[%s8 + $0x14] sm:$0xf]
        %v896 = vld [vmem:[%s8 + $0x18] sm:$0xf]
        %v897 = vld [vmem:[%s8 + $0x1c] sm:$0xf]
        %v898 = vld [vmem:[%s8 + $0x20] sm:$0xf]
        %v899 = vld [vmem:[%s8 + $0x24] sm:$0xf]
        %v900 = vld [vmem:[%s8 + $0x28] sm:$0xf]
        %v901 = vld [vmem:[%s8 + $0x2c] sm:$0xf]
        %v902 = vld [vmem:[%s8 + $0x30] sm:$0xf]
        %v903 = vld [vmem:[%s8 + $0x34] sm:$0xf]
        %v904 = vld [vmem:[%s8 + $0x38] sm:$0xf]
        %v905 = vld [vmem:[%s8 + $0x3c] sm:$0xf]
        %v906 = vld [vmem:[%s9] sm:$0x1]
        %v908 = vperm.slane %v906, 0
        %v926 = vunpack.c.l.b16 %v890
        %v927 = vunpack.c.l.b16 %v891
        %v928 = vunpack.c.l.b16 %v892
        %v929 = vunpack.c.l.b16 %v893
        %v930 = vunpack.c.l.b16 %v894
        %v931 = vunpack.c.l.b16 %v895
        %v932 = vunpack.c.l.b16 %v896
        %v933 = vunpack.c.l.b16 %v897
        %v934 = vunpack.c.l.b16 %v898
        %v935 = vunpack.c.l.b16 %v899
        %v936 = vunpack.c.l.b16 %v900
        %v937 = vunpack.c.l.b16 %v901
        %v938 = vunpack.c.l.b16 %v902
        %v939 = vunpack.c.l.b16 %v903
        %v940 = vunpack.c.l.b16 %v904
        %v941 = vunpack.c.l.b16 %v905
        %v942 = vpack.c.b16 %v927, %v926
        %v943 = vpack.c.b16 %v929, %v928
        %v944 = vpack.c.b16 %v931, %v930
        %v945 = vpack.c.b16 %v933, %v932
        %v946 = vpack.c.b16 %v935, %v934
        %v947 = vpack.c.b16 %v937, %v936
        %v948 = vpack.c.b16 %v939, %v938
        %v949 = vpack.c.b16 %v941, %v940
        %958 = vmatpush.bf16.msra.mxu0 %v949
        %959 = vmatpush.bf16.msra.mxu0 %v948
        %960 = vmatpush.bf16.msra.mxu0 %v947
        %961 = vmatpush.bf16.msra.mxu0 %v946
        %962 = vmatpush.bf16.msra.mxu0 %v945
        %963 = vmatpush.bf16.msra.mxu0 %v944
        %964 = vmatpush.bf16.msra.mxu0 %v943
        %965 = vmatpush.bf16.msra.mxu0 %v942
        %966 = vmatmul.bf16.gmra.mxu0 %v671
        %v967 = vpop.f32.mrf.mxu0
        %v968 = vadd.f32 %v908, %v967
        %v969 = vpop.f32.mrf.mxu0
        %v970 = vadd.f32 %v908, %v969
        %971 = vdwg.mxu0
        %v972 = vpack.c.bf16 %v968, %v968
        %v973 = vpack.c.bf16 %v970, %v970
        %974 = vst.msk [vmem:[#allocation4] sm:$0xf] %vm801, %v972
        %975 = vst.msk [vmem:[#allocation4 + $0x4] sm:$0xf] %vm801, %v973
        %s976 = scalar_lea.vmem %s4, 64
        %v977 = vld [vmem:[%s976] sm:$0xf]
        %v978 = vld [vmem:[%s976 + $0x4] sm:$0xf]
        %v979 = vld [vmem:[%s976 + $0x8] sm:$0xf]
        %v980 = vld [vmem:[%s976 + $0xc] sm:$0xf]
        %v981 = vld [vmem:[%s976 + $0x10] sm:$0xf]
        %v982 = vld [vmem:[%s976 + $0x14] sm:$0xf]
        %v983 = vld [vmem:[%s976 + $0x18] sm:$0xf]
        %v984 = vld [vmem:[%s976 + $0x1c] sm:$0xf]
        %v985 = vld [vmem:[%s976 + $0x20] sm:$0xf]
        %v986 = vld [vmem:[%s976 + $0x24] sm:$0xf]
        %v987 = vld [vmem:[%s976 + $0x28] sm:$0xf]
        %v988 = vld [vmem:[%s976 + $0x2c] sm:$0xf]
        %v989 = vld [vmem:[%s976 + $0x30] sm:$0xf]
        %v990 = vld [vmem:[%s976 + $0x34] sm:$0xf]
        %v991 = vld [vmem:[%s976 + $0x38] sm:$0xf]
        %v992 = vld [vmem:[%s976 + $0x3c] sm:$0xf]
        %s993 = scalar_lea.vmem %s5, 1
        %v994 = vld [vmem:[%s993] sm:$0x1]
        %v996 = vperm.slane %v994, 0
        %v1014 = vunpack.c.l.b16 %v977
        %v1015 = vunpack.c.l.b16 %v978
        %v1016 = vunpack.c.l.b16 %v979
        %v1017 = vunpack.c.l.b16 %v980
        %v1018 = vunpack.c.l.b16 %v981
        %v1019 = vunpack.c.l.b16 %v982
        %v1020 = vunpack.c.l.b16 %v983
        %v1021 = vunpack.c.l.b16 %v984
        %v1022 = vunpack.c.l.b16 %v985
        %v1023 = vunpack.c.l.b16 %v986
        %v1024 = vunpack.c.l.b16 %v987
        %v1025 = vunpack.c.l.b16 %v988
        %v1026 = vunpack.c.l.b16 %v989
        %v1027 = vunpack.c.l.b16 %v990
        %v1028 = vunpack.c.l.b16 %v991
        %v1029 = vunpack.c.l.b16 %v992
        %v1030 = vpack.c.b16 %v1015, %v1014
        %v1031 = vpack.c.b16 %v1017, %v1016
        %v1032 = vpack.c.b16 %v1019, %v1018
        %v1033 = vpack.c.b16 %v1021, %v1020
        %v1034 = vpack.c.b16 %v1023, %v1022
        %v1035 = vpack.c.b16 %v1025, %v1024
        %v1036 = vpack.c.b16 %v1027, %v1026
        %v1037 = vpack.c.b16 %v1029, %v1028
        %1046 = vmatpush.bf16.msra.mxu0 %v1037
        %1047 = vmatpush.bf16.msra.mxu0 %v1036
        %1048 = vmatpush.bf16.msra.mxu0 %v1035
        %1049 = vmatpush.bf16.msra.mxu0 %v1034
        %1050 = vmatpush.bf16.msra.mxu0 %v1033
        %1051 = vmatpush.bf16.msra.mxu0 %v1032
        %1052 = vmatpush.bf16.msra.mxu0 %v1031
        %1053 = vmatpush.bf16.msra.mxu0 %v1030
        %1054 = vmatmul.bf16.gmra.mxu0 %v716
        %v1055 = vpop.f32.mrf.mxu0
        %v1056 = vadd.f32 %v996, %v1055
        %v1057 = vpop.f32.mrf.mxu0
        %v1058 = vadd.f32 %v996, %v1057
        %1059 = vdwg.mxu0
        %v1060 = vpack.c.bf16 %v1056, %v1056
        %v1061 = vpack.c.bf16 %v1058, %v1058
        %s1062 = scalar_lea.vmem [#allocation2], 8
        %1063 = vst.msk [vmem:[%s1062] sm:$0xf] %vm801, %v1060
        %1064 = vst.msk [vmem:[%s1062 + $0x4] sm:$0xf] %vm801, %v1061
        %s1065 = scalar_lea.vmem %s6, 64
        %v1066 = vld [vmem:[%s1065] sm:$0xf]
        %v1067 = vld [vmem:[%s1065 + $0x4] sm:$0xf]
        %v1068 = vld [vmem:[%s1065 + $0x8] sm:$0xf]
        %v1069 = vld [vmem:[%s1065 + $0xc] sm:$0xf]
        %v1070 = vld [vmem:[%s1065 + $0x10] sm:$0xf]
        %v1071 = vld [vmem:[%s1065 + $0x14] sm:$0xf]
        %v1072 = vld [vmem:[%s1065 + $0x18] sm:$0xf]
        %v1073 = vld [vmem:[%s1065 + $0x1c] sm:$0xf]
        %v1074 = vld [vmem:[%s1065 + $0x20] sm:$0xf]
        %v1075 = vld [vmem:[%s1065 + $0x24] sm:$0xf]
        %v1076 = vld [vmem:[%s1065 + $0x28] sm:$0xf]
        %v1077 = vld [vmem:[%s1065 + $0x2c] sm:$0xf]
        %v1078 = vld [vmem:[%s1065 + $0x30] sm:$0xf]
        %v1079 = vld [vmem:[%s1065 + $0x34] sm:$0xf]
        %v1080 = vld [vmem:[%s1065 + $0x38] sm:$0xf]
        %v1081 = vld [vmem:[%s1065 + $0x3c] sm:$0xf]
        %s1082 = scalar_lea.vmem %s7, 1
        %v1083 = vld [vmem:[%s1082] sm:$0x1]
        %v1085 = vperm.slane %v1083, 0
        %v1103 = vunpack.c.l.b16 %v1066
        %v1104 = vunpack.c.l.b16 %v1067
        %v1105 = vunpack.c.l.b16 %v1068
        %v1106 = vunpack.c.l.b16 %v1069
        %v1107 = vunpack.c.l.b16 %v1070
        %v1108 = vunpack.c.l.b16 %v1071
        %v1109 = vunpack.c.l.b16 %v1072
        %v1110 = vunpack.c.l.b16 %v1073
        %v1111 = vunpack.c.l.b16 %v1074
        %v1112 = vunpack.c.l.b16 %v1075
        %v1113 = vunpack.c.l.b16 %v1076
        %v1114 = vunpack.c.l.b16 %v1077
        %v1115 = vunpack.c.l.b16 %v1078
        %v1116 = vunpack.c.l.b16 %v1079
        %v1117 = vunpack.c.l.b16 %v1080
        %v1118 = vunpack.c.l.b16 %v1081
        %v1119 = vpack.c.b16 %v1104, %v1103
        %v1120 = vpack.c.b16 %v1106, %v1105
        %v1121 = vpack.c.b16 %v1108, %v1107
        %v1122 = vpack.c.b16 %v1110, %v1109
        %v1123 = vpack.c.b16 %v1112, %v1111
        %v1124 = vpack.c.b16 %v1114, %v1113
        %v1125 = vpack.c.b16 %v1116, %v1115
        %v1126 = vpack.c.b16 %v1118, %v1117
        %1135 = vmatpush.bf16.msra.mxu0 %v1126
        %1136 = vmatpush.bf16.msra.mxu0 %v1125
        %1137 = vmatpush.bf16.msra.mxu0 %v1124
        %1138 = vmatpush.bf16.msra.mxu0 %v1123
        %1139 = vmatpush.bf16.msra.mxu0 %v1122
        %1140 = vmatpush.bf16.msra.mxu0 %v1121
        %1141 = vmatpush.bf16.msra.mxu0 %v1120
        %1142 = vmatpush.bf16.msra.mxu0 %v1119
        %1143 = vmatmul.bf16.gmra.mxu0 %v671
        %v1144 = vpop.f32.mrf.mxu0
        %v1145 = vadd.f32 %v1085, %v1144
        %v1146 = vpop.f32.mrf.mxu0
        %v1147 = vadd.f32 %v1085, %v1146
        %1148 = vdwg.mxu0
        %v1149 = vpack.c.bf16 %v1145, %v1145
        %v1150 = vpack.c.bf16 %v1147, %v1147
        %s1151 = scalar_lea.vmem [#allocation3], 8
        %1152 = vst.msk [vmem:[%s1151] sm:$0xf] %vm801, %v1149
        %1153 = vst.msk [vmem:[%s1151 + $0x4] sm:$0xf] %vm801, %v1150
        %s1154 = scalar_lea.vmem %s8, 64
        %v1155 = vld [vmem:[%s1154] sm:$0xf]
        %v1156 = vld [vmem:[%s1154 + $0x4] sm:$0xf]
        %v1157 = vld [vmem:[%s1154 + $0x8] sm:$0xf]
        %v1158 = vld [vmem:[%s1154 + $0xc] sm:$0xf]
        %v1159 = vld [vmem:[%s1154 + $0x10] sm:$0xf]
        %v1160 = vld [vmem:[%s1154 + $0x14] sm:$0xf]
        %v1161 = vld [vmem:[%s1154 + $0x18] sm:$0xf]
        %v1162 = vld [vmem:[%s1154 + $0x1c] sm:$0xf]
        %v1163 = vld [vmem:[%s1154 + $0x20] sm:$0xf]
        %v1164 = vld [vmem:[%s1154 + $0x24] sm:$0xf]
        %v1165 = vld [vmem:[%s1154 + $0x28] sm:$0xf]
        %v1166 = vld [vmem:[%s1154 + $0x2c] sm:$0xf]
        %v1167 = vld [vmem:[%s1154 + $0x30] sm:$0xf]
        %v1168 = vld [vmem:[%s1154 + $0x34] sm:$0xf]
        %v1169 = vld [vmem:[%s1154 + $0x38] sm:$0xf]
        %v1170 = vld [vmem:[%s1154 + $0x3c] sm:$0xf]
        %s1171 = scalar_lea.vmem %s9, 1
        %v1172 = vld [vmem:[%s1171] sm:$0x1]
        %v1174 = vperm.slane %v1172, 0
        %v1192 = vunpack.c.l.b16 %v1155
        %v1193 = vunpack.c.l.b16 %v1156
        %v1194 = vunpack.c.l.b16 %v1157
        %v1195 = vunpack.c.l.b16 %v1158
        %v1196 = vunpack.c.l.b16 %v1159
        %v1197 = vunpack.c.l.b16 %v1160
        %v1198 = vunpack.c.l.b16 %v1161
        %v1199 = vunpack.c.l.b16 %v1162
        %v1200 = vunpack.c.l.b16 %v1163
        %v1201 = vunpack.c.l.b16 %v1164
        %v1202 = vunpack.c.l.b16 %v1165
        %v1203 = vunpack.c.l.b16 %v1166
        %v1204 = vunpack.c.l.b16 %v1167
        %v1205 = vunpack.c.l.b16 %v1168
        %v1206 = vunpack.c.l.b16 %v1169
        %v1207 = vunpack.c.l.b16 %v1170
        %v1208 = vpack.c.b16 %v1193, %v1192
        %v1209 = vpack.c.b16 %v1195, %v1194
        %v1210 = vpack.c.b16 %v1197, %v1196
        %v1211 = vpack.c.b16 %v1199, %v1198
        %v1212 = vpack.c.b16 %v1201, %v1200
        %v1213 = vpack.c.b16 %v1203, %v1202
        %v1214 = vpack.c.b16 %v1205, %v1204
        %v1215 = vpack.c.b16 %v1207, %v1206
        %1224 = vmatpush.bf16.msra.mxu0 %v1215
        %1225 = vmatpush.bf16.msra.mxu0 %v1214
        %1226 = vmatpush.bf16.msra.mxu0 %v1213
        %1227 = vmatpush.bf16.msra.mxu0 %v1212
        %1228 = vmatpush.bf16.msra.mxu0 %v1211
        %1229 = vmatpush.bf16.msra.mxu0 %v1210
        %1230 = vmatpush.bf16.msra.mxu0 %v1209
        %1231 = vmatpush.bf16.msra.mxu0 %v1208
        %1232 = vmatmul.bf16.gmra.mxu0 %v671
        %v1233 = vpop.f32.mrf.mxu0
        %v1234 = vadd.f32 %v1174, %v1233
        %v1235 = vpop.f32.mrf.mxu0
        %v1236 = vadd.f32 %v1174, %v1235
        %1237 = vdwg.mxu0
        %v1238 = vpack.c.bf16 %v1234, %v1234
        %v1239 = vpack.c.bf16 %v1236, %v1236
        %s1240 = scalar_lea.vmem [#allocation4], 8
        %1241 = vst.msk [vmem:[%s1240] sm:$0xf] %vm801, %v1238
        %1242 = vst.msk [vmem:[%s1240 + $0x4] sm:$0xf] %vm801, %v1239
        %s1243 = scalar_lea.vmem %s4, 128
        %v1244 = vld [vmem:[%s1243] sm:$0xf]
        %v1245 = vld [vmem:[%s1243 + $0x4] sm:$0xf]
        %v1246 = vld [vmem:[%s1243 + $0x8] sm:$0xf]
        %v1247 = vld [vmem:[%s1243 + $0xc] sm:$0xf]
        %v1248 = vld [vmem:[%s1243 + $0x10] sm:$0xf]
        %v1249 = vld [vmem:[%s1243 + $0x14] sm:$0xf]
        %v1250 = vld [vmem:[%s1243 + $0x18] sm:$0xf]
        %v1251 = vld [vmem:[%s1243 + $0x1c] sm:$0xf]
        %v1252 = vld [vmem:[%s1243 + $0x20] sm:$0xf]
        %v1253 = vld [vmem:[%s1243 + $0x24] sm:$0xf]
        %v1254 = vld [vmem:[%s1243 + $0x28] sm:$0xf]
        %v1255 = vld [vmem:[%s1243 + $0x2c] sm:$0xf]
        %v1256 = vld [vmem:[%s1243 + $0x30] sm:$0xf]
        %v1257 = vld [vmem:[%s1243 + $0x34] sm:$0xf]
        %v1258 = vld [vmem:[%s1243 + $0x38] sm:$0xf]
        %v1259 = vld [vmem:[%s1243 + $0x3c] sm:$0xf]
        %s1260 = scalar_lea.vmem %s5, 2
        %v1261 = vld [vmem:[%s1260] sm:$0x1]
        %v1263 = vperm.slane %v1261, 0
        %v1281 = vunpack.c.l.b16 %v1244
        %v1282 = vunpack.c.l.b16 %v1245
        %v1283 = vunpack.c.l.b16 %v1246
        %v1284 = vunpack.c.l.b16 %v1247
        %v1285 = vunpack.c.l.b16 %v1248
        %v1286 = vunpack.c.l.b16 %v1249
        %v1287 = vunpack.c.l.b16 %v1250
        %v1288 = vunpack.c.l.b16 %v1251
        %v1289 = vunpack.c.l.b16 %v1252
        %v1290 = vunpack.c.l.b16 %v1253
        %v1291 = vunpack.c.l.b16 %v1254
        %v1292 = vunpack.c.l.b16 %v1255
        %v1293 = vunpack.c.l.b16 %v1256
        %v1294 = vunpack.c.l.b16 %v1257
        %v1295 = vunpack.c.l.b16 %v1258
        %v1296 = vunpack.c.l.b16 %v1259
        %v1297 = vpack.c.b16 %v1282, %v1281
        %v1298 = vpack.c.b16 %v1284, %v1283
        %v1299 = vpack.c.b16 %v1286, %v1285
        %v1300 = vpack.c.b16 %v1288, %v1287
        %v1301 = vpack.c.b16 %v1290, %v1289
        %v1302 = vpack.c.b16 %v1292, %v1291
        %v1303 = vpack.c.b16 %v1294, %v1293
        %v1304 = vpack.c.b16 %v1296, %v1295
        %1313 = vmatpush.bf16.msra.mxu0 %v1304
        %1314 = vmatpush.bf16.msra.mxu0 %v1303
        %1315 = vmatpush.bf16.msra.mxu0 %v1302
        %1316 = vmatpush.bf16.msra.mxu0 %v1301
        %1317 = vmatpush.bf16.msra.mxu0 %v1300
        %1318 = vmatpush.bf16.msra.mxu0 %v1299
        %1319 = vmatpush.bf16.msra.mxu0 %v1298
        %1320 = vmatpush.bf16.msra.mxu0 %v1297
        %1321 = vmatmul.bf16.gmra.mxu0 %v716
        %v1322 = vpop.f32.mrf.mxu0
        %v1323 = vadd.f32 %v1263, %v1322
        %v1324 = vpop.f32.mrf.mxu0
        %v1325 = vadd.f32 %v1263, %v1324
        %1326 = vdwg.mxu0
        %v1327 = vpack.c.bf16 %v1323, %v1323
        %v1328 = vpack.c.bf16 %v1325, %v1325
        %s1329 = scalar_lea.vmem [#allocation2], 16
        %1330 = vst.msk [vmem:[%s1329] sm:$0xf] %vm801, %v1327
        %1331 = vst.msk [vmem:[%s1329 + $0x4] sm:$0xf] %vm801, %v1328
        %s1332 = scalar_lea.vmem %s6, 128
        %v1333 = vld [vmem:[%s1332] sm:$0xf]
        %v1334 = vld [vmem:[%s1332 + $0x4] sm:$0xf]
        %v1335 = vld [vmem:[%s1332 + $0x8] sm:$0xf]
        %v1336 = vld [vmem:[%s1332 + $0xc] sm:$0xf]
        %v1337 = vld [vmem:[%s1332 + $0x10] sm:$0xf]
        %v1338 = vld [vmem:[%s1332 + $0x14] sm:$0xf]
        %v1339 = vld [vmem:[%s1332 + $0x18] sm:$0xf]
        %v1340 = vld [vmem:[%s1332 + $0x1c] sm:$0xf]
        %v1341 = vld [vmem:[%s1332 + $0x20] sm:$0xf]
        %v1342 = vld [vmem:[%s1332 + $0x24] sm:$0xf]
        %v1343 = vld [vmem:[%s1332 + $0x28] sm:$0xf]
        %v1344 = vld [vmem:[%s1332 + $0x2c] sm:$0xf]
        %v1345 = vld [vmem:[%s1332 + $0x30] sm:$0xf]
        %v1346 = vld [vmem:[%s1332 + $0x34] sm:$0xf]
        %v1347 = vld [vmem:[%s1332 + $0x38] sm:$0xf]
        %v1348 = vld [vmem:[%s1332 + $0x3c] sm:$0xf]
        %s1349 = scalar_lea.vmem %s7, 2
        %v1350 = vld [vmem:[%s1349] sm:$0x1]
        %v1352 = vperm.slane %v1350, 0
        %v1370 = vunpack.c.l.b16 %v1333
        %v1371 = vunpack.c.l.b16 %v1334
        %v1372 = vunpack.c.l.b16 %v1335
        %v1373 = vunpack.c.l.b16 %v1336
        %v1374 = vunpack.c.l.b16 %v1337
        %v1375 = vunpack.c.l.b16 %v1338
        %v1376 = vunpack.c.l.b16 %v1339
        %v1377 = vunpack.c.l.b16 %v1340
        %v1378 = vunpack.c.l.b16 %v1341
        %v1379 = vunpack.c.l.b16 %v1342
        %v1380 = vunpack.c.l.b16 %v1343
        %v1381 = vunpack.c.l.b16 %v1344
        %v1382 = vunpack.c.l.b16 %v1345
        %v1383 = vunpack.c.l.b16 %v1346
        %v1384 = vunpack.c.l.b16 %v1347
        %v1385 = vunpack.c.l.b16 %v1348
        %v1386 = vpack.c.b16 %v1371, %v1370
        %v1387 = vpack.c.b16 %v1373, %v1372
        %v1388 = vpack.c.b16 %v1375, %v1374
        %v1389 = vpack.c.b16 %v1377, %v1376
        %v1390 = vpack.c.b16 %v1379, %v1378
        %v1391 = vpack.c.b16 %v1381, %v1380
        %v1392 = vpack.c.b16 %v1383, %v1382
        %v1393 = vpack.c.b16 %v1385, %v1384
        %1402 = vmatpush.bf16.msra.mxu0 %v1393
        %1403 = vmatpush.bf16.msra.mxu0 %v1392
        %1404 = vmatpush.bf16.msra.mxu0 %v1391
        %1405 = vmatpush.bf16.msra.mxu0 %v1390
        %1406 = vmatpush.bf16.msra.mxu0 %v1389
        %1407 = vmatpush.bf16.msra.mxu0 %v1388
        %1408 = vmatpush.bf16.msra.mxu0 %v1387
        %1409 = vmatpush.bf16.msra.mxu0 %v1386
        %1410 = vmatmul.bf16.gmra.mxu0 %v671
        %v1411 = vpop.f32.mrf.mxu0
        %v1412 = vadd.f32 %v1352, %v1411
        %v1413 = vpop.f32.mrf.mxu0
        %v1414 = vadd.f32 %v1352, %v1413
        %1415 = vdwg.mxu0
        %v1416 = vpack.c.bf16 %v1412, %v1412
        %v1417 = vpack.c.bf16 %v1414, %v1414
        %s1418 = scalar_lea.vmem [#allocation3], 16
        %1419 = vst.msk [vmem:[%s1418] sm:$0xf] %vm801, %v1416
        %1420 = vst.msk [vmem:[%s1418 + $0x4] sm:$0xf] %vm801, %v1417
        %s1421 = scalar_lea.vmem %s8, 128
        %v1422 = vld [vmem:[%s1421] sm:$0xf]
        %v1423 = vld [vmem:[%s1421 + $0x4] sm:$0xf]
        %v1424 = vld [vmem:[%s1421 + $0x8] sm:$0xf]
        %v1425 = vld [vmem:[%s1421 + $0xc] sm:$0xf]
        %v1426 = vld [vmem:[%s1421 + $0x10] sm:$0xf]
        %v1427 = vld [vmem:[%s1421 + $0x14] sm:$0xf]
        %v1428 = vld [vmem:[%s1421 + $0x18] sm:$0xf]
        %v1429 = vld [vmem:[%s1421 + $0x1c] sm:$0xf]
        %v1430 = vld [vmem:[%s1421 + $0x20] sm:$0xf]
        %v1431 = vld [vmem:[%s1421 + $0x24] sm:$0xf]
        %v1432 = vld [vmem:[%s1421 + $0x28] sm:$0xf]
        %v1433 = vld [vmem:[%s1421 + $0x2c] sm:$0xf]
        %v1434 = vld [vmem:[%s1421 + $0x30] sm:$0xf]
        %v1435 = vld [vmem:[%s1421 + $0x34] sm:$0xf]
        %v1436 = vld [vmem:[%s1421 + $0x38] sm:$0xf]
        %v1437 = vld [vmem:[%s1421 + $0x3c] sm:$0xf]
        %s1438 = scalar_lea.vmem %s9, 2
        %v1439 = vld [vmem:[%s1438] sm:$0x1]
        %v1441 = vperm.slane %v1439, 0
        %v1459 = vunpack.c.l.b16 %v1422
        %v1460 = vunpack.c.l.b16 %v1423
        %v1461 = vunpack.c.l.b16 %v1424
        %v1462 = vunpack.c.l.b16 %v1425
        %v1463 = vunpack.c.l.b16 %v1426
        %v1464 = vunpack.c.l.b16 %v1427
        %v1465 = vunpack.c.l.b16 %v1428
        %v1466 = vunpack.c.l.b16 %v1429
        %v1467 = vunpack.c.l.b16 %v1430
        %v1468 = vunpack.c.l.b16 %v1431
        %v1469 = vunpack.c.l.b16 %v1432
        %v1470 = vunpack.c.l.b16 %v1433
        %v1471 = vunpack.c.l.b16 %v1434
        %v1472 = vunpack.c.l.b16 %v1435
        %v1473 = vunpack.c.l.b16 %v1436
        %v1474 = vunpack.c.l.b16 %v1437
        %v1475 = vpack.c.b16 %v1460, %v1459
        %v1476 = vpack.c.b16 %v1462, %v1461
        %v1477 = vpack.c.b16 %v1464, %v1463
        %v1478 = vpack.c.b16 %v1466, %v1465
        %v1479 = vpack.c.b16 %v1468, %v1467
        %v1480 = vpack.c.b16 %v1470, %v1469
        %v1481 = vpack.c.b16 %v1472, %v1471
        %v1482 = vpack.c.b16 %v1474, %v1473
        %1491 = vmatpush.bf16.msra.mxu0 %v1482
        %1492 = vmatpush.bf16.msra.mxu0 %v1481
        %1493 = vmatpush.bf16.msra.mxu0 %v1480
        %1494 = vmatpush.bf16.msra.mxu0 %v1479
        %1495 = vmatpush.bf16.msra.mxu0 %v1478
        %1496 = vmatpush.bf16.msra.mxu0 %v1477
        %1497 = vmatpush.bf16.msra.mxu0 %v1476
        %1498 = vmatpush.bf16.msra.mxu0 %v1475
        %1499 = vmatmul.bf16.gmra.mxu0 %v671
        %v1500 = vpop.f32.mrf.mxu0
        %v1501 = vadd.f32 %v1441, %v1500
        %v1502 = vpop.f32.mrf.mxu0
        %v1503 = vadd.f32 %v1441, %v1502
        %1504 = vdwg.mxu0
        %v1505 = vpack.c.bf16 %v1501, %v1501
        %v1506 = vpack.c.bf16 %v1503, %v1503
        %s1507 = scalar_lea.vmem [#allocation4], 16
        %1508 = vst.msk [vmem:[%s1507] sm:$0xf] %vm801, %v1505
        %1509 = vst.msk [vmem:[%s1507 + $0x4] sm:$0xf] %vm801, %v1506
        %s1510 = scalar_lea.vmem %s4, 192
        %v1511 = vld [vmem:[%s1510] sm:$0xf]
        %v1512 = vld [vmem:[%s1510 + $0x4] sm:$0xf]
        %v1513 = vld [vmem:[%s1510 + $0x8] sm:$0xf]
        %v1514 = vld [vmem:[%s1510 + $0xc] sm:$0xf]
        %v1515 = vld [vmem:[%s1510 + $0x10] sm:$0xf]
        %v1516 = vld [vmem:[%s1510 + $0x14] sm:$0xf]
        %v1517 = vld [vmem:[%s1510 + $0x18] sm:$0xf]
        %v1518 = vld [vmem:[%s1510 + $0x1c] sm:$0xf]
        %v1519 = vld [vmem:[%s1510 + $0x20] sm:$0xf]
        %v1520 = vld [vmem:[%s1510 + $0x24] sm:$0xf]
        %v1521 = vld [vmem:[%s1510 + $0x28] sm:$0xf]
        %v1522 = vld [vmem:[%s1510 + $0x2c] sm:$0xf]
        %v1523 = vld [vmem:[%s1510 + $0x30] sm:$0xf]
        %v1524 = vld [vmem:[%s1510 + $0x34] sm:$0xf]
        %v1525 = vld [vmem:[%s1510 + $0x38] sm:$0xf]
        %v1526 = vld [vmem:[%s1510 + $0x3c] sm:$0xf]
        %s1527 = scalar_lea.vmem %s5, 3
        %v1528 = vld [vmem:[%s1527] sm:$0x1]
        %v1530 = vperm.slane %v1528, 0
        %v1548 = vunpack.c.l.b16 %v1511
        %v1549 = vunpack.c.l.b16 %v1512
        %v1550 = vunpack.c.l.b16 %v1513
        %v1551 = vunpack.c.l.b16 %v1514
        %v1552 = vunpack.c.l.b16 %v1515
        %v1553 = vunpack.c.l.b16 %v1516
        %v1554 = vunpack.c.l.b16 %v1517
        %v1555 = vunpack.c.l.b16 %v1518
        %v1556 = vunpack.c.l.b16 %v1519
        %v1557 = vunpack.c.l.b16 %v1520
        %v1558 = vunpack.c.l.b16 %v1521
        %v1559 = vunpack.c.l.b16 %v1522
        %v1560 = vunpack.c.l.b16 %v1523
        %v1561 = vunpack.c.l.b16 %v1524
        %v1562 = vunpack.c.l.b16 %v1525
        %v1563 = vunpack.c.l.b16 %v1526
        %v1564 = vpack.c.b16 %v1549, %v1548
        %v1565 = vpack.c.b16 %v1551, %v1550
        %v1566 = vpack.c.b16 %v1553, %v1552
        %v1567 = vpack.c.b16 %v1555, %v1554
        %v1568 = vpack.c.b16 %v1557, %v1556
        %v1569 = vpack.c.b16 %v1559, %v1558
        %v1570 = vpack.c.b16 %v1561, %v1560
        %v1571 = vpack.c.b16 %v1563, %v1562
        %1580 = vmatpush.bf16.msra.mxu0 %v1571
        %1581 = vmatpush.bf16.msra.mxu0 %v1570
        %1582 = vmatpush.bf16.msra.mxu0 %v1569
        %1583 = vmatpush.bf16.msra.mxu0 %v1568
        %1584 = vmatpush.bf16.msra.mxu0 %v1567
        %1585 = vmatpush.bf16.msra.mxu0 %v1566
        %1586 = vmatpush.bf16.msra.mxu0 %v1565
        %1587 = vmatpush.bf16.msra.mxu0 %v1564
        %1588 = vmatmul.bf16.gmra.mxu0 %v716
        %v1589 = vpop.f32.mrf.mxu0
        %v1590 = vadd.f32 %v1530, %v1589
        %v1591 = vpop.f32.mrf.mxu0
        %v1592 = vadd.f32 %v1530, %v1591
        %1593 = vdwg.mxu0
        %v1594 = vpack.c.bf16 %v1590, %v1590
        %v1595 = vpack.c.bf16 %v1592, %v1592
        %s1596 = scalar_lea.vmem [#allocation2], 24
        %1597 = vst.msk [vmem:[%s1596] sm:$0xf] %vm801, %v1594
        %1598 = vst.msk [vmem:[%s1596 + $0x4] sm:$0xf] %vm801, %v1595
        %s1599 = scalar_lea.vmem %s6, 192
        %v1600 = vld [vmem:[%s1599] sm:$0xf]
        %v1601 = vld [vmem:[%s1599 + $0x4] sm:$0xf]
        %v1602 = vld [vmem:[%s1599 + $0x8] sm:$0xf]
        %v1603 = vld [vmem:[%s1599 + $0xc] sm:$0xf]
        %v1604 = vld [vmem:[%s1599 + $0x10] sm:$0xf]
        %v1605 = vld [vmem:[%s1599 + $0x14] sm:$0xf]
        %v1606 = vld [vmem:[%s1599 + $0x18] sm:$0xf]
        %v1607 = vld [vmem:[%s1599 + $0x1c] sm:$0xf]
        %v1608 = vld [vmem:[%s1599 + $0x20] sm:$0xf]
        %v1609 = vld [vmem:[%s1599 + $0x24] sm:$0xf]
        %v1610 = vld [vmem:[%s1599 + $0x28] sm:$0xf]
        %v1611 = vld [vmem:[%s1599 + $0x2c] sm:$0xf]
        %v1612 = vld [vmem:[%s1599 + $0x30] sm:$0xf]
        %v1613 = vld [vmem:[%s1599 + $0x34] sm:$0xf]
        %v1614 = vld [vmem:[%s1599 + $0x38] sm:$0xf]
        %v1615 = vld [vmem:[%s1599 + $0x3c] sm:$0xf]
        %s1616 = scalar_lea.vmem %s7, 3
        %v1617 = vld [vmem:[%s1616] sm:$0x1]
        %v1619 = vperm.slane %v1617, 0
        %v1637 = vunpack.c.l.b16 %v1600
        %v1638 = vunpack.c.l.b16 %v1601
        %v1639 = vunpack.c.l.b16 %v1602
        %v1640 = vunpack.c.l.b16 %v1603
        %v1641 = vunpack.c.l.b16 %v1604
        %v1642 = vunpack.c.l.b16 %v1605
        %v1643 = vunpack.c.l.b16 %v1606
        %v1644 = vunpack.c.l.b16 %v1607
        %v1645 = vunpack.c.l.b16 %v1608
        %v1646 = vunpack.c.l.b16 %v1609
        %v1647 = vunpack.c.l.b16 %v1610
        %v1648 = vunpack.c.l.b16 %v1611
        %v1649 = vunpack.c.l.b16 %v1612
        %v1650 = vunpack.c.l.b16 %v1613
        %v1651 = vunpack.c.l.b16 %v1614
        %v1652 = vunpack.c.l.b16 %v1615
        %v1653 = vpack.c.b16 %v1638, %v1637
        %v1654 = vpack.c.b16 %v1640, %v1639
        %v1655 = vpack.c.b16 %v1642, %v1641
        %v1656 = vpack.c.b16 %v1644, %v1643
        %v1657 = vpack.c.b16 %v1646, %v1645
        %v1658 = vpack.c.b16 %v1648, %v1647
        %v1659 = vpack.c.b16 %v1650, %v1649
        %v1660 = vpack.c.b16 %v1652, %v1651
        %1669 = vmatpush.bf16.msra.mxu0 %v1660
        %1670 = vmatpush.bf16.msra.mxu0 %v1659
        %1671 = vmatpush.bf16.msra.mxu0 %v1658
        %1672 = vmatpush.bf16.msra.mxu0 %v1657
        %1673 = vmatpush.bf16.msra.mxu0 %v1656
        %1674 = vmatpush.bf16.msra.mxu0 %v1655
        %1675 = vmatpush.bf16.msra.mxu0 %v1654
        %1676 = vmatpush.bf16.msra.mxu0 %v1653
        %1677 = vmatmul.bf16.gmra.mxu0 %v671
        %v1678 = vpop.f32.mrf.mxu0
        %v1679 = vadd.f32 %v1619, %v1678
        %v1680 = vpop.f32.mrf.mxu0
        %v1681 = vadd.f32 %v1619, %v1680
        %1682 = vdwg.mxu0
        %v1683 = vpack.c.bf16 %v1679, %v1679
        %v1684 = vpack.c.bf16 %v1681, %v1681
        %s1685 = scalar_lea.vmem [#allocation3], 24
        %1686 = vst.msk [vmem:[%s1685] sm:$0xf] %vm801, %v1683
        %1687 = vst.msk [vmem:[%s1685 + $0x4] sm:$0xf] %vm801, %v1684
        %s1688 = scalar_lea.vmem %s8, 192
        %v1689 = vld [vmem:[%s1688] sm:$0xf]
        %v1690 = vld [vmem:[%s1688 + $0x4] sm:$0xf]
        %v1691 = vld [vmem:[%s1688 + $0x8] sm:$0xf]
        %v1692 = vld [vmem:[%s1688 + $0xc] sm:$0xf]
        %v1693 = vld [vmem:[%s1688 + $0x10] sm:$0xf]
        %v1694 = vld [vmem:[%s1688 + $0x14] sm:$0xf]
        %v1695 = vld [vmem:[%s1688 + $0x18] sm:$0xf]
        %v1696 = vld [vmem:[%s1688 + $0x1c] sm:$0xf]
        %v1697 = vld [vmem:[%s1688 + $0x20] sm:$0xf]
        %v1698 = vld [vmem:[%s1688 + $0x24] sm:$0xf]
        %v1699 = vld [vmem:[%s1688 + $0x28] sm:$0xf]
        %v1700 = vld [vmem:[%s1688 + $0x2c] sm:$0xf]
        %v1701 = vld [vmem:[%s1688 + $0x30] sm:$0xf]
        %v1702 = vld [vmem:[%s1688 + $0x34] sm:$0xf]
        %v1703 = vld [vmem:[%s1688 + $0x38] sm:$0xf]
        %v1704 = vld [vmem:[%s1688 + $0x3c] sm:$0xf]
        %s1705 = scalar_lea.vmem %s9, 3
        %v1706 = vld [vmem:[%s1705] sm:$0x1]
        %v1708 = vperm.slane %v1706, 0
        %v1726 = vunpack.c.l.b16 %v1689
        %v1727 = vunpack.c.l.b16 %v1690
        %v1728 = vunpack.c.l.b16 %v1691
        %v1729 = vunpack.c.l.b16 %v1692
        %v1730 = vunpack.c.l.b16 %v1693
        %v1731 = vunpack.c.l.b16 %v1694
        %v1732 = vunpack.c.l.b16 %v1695
        %v1733 = vunpack.c.l.b16 %v1696
        %v1734 = vunpack.c.l.b16 %v1697
        %v1735 = vunpack.c.l.b16 %v1698
        %v1736 = vunpack.c.l.b16 %v1699
        %v1737 = vunpack.c.l.b16 %v1700
        %v1738 = vunpack.c.l.b16 %v1701
        %v1739 = vunpack.c.l.b16 %v1702
        %v1740 = vunpack.c.l.b16 %v1703
        %v1741 = vunpack.c.l.b16 %v1704
        %v1742 = vpack.c.b16 %v1727, %v1726
        %v1743 = vpack.c.b16 %v1729, %v1728
        %v1744 = vpack.c.b16 %v1731, %v1730
        %v1745 = vpack.c.b16 %v1733, %v1732
        %v1746 = vpack.c.b16 %v1735, %v1734
        %v1747 = vpack.c.b16 %v1737, %v1736
        %v1748 = vpack.c.b16 %v1739, %v1738
        %v1749 = vpack.c.b16 %v1741, %v1740
        %1758 = vmatpush.bf16.msra.mxu0 %v1749
        %1759 = vmatpush.bf16.msra.mxu0 %v1748
        %1760 = vmatpush.bf16.msra.mxu0 %v1747
        %1761 = vmatpush.bf16.msra.mxu0 %v1746
        %1762 = vmatpush.bf16.msra.mxu0 %v1745
        %1763 = vmatpush.bf16.msra.mxu0 %v1744
        %1764 = vmatpush.bf16.msra.mxu0 %v1743
        %1765 = vmatpush.bf16.msra.mxu0 %v1742
        %1766 = vmatmul.bf16.gmra.mxu0 %v671
        %v1767 = vpop.f32.mrf.mxu0
        %v1768 = vadd.f32 %v1708, %v1767
        %v1769 = vpop.f32.mrf.mxu0
        %v1770 = vadd.f32 %v1708, %v1769
        %1771 = vdwg.mxu0
        %v1772 = vpack.c.bf16 %v1768, %v1768
        %v1773 = vpack.c.bf16 %v1770, %v1770
        %s1774 = scalar_lea.vmem [#allocation4], 24
        %1775 = vst.msk [vmem:[%s1774] sm:$0xf] %vm801, %v1772
        %1776 = vst.msk [vmem:[%s1774 + $0x4] sm:$0xf] %vm801, %v1773
        %v1777 = vld [vmem:[#allocation2] sm:$0xf]
        %v1778 = vld [vmem:[#allocation2 + $0x4] sm:$0xf]
        %v1779 = vld [vmem:[#allocation2 + $0x8] sm:$0xf]
        %v1780 = vld [vmem:[#allocation2 + $0xc] sm:$0xf]
        %v1781 = vld [vmem:[#allocation2 + $0x10] sm:$0xf]
        %v1782 = vld [vmem:[#allocation2 + $0x14] sm:$0xf]
        %v1783 = vld [vmem:[#allocation2 + $0x18] sm:$0xf]
        %v1784 = vld [vmem:[#allocation2 + $0x1c] sm:$0xf]
        %v1785 = vld [vmem:[#allocation3] sm:$0xf]
        %v1786 = vld [vmem:[#allocation3 + $0x4] sm:$0xf]
        %v1787 = vld [vmem:[#allocation3 + $0x8] sm:$0xf]
        %v1788 = vld [vmem:[#allocation3 + $0xc] sm:$0xf]
        %v1789 = vld [vmem:[#allocation3 + $0x10] sm:$0xf]
        %v1790 = vld [vmem:[#allocation3 + $0x14] sm:$0xf]
        %v1791 = vld [vmem:[#allocation3 + $0x18] sm:$0xf]
        %v1792 = vld [vmem:[#allocation3 + $0x1c] sm:$0xf]
        %v1795 = vunpack.c.l.b16 %v1777
        %v1796 = vunpack.c.l.b16 %v1778
        %v1797 = vpack.c.b16 %v1796, %v1795
        %v1800 = vunpack.c.l.b16 %v1785
        %v1801 = vunpack.c.l.b16 %v1786
        %v1802 = vpack.c.b16 %v1801, %v1800
        %vm1803 = vcmask 261120
        %v1805 = vsel %vm1803, %v1797, 0
        %v1808 = vsel %vm1803, %v1802, 0
        %1810 = vmatpush.bf16.xpose.msra.mxu0 0
        %1811 = vmatpush.bf16.xpose.msra.mxu0 0
        %1812 = vmatpush.bf16.xpose.msra.mxu0 0
        %1813 = vmatpush.bf16.xpose.msra.mxu0 0
        %1814 = vmatpush.bf16.xpose.msra.mxu0 0
        %1815 = vmatpush.bf16.xpose.msra.mxu0 0
        %1816 = vmatpush.bf16.xpose.msra.mxu0 0
        %1817 = vmatpush.bf16.xpose.msra.mxu0 %v1808
        %1818 = vmatmul.bf16.gmra.mxu0 %v1805
        %v1819 = vpop.f32.mrf.mxu0
        %v1820 = vadd.f32 0.0, %v1819
        %v1821 = vpop.f32.mrf.mxu0
        %v1822 = vadd.f32 0.0, %v1821
        %1823 = vdwg.mxu0
        %v1826 = vunpack.c.l.b16 %v1779
        %v1827 = vunpack.c.l.b16 %v1780
        %v1828 = vpack.c.b16 %v1827, %v1826
        %v1831 = vunpack.c.l.b16 %v1787
        %v1832 = vunpack.c.l.b16 %v1788
        %v1833 = vpack.c.b16 %v1832, %v1831
        %v1835 = vsel %vm1803, %v1828, 0
        %v1838 = vsel %vm1803, %v1833, 0
        %1840 = vmatpush.bf16.xpose.msra.mxu0 0
        %1841 = vmatpush.bf16.xpose.msra.mxu0 0
        %1842 = vmatpush.bf16.xpose.msra.mxu0 0
        %1843 = vmatpush.bf16.xpose.msra.mxu0 0
        %1844 = vmatpush.bf16.xpose.msra.mxu0 0
        %1845 = vmatpush.bf16.xpose.msra.mxu0 0
        %1846 = vmatpush.bf16.xpose.msra.mxu0 0
        %1847 = vmatpush.bf16.xpose.msra.mxu0 %v1838
        %1848 = vmatmul.bf16.gmra.mxu0 %v1835
        %v1849 = vpop.f32.mrf.mxu0
        %v1850 = vadd.f32 0.0, %v1849
        %v1851 = vpop.f32.mrf.mxu0
        %v1852 = vadd.f32 0.0, %v1851
        %1853 = vdwg.mxu0
        %v1856 = vunpack.c.l.b16 %v1781
        %v1857 = vunpack.c.l.b16 %v1782
        %v1858 = vpack.c.b16 %v1857, %v1856
        %v1861 = vunpack.c.l.b16 %v1789
        %v1862 = vunpack.c.l.b16 %v1790
        %v1863 = vpack.c.b16 %v1862, %v1861
        %v1865 = vsel %vm1803, %v1858, 0
        %v1868 = vsel %vm1803, %v1863, 0
        %1870 = vmatpush.bf16.xpose.msra.mxu0 0
        %1871 = vmatpush.bf16.xpose.msra.mxu0 0
        %1872 = vmatpush.bf16.xpose.msra.mxu0 0
        %1873 = vmatpush.bf16.xpose.msra.mxu0 0
        %1874 = vmatpush.bf16.xpose.msra.mxu0 0
        %1875 = vmatpush.bf16.xpose.msra.mxu0 0
        %1876 = vmatpush.bf16.xpose.msra.mxu0 0
        %1877 = vmatpush.bf16.xpose.msra.mxu0 %v1868
        %1878 = vmatmul.bf16.gmra.mxu0 %v1865
        %v1879 = vpop.f32.mrf.mxu0
        %v1880 = vadd.f32 0.0, %v1879
        %v1881 = vpop.f32.mrf.mxu0
        %v1882 = vadd.f32 0.0, %v1881
        %1883 = vdwg.mxu0
        %v1886 = vunpack.c.l.b16 %v1783
        %v1887 = vunpack.c.l.b16 %v1784
        %v1888 = vpack.c.b16 %v1887, %v1886
        %v1891 = vunpack.c.l.b16 %v1791
        %v1892 = vunpack.c.l.b16 %v1792
        %v1893 = vpack.c.b16 %v1892, %v1891
        %v1895 = vsel %vm1803, %v1888, 0
        %v1898 = vsel %vm1803, %v1893, 0
        %1900 = vmatpush.bf16.xpose.msra.mxu0 0
        %1901 = vmatpush.bf16.xpose.msra.mxu0 0
        %1902 = vmatpush.bf16.xpose.msra.mxu0 0
        %1903 = vmatpush.bf16.xpose.msra.mxu0 0
        %1904 = vmatpush.bf16.xpose.msra.mxu0 0
        %1905 = vmatpush.bf16.xpose.msra.mxu0 0
        %1906 = vmatpush.bf16.xpose.msra.mxu0 0
        %1907 = vmatpush.bf16.xpose.msra.mxu0 %v1898
        %1908 = vmatmul.bf16.gmra.mxu0 %v1895
        %v1909 = vpop.f32.mrf.mxu0
        %v1910 = vadd.f32 0.0, %v1909
        %v1911 = vpop.f32.mrf.mxu0
        %v1912 = vadd.f32 0.0, %v1911
        %1913 = vdwg.mxu0
        %v1914 = vsel %vm611, 1, 0
        %v1915 = vperm.slane %v1914, 0
        %vm1916 = vcmp.eq.s32.totalorder %v1915, 1
        %v1917 = vsel %vm1916, -3.4028235e+38, %v1820
        %v1918 = vsel %vm1916, -3.4028235e+38, %v1822
        %v1919 = vsel %vm1916, -3.4028235e+38, %v1850
        %v1920 = vsel %vm1916, -3.4028235e+38, %v1852
        %v1921 = vsel %vm1916, -3.4028235e+38, %v1880
        %v1922 = vsel %vm1916, -3.4028235e+38, %v1882
        %v1923 = vsel %vm1916, -3.4028235e+38, %v1910
        %v1924 = vsel %vm1916, -3.4028235e+38, %v1912
        %vm1925 = vcmask 130048
        %v1926 = vsel %vm1925, %v1917, -inf
        %1927 = vmax.xlane.f32.xlu0 %v1926
        %v1928 = vpop.xlane.xlu0 %1927
        %v1929 = vsel %vm1925, %v1918, -inf
        %1930 = vmax.xlane.f32.xlu0 %v1929
        %v1931 = vpop.xlane.xlu0 %1930
        %v1932 = vsel %vm1925, %v1919, -inf
        %1933 = vmax.xlane.f32.xlu0 %v1932
        %v1934 = vpop.xlane.xlu0 %1933
        %v1935 = vsel %vm1925, %v1920, -inf
        %1936 = vmax.xlane.f32.xlu0 %v1935
        %v1937 = vpop.xlane.xlu0 %1936
        %v1938 = vsel %vm1925, %v1921, -inf
        %1939 = vmax.xlane.f32.xlu0 %v1938
        %v1940 = vpop.xlane.xlu0 %1939
        %v1941 = vsel %vm1925, %v1922, -inf
        %1942 = vmax.xlane.f32.xlu0 %v1941
        %v1943 = vpop.xlane.xlu0 %1942
        %v1944 = vsel %vm1925, %v1923, -inf
        %1945 = vmax.xlane.f32.xlu0 %v1944
        %v1946 = vpop.xlane.xlu0 %1945
        %v1947 = vsel %vm1925, %v1924, -inf
        %1948 = vmax.xlane.f32.xlu0 %v1947
        %v1949 = vpop.xlane.xlu0 %1948
        %v1950 = vsub.f32 %v1917, %v1928
        %v1951 = vsub.f32 %v1918, %v1931
        %v1952 = vsub.f32 %v1919, %v1934
        %v1953 = vsub.f32 %v1920, %v1937
        %v1954 = vsub.f32 %v1921, %v1940
        %v1955 = vsub.f32 %v1922, %v1943
        %v1956 = vsub.f32 %v1923, %v1946
        %v1957 = vsub.f32 %v1924, %v1949
        %v1958 = vmul.f32 %v1950, 1.442695
        %v1959 = vpow.pop %v1958
        %v1960 = vmul.f32 %v1951, 1.442695
        %v1961 = vpow.pop %v1960
        %v1962 = vmul.f32 %v1952, 1.442695
        %v1963 = vpow.pop %v1962
        %v1964 = vmul.f32 %v1953, 1.442695
        %v1965 = vpow.pop %v1964
        %v1966 = vmul.f32 %v1954, 1.442695
        %v1967 = vpow.pop %v1966
        %v1968 = vmul.f32 %v1955, 1.442695
        %v1969 = vpow.pop %v1968
        %v1970 = vmul.f32 %v1956, 1.442695
        %v1971 = vpow.pop %v1970
        %v1972 = vmul.f32 %v1957, 1.442695
        %v1973 = vpow.pop %v1972
        %v1974 = vsel %vm1925, %v1959, 0.0
        %1975 = vadd.xlane.f32.xlu0 %v1974
        %v1976 = vpop.xlane.xlu0 %1975
        %v1977 = vsel %vm1925, %v1961, 0.0
        %1978 = vadd.xlane.f32.xlu0 %v1977
        %v1979 = vpop.xlane.xlu0 %1978
        %v1980 = vsel %vm1925, %v1963, 0.0
        %1981 = vadd.xlane.f32.xlu0 %v1980
        %v1982 = vpop.xlane.xlu0 %1981
        %v1983 = vsel %vm1925, %v1965, 0.0
        %1984 = vadd.xlane.f32.xlu0 %v1983
        %v1985 = vpop.xlane.xlu0 %1984
        %v1986 = vsel %vm1925, %v1967, 0.0
        %1987 = vadd.xlane.f32.xlu0 %v1986
        %v1988 = vpop.xlane.xlu0 %1987
        %v1989 = vsel %vm1925, %v1969, 0.0
        %1990 = vadd.xlane.f32.xlu0 %v1989
        %v1991 = vpop.xlane.xlu0 %1990
        %v1992 = vsel %vm1925, %v1971, 0.0
        %1993 = vadd.xlane.f32.xlu0 %v1992
        %v1994 = vpop.xlane.xlu0 %1993
        %v1995 = vsel %vm1925, %v1973, 0.0
        %1996 = vadd.xlane.f32.xlu0 %v1995
        %v1997 = vpop.xlane.xlu0 %1996
        %v1998 = vrcp.pop %v1976
        %v1999 = vrcp.pop %v1979
        %v2000 = vrcp.pop %v1982
        %v2001 = vrcp.pop %v1985
        %v2002 = vrcp.pop %v1988
        %v2003 = vrcp.pop %v1991
        %v2004 = vrcp.pop %v1994
        %v2005 = vrcp.pop %v1997
        %v2006 = vmul.f32 %v1959, %v1998
        %v2007 = vmul.f32 %v1961, %v1999
        %v2008 = vmul.f32 %v1963, %v2000
        %v2009 = vmul.f32 %v1965, %v2001
        %v2010 = vmul.f32 %v1967, %v2002
        %v2011 = vmul.f32 %v1969, %v2003
        %v2012 = vmul.f32 %v1971, %v2004
        %v2013 = vmul.f32 %v1973, %v2005
        %v2014 = vsel %vm1916, 0.0, %v2006
        %v2015 = vsel %vm1916, 0.0, %v2007
        %v2016 = vsel %vm1916, 0.0, %v2008
        %v2017 = vsel %vm1916, 0.0, %v2009
        %v2018 = vsel %vm1916, 0.0, %v2010
        %v2019 = vsel %vm1916, 0.0, %v2011
        %v2020 = vsel %vm1916, 0.0, %v2012
        %v2021 = vsel %vm1916, 0.0, %v2013
        %v2022 = vpack.c.bf16 %v2014, %v2014
        %v2023 = vpack.c.bf16 %v2015, %v2015
        %v2024 = vpack.c.bf16 %v2016, %v2016
        %v2025 = vpack.c.bf16 %v2017, %v2017
        %v2026 = vpack.c.bf16 %v2018, %v2018
        %v2027 = vpack.c.bf16 %v2019, %v2019
        %v2028 = vpack.c.bf16 %v2020, %v2020
        %v2029 = vpack.c.bf16 %v2021, %v2021
        %v2030 = vld [vmem:[#allocation4] sm:$0xf]
        %v2031 = vld [vmem:[#allocation4 + $0x4] sm:$0xf]
        %v2032 = vld [vmem:[#allocation4 + $0x8] sm:$0xf]
        %v2033 = vld [vmem:[#allocation4 + $0xc] sm:$0xf]
        %v2034 = vld [vmem:[#allocation4 + $0x10] sm:$0xf]
        %v2035 = vld [vmem:[#allocation4 + $0x14] sm:$0xf]
        %v2036 = vld [vmem:[#allocation4 + $0x18] sm:$0xf]
        %v2037 = vld [vmem:[#allocation4 + $0x1c] sm:$0xf]
        %v2040 = vunpack.c.l.b16 %v2022
        %v2041 = vunpack.c.l.b16 %v2023
        %v2042 = vpack.c.b16 %v2041, %v2040
        %v2045 = vunpack.c.l.b16 %v2030
        %v2046 = vunpack.c.l.b16 %v2031
        %v2047 = vpack.c.b16 %v2046, %v2045
        %v2050 = vsel %vm1925, %v2042, 0
        %2052 = vmatpush.bf16.msra.mxu0 0
        %2053 = vmatpush.bf16.msra.mxu0 0
        %2054 = vmatpush.bf16.msra.mxu0 0
        %2055 = vmatpush.bf16.msra.mxu0 0
        %2056 = vmatpush.bf16.msra.mxu0 0
        %2057 = vmatpush.bf16.msra.mxu0 0
        %2058 = vmatpush.bf16.msra.mxu0 0
        %2059 = vmatpush.bf16.msra.mxu0 %v2047
        %2060 = vmatmul.bf16.gmra.mxu0 %v2050
        %v2061 = vpop.f32.mrf.mxu0
        %v2062 = vadd.f32 0.0, %v2061
        %v2063 = vpop.f32.mrf.mxu0
        %v2064 = vadd.f32 0.0, %v2063
        %2065 = vdwg.mxu0
        %v2068 = vunpack.c.l.b16 %v2024
        %v2069 = vunpack.c.l.b16 %v2025
        %v2070 = vpack.c.b16 %v2069, %v2068
        %v2073 = vunpack.c.l.b16 %v2032
        %v2074 = vunpack.c.l.b16 %v2033
        %v2075 = vpack.c.b16 %v2074, %v2073
        %v2078 = vsel %vm1925, %v2070, 0
        %2080 = vmatpush.bf16.msra.mxu0 0
        %2081 = vmatpush.bf16.msra.mxu0 0
        %2082 = vmatpush.bf16.msra.mxu0 0
        %2083 = vmatpush.bf16.msra.mxu0 0
        %2084 = vmatpush.bf16.msra.mxu0 0
        %2085 = vmatpush.bf16.msra.mxu0 0
        %2086 = vmatpush.bf16.msra.mxu0 0
        %2087 = vmatpush.bf16.msra.mxu0 %v2075
        %2088 = vmatmul.bf16.gmra.mxu0 %v2078
        %v2089 = vpop.f32.mrf.mxu0
        %v2090 = vadd.f32 0.0, %v2089
        %v2091 = vpop.f32.mrf.mxu0
        %v2092 = vadd.f32 0.0, %v2091
        %2093 = vdwg.mxu0
        %v2096 = vunpack.c.l.b16 %v2026
        %v2097 = vunpack.c.l.b16 %v2027
        %v2098 = vpack.c.b16 %v2097, %v2096
        %v2101 = vunpack.c.l.b16 %v2034
        %v2102 = vunpack.c.l.b16 %v2035
        %v2103 = vpack.c.b16 %v2102, %v2101
        %v2106 = vsel %vm1925, %v2098, 0
        %2108 = vmatpush.bf16.msra.mxu0 0
        %2109 = vmatpush.bf16.msra.mxu0 0
        %2110 = vmatpush.bf16.msra.mxu0 0
        %2111 = vmatpush.bf16.msra.mxu0 0
        %2112 = vmatpush.bf16.msra.mxu0 0
        %2113 = vmatpush.bf16.msra.mxu0 0
        %2114 = vmatpush.bf16.msra.mxu0 0
        %2115 = vmatpush.bf16.msra.mxu0 %v2103
        %2116 = vmatmul.bf16.gmra.mxu0 %v2106
        %v2117 = vpop.f32.mrf.mxu0
        %v2118 = vadd.f32 0.0, %v2117
        %v2119 = vpop.f32.mrf.mxu0
        %v2120 = vadd.f32 0.0, %v2119
        %2121 = vdwg.mxu0
        %v2124 = vunpack.c.l.b16 %v2028
        %v2125 = vunpack.c.l.b16 %v2029
        %v2126 = vpack.c.b16 %v2125, %v2124
        %v2129 = vunpack.c.l.b16 %v2036
        %v2130 = vunpack.c.l.b16 %v2037
        %v2131 = vpack.c.b16 %v2130, %v2129
        %v2134 = vsel %vm1925, %v2126, 0
        %2136 = vmatpush.bf16.msra.mxu0 0
        %2137 = vmatpush.bf16.msra.mxu0 0
        %2138 = vmatpush.bf16.msra.mxu0 0
        %2139 = vmatpush.bf16.msra.mxu0 0
        %2140 = vmatpush.bf16.msra.mxu0 0
        %2141 = vmatpush.bf16.msra.mxu0 0
        %2142 = vmatpush.bf16.msra.mxu0 0
        %2143 = vmatpush.bf16.msra.mxu0 %v2131
        %2144 = vmatmul.bf16.gmra.mxu0 %v2134
        %v2145 = vpop.f32.mrf.mxu0
        %v2146 = vadd.f32 0.0, %v2145
        %v2147 = vpop.f32.mrf.mxu0
        %v2148 = vadd.f32 0.0, %v2147
        %2149 = vdwg.mxu0
        %v2150 = vpack.c.bf16 %v2064, %v2062
        %v2151 = vld [vmem:[%s10] sm:$0xf]
        %v2152 = vld [vmem:[%s10 + $0x4] sm:$0xf]
        %v2153 = vld [vmem:[%s10 + $0x8] sm:$0xf]
        %v2154 = vld [vmem:[%s10 + $0xc] sm:$0xf]
        %v2155 = vpack.c.bf16 %v2092, %v2090
        %s2156 = scalar_lea.vmem %s10, 16
        %v2157 = vld [vmem:[%s2156] sm:$0xf]
        %v2158 = vld [vmem:[%s2156 + $0x4] sm:$0xf]
        %v2159 = vld [vmem:[%s2156 + $0x8] sm:$0xf]
        %v2160 = vld [vmem:[%s2156 + $0xc] sm:$0xf]
        %v2165 = vunpack.c.l.b16 %v2157
        %v2166 = vunpack.c.l.b16 %v2158
        %v2167 = vunpack.c.l.b16 %v2159
        %v2168 = vunpack.c.l.b16 %v2160
        %v2169 = vpack.c.b16 %v2166, %v2165
        %v2170 = vpack.c.b16 %v2168, %v2167
        %v2174 = vsel %vm1803, %v2155, 0
        %2176 = vmatpush.bf16.msra.mxu0 0
        %2177 = vmatpush.bf16.msra.mxu0 0
        %2178 = vmatpush.bf16.msra.mxu0 0
        %2179 = vmatpush.bf16.msra.mxu0 0
        %2180 = vmatpush.bf16.msra.mxu0 0
        %2181 = vmatpush.bf16.msra.mxu0 0
        %2182 = vmatpush.bf16.msra.mxu0 %v2170
        %2183 = vmatpush.bf16.msra.mxu0 %v2169
        %2184 = vmatmul.bf16.gmra.mxu0 %v2174
        %v2185 = vpop.f32.mrf.mxu0
        %v2186 = vadd.f32 0.0, %v2185
        %v2187 = vpop.f32.mrf.mxu0
        %v2188 = vadd.f32 0.0, %v2187
        %2189 = vdwg.mxu0
        %v2194 = vunpack.c.l.b16 %v2151
        %v2195 = vunpack.c.l.b16 %v2152
        %v2196 = vunpack.c.l.b16 %v2153
        %v2197 = vunpack.c.l.b16 %v2154
        %v2198 = vpack.c.b16 %v2195, %v2194
        %v2199 = vpack.c.b16 %v2197, %v2196
        %v2203 = vsel %vm1803, %v2150, 0
        %2205 = vmatpush.bf16.msra.mxu0 0
        %2206 = vmatpush.bf16.msra.mxu0 0
        %2207 = vmatpush.bf16.msra.mxu0 0
        %2208 = vmatpush.bf16.msra.mxu0 0
        %2209 = vmatpush.bf16.msra.mxu0 0
        %2210 = vmatpush.bf16.msra.mxu0 0
        %2211 = vmatpush.bf16.msra.mxu0 %v2199
        %2212 = vmatpush.bf16.msra.mxu0 %v2198
        %2213 = vmatmul.bf16.gmra.mxu0 %v2203
        %v2214 = vpop.f32.mrf.mxu0
        %v2215 = vadd.f32 %v2186, %v2214
        %v2216 = vpop.f32.mrf.mxu0
        %v2217 = vadd.f32 %v2188, %v2216
        %2218 = vdwg.mxu0
        %v2219 = vpack.c.bf16 %v2120, %v2118
        %s2220 = scalar_lea.vmem %s10, 32
        %v2221 = vld [vmem:[%s2220] sm:$0xf]
        %v2222 = vld [vmem:[%s2220 + $0x4] sm:$0xf]
        %v2223 = vld [vmem:[%s2220 + $0x8] sm:$0xf]
        %v2224 = vld [vmem:[%s2220 + $0xc] sm:$0xf]
        %v2229 = vunpack.c.l.b16 %v2221
        %v2230 = vunpack.c.l.b16 %v2222
        %v2231 = vunpack.c.l.b16 %v2223
        %v2232 = vunpack.c.l.b16 %v2224
        %v2233 = vpack.c.b16 %v2230, %v2229
        %v2234 = vpack.c.b16 %v2232, %v2231
        %v2238 = vsel %vm1803, %v2219, 0
        %2240 = vmatpush.bf16.msra.mxu0 0
        %2241 = vmatpush.bf16.msra.mxu0 0
        %2242 = vmatpush.bf16.msra.mxu0 0
        %2243 = vmatpush.bf16.msra.mxu0 0
        %2244 = vmatpush.bf16.msra.mxu0 0
        %2245 = vmatpush.bf16.msra.mxu0 0
        %2246 = vmatpush.bf16.msra.mxu0 %v2234
        %2247 = vmatpush.bf16.msra.mxu0 %v2233
        %2248 = vmatmul.bf16.gmra.mxu0 %v2238
        %v2249 = vpop.f32.mrf.mxu0
        %v2250 = vadd.f32 0.0, %v2249
        %v2251 = vpop.f32.mrf.mxu0
        %v2252 = vadd.f32 0.0, %v2251
        %2253 = vdwg.mxu0
        %v2254 = vadd.f32 %v2215, %v2250
        %v2255 = vadd.f32 %v2217, %v2252
        %v2256 = vpack.c.bf16 %v2148, %v2146
        %s2257 = scalar_lea.vmem %s10, 48
        %v2258 = vld [vmem:[%s2257] sm:$0xf]
        %v2259 = vld [vmem:[%s2257 + $0x4] sm:$0xf]
        %v2260 = vld [vmem:[%s2257 + $0x8] sm:$0xf]
        %v2261 = vld [vmem:[%s2257 + $0xc] sm:$0xf]
        %v2266 = vunpack.c.l.b16 %v2258
        %v2267 = vunpack.c.l.b16 %v2259
        %v2268 = vunpack.c.l.b16 %v2260
        %v2269 = vunpack.c.l.b16 %v2261
        %v2270 = vpack.c.b16 %v2267, %v2266
        %v2271 = vpack.c.b16 %v2269, %v2268
        %v2275 = vsel %vm1803, %v2256, 0
        %2277 = vmatpush.bf16.msra.mxu0 0
        %2278 = vmatpush.bf16.msra.mxu0 0
        %2279 = vmatpush.bf16.msra.mxu0 0
        %2280 = vmatpush.bf16.msra.mxu0 0
        %2281 = vmatpush.bf16.msra.mxu0 0
        %2282 = vmatpush.bf16.msra.mxu0 0
        %2283 = vmatpush.bf16.msra.mxu0 %v2271
        %2284 = vmatpush.bf16.msra.mxu0 %v2270
        %2285 = vmatmul.bf16.gmra.mxu0 %v2275
        %v2286 = vpop.f32.mrf.mxu0
        %v2287 = vadd.f32 0.0, %v2286
        %v2288 = vpop.f32.mrf.mxu0
        %v2289 = vadd.f32 0.0, %v2288
        %2290 = vdwg.mxu0
        %v2291 = vadd.f32 %v2254, %v2287
        %v2292 = vadd.f32 %v2255, %v2289
        %v2293 = vadd.f32 %v608, %v2291
        %v2294 = vadd.f32 %v609, %v2292
        %v2295 = vld [vmem:[%s11] sm:$0x1]
        %v2297 = vperm.slane %v2295, 0
        %v2299 = vadd.f32 %v2293, %v2297
        %v2300 = vadd.f32 %v2294, %v2297
        %v2301 = vld [vmem:[%s12] sm:$0x1]
        %v2302 = vld [vmem:[%s13] sm:$0x1]
        %2303 = vadd.xlane.f32.xlu0 %v2299
        %v2304 = vpop.xlane.xlu0 %2303
        %2305 = vadd.xlane.f32.xlu0 %v2300
        %v2306 = vpop.xlane.xlu0 %2305
        %v2307 = vmul.f32 %v2304, %v624
        %v2308 = vmul.f32 %v2306, %v624
        %v2309 = vsub.f32 %v2299, %v2307
        %v2310 = vsub.f32 %v2300, %v2308
        %v2311 = vmul.f32 %v2309, %v2309
        %v2312 = vmul.f32 %v2310, %v2310
        %2313 = vadd.xlane.f32.xlu0 %v2311
        %v2314 = vpop.xlane.xlu0 %2313
        %2315 = vadd.xlane.f32.xlu0 %v2312
        %v2316 = vpop.xlane.xlu0 %2315
        %v2317 = vmul.f32 %v2314, %v624
        %v2318 = vmul.f32 %v2316, %v624
        %v2319 = vadd.f32 %v2317, 1e-12
        %v2320 = vadd.f32 %v2318, 1e-12
        %v2321 = vrsqrt.pop %v2319
        %v2322 = vmul.f32 %v2321, %v2319
        %v2323 = vmul.f32 %v2322, %v2321
        %v2324 = vmul.f32 0.5, %v2323
        %v2325 = vsub.f32 1.5, %v2324
        %v2326 = vmul.f32 %v2321, %v2325
        %vm2327 = vweird.f32 %v2319
        %vm2328 = vweird.f32 %v2321
        %vm2329 = vmor %vm2327, %vm2328
        %v2330 = vsel %vm2329, %v2321, %v2326
        %v2331 = vrsqrt.pop %v2320
        %v2332 = vmul.f32 %v2331, %v2320
        %v2333 = vmul.f32 %v2332, %v2331
        %v2334 = vmul.f32 0.5, %v2333
        %v2335 = vsub.f32 1.5, %v2334
        %v2336 = vmul.f32 %v2331, %v2335
        %vm2337 = vweird.f32 %v2320
        %vm2338 = vweird.f32 %v2331
        %vm2339 = vmor %vm2337, %vm2338
        %v2340 = vsel %vm2339, %v2331, %v2336
        %v2341 = vmul.f32 %v2309, %v2330
        %v2342 = vmul.f32 %v2310, %v2340
        %v2344 = vperm.slane %v2301, 0
        %v2346 = vmul.f32 %v2341, %v2344
        %v2347 = vmul.f32 %v2342, %v2344
        %v2349 = vperm.slane %v2302, 0
        %v2351 = vadd.f32 %v2346, %v2349
        %v2352 = vadd.f32 %v2347, %v2349
        %v2353 = vpack.c.bf16 %v2352, %v2351
        %v2354 = vld [vmem:[%s14] sm:$0xff]
        %v2355 = vld [vmem:[%s14 + $0x8] sm:$0xff]
        %v2356 = vld [vmem:[%s14 + $0x10] sm:$0xff]
        %v2357 = vld [vmem:[%s14 + $0x18] sm:$0xff]
        %v2358 = vld [vmem:[%s14 + $0x20] sm:$0xff]
        %v2359 = vld [vmem:[%s14 + $0x28] sm:$0xff]
        %v2360 = vld [vmem:[%s14 + $0x30] sm:$0xff]
        %v2361 = vld [vmem:[%s14 + $0x38] sm:$0xff]
        %v2362 = vld [vmem:[%s14 + $0x40] sm:$0xff]
        %v2363 = vld [vmem:[%s14 + $0x48] sm:$0xff]
        %v2364 = vld [vmem:[%s14 + $0x50] sm:$0xff]
        %v2365 = vld [vmem:[%s14 + $0x58] sm:$0xff]
        %v2366 = vld [vmem:[%s14 + $0x60] sm:$0xff]
        %v2367 = vld [vmem:[%s14 + $0x68] sm:$0xff]
        %v2368 = vld [vmem:[%s14 + $0x70] sm:$0xff]
        %v2369 = vld [vmem:[%s14 + $0x78] sm:$0xff]
        %v2370 = vld [vmem:[%s15] sm:$0x3]
        %v2372 = vperm.slane %v2370, 0
        %v2373 = vperm.slane %v2370, 1
        %v2392 = vunpack.c.l.b16 %v2354
        %v2393 = vunpack.c.h.b16 %v2354
        %v2394 = vunpack.c.l.b16 %v2355
        %v2395 = vunpack.c.h.b16 %v2355
        %v2396 = vunpack.c.l.b16 %v2356
        %v2397 = vunpack.c.h.b16 %v2356
        %v2398 = vunpack.c.l.b16 %v2357
        %v2399 = vunpack.c.h.b16 %v2357
        %v2400 = vunpack.c.l.b16 %v2358
        %v2401 = vunpack.c.h.b16 %v2358
        %v2402 = vunpack.c.l.b16 %v2359
        %v2403 = vunpack.c.h.b16 %v2359
        %v2404 = vunpack.c.l.b16 %v2360
        %v2405 = vunpack.c.h.b16 %v2360
        %v2406 = vunpack.c.l.b16 %v2361
        %v2407 = vunpack.c.h.b16 %v2361
        %v2408 = vunpack.c.l.b16 %v2362
        %v2409 = vunpack.c.h.b16 %v2362
        %v2410 = vunpack.c.l.b16 %v2363
        %v2411 = vunpack.c.h.b16 %v2363
        %v2412 = vunpack.c.l.b16 %v2364
        %v2413 = vunpack.c.h.b16 %v2364
        %v2414 = vunpack.c.l.b16 %v2365
        %v2415 = vunpack.c.h.b16 %v2365
        %v2416 = vunpack.c.l.b16 %v2366
        %v2417 = vunpack.c.h.b16 %v2366
        %v2418 = vunpack.c.l.b16 %v2367
        %v2419 = vunpack.c.h.b16 %v2367
        %v2420 = vunpack.c.l.b16 %v2368
        %v2421 = vunpack.c.h.b16 %v2368
        %v2422 = vunpack.c.l.b16 %v2369
        %v2423 = vunpack.c.h.b16 %v2369
        %v2424 = vpack.c.b16 %v2394, %v2392
        %v2425 = vpack.c.b16 %v2395, %v2393
        %v2426 = vpack.c.b16 %v2398, %v2396
        %v2427 = vpack.c.b16 %v2399, %v2397
        %v2428 = vpack.c.b16 %v2402, %v2400
        %v2429 = vpack.c.b16 %v2403, %v2401
        %v2430 = vpack.c.b16 %v2406, %v2404
        %v2431 = vpack.c.b16 %v2407, %v2405
        %v2432 = vpack.c.b16 %v2410, %v2408
        %v2433 = vpack.c.b16 %v2411, %v2409
        %v2434 = vpack.c.b16 %v2414, %v2412
        %v2435 = vpack.c.b16 %v2415, %v2413
        %v2436 = vpack.c.b16 %v2418, %v2416
        %v2437 = vpack.c.b16 %v2419, %v2417
        %v2438 = vpack.c.b16 %v2422, %v2420
        %v2439 = vpack.c.b16 %v2423, %v2421
        %2456 = vmatpush.bf16.msra.mxu0 %v2438
        %2457 = vmatpush.bf16.msra.mxu0 %v2436
        %2458 = vmatpush.bf16.msra.mxu0 %v2434
        %2459 = vmatpush.bf16.msra.mxu0 %v2432
        %2460 = vmatpush.bf16.msra.mxu0 %v2430
        %2461 = vmatpush.bf16.msra.mxu0 %v2428
        %2462 = vmatpush.bf16.msra.mxu0 %v2426
        %2463 = vmatpush.bf16.msra.mxu0 %v2424
        %2464 = vmatmul.bf16.gmra.mxu0 %v2353
        %v2465 = vpop.f32.mrf.mxu0
        %v2466 = vadd.f32 %v2372, %v2465
        %v2467 = vpop.f32.mrf.mxu0
        %v2468 = vadd.f32 %v2372, %v2467
        %2469 = vdwg.mxu0
        %2470 = vmatpush.bf16.msra.mxu0 %v2439
        %2471 = vmatpush.bf16.msra.mxu0 %v2437
        %2472 = vmatpush.bf16.msra.mxu0 %v2435
        %2473 = vmatpush.bf16.msra.mxu0 %v2433
        %2474 = vmatpush.bf16.msra.mxu0 %v2431
        %2475 = vmatpush.bf16.msra.mxu0 %v2429
        %2476 = vmatpush.bf16.msra.mxu0 %v2427
        %2477 = vmatpush.bf16.msra.mxu0 %v2425
        %2478 = vmatmul.bf16.gmra.mxu0 %v2353
        %v2479 = vpop.f32.mrf.mxu0
        %v2480 = vadd.f32 %v2373, %v2479
        %v2481 = vpop.f32.mrf.mxu0
        %v2482 = vadd.f32 %v2373, %v2481
        %2483 = vdwg.mxu0
        %v2484 = vmax.f32 %v2466, 0.0
        %v2485 = vmax.f32 %v2480, 0.0
        %v2486 = vmax.f32 %v2468, 0.0
        %v2487 = vmax.f32 %v2482, 0.0
        %v2488 = vpack.c.bf16 %v2486, %v2484
        %v2489 = vpack.c.bf16 %v2487, %v2485
        %v2490 = vld [vmem:[%s16] sm:$0xf]
        %v2491 = vld [vmem:[%s16 + $0x4] sm:$0xf]
        %v2492 = vld [vmem:[%s16 + $0x8] sm:$0xf]
        %v2493 = vld [vmem:[%s16 + $0xc] sm:$0xf]
        %v2494 = vld [vmem:[%s16 + $0x10] sm:$0xf]
        %v2495 = vld [vmem:[%s16 + $0x14] sm:$0xf]
        %v2496 = vld [vmem:[%s16 + $0x18] sm:$0xf]
        %v2497 = vld [vmem:[%s16 + $0x1c] sm:$0xf]
        %v2498 = vld [vmem:[%s16 + $0x20] sm:$0xf]
        %v2499 = vld [vmem:[%s16 + $0x24] sm:$0xf]
        %v2500 = vld [vmem:[%s16 + $0x28] sm:$0xf]
        %v2501 = vld [vmem:[%s16 + $0x2c] sm:$0xf]
        %v2502 = vld [vmem:[%s16 + $0x30] sm:$0xf]
        %v2503 = vld [vmem:[%s16 + $0x34] sm:$0xf]
        %v2504 = vld [vmem:[%s16 + $0x38] sm:$0xf]
        %v2505 = vld [vmem:[%s16 + $0x3c] sm:$0xf]
        %v2506 = vld [vmem:[%s16 + $0x40] sm:$0xf]
        %v2507 = vld [vmem:[%s16 + $0x44] sm:$0xf]
        %v2508 = vld [vmem:[%s16 + $0x48] sm:$0xf]
        %v2509 = vld [vmem:[%s16 + $0x4c] sm:$0xf]
        %v2510 = vld [vmem:[%s16 + $0x50] sm:$0xf]
        %v2511 = vld [vmem:[%s16 + $0x54] sm:$0xf]
        %v2512 = vld [vmem:[%s16 + $0x58] sm:$0xf]
        %v2513 = vld [vmem:[%s16 + $0x5c] sm:$0xf]
        %v2514 = vld [vmem:[%s16 + $0x60] sm:$0xf]
        %v2515 = vld [vmem:[%s16 + $0x64] sm:$0xf]
        %v2516 = vld [vmem:[%s16 + $0x68] sm:$0xf]
        %v2517 = vld [vmem:[%s16 + $0x6c] sm:$0xf]
        %v2518 = vld [vmem:[%s16 + $0x70] sm:$0xf]
        %v2519 = vld [vmem:[%s16 + $0x74] sm:$0xf]
        %v2520 = vld [vmem:[%s16 + $0x78] sm:$0xf]
        %v2521 = vld [vmem:[%s16 + $0x7c] sm:$0xf]
        %v2522 = vld [vmem:[%s17] sm:$0x1]
        %v2524 = vperm.slane %v2522, 0
        %v2558 = vunpack.c.l.b16 %v2490
        %v2559 = vunpack.c.l.b16 %v2491
        %v2560 = vunpack.c.l.b16 %v2492
        %v2561 = vunpack.c.l.b16 %v2493
        %v2562 = vunpack.c.l.b16 %v2494
        %v2563 = vunpack.c.l.b16 %v2495
        %v2564 = vunpack.c.l.b16 %v2496
        %v2565 = vunpack.c.l.b16 %v2497
        %v2566 = vunpack.c.l.b16 %v2498
        %v2567 = vunpack.c.l.b16 %v2499
        %v2568 = vunpack.c.l.b16 %v2500
        %v2569 = vunpack.c.l.b16 %v2501
        %v2570 = vunpack.c.l.b16 %v2502
        %v2571 = vunpack.c.l.b16 %v2503
        %v2572 = vunpack.c.l.b16 %v2504
        %v2573 = vunpack.c.l.b16 %v2505
        %v2574 = vunpack.c.l.b16 %v2506
        %v2575 = vunpack.c.l.b16 %v2507
        %v2576 = vunpack.c.l.b16 %v2508
        %v2577 = vunpack.c.l.b16 %v2509
        %v2578 = vunpack.c.l.b16 %v2510
        %v2579 = vunpack.c.l.b16 %v2511
        %v2580 = vunpack.c.l.b16 %v2512
        %v2581 = vunpack.c.l.b16 %v2513
        %v2582 = vunpack.c.l.b16 %v2514
        %v2583 = vunpack.c.l.b16 %v2515
        %v2584 = vunpack.c.l.b16 %v2516
        %v2585 = vunpack.c.l.b16 %v2517
        %v2586 = vunpack.c.l.b16 %v2518
        %v2587 = vunpack.c.l.b16 %v2519
        %v2588 = vunpack.c.l.b16 %v2520
        %v2589 = vunpack.c.l.b16 %v2521
        %v2590 = vpack.c.b16 %v2559, %v2558
        %v2591 = vpack.c.b16 %v2561, %v2560
        %v2592 = vpack.c.b16 %v2563, %v2562
        %v2593 = vpack.c.b16 %v2565, %v2564
        %v2594 = vpack.c.b16 %v2567, %v2566
        %v2595 = vpack.c.b16 %v2569, %v2568
        %v2596 = vpack.c.b16 %v2571, %v2570
        %v2597 = vpack.c.b16 %v2573, %v2572
        %v2598 = vpack.c.b16 %v2575, %v2574
        %v2599 = vpack.c.b16 %v2577, %v2576
        %v2600 = vpack.c.b16 %v2579, %v2578
        %v2601 = vpack.c.b16 %v2581, %v2580
        %v2602 = vpack.c.b16 %v2583, %v2582
        %v2603 = vpack.c.b16 %v2585, %v2584
        %v2604 = vpack.c.b16 %v2587, %v2586
        %v2605 = vpack.c.b16 %v2589, %v2588
        %2622 = vmatpush.bf16.msra.mxu0 %v2597
        %2623 = vmatpush.bf16.msra.mxu0 %v2596
        %2624 = vmatpush.bf16.msra.mxu0 %v2595
        %2625 = vmatpush.bf16.msra.mxu0 %v2594
        %2626 = vmatpush.bf16.msra.mxu0 %v2593
        %2627 = vmatpush.bf16.msra.mxu0 %v2592
        %2628 = vmatpush.bf16.msra.mxu0 %v2591
        %2629 = vmatpush.bf16.msra.mxu0 %v2590
        %2630 = vmatmul.bf16.gmra.mxu0 %v2488
        %v2631 = vpop.f32.mrf.mxu0
        %v2632 = vadd.f32 %v2524, %v2631
        %v2633 = vpop.f32.mrf.mxu0
        %v2634 = vadd.f32 %v2524, %v2633
        %2635 = vdwg.mxu0
        %2636 = vmatpush.bf16.msra.mxu0 %v2605
        %2637 = vmatpush.bf16.msra.mxu0 %v2604
        %2638 = vmatpush.bf16.msra.mxu0 %v2603
        %2639 = vmatpush.bf16.msra.mxu0 %v2602
        %2640 = vmatpush.bf16.msra.mxu0 %v2601
        %2641 = vmatpush.bf16.msra.mxu0 %v2600
        %2642 = vmatpush.bf16.msra.mxu0 %v2599
        %2643 = vmatpush.bf16.msra.mxu0 %v2598
        %2644 = vmatmul.bf16.gmra.mxu0 %v2489
        %v2645 = vpop.f32.mrf.mxu0
        %v2646 = vadd.f32 %v2632, %v2645
        %v2647 = vpop.f32.mrf.mxu0
        %v2648 = vadd.f32 %v2634, %v2647
        %2649 = vdwg.mxu0
        %v2650 = vadd.f32 %v2299, %v2646
        %v2651 = vadd.f32 %v2300, %v2648
        %2652 = vst [vmem:[%s593] sm:$0xff] %v2650
        %2653 = vst [vmem:[%s593 + $0x8] sm:$0xff] %v2651
        %s2654 = sand.u32 %s442, 1
        %s2655 = scalar_lea.sflag [#allocation6], %s2654
        %s2656 = sand.u32 %s442, 1
        %s2657 = smul.addr %s2656, 16
        %s2658 = scalar_lea.vmem [#allocation5], %s2657
        // Predicated region
        $region93: #{tpu_custom_call.1} parent=91 // pred_check
          %p2659 = pneg %p452
        $region94: #{tpu_custom_call.1} parent=91 // pred_check_branch
          %2661 = sbr.rel (%p2659) target = $region96
        $region95: #{tpu_custom_call.1} parent=91 // pred_region
          %s2662 = smul.u32 2, %s37
          %2664 = vsyncadd %s2655, 0
          %s2665 = smul.addr %s36, 2
          %s2666 = sadd.s32 %s2662, %s2665
          %s2667 = smul.addr %s2666, 8
          %s2668 = scalar_lea.hbm %s18, %s2667
          %s2669 = sshll.u32 %s2658, 4
          %s2670 = int_to_ptr.vmem [resolvable:$true] %s2669
          %s2671 = sshll.u32 %s2668, 4
          %s2672 = int_to_ptr.hbm [resolvable:$true] %s2671
          %2677 = dma.vmem_to_hbm [thread:$0]  %s2670, 256, %s2672, %s2655, 128, 128, 8
        $region96: #{tpu_custom_call.1} parent=91 // pred_fallthru
          _
      $region92: #{tpu_custom_call.1} parent=5 // pred_fallthru
        _
      %p2678 = scmp.le.s32.totalorder 2, %s27
      // Predicated region
      $region97: #{tpu_custom_call.1} parent=5 // pred_check
        %p2679 = pneg %p2678
      $region98: #{tpu_custom_call.1} parent=5 // pred_check_branch
        %2681 = sbr.rel (%p2679) target = $region100
      $region99: #{tpu_custom_call.1} parent=5 // pred_region
        %s2682 = ssub.s32 %s27, 2
        // Predicated region
        $region101: #{tpu_custom_call.1} parent=99 // pred_check
          %p2683 = pneg %p458
        $region102: #{tpu_custom_call.1} parent=99 // pred_check_branch
          %2685 = sbr.rel (%p2683) target = $region104
        $region103: #{tpu_custom_call.1} parent=99 // pred_region
          %s2686 = sand.u32 %s443, 1
          %s2687 = scalar_lea.sflag [#allocation6], %s2686
          %s2688 = sand.u32 %s443, 1
          %s2689 = smul.addr %s2688, 16
          %s2690 = scalar_lea.vmem [#allocation5], %s2689
          %2692 = dma.done %s2687, 256
        $region104: #{tpu_custom_call.1} parent=99 // pred_fallthru
          _
      $region100: #{tpu_custom_call.1} parent=5 // pred_fallthru
        _
    $region6: #{tpu_custom_call.1} parent=1 // loop_footer
      %s31 = sadd.s32 1, %s27
    $region7: #{tpu_custom_call.1} parent=1 // loop_footer_branch
      %26 = sbr.rel target = $region3
    $region8: #{tpu_custom_call.1} parent=1 // loop_exit
      _
    %2693 = vsyncpa [#allocation6], 1
    %s2694 = scalar_lea.sflag [#allocation6], 1
    %2695 = vsyncpa %s2694, 1

// kernel: tpu_custom_call.1
$region0: #{tpu_custom_call.1}
  #allocation0 [shape = 'u32[]', space=smem, size = 0x4, offset = 0x4, fixed_abs, tag = 'smem constant byte address 0x4 - core index']
  #allocation1 [shape = 'u32[72,128]{1,0:T(1,128)}', space=vmem, size = 0x9000, scoped, tag = 'internal scratch']
  #allocation2 [shape = 'bf16[4,16,32]{2,1,0:T(8,128)(2,1)}', space=vmem, size = 0x4000, scoped, tag = 'scratch operand']
  #allocation3 [shape = 'bf16[4,16,32]{2,1,0:T(8,128)(2,1)}', space=vmem, size = 0x4000, scoped, tag = 'scratch operand']
  #allocation4 [shape = 'bf16[4,16,32]{2,1,0:T(8,128)(2,1)}', space=vmem, size = 0x4000, scoped, tag = 'scratch operand']
  %s0 = inlined_call_operand.vmem [shape: s32[2,1,16], index: 0, kind: input, shape index: {}]
  %s1 = inlined_call_operand.vmem [shape: f32[2,16,128], index: 1, kind: input, shape index: {}]
  %s2 = inlined_call_operand.vmem [shape: f32[1,128], index: 2, kind: input, shape index: {}]
  %s3 = inlined_call_operand.vmem [shape: f32[1,128], index: 3, kind: input, shape index: {}]
  %s4 = inlined_call_operand.vmem [shape: bf16[4,128,32], index: 4, kind: input, shape index: {}]
  %s5 = inlined_call_operand.vmem [shape: f32[4,1,32], index: 5, kind: input, shape index: {}]
  %s6 = inlined_call_operand.vmem [shape: bf16[4,128,32], index: 6, kind: input, shape index: {}]
  %s7 = inlined_call_operand.vmem [shape: f32[4,1,32], index: 7, kind: input, shape index: {}]
  %s8 = inlined_call_operand.vmem [shape: bf16[4,128,32], index: 8, kind: input, shape index: {}]
  %s9 = inlined_call_operand.vmem [shape: f32[4,1,32], index: 9, kind: input, shape index: {}]
  %s10 = inlined_call_operand.vmem [shape: bf16[4,32,128], index: 10, kind: input, shape index: {}]
  %s11 = inlined_call_operand.vmem [shape: f32[1,128], index: 11, kind: input, shape index: {}]
  %s12 = inlined_call_operand.vmem [shape: f32[1,128], index: 12, kind: input, shape index: {}]
  %s13 = inlined_call_operand.vmem [shape: f32[1,128], index: 13, kind: input, shape index: {}]
  %s14 = inlined_call_operand.vmem [shape: bf16[128,256], index: 14, kind: input, shape index: {}]
  %s15 = inlined_call_operand.vmem [shape: f32[1,256], index: 15, kind: input, shape index: {}]
  %s16 = inlined_call_operand.vmem [shape: bf16[256,128], index: 16, kind: input, shape index: {}]
  %s17 = inlined_call_operand.vmem [shape: f32[1,128], index: 17, kind: input, shape index: {}]
  %s18 = inlined_call_operand.hbm [shape: f32[2,16,128], index: 18, kind: output, shape index: {}]
  %s19 = sld [smem:[#allocation0]]
  $region105: #{tpu_custom_call.1} parent=0
    _
  %s21 = ssub.s32 1, %s19
  %s22 = scalar_select 0, %s21, %s19
  $region1: #{tpu_custom_call.1} parent=0
    #allocation5 [shape = 'u8[16384]{0}', space=vmem, size = 0x4000, scoped, tag = 'output window, operand 0']
    #allocation6 [shape = 's32[2]{0}', space=sflag, size = 0x8, scoped, tag = 'scoped memory for tpu_custom_call.1']
    %23 = vsyncpa [#allocation6], 0
    %s24 = scalar_lea.sflag [#allocation6], 1
    %25 = vsyncpa %s24, 0
    loop: start=0, step=1, limit=4
    $region2: #{tpu_custom_call.1} parent=1 // loop_pre_header
      _
    $region3: #{tpu_custom_call.1} parent=1 // loop_header
      %s27 = sphi 0, %s31
      %p28 = scmp.ge.s32.totalorder %s27, 4
      %s34 = sphi 0, %s46
      %s35 = sphi 0, %s42
      %s36 = sphi 0, %s34
      %s37 = sphi 0, %s35
      %s38 = sphi 0, %s36
      %s39 = sphi 0, %s37
      %s49 = sphi 0, %s51
      %s52 = sphi 0, %s49
      %s53 = sphi 0, %s52
      %s69 = sphi 0, %s53
      %s75 = sphi 0, %s77
      %s78 = sphi 0, %s75
      %s79 = sphi 0, %s78
      %s95 = sphi 0, %s79
      %s99 = sphi 0, %s99
      %s101 = sphi 0, %s99
      %s102 = sphi 0, %s101
      %s116 = sphi 0, %s102
      %s120 = sphi 0, %s120
      %s122 = sphi 0, %s120
      %s123 = sphi 0, %s122
      %s137 = sphi 0, %s123
      %s141 = sphi 0, %s141
      %s143 = sphi 0, %s141
      %s144 = sphi 0, %s143
      %s158 = sphi 0, %s144
      %s162 = sphi 0, %s162
      %s164 = sphi 0, %s162
      %s165 = sphi 0, %s164
      %s179 = sphi 0, %s165
      %s183 = sphi 0, %s183
      %s185 = sphi 0, %s183
      %s186 = sphi 0, %s185
      %s200 = sphi 0, %s186
      %s204 = sphi 0, %s204
      %s206 = sphi 0, %s204
      %s207 = sphi 0, %s206
      %s221 = sphi 0, %s207
      %s225 = sphi 0, %s225
      %s227 = sphi 0, %s225
      %s228 = sphi 0, %s227
      %s242 = sphi 0, %s228
      %s246 = sphi 0, %s246
      %s248 = sphi 0, %s246
      %s249 = sphi 0, %s248
      %s263 = sphi 0, %s249
      %s267 = sphi 0, %s267
      %s269 = sphi 0, %s267
      %s270 = sphi 0, %s269
      %s284 = sphi 0, %s270
      %s288 = sphi 0, %s288
      %s290 = sphi 0, %s288
      %s291 = sphi 0, %s290
      %s305 = sphi 0, %s291
      %s309 = sphi 0, %s309
      %s311 = sphi 0, %s309
      %s312 = sphi 0, %s311
      %s326 = sphi 0, %s312
      %s330 = sphi 0, %s330
      %s332 = sphi 0, %s330
      %s333 = sphi 0, %s332
      %s347 = sphi 0, %s333
      %s351 = sphi 0, %s351
      %s353 = sphi 0, %s351
      %s354 = sphi 0, %s353
      %s368 = sphi 0, %s354
      %s372 = sphi 0, %s372
      %s374 = sphi 0, %s372
      %s375 = sphi 0, %s374
      %s389 = sphi 0, %s375
      %s393 = sphi 0, %s393
      %s395 = sphi 0, %s393
      %s396 = sphi 0, %s395
      %s410 = sphi 0, %s396
      %s414 = sphi 0, %s414
      %s416 = sphi 0, %s414
      %s417 = sphi 0, %s416
      %s431 = sphi 0, %s417
      %s439 = sphi 0, %s441
      %s442 = sphi 0, %s439
      %s443 = sphi 0, %s442
      %s459 = sphi 0, %s443
    $region4: #{tpu_custom_call.1} parent=1 // loop_header_branch
      %30 = sbr.rel (%p28) target = $region8
    $region5: #{tpu_custom_call.1} parent=1 // loop_body
      %s32 = ssub.s32 %s27, 1
      %s33 = ssub.s32 %s27, 2
      %s40 = sadd.s32 1, %s35
      %p41 = scmp.ge.s32.totalorder %s40, 1
      %s42 = scalar_select %p41, 0, %s40
      %s43 = sadd.s32 1, %s34
      %s44 = scalar_select %p41, %s43, %s34
      %p45 = scmp.ge.s32.totalorder %s44, 2
      %s46 = scalar_select %p45, 0, %s44
      %s47 = ssub.s32 %s34, %s46
      %p48 = scmp.eq.s32.totalorder %s47, 0
      %s50 = sadd.s32 %s49, 1
      %s51 = scalar_select %p48, %s49, %s50
      %p54 = pneg %p48
      %p55 = scmp.eq.s32.totalorder %s27, 1
      %p56 = por %p54, %p55
      %p57 = scmp.ne.s32.totalorder %s49, %s52
      %p58 = scmp.eq.s32.totalorder %s27, 0
      %p59 = por %p57, %p58
      %p60 = scmp.ne.s32.totalorder %s49, %s52
      %p61 = scmp.eq.s32.totalorder %s32, 1
      %p62 = por %p60, %p61
      %p63 = scmp.ne.s32.totalorder %s52, %s53
      %p64 = scmp.eq.s32.totalorder %s32, 0
      %p65 = por %p63, %p64
      %p66 = scmp.ne.s32.totalorder %s52, %s53
      %p67 = scmp.eq.s32.totalorder %s33, 1
      %p68 = por %p66, %p67
      %p70 = scmp.ne.s32.totalorder %s53, %s69
      %p71 = scmp.eq.s32.totalorder %s33, 0
      %p72 = por %p70, %p71
      %s73 = ssub.s32 %s34, %s46
      %p74 = scmp.eq.s32.totalorder %s73, 0
      %s76 = sadd.s32 %s75, 1
      %s77 = scalar_select %p74, %s75, %s76
      %p80 = pneg %p74
      %p81 = scmp.eq.s32.totalorder %s27, 1
      %p82 = por %p80, %p81
      %p83 = scmp.ne.s32.totalorder %s75, %s78
      %p84 = scmp.eq.s32.totalorder %s27, 0
      %p85 = por %p83, %p84
      %p86 = scmp.ne.s32.totalorder %s75, %s78
      %p87 = scmp.eq.s32.totalorder %s32, 1
      %p88 = por %p86, %p87
      %p89 = scmp.ne.s32.totalorder %s78, %s79
      %p90 = scmp.eq.s32.totalorder %s32, 0
      %p91 = por %p89, %p90
      %p92 = scmp.ne.s32.totalorder %s78, %s79
      %p93 = scmp.eq.s32.totalorder %s33, 1
      %p94 = por %p92, %p93
      %p96 = scmp.ne.s32.totalorder %s79, %s95
      %p97 = scmp.eq.s32.totalorder %s33, 0
      %p98 = por %p96, %p97
      %s100 = sadd.s32 %s99, 1
      %p103 = scmp.eq.s32.totalorder %s27, 1
      %p104 = scmp.ne.s32.totalorder %s99, %s101
      %p105 = scmp.eq.s32.totalorder %s27, 0
      %p106 = por %p104, %p105
      %p107 = scmp.ne.s32.totalorder %s99, %s101
      %p108 = scmp.eq.s32.totalorder %s32, 1
      %p109 = por %p107, %p108
      %p110 = scmp.ne.s32.totalorder %s101, %s102
      %p111 = scmp.eq.s32.totalorder %s32, 0
      %p112 = por %p110, %p111
      %p113 = scmp.ne.s32.totalorder %s101, %s102
      %p114 = scmp.eq.s32.totalorder %s33, 1
      %p115 = por %p113, %p114
      %p117 = scmp.ne.s32.totalorder %s102, %s116
      %p118 = scmp.eq.s32.totalorder %s33, 0
      %p119 = por %p117, %p118
      %s121 = sadd.s32 %s120, 1
      %p124 = scmp.eq.s32.totalorder %s27, 1
      %p125 = scmp.ne.s32.totalorder %s120, %s122
      %p126 = scmp.eq.s32.totalorder %s27, 0
      %p127 = por %p125, %p126
      %p128 = scmp.ne.s32.totalorder %s120, %s122
      %p129 = scmp.eq.s32.totalorder %s32, 1
      %p130 = por %p128, %p129
      %p131 = scmp.ne.s32.totalorder %s122, %s123
      %p132 = scmp.eq.s32.totalorder %s32, 0
      %p133 = por %p131, %p132
      %p134 = scmp.ne.s32.totalorder %s122, %s123
      %p135 = scmp.eq.s32.totalorder %s33, 1
      %p136 = por %p134, %p135
      %p138 = scmp.ne.s32.totalorder %s123, %s137
      %p139 = scmp.eq.s32.totalorder %s33, 0
      %p140 = por %p138, %p139
      %s142 = sadd.s32 %s141, 1
      %p145 = scmp.eq.s32.totalorder %s27, 1
      %p146 = scmp.ne.s32.totalorder %s141, %s143
      %p147 = scmp.eq.s32.totalorder %s27, 0
      %p148 = por %p146, %p147
      %p149 = scmp.ne.s32.totalorder %s141, %s143
      %p150 = scmp.eq.s32.totalorder %s32, 1
      %p151 = por %p149, %p150
      %p152 = scmp.ne.s32.totalorder %s143, %s144
      %p153 = scmp.eq.s32.totalorder %s32, 0
      %p154 = por %p152, %p153
      %p155 = scmp.ne.s32.totalorder %s143, %s144
      %p156 = scmp.eq.s32.totalorder %s33, 1
      %p157 = por %p155, %p156
      %p159 = scmp.ne.s32.totalorder %s144, %s158
      %p160 = scmp.eq.s32.totalorder %s33, 0
      %p161 = por %p159, %p160
      %s163 = sadd.s32 %s162, 1
      %p166 = scmp.eq.s32.totalorder %s27, 1
      %p167 = scmp.ne.s32.totalorder %s162, %s164
      %p168 = scmp.eq.s32.totalorder %s27, 0
      %p169 = por %p167, %p168
      %p170 = scmp.ne.s32.totalorder %s162, %s164
      %p171 = scmp.eq.s32.totalorder %s32, 1
      %p172 = por %p170, %p171
      %p173 = scmp.ne.s32.totalorder %s164, %s165
      %p174 = scmp.eq.s32.totalorder %s32, 0
      %p175 = por %p173, %p174
      %p176 = scmp.ne.s32.totalorder %s164, %s165
      %p177 = scmp.eq.s32.totalorder %s33, 1
      %p178 = por %p176, %p177
      %p180 = scmp.ne.s32.totalorder %s165, %s179
      %p181 = scmp.eq.s32.totalorder %s33, 0
      %p182 = por %p180, %p181
      %s184 = sadd.s32 %s183, 1
      %p187 = scmp.eq.s32.totalorder %s27, 1
      %p188 = scmp.ne.s32.totalorder %s183, %s185
      %p189 = scmp.eq.s32.totalorder %s27, 0
      %p190 = por %p188, %p189
      %p191 = scmp.ne.s32.totalorder %s183, %s185
      %p192 = scmp.eq.s32.totalorder %s32, 1
      %p193 = por %p191, %p192
      %p194 = scmp.ne.s32.totalorder %s185, %s186
      %p195 = scmp.eq.s32.totalorder %s32, 0
      %p196 = por %p194, %p195
      %p197 = scmp.ne.s32.totalorder %s185, %s186
      %p198 = scmp.eq.s32.totalorder %s33, 1
      %p199 = por %p197, %p198
      %p201 = scmp.ne.s32.totalorder %s186, %s200
      %p202 = scmp.eq.s32.totalorder %s33, 0
      %p203 = por %p201, %p202
      %s205 = sadd.s32 %s204, 1
      %p208 = scmp.eq.s32.totalorder %s27, 1
      %p209 = scmp.ne.s32.totalorder %s204, %s206
      %p210 = scmp.eq.s32.totalorder %s27, 0
      %p211 = por %p209, %p210
      %p212 = scmp.ne.s32.totalorder %s204, %s206
      %p213 = scmp.eq.s32.totalorder %s32, 1
      %p214 = por %p212, %p213
      %p215 = scmp.ne.s32.totalorder %s206, %s207
      %p216 = scmp.eq.s32.totalorder %s32, 0
      %p217 = por %p215, %p216
      %p218 = scmp.ne.s32.totalorder %s206, %s207
      %p219 = scmp.eq.s32.totalorder %s33, 1
      %p220 = por %p218, %p219
      %p222 = scmp.ne.s32.totalorder %s207, %s221
      %p223 = scmp.eq.s32.totalorder %s33, 0
      %p224 = por %p222, %p223
      %s226 = sadd.s32 %s225, 1
      %p229 = scmp.eq.s32.totalorder %s27, 1
      %p230 = scmp.ne.s32.totalorder %s225, %s227
      %p231 = scmp.eq.s32.totalorder %s27, 0
      %p232 = por %p230, %p231
      %p233 = scmp.ne.s32.totalorder %s225, %s227
      %p234 = scmp.eq.s32.totalorder %s32, 1
      %p235 = por %p233, %p234
      %p236 = scmp.ne.s32.totalorder %s227, %s228
      %p237 = scmp.eq.s32.totalorder %s32, 0
      %p238 = por %p236, %p237
      %p239 = scmp.ne.s32.totalorder %s227, %s228
      %p240 = scmp.eq.s32.totalorder %s33, 1
      %p241 = por %p239, %p240
      %p243 = scmp.ne.s32.totalorder %s228, %s242
      %p244 = scmp.eq.s32.totalorder %s33, 0
      %p245 = por %p243, %p244
      %s247 = sadd.s32 %s246, 1
      %p250 = scmp.eq.s32.totalorder %s27, 1
      %p251 = scmp.ne.s32.totalorder %s246, %s248
      %p252 = scmp.eq.s32.totalorder %s27, 0
      %p253 = por %p251, %p252
      %p254 = scmp.ne.s32.totalorder %s246, %s248
      %p255 = scmp.eq.s32.totalorder %s32, 1
      %p256 = por %p254, %p255
      %p257 = scmp.ne.s32.totalorder %s248, %s249
      %p258 = scmp.eq.s32.totalorder %s32, 0
      %p259 = por %p257, %p258
      %p260 = scmp.ne.s32.totalorder %s248, %s249
      %p261 = scmp.eq.s32.totalorder %s33, 1
      %p262 = por %p260, %p261
      %p264 = scmp.ne.s32.totalorder %s249, %s263
      %p265 = scmp.eq.s32.totalorder %s33, 0
      %p266 = por %p264, %p265
      %s268 = sadd.s32 %s267, 1
      %p271 = scmp.eq.s32.totalorder %s27, 1
      %p272 = scmp.ne.s32.totalorder %s267, %s269
      %p273 = scmp.eq.s32.totalorder %s27, 0
      %p274 = por %p272, %p273
      %p275 = scmp.ne.s32.totalorder %s267, %s269
      %p276 = scmp.eq.s32.totalorder %s32, 1
      %p277 = por %p275, %p276
      %p278 = scmp.ne.s32.totalorder %s269, %s270
      %p279 = scmp.eq.s32.totalorder %s32, 0
      %p280 = por %p278, %p279
      %p281 = scmp.ne.s32.totalorder %s269, %s270
      %p282 = scmp.eq.s32.totalorder %s33, 1
      %p283 = por %p281, %p282
      %p285 = scmp.ne.s32.totalorder %s270, %s284
      %p286 = scmp.eq.s32.totalorder %s33, 0
      %p287 = por %p285, %p286
      %s289 = sadd.s32 %s288, 1
      %p292 = scmp.eq.s32.totalorder %s27, 1
      %p293 = scmp.ne.s32.totalorder %s288, %s290
      %p294 = scmp.eq.s32.totalorder %s27, 0
      %p295 = por %p293, %p294
      %p296 = scmp.ne.s32.totalorder %s288, %s290
      %p297 = scmp.eq.s32.totalorder %s32, 1
      %p298 = por %p296, %p297
      %p299 = scmp.ne.s32.totalorder %s290, %s291
      %p300 = scmp.eq.s32.totalorder %s32, 0
      %p301 = por %p299, %p300
      %p302 = scmp.ne.s32.totalorder %s290, %s291
      %p303 = scmp.eq.s32.totalorder %s33, 1
      %p304 = por %p302, %p303
      %p306 = scmp.ne.s32.totalorder %s291, %s305
      %p307 = scmp.eq.s32.totalorder %s33, 0
      %p308 = por %p306, %p307
      %s310 = sadd.s32 %s309, 1
      %p313 = scmp.eq.s32.totalorder %s27, 1
      %p314 = scmp.ne.s32.totalorder %s309, %s311
      %p315 = scmp.eq.s32.totalorder %s27, 0
      %p316 = por %p314, %p315
      %p317 = scmp.ne.s32.totalorder %s309, %s311
      %p318 = scmp.eq.s32.totalorder %s32, 1
      %p319 = por %p317, %p318
      %p320 = scmp.ne.s32.totalorder %s311, %s312
      %p321 = scmp.eq.s32.totalorder %s32, 0
      %p322 = por %p320, %p321
      %p323 = scmp.ne.s32.totalorder %s311, %s312
      %p324 = scmp.eq.s32.totalorder %s33, 1
      %p325 = por %p323, %p324
      %p327 = scmp.ne.s32.totalorder %s312, %s326
      %p328 = scmp.eq.s32.totalorder %s33, 0
      %p329 = por %p327, %p328
      %s331 = sadd.s32 %s330, 1
      %p334 = scmp.eq.s32.totalorder %s27, 1
      %p335 = scmp.ne.s32.totalorder %s330, %s332
      %p336 = scmp.eq.s32.totalorder %s27, 0
      %p337 = por %p335, %p336
      %p338 = scmp.ne.s32.totalorder %s330, %s332
      %p339 = scmp.eq.s32.totalorder %s32, 1
      %p340 = por %p338, %p339
      %p341 = scmp.ne.s32.totalorder %s332, %s333
      %p342 = scmp.eq.s32.totalorder %s32, 0
      %p343 = por %p341, %p342
      %p344 = scmp.ne.s32.totalorder %s332, %s333
      %p345 = scmp.eq.s32.totalorder %s33, 1
      %p346 = por %p344, %p345
      %p348 = scmp.ne.s32.totalorder %s333, %s347
      %p349 = scmp.eq.s32.totalorder %s33, 0
      %p350 = por %p348, %p349
      %s352 = sadd.s32 %s351, 1
      %p355 = scmp.eq.s32.totalorder %s27, 1
      %p356 = scmp.ne.s32.totalorder %s351, %s353
      %p357 = scmp.eq.s32.totalorder %s27, 0
      %p358 = por %p356, %p357
      %p359 = scmp.ne.s32.totalorder %s351, %s353
      %p360 = scmp.eq.s32.totalorder %s32, 1
      %p361 = por %p359, %p360
      %p362 = scmp.ne.s32.totalorder %s353, %s354
      %p363 = scmp.eq.s32.totalorder %s32, 0
      %p364 = por %p362, %p363
      %p365 = scmp.ne.s32.totalorder %s353, %s354
      %p366 = scmp.eq.s32.totalorder %s33, 1
      %p367 = por %p365, %p366
      %p369 = scmp.ne.s32.totalorder %s354, %s368
      %p370 = scmp.eq.s32.totalorder %s33, 0
      %p371 = por %p369, %p370
      %s373 = sadd.s32 %s372, 1
      %p376 = scmp.eq.s32.totalorder %s27, 1
      %p377 = scmp.ne.s32.totalorder %s372, %s374
      %p378 = scmp.eq.s32.totalorder %s27, 0
      %p379 = por %p377, %p378
      %p380 = scmp.ne.s32.totalorder %s372, %s374
      %p381 = scmp.eq.s32.totalorder %s32, 1
      %p382 = por %p380, %p381
      %p383 = scmp.ne.s32.totalorder %s374, %s375
      %p384 = scmp.eq.s32.totalorder %s32, 0
      %p385 = por %p383, %p384
      %p386 = scmp.ne.s32.totalorder %s374, %s375
      %p387 = scmp.eq.s32.totalorder %s33, 1
      %p388 = por %p386, %p387
      %p390 = scmp.ne.s32.totalorder %s375, %s389
      %p391 = scmp.eq.s32.totalorder %s33, 0
      %p392 = por %p390, %p391
      %s394 = sadd.s32 %s393, 1
      %p397 = scmp.eq.s32.totalorder %s27, 1
      %p398 = scmp.ne.s32.totalorder %s393, %s395
      %p399 = scmp.eq.s32.totalorder %s27, 0
      %p400 = por %p398, %p399
      %p401 = scmp.ne.s32.totalorder %s393, %s395
      %p402 = scmp.eq.s32.totalorder %s32, 1
      %p403 = por %p401, %p402
      %p404 = scmp.ne.s32.totalorder %s395, %s396
      %p405 = scmp.eq.s32.totalorder %s32, 0
      %p406 = por %p404, %p405
      %p407 = scmp.ne.s32.totalorder %s395, %s396
      %p408 = scmp.eq.s32.totalorder %s33, 1
      %p409 = por %p407, %p408
      %p411 = scmp.ne.s32.totalorder %s396, %s410
      %p412 = scmp.eq.s32.totalorder %s33, 0
      %p413 = por %p411, %p412
      %s415 = sadd.s32 %s414, 1
      %p418 = scmp.eq.s32.totalorder %s27, 1
      %p419 = scmp.ne.s32.totalorder %s414, %s416
      %p420 = scmp.eq.s32.totalorder %s27, 0
      %p421 = por %p419, %p420
      %p422 = scmp.ne.s32.totalorder %s414, %s416
      %p423 = scmp.eq.s32.totalorder %s32, 1
      %p424 = por %p422, %p423
      %p425 = scmp.ne.s32.totalorder %s416, %s417
      %p426 = scmp.eq.s32.totalorder %s32, 0
      %p427 = por %p425, %p426
      %p428 = scmp.ne.s32.totalorder %s416, %s417
      %p429 = scmp.eq.s32.totalorder %s33, 1
      %p430 = por %p428, %p429
      %p432 = scmp.ne.s32.totalorder %s417, %s431
      %p433 = scmp.eq.s32.totalorder %s33, 0
      %p434 = por %p432, %p433
      %s435 = ssub.s32 %s34, %s46
      %s436 = ssub.s32 %s35, %s42
      %s437 = sor.u32 %s435, %s436
      %p438 = scmp.eq.s32.totalorder %s437, 0
      %s440 = sadd.s32 %s439, 1
      %s441 = scalar_select %p438, %s439, %s440
      %p444 = pneg %p438
      %p445 = scmp.eq.s32.totalorder %s27, 1
      %p446 = por %p444, %p445
      %p447 = scmp.ne.s32.totalorder %s439, %s442
      %p448 = scmp.eq.s32.totalorder %s27, 0
      %p449 = por %p447, %p448
      %p450 = scmp.ne.s32.totalorder %s439, %s442
      %p451 = scmp.eq.s32.totalorder %s32, 1
      %p452 = por %p450, %p451
      %p453 = scmp.ne.s32.totalorder %s442, %s443
      %p454 = scmp.eq.s32.totalorder %s32, 0
      %p455 = por %p453, %p454
      %p456 = scmp.ne.s32.totalorder %s442, %s443
      %p457 = scmp.eq.s32.totalorder %s33, 1
      %p458 = por %p456, %p457
      %p460 = scmp.ne.s32.totalorder %s443, %s459
      %p461 = scmp.eq.s32.totalorder %s33, 0
      %p462 = por %p460, %p461
      %p463 = scmp.le.s32.totalorder 1, %s27
      %p464 = scmp.lt.s32.totalorder %s27, 3
      %p465 = pnand %p463, %p464
      %p466 = pneg %p465
      // Predicated region
      $region9: #{tpu_custom_call.1} parent=5 // pred_check
        _
      $region10: #{tpu_custom_call.1} parent=5 // pred_check_branch
        %468 = sbr.rel (%p465) target = $region12
      $region11: #{tpu_custom_call.1} parent=5 // pred_region
        %s469 = ssub.s32 %s27, 1
        // Predicated region
        $region13: #{tpu_custom_call.1} parent=11 // pred_check
          %p470 = pneg %p112
        $region14: #{tpu_custom_call.1} parent=11 // pred_check_branch
          %472 = sbr.rel (%p470) target = $region16
        $region15: #{tpu_custom_call.1} parent=11 // pred_region
          _
        $region16: #{tpu_custom_call.1} parent=11 // pred_fallthru
          _
        // Predicated region
        $region17: #{tpu_custom_call.1} parent=11 // pred_check
          %p473 = pneg %p133
        $region18: #{tpu_custom_call.1} parent=11 // pred_check_branch
          %475 = sbr.rel (%p473) target = $region20
        $region19: #{tpu_custom_call.1} parent=11 // pred_region
          _
        $region20: #{tpu_custom_call.1} parent=11 // pred_fallthru
          _
        // Predicated region
        $region21: #{tpu_custom_call.1} parent=11 // pred_check
          %p476 = pneg %p154
        $region22: #{tpu_custom_call.1} parent=11 // pred_check_branch
          %478 = sbr.rel (%p476) target = $region24
        $region23: #{tpu_custom_call.1} parent=11 // pred_region
          _
        $region24: #{tpu_custom_call.1} parent=11 // pred_fallthru
          _
        // Predicated region
        $region25: #{tpu_custom_call.1} parent=11 // pred_check
          %p479 = pneg %p175
        $region26: #{tpu_custom_call.1} parent=11 // pred_check_branch
          %481 = sbr.rel (%p479) target = $region28
        $region27: #{tpu_custom_call.1} parent=11 // pred_region
          _
        $region28: #{tpu_custom_call.1} parent=11 // pred_fallthru
          _
        // Predicated region
        $region29: #{tpu_custom_call.1} parent=11 // pred_check
          %p482 = pneg %p196
        $region30: #{tpu_custom_call.1} parent=11 // pred_check_branch
          %484 = sbr.rel (%p482) target = $region32
        $region31: #{tpu_custom_call.1} parent=11 // pred_region
          _
        $region32: #{tpu_custom_call.1} parent=11 // pred_fallthru
          _
        // Predicated region
        $region33: #{tpu_custom_call.1} parent=11 // pred_check
          %p485 = pneg %p217
        $region34: #{tpu_custom_call.1} parent=11 // pred_check_branch
          %487 = sbr.rel (%p485) target = $region36
        $region35: #{tpu_custom_call.1} parent=11 // pred_region
          _
        $region36: #{tpu_custom_call.1} parent=11 // pred_fallthru
          _
        // Predicated region
        $region37: #{tpu_custom_call.1} parent=11 // pred_check
          %p488 = pneg %p238
        $region38: #{tpu_custom_call.1} parent=11 // pred_check_branch
          %490 = sbr.rel (%p488) target = $region40
        $region39: #{tpu_custom_call.1} parent=11 // pred_region
          _
        $region40: #{tpu_custom_call.1} parent=11 // pred_fallthru
          _
        // Predicated region
        $region41: #{tpu_custom_call.1} parent=11 // pred_check
          %p491 = pneg %p259
        $region42: #{tpu_custom_call.1} parent=11 // pred_check_branch
          %493 = sbr.rel (%p491) target = $region44
        $region43: #{tpu_custom_call.1} parent=11 // pred_region
          _
        $region44: #{tpu_custom_call.1} parent=11 // pred_fallthru
          _
        // Predicated region
        $region45: #{tpu_custom_call.1} parent=11 // pred_check
          %p494 = pneg %p280
        $region46: #{tpu_custom_call.1} parent=11 // pred_check_branch
          %496 = sbr.rel (%p494) target = $region48
        $region47: #{tpu_custom_call.1} parent=11 // pred_region
          _
        $region48: #{tpu_custom_call.1} parent=11 // pred_fallthru
          _
        // Predicated region
        $region49: #{tpu_custom_call.1} parent=11 // pred_check
          %p497 = pneg %p301
        $region50: #{tpu_custom_call.1} parent=11 // pred_check_branch
          %499 = sbr.rel (%p497) target = $region52
        $region51: #{tpu_custom_call.1} parent=11 // pred_region
          _
        $region52: #{tpu_custom_call.1} parent=11 // pred_fallthru
          _
        // Predicated region
        $region53: #{tpu_custom_call.1} parent=11 // pred_check
          %p500 = pneg %p322
        $region54: #{tpu_custom_call.1} parent=11 // pred_check_branch
          %502 = sbr.rel (%p500) target = $region56
        $region55: #{tpu_custom_call.1} parent=11 // pred_region
          _
        $region56: #{tpu_custom_call.1} parent=11 // pred_fallthru
          _
        // Predicated region
        $region57: #{tpu_custom_call.1} parent=11 // pred_check
          %p503 = pneg %p343
        $region58: #{tpu_custom_call.1} parent=11 // pred_check_branch
          %505 = sbr.rel (%p503) target = $region60
        $region59: #{tpu_custom_call.1} parent=11 // pred_region
          _
        $region60: #{tpu_custom_call.1} parent=11 // pred_fallthru
          _
        // Predicated region
        $region61: #{tpu_custom_call.1} parent=11 // pred_check
          %p506 = pneg %p364
        $region62: #{tpu_custom_call.1} parent=11 // pred_check_branch
          %508 = sbr.rel (%p506) target = $region64
        $region63: #{tpu_custom_call.1} parent=11 // pred_region
          _
        $region64: #{tpu_custom_call.1} parent=11 // pred_fallthru
          _
        // Predicated region
        $region65: #{tpu_custom_call.1} parent=11 // pred_check
          %p509 = pneg %p385
        $region66: #{tpu_custom_call.1} parent=11 // pred_check_branch
          %511 = sbr.rel (%p509) target = $region68
        $region67: #{tpu_custom_call.1} parent=11 // pred_region
          _
        $region68: #{tpu_custom_call.1} parent=11 // pred_fallthru
          _
        // Predicated region
        $region69: #{tpu_custom_call.1} parent=11 // pred_check
          %p512 = pneg %p406
        $region70: #{tpu_custom_call.1} parent=11 // pred_check_branch
          %514 = sbr.rel (%p512) target = $region72
        $region71: #{tpu_custom_call.1} parent=11 // pred_region
          _
        $region72: #{tpu_custom_call.1} parent=11 // pred_fallthru
          _
        // Predicated region
        $region73: #{tpu_custom_call.1} parent=11 // pred_check
          %p515 = pneg %p427
        $region74: #{tpu_custom_call.1} parent=11 // pred_check_branch
          %517 = sbr.rel (%p515) target = $region76
        $region75: #{tpu_custom_call.1} parent=11 // pred_region
          _
        $region76: #{tpu_custom_call.1} parent=11 // pred_fallthru
          _
      $region12: #{tpu_custom_call.1} parent=5 // pred_fallthru
        _
      %p518 = scmp.lt.s32.totalorder %s27, 2
      // Predicated region
      $region77: #{tpu_custom_call.1} parent=5 // pred_check
        %p519 = pneg %p518
      $region78: #{tpu_custom_call.1} parent=5 // pred_check_branch
        %521 = sbr.rel (%p519) target = $region80
      $region79: #{tpu_custom_call.1} parent=5 // pred_region
        // Predicated region
        $region81: #{tpu_custom_call.1} parent=79 // pred_check
          %p522 = pneg %p59
        $region82: #{tpu_custom_call.1} parent=79 // pred_check_branch
          %524 = sbr.rel (%p522) target = $region84
        $region83: #{tpu_custom_call.1} parent=79 // pred_region
          %p525 = scmp.lt.s32.totalorder %s34, 1
          %s526 = scalar_select %p525, %s34, 1
          %s527 = scalar_lea.vmem %s0, %s526
        $region84: #{tpu_custom_call.1} parent=79 // pred_fallthru
          _
        // Predicated region
        $region85: #{tpu_custom_call.1} parent=79 // pred_check
          %p528 = pneg %p85
        $region86: #{tpu_custom_call.1} parent=79 // pred_check_branch
          %530 = sbr.rel (%p528) target = $region88
        $region87: #{tpu_custom_call.1} parent=79 // pred_region
          %p531 = scmp.lt.s32.totalorder %s34, 1
          %s532 = scalar_select %p531, %s34, 1
          %s533 = smul.addr %s532, 2
          %s534 = smul.addr %s533, 8
          %s535 = scalar_lea.vmem %s1, %s534
        $region88: #{tpu_custom_call.1} parent=79 // pred_fallthru
          _
      $region80: #{tpu_custom_call.1} parent=5 // pred_fallthru
        _
      %p536 = scmp.le.s32.totalorder 1, %s27
      %p537 = scmp.lt.s32.totalorder %s27, 3
      %p538 = pnand %p536, %p537
      %p539 = pneg %p538
      // Predicated region
      $region89: #{tpu_custom_call.1} parent=5 // pred_check
        _
      $region90: #{tpu_custom_call.1} parent=5 // pred_check_branch
        %541 = sbr.rel (%p538) target = $region92
      $region91: #{tpu_custom_call.1} parent=5 // pred_region
        %s542 = ssub.s32 %s27, 1
        %p543 = scmp.lt.s32.totalorder %s36, 1
        %s544 = scalar_select %p543, %s36, 1
        %s545 = scalar_lea.vmem %s0, %s544
        %p546 = pneg %p65
        %p547 = pneg %p62
        %p548 = scmp.lt.s32.totalorder %s36, 1
        %s549 = scalar_select %p548, %s36, 1
        %s550 = smul.addr %s549, 2
        %s551 = smul.addr %s550, 8
        %s552 = scalar_lea.vmem %s1, %s551
        %p553 = pneg %p91
        %p554 = pneg %p88
        %p555 = pneg %p112
        %p556 = pneg %p109
        %p557 = pneg %p133
        %p558 = pneg %p130
        %p559 = pneg %p154
        %p560 = pneg %p151
        %p561 = pneg %p175
        %p562 = pneg %p172
        %p563 = pneg %p196
        %p564 = pneg %p193
        %p565 = pneg %p217
        %p566 = pneg %p214
        %p567 = pneg %p238
        %p568 = pneg %p235
        %p569 = pneg %p259
        %p570 = pneg %p256
        %p571 = pneg %p280
        %p572 = pneg %p277
        %p573 = pneg %p301
        %p574 = pneg %p298
        %p575 = pneg %p322
        %p576 = pneg %p319
        %p577 = pneg %p343
        %p578 = pneg %p340
        %p579 = pneg %p364
        %p580 = pneg %p361
        %p581 = pneg %p385
        %p582 = pneg %p382
        %p583 = pneg %p406
        %p584 = pneg %p403
        %p585 = pneg %p427
        %p586 = pneg %p424
        %p587 = pneg %p455
        %p588 = pneg %p452
        %s589 = sand.u32 %s442, 1
        %s590 = scalar_lea.sflag [#allocation6], %s589
        %s591 = sand.u32 %s442, 1
        %s592 = smul.addr %s591, 16
        %s593 = scalar_lea.vmem [#allocation5], %s592
        %p594 = scmp.lt.s32.totalorder %s36, 1
        %s595 = scalar_select %p594, %s36, 1
        %s596 = scalar_lea.vmem %s0, %s595
        %p597 = scmp.lt.s32.totalorder %s36, 1
        %s598 = scalar_select %p597, %s36, 1
        %s599 = smul.addr %s598, 2
        %s600 = smul.addr %s599, 8
        %s601 = scalar_lea.vmem %s1, %s600
        %s602 = smul.u32 2, %s37
        %v604 = vld [vmem:[%s601] sm:$0xff]
        %v605 = vld [vmem:[%s601 + $0x8] sm:$0xff]
        %s606 = smul.u32 %s37, 16
        %s607 = scalar_lea.vmem %s601, %s606
        %v608 = vld [vmem:[%s607] sm:$0xff]
        %v609 = vld [vmem:[%s607 + $0x8] sm:$0xff]
        %v610 = vld [vmem:[%s596] sm:$0x1]
        %vm611 = vcmp.eq.s32.totalorder %v610, 0
        %v612 = vld [vmem:[%s2] sm:$0x1]
        %v613 = vld [vmem:[%s3] sm:$0x1]
        %614 = vadd.xlane.f32.xlu0 %v604
        %v615 = vpop.xlane.xlu0 %614
        %616 = vadd.xlane.f32.xlu0 %v605
        %v617 = vpop.xlane.xlu0 %616
        %v618 = vrcp.pop 128.0
        %v619 = vmul.f32 128.0, %v618
        %v620 = vsub.f32 1.0, %v619
        %v621 = vmul.f32 %v618, %v620
        %v622 = vadd.f32 %v618, %v621
        %vm623 = vweird.f32 %v618
        %v624 = vsel %vm623, %v618, %v622
        %v625 = vmul.f32 %v615, %v624
        %v626 = vmul.f32 %v617, %v624
        %v627 = vsub.f32 %v604, %v625
        %v628 = vsub.f32 %v605, %v626
        %v629 = vmul.f32 %v627, %v627
        %v630 = vmul.f32 %v628, %v628
        %631 = vadd.xlane.f32.xlu0 %v629
        %v632 = vpop.xlane.xlu0 %631
        %633 = vadd.xlane.f32.xlu0 %v630
        %v634 = vpop.xlane.xlu0 %633
        %v635 = vmul.f32 %v632, %v624
        %v636 = vmul.f32 %v634, %v624
        %v637 = vadd.f32 %v635, 1e-12
        %v638 = vadd.f32 %v636, 1e-12
        %v639 = vrsqrt.pop %v637
        %v640 = vmul.f32 %v639, %v637
        %v641 = vmul.f32 %v640, %v639
        %v642 = vmul.f32 0.5, %v641
        %v643 = vsub.f32 1.5, %v642
        %v644 = vmul.f32 %v639, %v643
        %vm645 = vweird.f32 %v637
        %vm646 = vweird.f32 %v639
        %vm647 = vmor %vm645, %vm646
        %v648 = vsel %vm647, %v639, %v644
        %v649 = vrsqrt.pop %v638
        %v650 = vmul.f32 %v649, %v638
        %v651 = vmul.f32 %v650, %v649
        %v652 = vmul.f32 0.5, %v651
        %v653 = vsub.f32 1.5, %v652
        %v654 = vmul.f32 %v649, %v653
        %vm655 = vweird.f32 %v638
        %vm656 = vweird.f32 %v649
        %vm657 = vmor %vm655, %vm656
        %v658 = vsel %vm657, %v649, %v654
        %v659 = vmul.f32 %v627, %v648
        %v660 = vmul.f32 %v628, %v658
        %v662 = vperm.slane %v612, 0
        %v664 = vmul.f32 %v659, %v662
        %v665 = vmul.f32 %v660, %v662
        %v667 = vperm.slane %v613, 0
        %v669 = vadd.f32 %v664, %v667
        %v670 = vadd.f32 %v665, %v667
        %v671 = vpack.c.bf16 %v670, %v669
        %672 = vadd.xlane.f32.xlu0 %v608
        %v673 = vpop.xlane.xlu0 %672
        %674 = vadd.xlane.f32.xlu0 %v609
        %v675 = vpop.xlane.xlu0 %674
        %v676 = vmul.f32 %v673, %v624
        %v677 = vmul.f32 %v675, %v624
        %v678 = vsub.f32 %v608, %v676
        %v679 = vsub.f32 %v609, %v677
        %v680 = vmul.f32 %v678, %v678
        %v681 = vmul.f32 %v679, %v679
        %682 = vadd.xlane.f32.xlu0 %v680
        %v683 = vpop.xlane.xlu0 %682
        %684 = vadd.xlane.f32.xlu0 %v681
        %v685 = vpop.xlane.xlu0 %684
        %v686 = vmul.f32 %v683, %v624
        %v687 = vmul.f32 %v685, %v624
        %v688 = vadd.f32 %v686, 1e-12
        %v689 = vadd.f32 %v687, 1e-12
        %v690 = vrsqrt.pop %v688
        %v691 = vmul.f32 %v690, %v688
        %v692 = vmul.f32 %v691, %v690
        %v693 = vmul.f32 0.5, %v692
        %v694 = vsub.f32 1.5, %v693
        %v695 = vmul.f32 %v690, %v694
        %vm696 = vweird.f32 %v688
        %vm697 = vweird.f32 %v690
        %vm698 = vmor %vm696, %vm697
        %v699 = vsel %vm698, %v690, %v695
        %v700 = vrsqrt.pop %v689
        %v701 = vmul.f32 %v700, %v689
        %v702 = vmul.f32 %v701, %v700
        %v703 = vmul.f32 0.5, %v702
        %v704 = vsub.f32 1.5, %v703
        %v705 = vmul.f32 %v700, %v704
        %vm706 = vweird.f32 %v689
        %vm707 = vweird.f32 %v700
        %vm708 = vmor %vm706, %vm707
        %v709 = vsel %vm708, %v700, %v705
        %v710 = vmul.f32 %v678, %v699
        %v711 = vmul.f32 %v679, %v709
        %v712 = vmul.f32 %v710, %v662
        %v713 = vmul.f32 %v711, %v662
        %v714 = vadd.f32 %v712, %v667
        %v715 = vadd.f32 %v713, %v667
        %v716 = vpack.c.bf16 %v715, %v714
        %v717 = vld [vmem:[%s4] sm:$0xf]
        %v718 = vld [vmem:[%s4 + $0x4] sm:$0xf]
        %v719 = vld [vmem:[%s4 + $0x8] sm:$0xf]
        %v720 = vld [vmem:[%s4 + $0xc] sm:$0xf]
        %v721 = vld [vmem:[%s4 + $0x10] sm:$0xf]
        %v722 = vld [vmem:[%s4 + $0x14] sm:$0xf]
        %v723 = vld [vmem:[%s4 + $0x18] sm:$0xf]
        %v724 = vld [vmem:[%s4 + $0x1c] sm:$0xf]
        %v725 = vld [vmem:[%s4 + $0x20] sm:$0xf]
        %v726 = vld [vmem:[%s4 + $0x24] sm:$0xf]
        %v727 = vld [vmem:[%s4 + $0x28] sm:$0xf]
        %v728 = vld [vmem:[%s4 + $0x2c] sm:$0xf]
        %v729 = vld [vmem:[%s4 + $0x30] sm:$0xf]
        %v730 = vld [vmem:[%s4 + $0x34] sm:$0xf]
        %v731 = vld [vmem:[%s4 + $0x38] sm:$0xf]
        %v732 = vld [vmem:[%s4 + $0x3c] sm:$0xf]
        %v733 = vld [vmem:[%s5] sm:$0x1]
        %v735 = vperm.slane %v733, 0
        %v753 = vunpack.c.l.b16 %v717
        %v754 = vunpack.c.l.b16 %v718
        %v755 = vunpack.c.l.b16 %v719
        %v756 = vunpack.c.l.b16 %v720
        %v757 = vunpack.c.l.b16 %v721
        %v758 = vunpack.c.l.b16 %v722
        %v759 = vunpack.c.l.b16 %v723
        %v760 = vunpack.c.l.b16 %v724
        %v761 = vunpack.c.l.b16 %v725
        %v762 = vunpack.c.l.b16 %v726
        %v763 = vunpack.c.l.b16 %v727
        %v764 = vunpack.c.l.b16 %v728
        %v765 = vunpack.c.l.b16 %v729
        %v766 = vunpack.c.l.b16 %v730
        %v767 = vunpack.c.l.b16 %v731
        %v768 = vunpack.c.l.b16 %v732
        %v769 = vpack.c.b16 %v754, %v753
        %v770 = vpack.c.b16 %v756, %v755
        %v771 = vpack.c.b16 %v758, %v757
        %v772 = vpack.c.b16 %v760, %v759
        %v773 = vpack.c.b16 %v762, %v761
        %v774 = vpack.c.b16 %v764, %v763
        %v775 = vpack.c.b16 %v766, %v765
        %v776 = vpack.c.b16 %v768, %v767
        %785 = vmatpush.bf16.msra.mxu0 %v776
        %786 = vmatpush.bf16.msra.mxu0 %v775
        %787 = vmatpush.bf16.msra.mxu0 %v774
        %788 = vmatpush.bf16.msra.mxu0 %v773
        %789 = vmatpush.bf16.msra.mxu0 %v772
        %790 = vmatpush.bf16.msra.mxu0 %v771
        %791 = vmatpush.bf16.msra.mxu0 %v770
        %792 = vmatpush.bf16.msra.mxu0 %v769
        %793 = vmatmul.bf16.gmra.mxu0 %v716
        %v794 = vpop.f32.mrf.mxu0
        %v795 = vadd.f32 %v735, %v794
        %v796 = vpop.f32.mrf.mxu0
        %v797 = vadd.f32 %v735, %v796
        %798 = vdwg.mxu0
        %v799 = vpack.c.bf16 %v795, %v795
        %v800 = vpack.c.bf16 %v797, %v797
        %vm801 = vcmask 257024
        %802 = vst.msk [vmem:[#allocation2] sm:$0xf] %vm801, %v799
        %803 = vst.msk [vmem:[#allocation2 + $0x4] sm:$0xf] %vm801, %v800
        %v804 = vld [vmem:[%s6] sm:$0xf]
        %v805 = vld [vmem:[%s6 + $0x4] sm:$0xf]
        %v806 = vld [vmem:[%s6 + $0x8] sm:$0xf]
        %v807 = vld [vmem:[%s6 + $0xc] sm:$0xf]
        %v808 = vld [vmem:[%s6 + $0x10] sm:$0xf]
        %v809 = vld [vmem:[%s6 + $0x14] sm:$0xf]
        %v810 = vld [vmem:[%s6 + $0x18] sm:$0xf]
        %v811 = vld [vmem:[%s6 + $0x1c] sm:$0xf]
        %v812 = vld [vmem:[%s6 + $0x20] sm:$0xf]
        %v813 = vld [vmem:[%s6 + $0x24] sm:$0xf]
        %v814 = vld [vmem:[%s6 + $0x28] sm:$0xf]
        %v815 = vld [vmem:[%s6 + $0x2c] sm:$0xf]
        %v816 = vld [vmem:[%s6 + $0x30] sm:$0xf]
        %v817 = vld [vmem:[%s6 + $0x34] sm:$0xf]
        %v818 = vld [vmem:[%s6 + $0x38] sm:$0xf]
        %v819 = vld [vmem:[%s6 + $0x3c] sm:$0xf]
        %v820 = vld [vmem:[%s7] sm:$0x1]
        %v822 = vperm.slane %v820, 0
        %v840 = vunpack.c.l.b16 %v804
        %v841 = vunpack.c.l.b16 %v805
        %v842 = vunpack.c.l.b16 %v806
        %v843 = vunpack.c.l.b16 %v807
        %v844 = vunpack.c.l.b16 %v808
        %v845 = vunpack.c.l.b16 %v809
        %v846 = vunpack.c.l.b16 %v810
        %v847 = vunpack.c.l.b16 %v811
        %v848 = vunpack.c.l.b16 %v812
        %v849 = vunpack.c.l.b16 %v813
        %v850 = vunpack.c.l.b16 %v814
        %v851 = vunpack.c.l.b16 %v815
        %v852 = vunpack.c.l.b16 %v816
        %v853 = vunpack.c.l.b16 %v817
        %v854 = vunpack.c.l.b16 %v818
        %v855 = vunpack.c.l.b16 %v819
        %v856 = vpack.c.b16 %v841, %v840
        %v857 = vpack.c.b16 %v843, %v842
        %v858 = vpack.c.b16 %v845, %v844
        %v859 = vpack.c.b16 %v847, %v846
        %v860 = vpack.c.b16 %v849, %v848
        %v861 = vpack.c.b16 %v851, %v850
        %v862 = vpack.c.b16 %v853, %v852
        %v863 = vpack.c.b16 %v855, %v854
        %872 = vmatpush.bf16.msra.mxu0 %v863
        %873 = vmatpush.bf16.msra.mxu0 %v862
        %874 = vmatpush.bf16.msra.mxu0 %v861
        %875 = vmatpush.bf16.msra.mxu0 %v860
        %876 = vmatpush.bf16.msra.mxu0 %v859
        %877 = vmatpush.bf16.msra.mxu0 %v858
        %878 = vmatpush.bf16.msra.mxu0 %v857
        %879 = vmatpush.bf16.msra.mxu0 %v856
        %880 = vmatmul.bf16.gmra.mxu0 %v671
        %v881 = vpop.f32.mrf.mxu0
        %v882 = vadd.f32 %v822, %v881
        %v883 = vpop.f32.mrf.mxu0
        %v884 = vadd.f32 %v822, %v883
        %885 = vdwg.mxu0
        %v886 = vpack.c.bf16 %v882, %v882
        %v887 = vpack.c.bf16 %v884, %v884
        %888 = vst.msk [vmem:[#allocation3] sm:$0xf] %vm801, %v886
        %889 = vst.msk [vmem:[#allocation3 + $0x4] sm:$0xf] %vm801, %v887
        %v890 = vld [vmem:[%s8] sm:$0xf]
        %v891 = vld [vmem:[%s8 + $0x4] sm:$0xf]
        %v892 = vld [vmem:[%s8 + $0x8] sm:$0xf]
        %v893 = vld [vmem:[%s8 + $0xc] sm:$0xf]
        %v894 = vld [vmem:[%s8 + $0x10] sm:$0xf]
        %v895 = vld [vmem:[%s8 + $0x14] sm:$0xf]
        %v896 = vld [vmem:[%s8 + $0x18] sm:$0xf]
        %v897 = vld [vmem:[%s8 + $0x1c] sm:$0xf]
        %v898 = vld [vmem:[%s8 + $0x20] sm:$0xf]
        %v899 = vld [vmem:[%s8 + $0x24] sm:$0xf]
        %v900 = vld [vmem:[%s8 + $0x28] sm:$0xf]
        %v901 = vld [vmem:[%s8 + $0x2c] sm:$0xf]
        %v902 = vld [vmem:[%s8 + $0x30] sm:$0xf]
        %v903 = vld [vmem:[%s8 + $0x34] sm:$0xf]
        %v904 = vld [vmem:[%s8 + $0x38] sm:$0xf]
        %v905 = vld [vmem:[%s8 + $0x3c] sm:$0xf]
        %v906 = vld [vmem:[%s9] sm:$0x1]
        %v908 = vperm.slane %v906, 0
        %v926 = vunpack.c.l.b16 %v890
        %v927 = vunpack.c.l.b16 %v891
        %v928 = vunpack.c.l.b16 %v892
        %v929 = vunpack.c.l.b16 %v893
        %v930 = vunpack.c.l.b16 %v894
        %v931 = vunpack.c.l.b16 %v895
        %v932 = vunpack.c.l.b16 %v896
        %v933 = vunpack.c.l.b16 %v897
        %v934 = vunpack.c.l.b16 %v898
        %v935 = vunpack.c.l.b16 %v899
        %v936 = vunpack.c.l.b16 %v900
        %v937 = vunpack.c.l.b16 %v901
        %v938 = vunpack.c.l.b16 %v902
        %v939 = vunpack.c.l.b16 %v903
        %v940 = vunpack.c.l.b16 %v904
        %v941 = vunpack.c.l.b16 %v905
        %v942 = vpack.c.b16 %v927, %v926
        %v943 = vpack.c.b16 %v929, %v928
        %v944 = vpack.c.b16 %v931, %v930
        %v945 = vpack.c.b16 %v933, %v932
        %v946 = vpack.c.b16 %v935, %v934
        %v947 = vpack.c.b16 %v937, %v936
        %v948 = vpack.c.b16 %v939, %v938
        %v949 = vpack.c.b16 %v941, %v940
        %958 = vmatpush.bf16.msra.mxu0 %v949
        %959 = vmatpush.bf16.msra.mxu0 %v948
        %960 = vmatpush.bf16.msra.mxu0 %v947
        %961 = vmatpush.bf16.msra.mxu0 %v946
        %962 = vmatpush.bf16.msra.mxu0 %v945
        %963 = vmatpush.bf16.msra.mxu0 %v944
        %964 = vmatpush.bf16.msra.mxu0 %v943
        %965 = vmatpush.bf16.msra.mxu0 %v942
        %966 = vmatmul.bf16.gmra.mxu0 %v671
        %v967 = vpop.f32.mrf.mxu0
        %v968 = vadd.f32 %v908, %v967
        %v969 = vpop.f32.mrf.mxu0
        %v970 = vadd.f32 %v908, %v969
        %971 = vdwg.mxu0
        %v972 = vpack.c.bf16 %v968, %v968
        %v973 = vpack.c.bf16 %v970, %v970
        %974 = vst.msk [vmem:[#allocation4] sm:$0xf] %vm801, %v972
        %975 = vst.msk [vmem:[#allocation4 + $0x4] sm:$0xf] %vm801, %v973
        %s976 = scalar_lea.vmem %s4, 64
        %v977 = vld [vmem:[%s976] sm:$0xf]
        %v978 = vld [vmem:[%s976 + $0x4] sm:$0xf]
        %v979 = vld [vmem:[%s976 + $0x8] sm:$0xf]
        %v980 = vld [vmem:[%s976 + $0xc] sm:$0xf]
        %v981 = vld [vmem:[%s976 + $0x10] sm:$0xf]
        %v982 = vld [vmem:[%s976 + $0x14] sm:$0xf]
        %v983 = vld [vmem:[%s976 + $0x18] sm:$0xf]
        %v984 = vld [vmem:[%s976 + $0x1c] sm:$0xf]
        %v985 = vld [vmem:[%s976 + $0x20] sm:$0xf]
        %v986 = vld [vmem:[%s976 + $0x24] sm:$0xf]
        %v987 = vld [vmem:[%s976 + $0x28] sm:$0xf]
        %v988 = vld [vmem:[%s976 + $0x2c] sm:$0xf]
        %v989 = vld [vmem:[%s976 + $0x30] sm:$0xf]
        %v990 = vld [vmem:[%s976 + $0x34] sm:$0xf]
        %v991 = vld [vmem:[%s976 + $0x38] sm:$0xf]
        %v992 = vld [vmem:[%s976 + $0x3c] sm:$0xf]
        %s993 = scalar_lea.vmem %s5, 1
        %v994 = vld [vmem:[%s993] sm:$0x1]
        %v996 = vperm.slane %v994, 0
        %v1014 = vunpack.c.l.b16 %v977
        %v1015 = vunpack.c.l.b16 %v978
        %v1016 = vunpack.c.l.b16 %v979
        %v1017 = vunpack.c.l.b16 %v980
        %v1018 = vunpack.c.l.b16 %v981
        %v1019 = vunpack.c.l.b16 %v982
        %v1020 = vunpack.c.l.b16 %v983
        %v1021 = vunpack.c.l.b16 %v984
        %v1022 = vunpack.c.l.b16 %v985
        %v1023 = vunpack.c.l.b16 %v986
        %v1024 = vunpack.c.l.b16 %v987
        %v1025 = vunpack.c.l.b16 %v988
        %v1026 = vunpack.c.l.b16 %v989
        %v1027 = vunpack.c.l.b16 %v990
        %v1028 = vunpack.c.l.b16 %v991
        %v1029 = vunpack.c.l.b16 %v992
        %v1030 = vpack.c.b16 %v1015, %v1014
        %v1031 = vpack.c.b16 %v1017, %v1016
        %v1032 = vpack.c.b16 %v1019, %v1018
        %v1033 = vpack.c.b16 %v1021, %v1020
        %v1034 = vpack.c.b16 %v1023, %v1022
        %v1035 = vpack.c.b16 %v1025, %v1024
        %v1036 = vpack.c.b16 %v1027, %v1026
        %v1037 = vpack.c.b16 %v1029, %v1028
        %1046 = vmatpush.bf16.msra.mxu0 %v1037
        %1047 = vmatpush.bf16.msra.mxu0 %v1036
        %1048 = vmatpush.bf16.msra.mxu0 %v1035
        %1049 = vmatpush.bf16.msra.mxu0 %v1034
        %1050 = vmatpush.bf16.msra.mxu0 %v1033
        %1051 = vmatpush.bf16.msra.mxu0 %v1032
        %1052 = vmatpush.bf16.msra.mxu0 %v1031
        %1053 = vmatpush.bf16.msra.mxu0 %v1030
        %1054 = vmatmul.bf16.gmra.mxu0 %v716
        %v1055 = vpop.f32.mrf.mxu0
        %v1056 = vadd.f32 %v996, %v1055
        %v1057 = vpop.f32.mrf.mxu0
        %v1058 = vadd.f32 %v996, %v1057
        %1059 = vdwg.mxu0
        %v1060 = vpack.c.bf16 %v1056, %v1056
        %v1061 = vpack.c.bf16 %v1058, %v1058
        %s1062 = scalar_lea.vmem [#allocation2], 8
        %1063 = vst.msk [vmem:[%s1062] sm:$0xf] %vm801, %v1060
        %1064 = vst.msk [vmem:[%s1062 + $0x4] sm:$0xf] %vm801, %v1061
        %s1065 = scalar_lea.vmem %s6, 64
        %v1066 = vld [vmem:[%s1065] sm:$0xf]
        %v1067 = vld [vmem:[%s1065 + $0x4] sm:$0xf]
        %v1068 = vld [vmem:[%s1065 + $0x8] sm:$0xf]
        %v1069 = vld [vmem:[%s1065 + $0xc] sm:$0xf]
        %v1070 = vld [vmem:[%s1065 + $0x10] sm:$0xf]
        %v1071 = vld [vmem:[%s1065 + $0x14] sm:$0xf]
        %v1072 = vld [vmem:[%s1065 + $0x18] sm:$0xf]
        %v1073 = vld [vmem:[%s1065 + $0x1c] sm:$0xf]
        %v1074 = vld [vmem:[%s1065 + $0x20] sm:$0xf]
        %v1075 = vld [vmem:[%s1065 + $0x24] sm:$0xf]
        %v1076 = vld [vmem:[%s1065 + $0x28] sm:$0xf]
        %v1077 = vld [vmem:[%s1065 + $0x2c] sm:$0xf]
        %v1078 = vld [vmem:[%s1065 + $0x30] sm:$0xf]
        %v1079 = vld [vmem:[%s1065 + $0x34] sm:$0xf]
        %v1080 = vld [vmem:[%s1065 + $0x38] sm:$0xf]
        %v1081 = vld [vmem:[%s1065 + $0x3c] sm:$0xf]
        %s1082 = scalar_lea.vmem %s7, 1
        %v1083 = vld [vmem:[%s1082] sm:$0x1]
        %v1085 = vperm.slane %v1083, 0
        %v1103 = vunpack.c.l.b16 %v1066
        %v1104 = vunpack.c.l.b16 %v1067
        %v1105 = vunpack.c.l.b16 %v1068
        %v1106 = vunpack.c.l.b16 %v1069
        %v1107 = vunpack.c.l.b16 %v1070
        %v1108 = vunpack.c.l.b16 %v1071
        %v1109 = vunpack.c.l.b16 %v1072
        %v1110 = vunpack.c.l.b16 %v1073
        %v1111 = vunpack.c.l.b16 %v1074
        %v1112 = vunpack.c.l.b16 %v1075
        %v1113 = vunpack.c.l.b16 %v1076
        %v1114 = vunpack.c.l.b16 %v1077
        %v1115 = vunpack.c.l.b16 %v1078
        %v1116 = vunpack.c.l.b16 %v1079
        %v1117 = vunpack.c.l.b16 %v1080
        %v1118 = vunpack.c.l.b16 %v1081
        %v1119 = vpack.c.b16 %v1104, %v1103
        %v1120 = vpack.c.b16 %v1106, %v1105
        %v1121 = vpack.c.b16 %v1108, %v1107
        %v1122 = vpack.c.b16 %v1110, %v1109
        %v1123 = vpack.c.b16 %v1112, %v1111
        %v1124 = vpack.c.b16 %v1114, %v1113
        %v1125 = vpack.c.b16 %v1116, %v1115
        %v1126 = vpack.c.b16 %v1118, %v1117
        %1135 = vmatpush.bf16.msra.mxu0 %v1126
        %1136 = vmatpush.bf16.msra.mxu0 %v1125
        %1137 = vmatpush.bf16.msra.mxu0 %v1124
        %1138 = vmatpush.bf16.msra.mxu0 %v1123
        %1139 = vmatpush.bf16.msra.mxu0 %v1122
        %1140 = vmatpush.bf16.msra.mxu0 %v1121
        %1141 = vmatpush.bf16.msra.mxu0 %v1120
        %1142 = vmatpush.bf16.msra.mxu0 %v1119
        %1143 = vmatmul.bf16.gmra.mxu0 %v671
        %v1144 = vpop.f32.mrf.mxu0
        %v1145 = vadd.f32 %v1085, %v1144
        %v1146 = vpop.f32.mrf.mxu0
        %v1147 = vadd.f32 %v1085, %v1146
        %1148 = vdwg.mxu0
        %v1149 = vpack.c.bf16 %v1145, %v1145
        %v1150 = vpack.c.bf16 %v1147, %v1147
        %s1151 = scalar_lea.vmem [#allocation3], 8
        %1152 = vst.msk [vmem:[%s1151] sm:$0xf] %vm801, %v1149
        %1153 = vst.msk [vmem:[%s1151 + $0x4] sm:$0xf] %vm801, %v1150
        %s1154 = scalar_lea.vmem %s8, 64
        %v1155 = vld [vmem:[%s1154] sm:$0xf]
        %v1156 = vld [vmem:[%s1154 + $0x4] sm:$0xf]
        %v1157 = vld [vmem:[%s1154 + $0x8] sm:$0xf]
        %v1158 = vld [vmem:[%s1154 + $0xc] sm:$0xf]
        %v1159 = vld [vmem:[%s1154 + $0x10] sm:$0xf]
        %v1160 = vld [vmem:[%s1154 + $0x14] sm:$0xf]
        %v1161 = vld [vmem:[%s1154 + $0x18] sm:$0xf]
        %v1162 = vld [vmem:[%s1154 + $0x1c] sm:$0xf]
        %v1163 = vld [vmem:[%s1154 + $0x20] sm:$0xf]
        %v1164 = vld [vmem:[%s1154 + $0x24] sm:$0xf]
        %v1165 = vld [vmem:[%s1154 + $0x28] sm:$0xf]
        %v1166 = vld [vmem:[%s1154 + $0x2c] sm:$0xf]
        %v1167 = vld [vmem:[%s1154 + $0x30] sm:$0xf]
        %v1168 = vld [vmem:[%s1154 + $0x34] sm:$0xf]
        %v1169 = vld [vmem:[%s1154 + $0x38] sm:$0xf]
        %v1170 = vld [vmem:[%s1154 + $0x3c] sm:$0xf]
        %s1171 = scalar_lea.vmem %s9, 1
        %v1172 = vld [vmem:[%s1171] sm:$0x1]
        %v1174 = vperm.slane %v1172, 0
        %v1192 = vunpack.c.l.b16 %v1155
        %v1193 = vunpack.c.l.b16 %v1156
        %v1194 = vunpack.c.l.b16 %v1157
        %v1195 = vunpack.c.l.b16 %v1158
        %v1196 = vunpack.c.l.b16 %v1159
        %v1197 = vunpack.c.l.b16 %v1160
        %v1198 = vunpack.c.l.b16 %v1161
        %v1199 = vunpack.c.l.b16 %v1162
        %v1200 = vunpack.c.l.b16 %v1163
        %v1201 = vunpack.c.l.b16 %v1164
        %v1202 = vunpack.c.l.b16 %v1165
        %v1203 = vunpack.c.l.b16 %v1166
        %v1204 = vunpack.c.l.b16 %v1167
        %v1205 = vunpack.c.l.b16 %v1168
        %v1206 = vunpack.c.l.b16 %v1169
        %v1207 = vunpack.c.l.b16 %v1170
        %v1208 = vpack.c.b16 %v1193, %v1192
        %v1209 = vpack.c.b16 %v1195, %v1194
        %v1210 = vpack.c.b16 %v1197, %v1196
        %v1211 = vpack.c.b16 %v1199, %v1198
        %v1212 = vpack.c.b16 %v1201, %v1200
        %v1213 = vpack.c.b16 %v1203, %v1202
        %v1214 = vpack.c.b16 %v1205, %v1204
        %v1215 = vpack.c.b16 %v1207, %v1206
        %1224 = vmatpush.bf16.msra.mxu0 %v1215
        %1225 = vmatpush.bf16.msra.mxu0 %v1214
        %1226 = vmatpush.bf16.msra.mxu0 %v1213
        %1227 = vmatpush.bf16.msra.mxu0 %v1212
        %1228 = vmatpush.bf16.msra.mxu0 %v1211
        %1229 = vmatpush.bf16.msra.mxu0 %v1210
        %1230 = vmatpush.bf16.msra.mxu0 %v1209
        %1231 = vmatpush.bf16.msra.mxu0 %v1208
        %1232 = vmatmul.bf16.gmra.mxu0 %v671
        %v1233 = vpop.f32.mrf.mxu0
        %v1234 = vadd.f32 %v1174, %v1233
        %v1235 = vpop.f32.mrf.mxu0
        %v1236 = vadd.f32 %v1174, %v1235
        %1237 = vdwg.mxu0
        %v1238 = vpack.c.bf16 %v1234, %v1234
        %v1239 = vpack.c.bf16 %v1236, %v1236
        %s1240 = scalar_lea.vmem [#allocation4], 8
        %1241 = vst.msk [vmem:[%s1240] sm:$0xf] %vm801, %v1238
        %1242 = vst.msk [vmem:[%s1240 + $0x4] sm:$0xf] %vm801, %v1239
        %s1243 = scalar_lea.vmem %s4, 128
        %v1244 = vld [vmem:[%s1243] sm:$0xf]
        %v1245 = vld [vmem:[%s1243 + $0x4] sm:$0xf]
        %v1246 = vld [vmem:[%s1243 + $0x8] sm:$0xf]
        %v1247 = vld [vmem:[%s1243 + $0xc] sm:$0xf]
        %v1248 = vld [vmem:[%s1243 + $0x10] sm:$0xf]
        %v1249 = vld [vmem:[%s1243 + $0x14] sm:$0xf]
        %v1250 = vld [vmem:[%s1243 + $0x18] sm:$0xf]
        %v1251 = vld [vmem:[%s1243 + $0x1c] sm:$0xf]
        %v1252 = vld [vmem:[%s1243 + $0x20] sm:$0xf]
        %v1253 = vld [vmem:[%s1243 + $0x24] sm:$0xf]
        %v1254 = vld [vmem:[%s1243 + $0x28] sm:$0xf]
        %v1255 = vld [vmem:[%s1243 + $0x2c] sm:$0xf]
        %v1256 = vld [vmem:[%s1243 + $0x30] sm:$0xf]
        %v1257 = vld [vmem:[%s1243 + $0x34] sm:$0xf]
        %v1258 = vld [vmem:[%s1243 + $0x38] sm:$0xf]
        %v1259 = vld [vmem:[%s1243 + $0x3c] sm:$0xf]
        %s1260 = scalar_lea.vmem %s5, 2
        %v1261 = vld [vmem:[%s1260] sm:$0x1]
        %v1263 = vperm.slane %v1261, 0
        %v1281 = vunpack.c.l.b16 %v1244
        %v1282 = vunpack.c.l.b16 %v1245
        %v1283 = vunpack.c.l.b16 %v1246
        %v1284 = vunpack.c.l.b16 %v1247
        %v1285 = vunpack.c.l.b16 %v1248
        %v1286 = vunpack.c.l.b16 %v1249
        %v1287 = vunpack.c.l.b16 %v1250
        %v1288 = vunpack.c.l.b16 %v1251
        %v1289 = vunpack.c.l.b16 %v1252
        %v1290 = vunpack.c.l.b16 %v1253
        %v1291 = vunpack.c.l.b16 %v1254
        %v1292 = vunpack.c.l.b16 %v1255
        %v1293 = vunpack.c.l.b16 %v1256
        %v1294 = vunpack.c.l.b16 %v1257
        %v1295 = vunpack.c.l.b16 %v1258
        %v1296 = vunpack.c.l.b16 %v1259
        %v1297 = vpack.c.b16 %v1282, %v1281
        %v1298 = vpack.c.b16 %v1284, %v1283
        %v1299 = vpack.c.b16 %v1286, %v1285
        %v1300 = vpack.c.b16 %v1288, %v1287
        %v1301 = vpack.c.b16 %v1290, %v1289
        %v1302 = vpack.c.b16 %v1292, %v1291
        %v1303 = vpack.c.b16 %v1294, %v1293
        %v1304 = vpack.c.b16 %v1296, %v1295
        %1313 = vmatpush.bf16.msra.mxu0 %v1304
        %1314 = vmatpush.bf16.msra.mxu0 %v1303
        %1315 = vmatpush.bf16.msra.mxu0 %v1302
        %1316 = vmatpush.bf16.msra.mxu0 %v1301
        %1317 = vmatpush.bf16.msra.mxu0 %v1300
        %1318 = vmatpush.bf16.msra.mxu0 %v1299
        %1319 = vmatpush.bf16.msra.mxu0 %v1298
        %1320 = vmatpush.bf16.msra.mxu0 %v1297
        %1321 = vmatmul.bf16.gmra.mxu0 %v716
        %v1322 = vpop.f32.mrf.mxu0
        %v1323 = vadd.f32 %v1263, %v1322
        %v1324 = vpop.f32.mrf.mxu0
        %v1325 = vadd.f32 %v1263, %v1324
        %1326 = vdwg.mxu0
        %v1327 = vpack.c.bf16 %v1323, %v1323
        %v1328 = vpack.c.bf16 %v1325, %v1325
        %s1329 = scalar_lea.vmem [#allocation2], 16
        %1330 = vst.msk [vmem:[%s1329] sm:$0xf] %vm801, %v1327
        %1331 = vst.msk [vmem:[%s1329 + $0x4] sm:$0xf] %vm801, %v1328
        %s1332 = scalar_lea.vmem %s6, 128
        %v1333 = vld [vmem:[%s1332] sm:$0xf]
        %v1334 = vld [vmem:[%s1332 + $0x4] sm:$0xf]
        %v1335 = vld [vmem:[%s1332 + $0x8] sm:$0xf]
        %v1336 = vld [vmem:[%s1332 + $0xc] sm:$0xf]
        %v1337 = vld [vmem:[%s1332 + $0x10] sm:$0xf]
        %v1338 = vld [vmem:[%s1332 + $0x14] sm:$0xf]
        %v1339 = vld [vmem:[%s1332 + $0x18] sm:$0xf]
        %v1340 = vld [vmem:[%s1332 + $0x1c] sm:$0xf]
        %v1341 = vld [vmem:[%s1332 + $0x20] sm:$0xf]
        %v1342 = vld [vmem:[%s1332 + $0x24] sm:$0xf]
        %v1343 = vld [vmem:[%s1332 + $0x28] sm:$0xf]
        %v1344 = vld [vmem:[%s1332 + $0x2c] sm:$0xf]
        %v1345 = vld [vmem:[%s1332 + $0x30] sm:$0xf]
        %v1346 = vld [vmem:[%s1332 + $0x34] sm:$0xf]
        %v1347 = vld [vmem:[%s1332 + $0x38] sm:$0xf]
        %v1348 = vld [vmem:[%s1332 + $0x3c] sm:$0xf]
        %s1349 = scalar_lea.vmem %s7, 2
        %v1350 = vld [vmem:[%s1349] sm:$0x1]
        %v1352 = vperm.slane %v1350, 0
        %v1370 = vunpack.c.l.b16 %v1333
        %v1371 = vunpack.c.l.b16 %v1334
        %v1372 = vunpack.c.l.b16 %v1335
        %v1373 = vunpack.c.l.b16 %v1336
        %v1374 = vunpack.c.l.b16 %v1337
        %v1375 = vunpack.c.l.b16 %v1338
        %v1376 = vunpack.c.l.b16 %v1339
        %v1377 = vunpack.c.l.b16 %v1340
        %v1378 = vunpack.c.l.b16 %v1341
        %v1379 = vunpack.c.l.b16 %v1342
        %v1380 = vunpack.c.l.b16 %v1343
        %v1381 = vunpack.c.l.b16 %v1344
        %v1382 = vunpack.c.l.b16 %v1345
        %v1383 = vunpack.c.l.b16 %v1346
        %v1384 = vunpack.c.l.b16 %v1347
        %v1385 = vunpack.c.l.b16 %v1348
        %v1386 = vpack.c.b16 %v1371, %v1370
        %v1387 = vpack.c.b16 %v1373, %v1372
        %v1388 = vpack.c.b16 %v1375, %v1374
        %v1389 = vpack.c.b16 %v1377, %v1376
        %v1390 = vpack.c.b16 %v1379, %v1378
        %v1391 = vpack.c.b16 %v1381, %v1380
        %v1392 = vpack.c.b16 %v1383, %v1382
        %v1393 = vpack.c.b16 %v1385, %v1384
        %1402 = vmatpush.bf16.msra.mxu0 %v1393
        %1403 = vmatpush.bf16.msra.mxu0 %v1392
        %1404 = vmatpush.bf16.msra.mxu0 %v1391
        %1405 = vmatpush.bf16.msra.mxu0 %v1390
        %1406 = vmatpush.bf16.msra.mxu0 %v1389
        %1407 = vmatpush.bf16.msra.mxu0 %v1388
        %1408 = vmatpush.bf16.msra.mxu0 %v1387
        %1409 = vmatpush.bf16.msra.mxu0 %v1386
        %1410 = vmatmul.bf16.gmra.mxu0 %v671
        %v1411 = vpop.f32.mrf.mxu0
        %v1412 = vadd.f32 %v1352, %v1411
        %v1413 = vpop.f32.mrf.mxu0
        %v1414 = vadd.f32 %v1352, %v1413
        %1415 = vdwg.mxu0
        %v1416 = vpack.c.bf16 %v1412, %v1412
        %v1417 = vpack.c.bf16 %v1414, %v1414
        %s1418 = scalar_lea.vmem [#allocation3], 16
        %1419 = vst.msk [vmem:[%s1418] sm:$0xf] %vm801, %v1416
        %1420 = vst.msk [vmem:[%s1418 + $0x4] sm:$0xf] %vm801, %v1417
        %s1421 = scalar_lea.vmem %s8, 128
        %v1422 = vld [vmem:[%s1421] sm:$0xf]
        %v1423 = vld [vmem:[%s1421 + $0x4] sm:$0xf]
        %v1424 = vld [vmem:[%s1421 + $0x8] sm:$0xf]
        %v1425 = vld [vmem:[%s1421 + $0xc] sm:$0xf]
        %v1426 = vld [vmem:[%s1421 + $0x10] sm:$0xf]
        %v1427 = vld [vmem:[%s1421 + $0x14] sm:$0xf]
        %v1428 = vld [vmem:[%s1421 + $0x18] sm:$0xf]
        %v1429 = vld [vmem:[%s1421 + $0x1c] sm:$0xf]
        %v1430 = vld [vmem:[%s1421 + $0x20] sm:$0xf]
        %v1431 = vld [vmem:[%s1421 + $0x24] sm:$0xf]
        %v1432 = vld [vmem:[%s1421 + $0x28] sm:$0xf]
        %v1433 = vld [vmem:[%s1421 + $0x2c] sm:$0xf]
        %v1434 = vld [vmem:[%s1421 + $0x30] sm:$0xf]
        %v1435 = vld [vmem:[%s1421 + $0x34] sm:$0xf]
        %v1436 = vld [vmem:[%s1421 + $0x38] sm:$0xf]
        %v1437 = vld [vmem:[%s1421 + $0x3c] sm:$0xf]
        %s1438 = scalar_lea.vmem %s9, 2
        %v1439 = vld [vmem:[%s1438] sm:$0x1]
        %v1441 = vperm.slane %v1439, 0
        %v1459 = vunpack.c.l.b16 %v1422
        %v1460 = vunpack.c.l.b16 %v1423
        %v1461 = vunpack.c.l.b16 %v1424
        %v1462 = vunpack.c.l.b16 %v1425
        %v1463 = vunpack.c.l.b16 %v1426
        %v1464 = vunpack.c.l.b16 %v1427
        %v1465 = vunpack.c.l.b16 %v1428
        %v1466 = vunpack.c.l.b16 %v1429
        %v1467 = vunpack.c.l.b16 %v1430
        %v1468 = vunpack.c.l.b16 %v1431
        %v1469 = vunpack.c.l.b16 %v1432
        %v1470 = vunpack.c.l.b16 %v1433
        %v1471 = vunpack.c.l.b16 %v1434
        %v1472 = vunpack.c.l.b16 %v1435
        %v1473 = vunpack.c.l.b16 %v1436
        %v1474 = vunpack.c.l.b16 %v1437
        %v1475 = vpack.c.b16 %v1460, %v1459
        %v1476 = vpack.c.b16 %v1462, %v1461
        %v1477 = vpack.c.b16 %v1464, %v1463
        %v1478 = vpack.c.b16 %v1466, %v1465
        %v1479 = vpack.c.b16 %v1468, %v1467
        %v1480 = vpack.c.b16 %v1470, %v1469
        %v1481 = vpack.c.b16 %v1472, %v1471
        %v1482 = vpack.c.b16 %v1474, %v1473
        %1491 = vmatpush.bf16.msra.mxu0 %v1482
        %1492 = vmatpush.bf16.msra.mxu0 %v1481
        %1493 = vmatpush.bf16.msra.mxu0 %v1480
        %1494 = vmatpush.bf16.msra.mxu0 %v1479
        %1495 = vmatpush.bf16.msra.mxu0 %v1478
        %1496 = vmatpush.bf16.msra.mxu0 %v1477
        %1497 = vmatpush.bf16.msra.mxu0 %v1476
        %1498 = vmatpush.bf16.msra.mxu0 %v1475
        %1499 = vmatmul.bf16.gmra.mxu0 %v671
        %v1500 = vpop.f32.mrf.mxu0
        %v1501 = vadd.f32 %v1441, %v1500
        %v1502 = vpop.f32.mrf.mxu0
        %v1503 = vadd.f32 %v1441, %v1502
        %1504 = vdwg.mxu0
        %v1505 = vpack.c.bf16 %v1501, %v1501
        %v1506 = vpack.c.bf16 %v1503, %v1503
        %s1507 = scalar_lea.vmem [#allocation4], 16
        %1508 = vst.msk [vmem:[%s1507] sm:$0xf] %vm801, %v1505
        %1509 = vst.msk [vmem:[%s1507 + $0x4] sm:$0xf] %vm801, %v1506
        %s1510 = scalar_lea.vmem %s4, 192
        %v1511 = vld [vmem:[%s1510] sm:$0xf]
        %v1512 = vld [vmem:[%s1510 + $0x4] sm:$0xf]
        %v1513 = vld [vmem:[%s1510 + $0x8] sm:$0xf]
        %v1514 = vld [vmem:[%s1510 + $0xc] sm:$0xf]
        %v1515 = vld [vmem:[%s1510 + $0x10] sm:$0xf]
        %v1516 = vld [vmem:[%s1510 + $0x14] sm:$0xf]
        %v1517 = vld [vmem:[%s1510 + $0x18] sm:$0xf]
        %v1518 = vld [vmem:[%s1510 + $0x1c] sm:$0xf]
        %v1519 = vld [vmem:[%s1510 + $0x20] sm:$0xf]
        %v1520 = vld [vmem:[%s1510 + $0x24] sm:$0xf]
        %v1521 = vld [vmem:[%s1510 + $0x28] sm:$0xf]
        %v1522 = vld [vmem:[%s1510 + $0x2c] sm:$0xf]
        %v1523 = vld [vmem:[%s1510 + $0x30] sm:$0xf]
        %v1524 = vld [vmem:[%s1510 + $0x34] sm:$0xf]
        %v1525 = vld [vmem:[%s1510 + $0x38] sm:$0xf]
        %v1526 = vld [vmem:[%s1510 + $0x3c] sm:$0xf]
        %s1527 = scalar_lea.vmem %s5, 3
        %v1528 = vld [vmem:[%s1527] sm:$0x1]
        %v1530 = vperm.slane %v1528, 0
        %v1548 = vunpack.c.l.b16 %v1511
        %v1549 = vunpack.c.l.b16 %v1512
        %v1550 = vunpack.c.l.b16 %v1513
        %v1551 = vunpack.c.l.b16 %v1514
        %v1552 = vunpack.c.l.b16 %v1515
        %v1553 = vunpack.c.l.b16 %v1516
        %v1554 = vunpack.c.l.b16 %v1517
        %v1555 = vunpack.c.l.b16 %v1518
        %v1556 = vunpack.c.l.b16 %v1519
        %v1557 = vunpack.c.l.b16 %v1520
        %v1558 = vunpack.c.l.b16 %v1521
        %v1559 = vunpack.c.l.b16 %v1522
        %v1560 = vunpack.c.l.b16 %v1523
        %v1561 = vunpack.c.l.b16 %v1524
        %v1562 = vunpack.c.l.b16 %v1525
        %v1563 = vunpack.c.l.b16 %v1526
        %v1564 = vpack.c.b16 %v1549, %v1548
        %v1565 = vpack.c.b16 %v1551, %v1550
        %v1566 = vpack.c.b16 %v1553, %v1552
        %v1567 = vpack.c.b16 %v1555, %v1554
        %v1568 = vpack.c.b16 %v1557, %v1556
        %v1569 = vpack.c.b16 %v1559, %v1558
        %v1570 = vpack.c.b16 %v1561, %v1560
        %v1571 = vpack.c.b16 %v1563, %v1562
        %1580 = vmatpush.bf16.msra.mxu0 %v1571
        %1581 = vmatpush.bf16.msra.mxu0 %v1570
        %1582 = vmatpush.bf16.msra.mxu0 %v1569
        %1583 = vmatpush.bf16.msra.mxu0 %v1568
        %1584 = vmatpush.bf16.msra.mxu0 %v1567
        %1585 = vmatpush.bf16.msra.mxu0 %v1566
        %1586 = vmatpush.bf16.msra.mxu0 %v1565
        %1587 = vmatpush.bf16.msra.mxu0 %v1564
        %1588 = vmatmul.bf16.gmra.mxu0 %v716
        %v1589 = vpop.f32.mrf.mxu0
        %v1590 = vadd.f32 %v1530, %v1589
        %v1591 = vpop.f32.mrf.mxu0
        %v1592 = vadd.f32 %v1530, %v1591
        %1593 = vdwg.mxu0
        %v1594 = vpack.c.bf16 %v1590, %v1590
        %v1595 = vpack.c.bf16 %v1592, %v1592
        %s1596 = scalar_lea.vmem [#allocation2], 24
        %1597 = vst.msk [vmem:[%s1596] sm:$0xf] %vm801, %v1594
        %1598 = vst.msk [vmem:[%s1596 + $0x4] sm:$0xf] %vm801, %v1595
        %s1599 = scalar_lea.vmem %s6, 192
        %v1600 = vld [vmem:[%s1599] sm:$0xf]
        %v1601 = vld [vmem:[%s1599 + $0x4] sm:$0xf]
        %v1602 = vld [vmem:[%s1599 + $0x8] sm:$0xf]
        %v1603 = vld [vmem:[%s1599 + $0xc] sm:$0xf]
        %v1604 = vld [vmem:[%s1599 + $0x10] sm:$0xf]
        %v1605 = vld [vmem:[%s1599 + $0x14] sm:$0xf]
        %v1606 = vld [vmem:[%s1599 + $0x18] sm:$0xf]
        %v1607 = vld [vmem:[%s1599 + $0x1c] sm:$0xf]
        %v1608 = vld [vmem:[%s1599 + $0x20] sm:$0xf]
        %v1609 = vld [vmem:[%s1599 + $0x24] sm:$0xf]
        %v1610 = vld [vmem:[%s1599 + $0x28] sm:$0xf]
        %v1611 = vld [vmem:[%s1599 + $0x2c] sm:$0xf]
        %v1612 = vld [vmem:[%s1599 + $0x30] sm:$0xf]
        %v1613 = vld [vmem:[%s1599 + $0x34] sm:$0xf]
        %v1614 = vld [vmem:[%s1599 + $0x38] sm:$0xf]
        %v1615 = vld [vmem:[%s1599 + $0x3c] sm:$0xf]
        %s1616 = scalar_lea.vmem %s7, 3
        %v1617 = vld [vmem:[%s1616] sm:$0x1]
        %v1619 = vperm.slane %v1617, 0
        %v1637 = vunpack.c.l.b16 %v1600
        %v1638 = vunpack.c.l.b16 %v1601
        %v1639 = vunpack.c.l.b16 %v1602
        %v1640 = vunpack.c.l.b16 %v1603
        %v1641 = vunpack.c.l.b16 %v1604
        %v1642 = vunpack.c.l.b16 %v1605
        %v1643 = vunpack.c.l.b16 %v1606
        %v1644 = vunpack.c.l.b16 %v1607
        %v1645 = vunpack.c.l.b16 %v1608
        %v1646 = vunpack.c.l.b16 %v1609
        %v1647 = vunpack.c.l.b16 %v1610
        %v1648 = vunpack.c.l.b16 %v1611
        %v1649 = vunpack.c.l.b16 %v1612
        %v1650 = vunpack.c.l.b16 %v1613
        %v1651 = vunpack.c.l.b16 %v1614
        %v1652 = vunpack.c.l.b16 %v1615
        %v1653 = vpack.c.b16 %v1638, %v1637
        %v1654 = vpack.c.b16 %v1640, %v1639
        %v1655 = vpack.c.b16 %v1642, %v1641
        %v1656 = vpack.c.b16 %v1644, %v1643
        %v1657 = vpack.c.b16 %v1646, %v1645
        %v1658 = vpack.c.b16 %v1648, %v1647
        %v1659 = vpack.c.b16 %v1650, %v1649
        %v1660 = vpack.c.b16 %v1652, %v1651
        %1669 = vmatpush.bf16.msra.mxu0 %v1660
        %1670 = vmatpush.bf16.msra.mxu0 %v1659
        %1671 = vmatpush.bf16.msra.mxu0 %v1658
        %1672 = vmatpush.bf16.msra.mxu0 %v1657
        %1673 = vmatpush.bf16.msra.mxu0 %v1656
        %1674 = vmatpush.bf16.msra.mxu0 %v1655
        %1675 = vmatpush.bf16.msra.mxu0 %v1654
        %1676 = vmatpush.bf16.msra.mxu0 %v1653
        %1677 = vmatmul.bf16.gmra.mxu0 %v671
        %v1678 = vpop.f32.mrf.mxu0
        %v1679 = vadd.f32 %v1619, %v1678
        %v1680 = vpop.f32.mrf.mxu0
        %v1681 = vadd.f32 %v1619, %v1680
        %1682 = vdwg.mxu0
        %v1683 = vpack.c.bf16 %v1679, %v1679
        %v1684 = vpack.c.bf16 %v1681, %v1681
        %s1685 = scalar_lea.vmem [#allocation3], 24
        %1686 = vst.msk [vmem:[%s1685] sm:$0xf] %vm801, %v1683
        %1687 = vst.msk [vmem:[%s1685 + $0x4] sm:$0xf] %vm801, %v1684
        %s1688 = scalar_lea.vmem %s8, 192
        %v1689 = vld [vmem:[%s1688] sm:$0xf]
        %v1690 = vld [vmem:[%s1688 + $0x4] sm:$0xf]
        %v1691 = vld [vmem:[%s1688 + $0x8] sm:$0xf]
        %v1692 = vld [vmem:[%s1688 + $0xc] sm:$0xf]
        %v1693 = vld [vmem:[%s1688 + $0x10] sm:$0xf]
        %v1694 = vld [vmem:[%s1688 + $0x14] sm:$0xf]
        %v1695 = vld [vmem:[%s1688 + $0x18] sm:$0xf]
        %v1696 = vld [vmem:[%s1688 + $0x1c] sm:$0xf]
        %v1697 = vld [vmem:[%s1688 + $0x20] sm:$0xf]
        %v1698 = vld [vmem:[%s1688 + $0x24] sm:$0xf]
        %v1699 = vld [vmem:[%s1688 + $0x28] sm:$0xf]
        %v1700 = vld [vmem:[%s1688 + $0x2c] sm:$0xf]
        %v1701 = vld [vmem:[%s1688 + $0x30] sm:$0xf]
        %v1702 = vld [vmem:[%s1688 + $0x34] sm:$0xf]
        %v1703 = vld [vmem:[%s1688 + $0x38] sm:$0xf]
        %v1704 = vld [vmem:[%s1688 + $0x3c] sm:$0xf]
        %s1705 = scalar_lea.vmem %s9, 3
        %v1706 = vld [vmem:[%s1705] sm:$0x1]
        %v1708 = vperm.slane %v1706, 0
        %v1726 = vunpack.c.l.b16 %v1689
        %v1727 = vunpack.c.l.b16 %v1690
        %v1728 = vunpack.c.l.b16 %v1691
        %v1729 = vunpack.c.l.b16 %v1692
        %v1730 = vunpack.c.l.b16 %v1693
        %v1731 = vunpack.c.l.b16 %v1694
        %v1732 = vunpack.c.l.b16 %v1695
        %v1733 = vunpack.c.l.b16 %v1696
        %v1734 = vunpack.c.l.b16 %v1697
        %v1735 = vunpack.c.l.b16 %v1698
        %v1736 = vunpack.c.l.b16 %v1699
        %v1737 = vunpack.c.l.b16 %v1700
        %v1738 = vunpack.c.l.b16 %v1701
        %v1739 = vunpack.c.l.b16 %v1702
        %v1740 = vunpack.c.l.b16 %v1703
        %v1741 = vunpack.c.l.b16 %v1704
        %v1742 = vpack.c.b16 %v1727, %v1726
        %v1743 = vpack.c.b16 %v1729, %v1728
        %v1744 = vpack.c.b16 %v1731, %v1730
        %v1745 = vpack.c.b16 %v1733, %v1732
        %v1746 = vpack.c.b16 %v1735, %v1734
        %v1747 = vpack.c.b16 %v1737, %v1736
        %v1748 = vpack.c.b16 %v1739, %v1738
        %v1749 = vpack.c.b16 %v1741, %v1740
        %1758 = vmatpush.bf16.msra.mxu0 %v1749
        %1759 = vmatpush.bf16.msra.mxu0 %v1748
        %1760 = vmatpush.bf16.msra.mxu0 %v1747
        %1761 = vmatpush.bf16.msra.mxu0 %v1746
        %1762 = vmatpush.bf16.msra.mxu0 %v1745
        %1763 = vmatpush.bf16.msra.mxu0 %v1744
        %1764 = vmatpush.bf16.msra.mxu0 %v1743
        %1765 = vmatpush.bf16.msra.mxu0 %v1742
        %1766 = vmatmul.bf16.gmra.mxu0 %v671
        %v1767 = vpop.f32.mrf.mxu0
        %v1768 = vadd.f32 %v1708, %v1767
        %v1769 = vpop.f32.mrf.mxu0
        %v1770 = vadd.f32 %v1708, %v1769
        %1771 = vdwg.mxu0
        %v1772 = vpack.c.bf16 %v1768, %v1768
        %v1773 = vpack.c.bf16 %v1770, %v1770
        %s1774 = scalar_lea.vmem [#allocation4], 24
        %1775 = vst.msk [vmem:[%s1774] sm:$0xf] %vm801, %v1772
        %1776 = vst.msk [vmem:[%s1774 + $0x4] sm:$0xf] %vm801, %v1773
        %v1777 = vld [vmem:[#allocation2] sm:$0xf]
        %v1778 = vld [vmem:[#allocation2 + $0x4] sm:$0xf]
        %v1779 = vld [vmem:[#allocation2 + $0x8] sm:$0xf]
        %v1780 = vld [vmem:[#allocation2 + $0xc] sm:$0xf]
        %v1781 = vld [vmem:[#allocation2 + $0x10] sm:$0xf]
        %v1782 = vld [vmem:[#allocation2 + $0x14] sm:$0xf]
        %v1783 = vld [vmem:[#allocation2 + $0x18] sm:$0xf]
        %v1784 = vld [vmem:[#allocation2 + $0x1c] sm:$0xf]
        %v1785 = vld [vmem:[#allocation3] sm:$0xf]
        %v1786 = vld [vmem:[#allocation3 + $0x4] sm:$0xf]
        %v1787 = vld [vmem:[#allocation3 + $0x8] sm:$0xf]
        %v1788 = vld [vmem:[#allocation3 + $0xc] sm:$0xf]
        %v1789 = vld [vmem:[#allocation3 + $0x10] sm:$0xf]
        %v1790 = vld [vmem:[#allocation3 + $0x14] sm:$0xf]
        %v1791 = vld [vmem:[#allocation3 + $0x18] sm:$0xf]
        %v1792 = vld [vmem:[#allocation3 + $0x1c] sm:$0xf]
        %v1795 = vunpack.c.l.b16 %v1777
        %v1796 = vunpack.c.l.b16 %v1778
        %v1797 = vpack.c.b16 %v1796, %v1795
        %v1800 = vunpack.c.l.b16 %v1785
        %v1801 = vunpack.c.l.b16 %v1786
        %v1802 = vpack.c.b16 %v1801, %v1800
        %vm1803 = vcmask 261120
        %v1805 = vsel %vm1803, %v1797, 0
        %v1808 = vsel %vm1803, %v1802, 0
        %1810 = vmatpush.bf16.xpose.msra.mxu0 0
        %1811 = vmatpush.bf16.xpose.msra.mxu0 0
        %1812 = vmatpush.bf16.xpose.msra.mxu0 0
        %1813 = vmatpush.bf16.xpose.msra.mxu0 0
        %1814 = vmatpush.bf16.xpose.msra.mxu0 0
        %1815 = vmatpush.bf16.xpose.msra.mxu0 0
        %1816 = vmatpush.bf16.xpose.msra.mxu0 0
        %1817 = vmatpush.bf16.xpose.msra.mxu0 %v1808
        %1818 = vmatmul.bf16.gmra.mxu0 %v1805
        %v1819 = vpop.f32.mrf.mxu0
        %v1820 = vadd.f32 0.0, %v1819
        %v1821 = vpop.f32.mrf.mxu0
        %v1822 = vadd.f32 0.0, %v1821
        %1823 = vdwg.mxu0
        %v1826 = vunpack.c.l.b16 %v1779
        %v1827 = vunpack.c.l.b16 %v1780
        %v1828 = vpack.c.b16 %v1827, %v1826
        %v1831 = vunpack.c.l.b16 %v1787
        %v1832 = vunpack.c.l.b16 %v1788
        %v1833 = vpack.c.b16 %v1832, %v1831
        %v1835 = vsel %vm1803, %v1828, 0
        %v1838 = vsel %vm1803, %v1833, 0
        %1840 = vmatpush.bf16.xpose.msra.mxu0 0
        %1841 = vmatpush.bf16.xpose.msra.mxu0 0
        %1842 = vmatpush.bf16.xpose.msra.mxu0 0
        %1843 = vmatpush.bf16.xpose.msra.mxu0 0
        %1844 = vmatpush.bf16.xpose.msra.mxu0 0
        %1845 = vmatpush.bf16.xpose.msra.mxu0 0
        %1846 = vmatpush.bf16.xpose.msra.mxu0 0
        %1847 = vmatpush.bf16.xpose.msra.mxu0 %v1838
        %1848 = vmatmul.bf16.gmra.mxu0 %v1835
        %v1849 = vpop.f32.mrf.mxu0
        %v1850 = vadd.f32 0.0, %v1849
        %v1851 = vpop.f32.mrf.mxu0
        %v1852 = vadd.f32 0.0, %v1851
        %1853 = vdwg.mxu0
        %v1856 = vunpack.c.l.b16 %v1781
        %v1857 = vunpack.c.l.b16 %v1782
        %v1858 = vpack.c.b16 %v1857, %v1856
        %v1861 = vunpack.c.l.b16 %v1789
        %v1862 = vunpack.c.l.b16 %v1790
        %v1863 = vpack.c.b16 %v1862, %v1861
        %v1865 = vsel %vm1803, %v1858, 0
        %v1868 = vsel %vm1803, %v1863, 0
        %1870 = vmatpush.bf16.xpose.msra.mxu0 0
        %1871 = vmatpush.bf16.xpose.msra.mxu0 0
        %1872 = vmatpush.bf16.xpose.msra.mxu0 0
        %1873 = vmatpush.bf16.xpose.msra.mxu0 0
        %1874 = vmatpush.bf16.xpose.msra.mxu0 0
        %1875 = vmatpush.bf16.xpose.msra.mxu0 0
        %1876 = vmatpush.bf16.xpose.msra.mxu0 0
        %1877 = vmatpush.bf16.xpose.msra.mxu0 %v1868
        %1878 = vmatmul.bf16.gmra.mxu0 %v1865
        %v1879 = vpop.f32.mrf.mxu0
        %v1880 = vadd.f32 0.0, %v1879
        %v1881 = vpop.f32.mrf.mxu0
        %v1882 = vadd.f32 0.0, %v1881
        %1883 = vdwg.mxu0
        %v1886 = vunpack.c.l.b16 %v1783
        %v1887 = vunpack.c.l.b16 %v1784
        %v1888 = vpack.c.b16 %v1887, %v1886
        %v1891 = vunpack.c.l.b16 %v1791
        %v1892 = vunpack.c.l.b16 %v1792
        %v1893 = vpack.c.b16 %v1892, %v1891
        %v1895 = vsel %vm1803, %v1888, 0
        %v1898 = vsel %vm1803, %v1893, 0
        %1900 = vmatpush.bf16.xpose.msra.mxu0 0
        %1901 = vmatpush.bf16.xpose.msra.mxu0 0
        %1902 = vmatpush.bf16.xpose.msra.mxu0 0
        %1903 = vmatpush.bf16.xpose.msra.mxu0 0
        %1904 = vmatpush.bf16.xpose.msra.mxu0 0
        %1905 = vmatpush.bf16.xpose.msra.mxu0 0
        %1906 = vmatpush.bf16.xpose.msra.mxu0 0
        %1907 = vmatpush.bf16.xpose.msra.mxu0 %v1898
        %1908 = vmatmul.bf16.gmra.mxu0 %v1895
        %v1909 = vpop.f32.mrf.mxu0
        %v1910 = vadd.f32 0.0, %v1909
        %v1911 = vpop.f32.mrf.mxu0
        %v1912 = vadd.f32 0.0, %v1911
        %1913 = vdwg.mxu0
        %v1914 = vsel %vm611, 1, 0
        %v1915 = vperm.slane %v1914, 0
        %vm1916 = vcmp.eq.s32.totalorder %v1915, 1
        %v1917 = vsel %vm1916, -3.4028235e+38, %v1820
        %v1918 = vsel %vm1916, -3.4028235e+38, %v1822
        %v1919 = vsel %vm1916, -3.4028235e+38, %v1850
        %v1920 = vsel %vm1916, -3.4028235e+38, %v1852
        %v1921 = vsel %vm1916, -3.4028235e+38, %v1880
        %v1922 = vsel %vm1916, -3.4028235e+38, %v1882
        %v1923 = vsel %vm1916, -3.4028235e+38, %v1910
        %v1924 = vsel %vm1916, -3.4028235e+38, %v1912
        %vm1925 = vcmask 130048
        %v1926 = vsel %vm1925, %v1917, -inf
        %1927 = vmax.xlane.f32.xlu0 %v1926
        %v1928 = vpop.xlane.xlu0 %1927
        %v1929 = vsel %vm1925, %v1918, -inf
        %1930 = vmax.xlane.f32.xlu0 %v1929
        %v1931 = vpop.xlane.xlu0 %1930
        %v1932 = vsel %vm1925, %v1919, -inf
        %1933 = vmax.xlane.f32.xlu0 %v1932
        %v1934 = vpop.xlane.xlu0 %1933
        %v1935 = vsel %vm1925, %v1920, -inf
        %1936 = vmax.xlane.f32.xlu0 %v1935
        %v1937 = vpop.xlane.xlu0 %1936
        %v1938 = vsel %vm1925, %v1921, -inf
        %1939 = vmax.xlane.f32.xlu0 %v1938
        %v1940 = vpop.xlane.xlu0 %1939
        %v1941 = vsel %vm1925, %v1922, -inf
        %1942 = vmax.xlane.f32.xlu0 %v1941
        %v1943 = vpop.xlane.xlu0 %1942
        %v1944 = vsel %vm1925, %v1923, -inf
        %1945 = vmax.xlane.f32.xlu0 %v1944
        %v1946 = vpop.xlane.xlu0 %1945
        %v1947 = vsel %vm1925, %v1924, -inf
        %1948 = vmax.xlane.f32.xlu0 %v1947
        %v1949 = vpop.xlane.xlu0 %1948
        %v1950 = vsub.f32 %v1917, %v1928
        %v1951 = vsub.f32 %v1918, %v1931
        %v1952 = vsub.f32 %v1919, %v1934
        %v1953 = vsub.f32 %v1920, %v1937
        %v1954 = vsub.f32 %v1921, %v1940
        %v1955 = vsub.f32 %v1922, %v1943
        %v1956 = vsub.f32 %v1923, %v1946
        %v1957 = vsub.f32 %v1924, %v1949
        %v1958 = vmul.f32 %v1950, 1.442695
        %v1959 = vpow.pop %v1958
        %v1960 = vmul.f32 %v1951, 1.442695
        %v1961 = vpow.pop %v1960
        %v1962 = vmul.f32 %v1952, 1.442695
        %v1963 = vpow.pop %v1962
        %v1964 = vmul.f32 %v1953, 1.442695
        %v1965 = vpow.pop %v1964
        %v1966 = vmul.f32 %v1954, 1.442695
        %v1967 = vpow.pop %v1966
        %v1968 = vmul.f32 %v1955, 1.442695
        %v1969 = vpow.pop %v1968
        %v1970 = vmul.f32 %v1956, 1.442695
        %v1971 = vpow.pop %v1970
        %v1972 = vmul.f32 %v1957, 1.442695
        %v1973 = vpow.pop %v1972
        %v1974 = vsel %vm1925, %v1959, 0.0
        %1975 = vadd.xlane.f32.xlu0 %v1974
        %v1976 = vpop.xlane.xlu0 %1975
        %v1977 = vsel %vm1925, %v1961, 0.0
        %1978 = vadd.xlane.f32.xlu0 %v1977
        %v1979 = vpop.xlane.xlu0 %1978
        %v1980 = vsel %vm1925, %v1963, 0.0
        %1981 = vadd.xlane.f32.xlu0 %v1980
        %v1982 = vpop.xlane.xlu0 %1981
        %v1983 = vsel %vm1925, %v1965, 0.0
        %1984 = vadd.xlane.f32.xlu0 %v1983
        %v1985 = vpop.xlane.xlu0 %1984
        %v1986 = vsel %vm1925, %v1967, 0.0
        %1987 = vadd.xlane.f32.xlu0 %v1986
        %v1988 = vpop.xlane.xlu0 %1987
        %v1989 = vsel %vm1925, %v1969, 0.0
        %1990 = vadd.xlane.f32.xlu0 %v1989
        %v1991 = vpop.xlane.xlu0 %1990
        %v1992 = vsel %vm1925, %v1971, 0.0
        %1993 = vadd.xlane.f32.xlu0 %v1992
        %v1994 = vpop.xlane.xlu0 %1993
        %v1995 = vsel %vm1925, %v1973, 0.0
        %1996 = vadd.xlane.f32.xlu0 %v1995
        %v1997 = vpop.xlane.xlu0 %1996
        %v1998 = vrcp.pop %v1976
        %v1999 = vrcp.pop %v1979
        %v2000 = vrcp.pop %v1982
        %v2001 = vrcp.pop %v1985
        %v2002 = vrcp.pop %v1988
        %v2003 = vrcp.pop %v1991
        %v2004 = vrcp.pop %v1994
        %v2005 = vrcp.pop %v1997
        %v2006 = vmul.f32 %v1959, %v1998
        %v2007 = vmul.f32 %v1961, %v1999
        %v2008 = vmul.f32 %v1963, %v2000
        %v2009 = vmul.f32 %v1965, %v2001
        %v2010 = vmul.f32 %v1967, %v2002
        %v2011 = vmul.f32 %v1969, %v2003
        %v2012 = vmul.f32 %v1971, %v2004
        %v2013 = vmul.f32 %v1973, %v2005
        %v2014 = vsel %vm1916, 0.0, %v2006
        %v2015 = vsel %vm1916, 0.0, %v2007
        %v2016 = vsel %vm1916, 0.0, %v2008
        %v2017 = vsel %vm1916, 0.0, %v2009
        %v2018 = vsel %vm1916, 0.0, %v2010
        %v2019 = vsel %vm1916, 0.0, %v2011
        %v2020 = vsel %vm1916, 0.0, %v2012
        %v2021 = vsel %vm1916, 0.0, %v2013
        %v2022 = vpack.c.bf16 %v2014, %v2014
        %v2023 = vpack.c.bf16 %v2015, %v2015
        %v2024 = vpack.c.bf16 %v2016, %v2016
        %v2025 = vpack.c.bf16 %v2017, %v2017
        %v2026 = vpack.c.bf16 %v2018, %v2018
        %v2027 = vpack.c.bf16 %v2019, %v2019
        %v2028 = vpack.c.bf16 %v2020, %v2020
        %v2029 = vpack.c.bf16 %v2021, %v2021
        %v2030 = vld [vmem:[#allocation4] sm:$0xf]
        %v2031 = vld [vmem:[#allocation4 + $0x4] sm:$0xf]
        %v2032 = vld [vmem:[#allocation4 + $0x8] sm:$0xf]
        %v2033 = vld [vmem:[#allocation4 + $0xc] sm:$0xf]
        %v2034 = vld [vmem:[#allocation4 + $0x10] sm:$0xf]
        %v2035 = vld [vmem:[#allocation4 + $0x14] sm:$0xf]
        %v2036 = vld [vmem:[#allocation4 + $0x18] sm:$0xf]
        %v2037 = vld [vmem:[#allocation4 + $0x1c] sm:$0xf]
        %v2040 = vunpack.c.l.b16 %v2022
        %v2041 = vunpack.c.l.b16 %v2023
        %v2042 = vpack.c.b16 %v2041, %v2040
        %v2045 = vunpack.c.l.b16 %v2030
        %v2046 = vunpack.c.l.b16 %v2031
        %v2047 = vpack.c.b16 %v2046, %v2045
        %v2050 = vsel %vm1925, %v2042, 0
        %2052 = vmatpush.bf16.msra.mxu0 0
        %2053 = vmatpush.bf16.msra.mxu0 0
        %2054 = vmatpush.bf16.msra.mxu0 0
        %2055 = vmatpush.bf16.msra.mxu0 0
        %2056 = vmatpush.bf16.msra.mxu0 0
        %2057 = vmatpush.bf16.msra.mxu0 0
        %2058 = vmatpush.bf16.msra.mxu0 0
        %2059 = vmatpush.bf16.msra.mxu0 %v2047
        %2060 = vmatmul.bf16.gmra.mxu0 %v2050
        %v2061 = vpop.f32.mrf.mxu0
        %v2062 = vadd.f32 0.0, %v2061
        %v2063 = vpop.f32.mrf.mxu0
        %v2064 = vadd.f32 0.0, %v2063
        %2065 = vdwg.mxu0
        %v2068 = vunpack.c.l.b16 %v2024
        %v2069 = vunpack.c.l.b16 %v2025
        %v2070 = vpack.c.b16 %v2069, %v2068
        %v2073 = vunpack.c.l.b16 %v2032
        %v2074 = vunpack.c.l.b16 %v2033
        %v2075 = vpack.c.b16 %v2074, %v2073
        %v2078 = vsel %vm1925, %v2070, 0
        %2080 = vmatpush.bf16.msra.mxu0 0
        %2081 = vmatpush.bf16.msra.mxu0 0
        %2082 = vmatpush.bf16.msra.mxu0 0
        %2083 = vmatpush.bf16.msra.mxu0 0
        %2084 = vmatpush.bf16.msra.mxu0 0
        %2085 = vmatpush.bf16.msra.mxu0 0
        %2086 = vmatpush.bf16.msra.mxu0 0
        %2087 = vmatpush.bf16.msra.mxu0 %v2075
        %2088 = vmatmul.bf16.gmra.mxu0 %v2078
        %v2089 = vpop.f32.mrf.mxu0
        %v2090 = vadd.f32 0.0, %v2089
        %v2091 = vpop.f32.mrf.mxu0
        %v2092 = vadd.f32 0.0, %v2091
        %2093 = vdwg.mxu0
        %v2096 = vunpack.c.l.b16 %v2026
        %v2097 = vunpack.c.l.b16 %v2027
        %v2098 = vpack.c.b16 %v2097, %v2096
        %v2101 = vunpack.c.l.b16 %v2034
        %v2102 = vunpack.c.l.b16 %v2035
        %v2103 = vpack.c.b16 %v2102, %v2101
        %v2106 = vsel %vm1925, %v2098, 0
        %2108 = vmatpush.bf16.msra.mxu0 0
        %2109 = vmatpush.bf16.msra.mxu0 0
        %2110 = vmatpush.bf16.msra.mxu0 0
        %2111 = vmatpush.bf16.msra.mxu0 0
        %2112 = vmatpush.bf16.msra.mxu0 0
        %2113 = vmatpush.bf16.msra.mxu0 0
        %2114 = vmatpush.bf16.msra.mxu0 0
        %2115 = vmatpush.bf16.msra.mxu0 %v2103
        %2116 = vmatmul.bf16.gmra.mxu0 %v2106
        %v2117 = vpop.f32.mrf.mxu0
        %v2118 = vadd.f32 0.0, %v2117
        %v2119 = vpop.f32.mrf.mxu0
        %v2120 = vadd.f32 0.0, %v2119
        %2121 = vdwg.mxu0
        %v2124 = vunpack.c.l.b16 %v2028
        %v2125 = vunpack.c.l.b16 %v2029
        %v2126 = vpack.c.b16 %v2125, %v2124
        %v2129 = vunpack.c.l.b16 %v2036
        %v2130 = vunpack.c.l.b16 %v2037
        %v2131 = vpack.c.b16 %v2130, %v2129
        %v2134 = vsel %vm1925, %v2126, 0
        %2136 = vmatpush.bf16.msra.mxu0 0
        %2137 = vmatpush.bf16.msra.mxu0 0
        %2138 = vmatpush.bf16.msra.mxu0 0
        %2139 = vmatpush.bf16.msra.mxu0 0
        %2140 = vmatpush.bf16.msra.mxu0 0
        %2141 = vmatpush.bf16.msra.mxu0 0
        %2142 = vmatpush.bf16.msra.mxu0 0
        %2143 = vmatpush.bf16.msra.mxu0 %v2131
        %2144 = vmatmul.bf16.gmra.mxu0 %v2134
        %v2145 = vpop.f32.mrf.mxu0
        %v2146 = vadd.f32 0.0, %v2145
        %v2147 = vpop.f32.mrf.mxu0
        %v2148 = vadd.f32 0.0, %v2147
        %2149 = vdwg.mxu0
        %v2150 = vpack.c.bf16 %v2064, %v2062
        %v2151 = vld [vmem:[%s10] sm:$0xf]
        %v2152 = vld [vmem:[%s10 + $0x4] sm:$0xf]
        %v2153 = vld [vmem:[%s10 + $0x8] sm:$0xf]
        %v2154 = vld [vmem:[%s10 + $0xc] sm:$0xf]
        %v2155 = vpack.c.bf16 %v2092, %v2090
        %s2156 = scalar_lea.vmem %s10, 16
        %v2157 = vld [vmem:[%s2156] sm:$0xf]
        %v2158 = vld [vmem:[%s2156 + $0x4] sm:$0xf]
        %v2159 = vld [vmem:[%s2156 + $0x8] sm:$0xf]
        %v2160 = vld [vmem:[%s2156 + $0xc] sm:$0xf]
        %v2165 = vunpack.c.l.b16 %v2157
        %v2166 = vunpack.c.l.b16 %v2158
        %v2167 = vunpack.c.l.b16 %v2159
        %v2168 = vunpack.c.l.b16 %v2160
        %v2169 = vpack.c.b16 %v2166, %v2165
        %v2170 = vpack.c.b16 %v2168, %v2167
        %v2174 = vsel %vm1803, %v2155, 0
        %2176 = vmatpush.bf16.msra.mxu0 0
        %2177 = vmatpush.bf16.msra.mxu0 0
        %2178 = vmatpush.bf16.msra.mxu0 0
        %2179 = vmatpush.bf16.msra.mxu0 0
        %2180 = vmatpush.bf16.msra.mxu0 0
        %2181 = vmatpush.bf16.msra.mxu0 0
        %2182 = vmatpush.bf16.msra.mxu0 %v2170
        %2183 = vmatpush.bf16.msra.mxu0 %v2169
        %2184 = vmatmul.bf16.gmra.mxu0 %v2174
        %v2185 = vpop.f32.mrf.mxu0
        %v2186 = vadd.f32 0.0, %v2185
        %v2187 = vpop.f32.mrf.mxu0
        %v2188 = vadd.f32 0.0, %v2187
        %2189 = vdwg.mxu0
        %v2194 = vunpack.c.l.b16 %v2151
        %v2195 = vunpack.c.l.b16 %v2152
        %v2196 = vunpack.c.l.b16 %v2153
        %v2197 = vunpack.c.l.b16 %v2154
        %v2198 = vpack.c.b16 %v2195, %v2194
        %v2199 = vpack.c.b16 %v2197, %v2196
        %v2203 = vsel %vm1803, %v2150, 0
        %2205 = vmatpush.bf16.msra.mxu0 0
        %2206 = vmatpush.bf16.msra.mxu0 0
        %2207 = vmatpush.bf16.msra.mxu0 0
        %2208 = vmatpush.bf16.msra.mxu0 0
        %2209 = vmatpush.bf16.msra.mxu0 0
        %2210 = vmatpush.bf16.msra.mxu0 0
        %2211 = vmatpush.bf16.msra.mxu0 %v2199
        %2212 = vmatpush.bf16.msra.mxu0 %v2198
        %2213 = vmatmul.bf16.gmra.mxu0 %v2203
        %v2214 = vpop.f32.mrf.mxu0
        %v2215 = vadd.f32 %v2186, %v2214
        %v2216 = vpop.f32.mrf.mxu0
        %v2217 = vadd.f32 %v2188, %v2216
        %2218 = vdwg.mxu0
        %v2219 = vpack.c.bf16 %v2120, %v2118
        %s2220 = scalar_lea.vmem %s10, 32
        %v2221 = vld [vmem:[%s2220] sm:$0xf]
        %v2222 = vld [vmem:[%s2220 + $0x4] sm:$0xf]
        %v2223 = vld [vmem:[%s2220 + $0x8] sm:$0xf]
        %v2224 = vld [vmem:[%s2220 + $0xc] sm:$0xf]
        %v2229 = vunpack.c.l.b16 %v2221
        %v2230 = vunpack.c.l.b16 %v2222
        %v2231 = vunpack.c.l.b16 %v2223
        %v2232 = vunpack.c.l.b16 %v2224
        %v2233 = vpack.c.b16 %v2230, %v2229
        %v2234 = vpack.c.b16 %v2232, %v2231
        %v2238 = vsel %vm1803, %v2219, 0
        %2240 = vmatpush.bf16.msra.mxu0 0
        %2241 = vmatpush.bf16.msra.mxu0 0
        %2242 = vmatpush.bf16.msra.mxu0 0
        %2243 = vmatpush.bf16.msra.mxu0 0
        %2244 = vmatpush.bf16.msra.mxu0 0
        %2245 = vmatpush.bf16.msra.mxu0 0
        %2246 = vmatpush.bf16.msra.mxu0 %v2234
        %2247 = vmatpush.bf16.msra.mxu0 %v2233
        %2248 = vmatmul.bf16.gmra.mxu0 %v2238
        %v2249 = vpop.f32.mrf.mxu0
        %v2250 = vadd.f32 0.0, %v2249
        %v2251 = vpop.f32.mrf.mxu0
        %v2252 = vadd.f32 0.0, %v2251
        %2253 = vdwg.mxu0
        %v2254 = vadd.f32 %v2215, %v2250
        %v2255 = vadd.f32 %v2217, %v2252
        %v2256 = vpack.c.bf16 %v2148, %v2146
        %s2257 = scalar_lea.vmem %s10, 48
        %v2258 = vld [vmem:[%s2257] sm:$0xf]
        %v2259 = vld [vmem:[%s2257 + $0x4] sm:$0xf]
        %v2260 = vld [vmem:[%s2257 + $0x8] sm:$0xf]
        %v2261 = vld [vmem:[%s2257 + $0xc] sm:$0xf]
        %v2266 = vunpack.c.l.b16 %v2258
        %v2267 = vunpack.c.l.b16 %v2259
        %v2268 = vunpack.c.l.b16 %v2260
        %v2269 = vunpack.c.l.b16 %v2261
        %v2270 = vpack.c.b16 %v2267, %v2266
        %v2271 = vpack.c.b16 %v2269, %v2268
        %v2275 = vsel %vm1803, %v2256, 0
        %2277 = vmatpush.bf16.msra.mxu0 0
        %2278 = vmatpush.bf16.msra.mxu0 0
        %2279 = vmatpush.bf16.msra.mxu0 0
        %2280 = vmatpush.bf16.msra.mxu0 0
        %2281 = vmatpush.bf16.msra.mxu0 0
        %2282 = vmatpush.bf16.msra.mxu0 0
        %2283 = vmatpush.bf16.msra.mxu0 %v2271
        %2284 = vmatpush.bf16.msra.mxu0 %v2270
        %2285 = vmatmul.bf16.gmra.mxu0 %v2275
        %v2286 = vpop.f32.mrf.mxu0
        %v2287 = vadd.f32 0.0, %v2286
        %v2288 = vpop.f32.mrf.mxu0
        %v2289 = vadd.f32 0.0, %v2288
        %2290 = vdwg.mxu0
        %v2291 = vadd.f32 %v2254, %v2287
        %v2292 = vadd.f32 %v2255, %v2289
        %v2293 = vadd.f32 %v608, %v2291
        %v2294 = vadd.f32 %v609, %v2292
        %v2295 = vld [vmem:[%s11] sm:$0x1]
        %v2297 = vperm.slane %v2295, 0
        %v2299 = vadd.f32 %v2293, %v2297
        %v2300 = vadd.f32 %v2294, %v2297
        %v2301 = vld [vmem:[%s12] sm:$0x1]
        %v2302 = vld [vmem:[%s13] sm:$0x1]
        %2303 = vadd.xlane.f32.xlu0 %v2299
        %v2304 = vpop.xlane.xlu0 %2303
        %2305 = vadd.xlane.f32.xlu0 %v2300
        %v2306 = vpop.xlane.xlu0 %2305
        %v2307 = vmul.f32 %v2304, %v624
        %v2308 = vmul.f32 %v2306, %v624
        %v2309 = vsub.f32 %v2299, %v2307
        %v2310 = vsub.f32 %v2300, %v2308
        %v2311 = vmul.f32 %v2309, %v2309
        %v2312 = vmul.f32 %v2310, %v2310
        %2313 = vadd.xlane.f32.xlu0 %v2311
        %v2314 = vpop.xlane.xlu0 %2313
        %2315 = vadd.xlane.f32.xlu0 %v2312
        %v2316 = vpop.xlane.xlu0 %2315
        %v2317 = vmul.f32 %v2314, %v624
        %v2318 = vmul.f32 %v2316, %v624
        %v2319 = vadd.f32 %v2317, 1e-12
        %v2320 = vadd.f32 %v2318, 1e-12
        %v2321 = vrsqrt.pop %v2319
        %v2322 = vmul.f32 %v2321, %v2319
        %v2323 = vmul.f32 %v2322, %v2321
        %v2324 = vmul.f32 0.5, %v2323
        %v2325 = vsub.f32 1.5, %v2324
        %v2326 = vmul.f32 %v2321, %v2325
        %vm2327 = vweird.f32 %v2319
        %vm2328 = vweird.f32 %v2321
        %vm2329 = vmor %vm2327, %vm2328
        %v2330 = vsel %vm2329, %v2321, %v2326
        %v2331 = vrsqrt.pop %v2320
        %v2332 = vmul.f32 %v2331, %v2320
        %v2333 = vmul.f32 %v2332, %v2331
        %v2334 = vmul.f32 0.5, %v2333
        %v2335 = vsub.f32 1.5, %v2334
        %v2336 = vmul.f32 %v2331, %v2335
        %vm2337 = vweird.f32 %v2320
        %vm2338 = vweird.f32 %v2331
        %vm2339 = vmor %vm2337, %vm2338
        %v2340 = vsel %vm2339, %v2331, %v2336
        %v2341 = vmul.f32 %v2309, %v2330
        %v2342 = vmul.f32 %v2310, %v2340
        %v2344 = vperm.slane %v2301, 0
        %v2346 = vmul.f32 %v2341, %v2344
        %v2347 = vmul.f32 %v2342, %v2344
        %v2349 = vperm.slane %v2302, 0
        %v2351 = vadd.f32 %v2346, %v2349
        %v2352 = vadd.f32 %v2347, %v2349
        %v2353 = vpack.c.bf16 %v2352, %v2351
        %v2354 = vld [vmem:[%s14] sm:$0xff]
        %v2355 = vld [vmem:[%s14 + $0x8] sm:$0xff]
        %v2356 = vld [vmem:[%s14 + $0x10] sm:$0xff]
        %v2357 = vld [vmem:[%s14 + $0x18] sm:$0xff]
        %v2358 = vld [vmem:[%s14 + $0x20] sm:$0xff]
        %v2359 = vld [vmem:[%s14 + $0x28] sm:$0xff]
        %v2360 = vld [vmem:[%s14 + $0x30] sm:$0xff]
        %v2361 = vld [vmem:[%s14 + $0x38] sm:$0xff]
        %v2362 = vld [vmem:[%s14 + $0x40] sm:$0xff]
        %v2363 = vld [vmem:[%s14 + $0x48] sm:$0xff]
        %v2364 = vld [vmem:[%s14 + $0x50] sm:$0xff]
        %v2365 = vld [vmem:[%s14 + $0x58] sm:$0xff]
        %v2366 = vld [vmem:[%s14 + $0x60] sm:$0xff]
        %v2367 = vld [vmem:[%s14 + $0x68] sm:$0xff]
        %v2368 = vld [vmem:[%s14 + $0x70] sm:$0xff]
        %v2369 = vld [vmem:[%s14 + $0x78] sm:$0xff]
        %v2370 = vld [vmem:[%s15] sm:$0x3]
        %v2372 = vperm.slane %v2370, 0
        %v2373 = vperm.slane %v2370, 1
        %v2392 = vunpack.c.l.b16 %v2354
        %v2393 = vunpack.c.h.b16 %v2354
        %v2394 = vunpack.c.l.b16 %v2355
        %v2395 = vunpack.c.h.b16 %v2355
        %v2396 = vunpack.c.l.b16 %v2356
        %v2397 = vunpack.c.h.b16 %v2356
        %v2398 = vunpack.c.l.b16 %v2357
        %v2399 = vunpack.c.h.b16 %v2357
        %v2400 = vunpack.c.l.b16 %v2358
        %v2401 = vunpack.c.h.b16 %v2358
        %v2402 = vunpack.c.l.b16 %v2359
        %v2403 = vunpack.c.h.b16 %v2359
        %v2404 = vunpack.c.l.b16 %v2360
        %v2405 = vunpack.c.h.b16 %v2360
        %v2406 = vunpack.c.l.b16 %v2361
        %v2407 = vunpack.c.h.b16 %v2361
        %v2408 = vunpack.c.l.b16 %v2362
        %v2409 = vunpack.c.h.b16 %v2362
        %v2410 = vunpack.c.l.b16 %v2363
        %v2411 = vunpack.c.h.b16 %v2363
        %v2412 = vunpack.c.l.b16 %v2364
        %v2413 = vunpack.c.h.b16 %v2364
        %v2414 = vunpack.c.l.b16 %v2365
        %v2415 = vunpack.c.h.b16 %v2365
        %v2416 = vunpack.c.l.b16 %v2366
        %v2417 = vunpack.c.h.b16 %v2366
        %v2418 = vunpack.c.l.b16 %v2367
        %v2419 = vunpack.c.h.b16 %v2367
        %v2420 = vunpack.c.l.b16 %v2368
        %v2421 = vunpack.c.h.b16 %v2368
        %v2422 = vunpack.c.l.b16 %v2369
        %v2423 = vunpack.c.h.b16 %v2369
        %v2424 = vpack.c.b16 %v2394, %v2392
        %v2425 = vpack.c.b16 %v2395, %v2393
        %v2426 = vpack.c.b16 %v2398, %v2396
        %v2427 = vpack.c.b16 %v2399, %v2397
        %v2428 = vpack.c.b16 %v2402, %v2400
        %v2429 = vpack.c.b16 %v2403, %v2401
        %v2430 = vpack.c.b16 %v2406, %v2404
        %v2431 = vpack.c.b16 %v2407, %v2405
        %v2432 = vpack.c.b16 %v2410, %v2408
        %v2433 = vpack.c.b16 %v2411, %v2409
        %v2434 = vpack.c.b16 %v2414, %v2412
        %v2435 = vpack.c.b16 %v2415, %v2413
        %v2436 = vpack.c.b16 %v2418, %v2416
        %v2437 = vpack.c.b16 %v2419, %v2417
        %v2438 = vpack.c.b16 %v2422, %v2420
        %v2439 = vpack.c.b16 %v2423, %v2421
        %2456 = vmatpush.bf16.msra.mxu0 %v2438
        %2457 = vmatpush.bf16.msra.mxu0 %v2436
        %2458 = vmatpush.bf16.msra.mxu0 %v2434
        %2459 = vmatpush.bf16.msra.mxu0 %v2432
        %2460 = vmatpush.bf16.msra.mxu0 %v2430
        %2461 = vmatpush.bf16.msra.mxu0 %v2428
        %2462 = vmatpush.bf16.msra.mxu0 %v2426
        %2463 = vmatpush.bf16.msra.mxu0 %v2424
        %2464 = vmatmul.bf16.gmra.mxu0 %v2353
        %v2465 = vpop.f32.mrf.mxu0
        %v2466 = vadd.f32 %v2372, %v2465
        %v2467 = vpop.f32.mrf.mxu0
        %v2468 = vadd.f32 %v2372, %v2467
        %2469 = vdwg.mxu0
        %2470 = vmatpush.bf16.msra.mxu0 %v2439
        %2471 = vmatpush.bf16.msra.mxu0 %v2437
        %2472 = vmatpush.bf16.msra.mxu0 %v2435
        %2473 = vmatpush.bf16.msra.mxu0 %v2433
        %2474 = vmatpush.bf16.msra.mxu0 %v2431
        %2475 = vmatpush.bf16.msra.mxu0 %v2429
        %2476 = vmatpush.bf16.msra.mxu0 %v2427
        %2477 = vmatpush.bf16.msra.mxu0 %v2425
        %2478 = vmatmul.bf16.gmra.mxu0 %v2353
        %v2479 = vpop.f32.mrf.mxu0
        %v2480 = vadd.f32 %v2373, %v2479
        %v2481 = vpop.f32.mrf.mxu0
        %v2482 = vadd.f32 %v2373, %v2481
        %2483 = vdwg.mxu0
        %v2484 = vmax.f32 %v2466, 0.0
        %v2485 = vmax.f32 %v2480, 0.0
        %v2486 = vmax.f32 %v2468, 0.0
        %v2487 = vmax.f32 %v2482, 0.0
        %v2488 = vpack.c.bf16 %v2486, %v2484
        %v2489 = vpack.c.bf16 %v2487, %v2485
        %v2490 = vld [vmem:[%s16] sm:$0xf]
        %v2491 = vld [vmem:[%s16 + $0x4] sm:$0xf]
        %v2492 = vld [vmem:[%s16 + $0x8] sm:$0xf]
        %v2493 = vld [vmem:[%s16 + $0xc] sm:$0xf]
        %v2494 = vld [vmem:[%s16 + $0x10] sm:$0xf]
        %v2495 = vld [vmem:[%s16 + $0x14] sm:$0xf]
        %v2496 = vld [vmem:[%s16 + $0x18] sm:$0xf]
        %v2497 = vld [vmem:[%s16 + $0x1c] sm:$0xf]
        %v2498 = vld [vmem:[%s16 + $0x20] sm:$0xf]
        %v2499 = vld [vmem:[%s16 + $0x24] sm:$0xf]
        %v2500 = vld [vmem:[%s16 + $0x28] sm:$0xf]
        %v2501 = vld [vmem:[%s16 + $0x2c] sm:$0xf]
        %v2502 = vld [vmem:[%s16 + $0x30] sm:$0xf]
        %v2503 = vld [vmem:[%s16 + $0x34] sm:$0xf]
        %v2504 = vld [vmem:[%s16 + $0x38] sm:$0xf]
        %v2505 = vld [vmem:[%s16 + $0x3c] sm:$0xf]
        %v2506 = vld [vmem:[%s16 + $0x40] sm:$0xf]
        %v2507 = vld [vmem:[%s16 + $0x44] sm:$0xf]
        %v2508 = vld [vmem:[%s16 + $0x48] sm:$0xf]
        %v2509 = vld [vmem:[%s16 + $0x4c] sm:$0xf]
        %v2510 = vld [vmem:[%s16 + $0x50] sm:$0xf]
        %v2511 = vld [vmem:[%s16 + $0x54] sm:$0xf]
        %v2512 = vld [vmem:[%s16 + $0x58] sm:$0xf]
        %v2513 = vld [vmem:[%s16 + $0x5c] sm:$0xf]
        %v2514 = vld [vmem:[%s16 + $0x60] sm:$0xf]
        %v2515 = vld [vmem:[%s16 + $0x64] sm:$0xf]
        %v2516 = vld [vmem:[%s16 + $0x68] sm:$0xf]
        %v2517 = vld [vmem:[%s16 + $0x6c] sm:$0xf]
        %v2518 = vld [vmem:[%s16 + $0x70] sm:$0xf]
        %v2519 = vld [vmem:[%s16 + $0x74] sm:$0xf]
        %v2520 = vld [vmem:[%s16 + $0x78] sm:$0xf]
        %v2521 = vld [vmem:[%s16 + $0x7c] sm:$0xf]
        %v2522 = vld [vmem:[%s17] sm:$0x1]
        %v2524 = vperm.slane %v2522, 0
        %v2558 = vunpack.c.l.b16 %v2490
        %v2559 = vunpack.c.l.b16 %v2491
        %v2560 = vunpack.c.l.b16 %v2492
        %v2561 = vunpack.c.l.b16 %v2493
        %v2562 = vunpack.c.l.b16 %v2494
        %v2563 = vunpack.c.l.b16 %v2495
        %v2564 = vunpack.c.l.b16 %v2496
        %v2565 = vunpack.c.l.b16 %v2497
        %v2566 = vunpack.c.l.b16 %v2498
        %v2567 = vunpack.c.l.b16 %v2499
        %v2568 = vunpack.c.l.b16 %v2500
        %v2569 = vunpack.c.l.b16 %v2501
        %v2570 = vunpack.c.l.b16 %v2502
        %v2571 = vunpack.c.l.b16 %v2503
        %v2572 = vunpack.c.l.b16 %v2504
        %v2573 = vunpack.c.l.b16 %v2505
        %v2574 = vunpack.c.l.b16 %v2506
        %v2575 = vunpack.c.l.b16 %v2507
        %v2576 = vunpack.c.l.b16 %v2508
        %v2577 = vunpack.c.l.b16 %v2509
        %v2578 = vunpack.c.l.b16 %v2510
        %v2579 = vunpack.c.l.b16 %v2511
        %v2580 = vunpack.c.l.b16 %v2512
        %v2581 = vunpack.c.l.b16 %v2513
        %v2582 = vunpack.c.l.b16 %v2514
        %v2583 = vunpack.c.l.b16 %v2515
        %v2584 = vunpack.c.l.b16 %v2516
        %v2585 = vunpack.c.l.b16 %v2517
        %v2586 = vunpack.c.l.b16 %v2518
        %v2587 = vunpack.c.l.b16 %v2519
        %v2588 = vunpack.c.l.b16 %v2520
        %v2589 = vunpack.c.l.b16 %v2521
        %v2590 = vpack.c.b16 %v2559, %v2558
        %v2591 = vpack.c.b16 %v2561, %v2560
        %v2592 = vpack.c.b16 %v2563, %v2562
        %v2593 = vpack.c.b16 %v2565, %v2564
        %v2594 = vpack.c.b16 %v2567, %v2566
        %v2595 = vpack.c.b16 %v2569, %v2568
        %v2596 = vpack.c.b16 %v2571, %v2570
        %v2597 = vpack.c.b16 %v2573, %v2572
        %v2598 = vpack.c.b16 %v2575, %v2574
        %v2599 = vpack.c.b16 %v2577, %v2576
        %v2600 = vpack.c.b16 %v2579, %v2578
        %v2601 = vpack.c.b16 %v2581, %v2580
        %v2602 = vpack.c.b16 %v2583, %v2582
        %v2603 = vpack.c.b16 %v2585, %v2584
        %v2604 = vpack.c.b16 %v2587, %v2586
        %v2605 = vpack.c.b16 %v2589, %v2588
        %2622 = vmatpush.bf16.msra.mxu0 %v2597
        %2623 = vmatpush.bf16.msra.mxu0 %v2596
        %2624 = vmatpush.bf16.msra.mxu0 %v2595
        %2625 = vmatpush.bf16.msra.mxu0 %v2594
        %2626 = vmatpush.bf16.msra.mxu0 %v2593
        %2627 = vmatpush.bf16.msra.mxu0 %v2592
        %2628 = vmatpush.bf16.msra.mxu0 %v2591
        %2629 = vmatpush.bf16.msra.mxu0 %v2590
        %2630 = vmatmul.bf16.gmra.mxu0 %v2488
        %v2631 = vpop.f32.mrf.mxu0
        %v2632 = vadd.f32 %v2524, %v2631
        %v2633 = vpop.f32.mrf.mxu0
        %v2634 = vadd.f32 %v2524, %v2633
        %2635 = vdwg.mxu0
        %2636 = vmatpush.bf16.msra.mxu0 %v2605
        %2637 = vmatpush.bf16.msra.mxu0 %v2604
        %2638 = vmatpush.bf16.msra.mxu0 %v2603
        %2639 = vmatpush.bf16.msra.mxu0 %v2602
        %2640 = vmatpush.bf16.msra.mxu0 %v2601
        %2641 = vmatpush.bf16.msra.mxu0 %v2600
        %2642 = vmatpush.bf16.msra.mxu0 %v2599
        %2643 = vmatpush.bf16.msra.mxu0 %v2598
        %2644 = vmatmul.bf16.gmra.mxu0 %v2489
        %v2645 = vpop.f32.mrf.mxu0
        %v2646 = vadd.f32 %v2632, %v2645
        %v2647 = vpop.f32.mrf.mxu0
        %v2648 = vadd.f32 %v2634, %v2647
        %2649 = vdwg.mxu0
        %v2650 = vadd.f32 %v2299, %v2646
        %v2651 = vadd.f32 %v2300, %v2648
        %2652 = vst [vmem:[%s593] sm:$0xff] %v2650
        %2653 = vst [vmem:[%s593 + $0x8] sm:$0xff] %v2651
        %s2654 = sand.u32 %s442, 1
        %s2655 = scalar_lea.sflag [#allocation6], %s2654
        %s2656 = sand.u32 %s442, 1
        %s2657 = smul.addr %s2656, 16
        %s2658 = scalar_lea.vmem [#allocation5], %s2657
        // Predicated region
        $region93: #{tpu_custom_call.1} parent=91 // pred_check
          %p2659 = pneg %p452
        $region94: #{tpu_custom_call.1} parent=91 // pred_check_branch
          %2661 = sbr.rel (%p2659) target = $region96
        $region95: #{tpu_custom_call.1} parent=91 // pred_region
          %s2662 = smul.u32 2, %s37
          %2664 = vsyncadd %s2655, 0
          %s2665 = smul.addr %s36, 2
          %s2666 = sadd.s32 %s2662, %s2665
          %s2667 = smul.addr %s2666, 8
          %s2668 = scalar_lea.hbm %s18, %s2667
          %s2669 = sshll.u32 %s2658, 4
          %s2670 = int_to_ptr.vmem [resolvable:$true] %s2669
          %s2671 = sshll.u32 %s2668, 4
          %s2672 = int_to_ptr.hbm [resolvable:$true] %s2671
          %2677 = dma.vmem_to_hbm [thread:$0]  %s2670, 256, %s2672, %s2655, 128, 128, 8
        $region96: #{tpu_custom_call.1} parent=91 // pred_fallthru
          _
      $region92: #{tpu_custom_call.1} parent=5 // pred_fallthru
        _
      %p2678 = scmp.le.s32.totalorder 2, %s27
      // Predicated region
      $region97: #{tpu_custom_call.1} parent=5 // pred_check
        %p2679 = pneg %p2678
      $region98: #{tpu_custom_call.1} parent=5 // pred_check_branch
        %2681 = sbr.rel (%p2679) target = $region100
      $region99: #{tpu_custom_call.1} parent=5 // pred_region
        %s2682 = ssub.s32 %s27, 2
        // Predicated region
        $region101: #{tpu_custom_call.1} parent=99 // pred_check
          %p2683 = pneg %p458
        $region102: #{tpu_custom_call.1} parent=99 // pred_check_branch
          %2685 = sbr.rel (%p2683) target = $region104
        $region103: #{tpu_custom_call.1} parent=99 // pred_region
          %s2686 = sand.u32 %s443, 1
          %s2687 = scalar_lea.sflag [#allocation6], %s2686
          %s2688 = sand.u32 %s443, 1
          %s2689 = smul.addr %s2688, 16
          %s2690 = scalar_lea.vmem [#allocation5], %s2689
          %2692 = dma.done %s2687, 256
        $region104: #{tpu_custom_call.1} parent=99 // pred_fallthru
          _
      $region100: #{tpu_custom_call.1} parent=5 // pred_fallthru
        _
    $region6: #{tpu_custom_call.1} parent=1 // loop_footer
      %s31 = sadd.s32 1, %s27
    $region7: #{tpu_custom_call.1} parent=1 // loop_footer_branch
      %26 = sbr.rel target = $region3
    $region8: #{tpu_custom_call.1} parent=1 // loop_exit
      _
    %2693 = vsyncpa [#allocation6], 1
    %s2694 = scalar_lea.sflag [#allocation6], 1
    %2695 = vsyncpa %s2694, 1

</llo_original>
